<compile_context>
chip_gen: v7x
topology: tpu7x:2x2x1
jax: 0.10.0
libtpu: 0.0.40
codegen_flags: <defaults>
</compile_context>

<pallas_src>
import math
import numpy as np
import jax
import jax.numpy as jnp
from jax.experimental import pallas as pl
from jax.experimental.pallas import tpu as pltpu

# sublane-aligned column offset of the tile interior inside the padded scratch
_OFF = 8


# ---------------------------------------------------------------------------
# small helpers
# ---------------------------------------------------------------------------

def _round_up(x, m):
    return (x + m - 1) // m * m


def _pick_tile(h, target):
    """Largest divisor of h that is <= target."""
    t = max(1, min(target, h))
    while h % t:
        t -= 1
    return t


def _bf16_round(x):
    """Round an f32 array to bf16-representable f32 values."""
    return jnp.asarray(x, jnp.float32).astype(jnp.bfloat16).astype(jnp.float32)


def bf16_round_np(x):
    return np.asarray(
        jnp.asarray(np.asarray(x, np.float32)).astype(jnp.bfloat16).astype(jnp.float32))


def _pack_kw(w):
    """(3, 3, Cin, Cout) -> (3, Cin, 3*Cout): kw taps packed into the matmul N dim."""
    return jnp.concatenate([w[:, kw] for kw in range(3)], axis=-1)


# ---------------------------------------------------------------------------
# Pallas kernels
# ---------------------------------------------------------------------------

def _fill_pad_scratch(xpad_ref, x_ref, top_ref, bot_ref):
    """Build a zero-padded (TH+2, Wp, C) halo tile in VMEM without a full memset.

    The tile interior lands at sublane-aligned column offset _OFF (aligned bulk
    store); only the left/right column strips and the two halo rows are filled
    (halo rows come from the neighbouring row tile when it exists, zeros at the
    image border).  Downstream only columns _OFF-1 .. _OFF+W are consumed.
    """
    TH, W = x_ref.shape[1], x_ref.shape[2]
    Wp, C = xpad_ref.shape[1], xpad_ref.shape[2]
    dt = xpad_ref.dtype
    t = pl.program_id(1)
    nt = pl.num_programs(1)

    # left / right pad strips (cover the required zero columns _OFF-1 and _OFF+W)
    xpad_ref[:, 0:_OFF, :] = jnp.zeros((TH + 2, _OFF, C), dt)
    xpad_ref[:, _OFF + W:Wp, :] = jnp.zeros((TH + 2, Wp - _OFF - W, C), dt)
    # interior rows: sublane-aligned store at column _OFF
    xpad_ref[1:TH + 1, _OFF:_OFF + W, :] = x_ref[0].astype(dt)

    @pl.when(t > 0)
    def _():
        xpad_ref[0:1, _OFF:_OFF + W, :] = top_ref[0].astype(dt)

    @pl.when(t == 0)
    def _():
        xpad_ref[0:1, _OFF:_OFF + W, :] = jnp.zeros((1, W, C), dt)

    @pl.when(t < nt - 1)
    def _():
        xpad_ref[TH + 1:TH + 2, _OFF:_OFF + W, :] = bot_ref[0].astype(dt)

    @pl.when(t == nt - 1)
    def _():
        xpad_ref[TH + 1:TH + 2, _OFF:_OFF + W, :] = jnp.zeros((1, W, C), dt)


def _conv3x3_taps(xpad_ref, wpk_ref, TH, W, Wp, Cout):
    """3x3 conv body: 3 MXU matmuls, kw packed into the matmul N dimension.

    Per kh one contiguous (TH*Wp, Cin) row slab (free reshape, Wp % 8 == 0) is
    multiplied by the (Cin, 3*Cout) kw-packed weight; the kw shift is applied
    to the matmul RESULT with a sublane slice, so no strided input copies are
    materialised and the MXU sees 3x fewer weight pushes / result pops.
    """
    Cin = xpad_ref.shape[2]
    acc = jnp.zeros((TH, W, Cout), jnp.float32)
    for kh in range(3):
        slab = xpad_ref[kh:kh + TH, :, :].reshape(TH * Wp, Cin)
        y3 = jnp.dot(slab, wpk_ref[kh],
                     preferred_element_type=jnp.float32).reshape(TH, Wp, 3 * Cout)
        for kw in range(3):
            acc = acc + y3[:, _OFF - 1 + kw:_OFF - 1 + kw + W,
                           kw * Cout:(kw + 1) * Cout]
    return acc


def _conv3x3_kernel(x_ref, top_ref, bot_ref, wpk_ref, b_ref, o_ref, xpad_ref):
    """3x3 conv, padding=1, bias; one (batch, row-tile) block per grid step.

    x_ref   : (1, TH, W, Cin)   bf16
    top_ref : (1, 1, W, Cin)    row above the tile (zeroed at the image top)
    bot_ref : (1, 1, W, Cin)    row below the tile (zeroed at the image bottom)
    wpk_ref : (3, Cin, 3*Cout)  bf16 kw-packed weight
    b_ref   : (1, 1, Cout)      f32
    o_ref   : (1, TH, W, Cout)  bf16
    xpad_ref: (TH+2, Wp, Cin)   bf16 VMEM halo scratch
    """
    TH, W = x_ref.shape[1], x_ref.shape[2]
    Cout = wpk_ref.shape[2] // 3
    Wp = xpad_ref.shape[1]
    _fill_pad_scratch(xpad_ref, x_ref, top_ref, bot_ref)
    acc = _conv3x3_taps(xpad_ref, wpk_ref, TH, W, Wp, Cout)
    o_ref[0] = (acc + b_ref[...]).astype(o_ref.dtype)


def _heads_kernel(x_ref, top_ref, bot_ref, wpk_ref, b1_ref, w2_ref, b2_ref,
                  o_ref, xpad_ref):
    """All detection heads fused: conv3x3(256 -> n_heads*HC)+bias -> ReLU ->
    block-diagonal 1x1 (n_heads*HC -> sum CLS) + bias.

    The upsampled map is read from HBM once for all heads and the
    (TH, W, n_heads*HC) intermediate never leaves VMEM.
    """
    TH, W = x_ref.shape[1], x_ref.shape[2]
    HC3 = wpk_ref.shape[2] // 3
    CLS = w2_ref.shape[1]
    Wp = xpad_ref.shape[1]
    _fill_pad_scratch(xpad_ref, x_ref, top_ref, bot_ref)
    acc = _conv3x3_taps(xpad_ref, wpk_ref, TH, W, Wp, HC3)
    h = jnp.maximum(acc + b1_ref[...], 0.0).astype(jnp.bfloat16)
    out = jnp.dot(h.reshape(TH * W, HC3), w2_ref[...],
                  preferred_element_type=jnp.float32)
    # NOTE: CLS (=sum of classes, e.g. 7) < 128 lanes, but all heads are
    # emitted in a single store per tile instead of three separate 2-3 wide ones.
    o_ref[0] = (out.reshape(TH, W, CLS) + b2_ref[...]).astype(o_ref.dtype)


def _upsample_kernel(x_ref, top_ref, bot_ref, wc_ref, o_ref, xpad_ref):
    """Depthwise ConvTranspose2d(C, C, K=2s, stride=s, padding=s//2, groups=C).

    Reformulated as an s x s pixel shuffle: every output phase (r, r') has
    exactly 2x2 valid input taps.  Phases are processed per (row phase r,
    column half-group g) with a small (TH, W, s/2, C) f32 accumulator that is
    written straight into its strided slot of the output block, so no
    multi-MiB accumulator ever streams through VMEM.

    x_ref : (1, TH, W, C)           bf16
    wc_ref: (2, 2, s, s, C)         f32 compact phase weights (valid taps only)
    o_ref : (1, TH, s, W, s, C)     bf16  -> reshaped to (TH*s, W*s, C) outside
    """
    TH, W = x_ref.shape[1], x_ref.shape[2]
    s = wc_ref.shape[2]
    half = s // 2
    _fill_pad_scratch(xpad_ref, x_ref, top_ref, bot_ref)

    for r in range(s):
        r0 = 0 if r < half else 1          # xpad row of the first valid row tap
        for g in range(2):                 # column phases [g*half, (g+1)*half)
            c0 = _OFF - 1 + g              # xpad col of the first valid col tap
            acc = None
            for j in range(2):
                for i in range(2):
                    slab = xpad_ref[r0 + j:r0 + j + TH,
                                    c0 + i:c0 + i + W, :].astype(jnp.float32)
                    wvec = wc_ref[j, i, r, g * half:(g + 1) * half, :]   # (half, C)
                    term = slab[:, :, None, :] * wvec[None, None, :, :]
                    acc = term if acc is None else acc + term
            o_ref[0, :, r, :, g * half:(g + 1) * half, :] = acc.astype(o_ref.dtype)


# ---------------------------------------------------------------------------
# JAX wrappers (BlockSpecs / grid; no jnp.pad, no dilation, no transposes)
# ---------------------------------------------------------------------------

_COMPILER_PARAMS = pltpu.CompilerParams(
    dimension_semantics=("parallel", "parallel"))


def _row_tile_specs(H, W, C, tile_h):
    """(main tile, top halo row, bottom halo row) BlockSpecs for grid (N, H//tile_h)."""
    main = pl.BlockSpec((1, tile_h, W, C), lambda n, t: (n, t, 0, 0))
    top = pl.BlockSpec((1, 1, W, C),
                       lambda n, t: (n, jnp.maximum(t * tile_h - 1, 0), 0, 0))
    bot = pl.BlockSpec((1, 1, W, C),
                       lambda n, t: (n, jnp.minimum((t + 1) * tile_h, H - 1), 0, 0))
    return main, top, bot


def conv3x3_bias(x, wpk, b, *, tile_h):
    """NHWC 3x3 conv, padding=1, bias.  wpk: (3, Cin, 3*Cout) kw-packed bf16."""
    N, H, W, Cin = x.shape
    Cout = wpk.shape[2] // 3
    tile_h = _pick_tile(H, tile_h)
    Wp = _round_up(_OFF + W + 1, 8)
    main, top, bot = _row_tile_specs(H, W, Cin, tile_h)
    return pl.pallas_call(
        _conv3x3_kernel,
        out_shape=jax.ShapeDtypeStruct((N, H, W, Cout), jnp.bfloat16),
        grid=(N, H // tile_h),
        in_specs=[main, top, bot,
                  pl.BlockSpec(wpk.shape, lambda n, t: (0, 0, 0)),
                  pl.BlockSpec((1, 1, Cout), lambda n, t: (0, 0, 0))],
        out_specs=pl.BlockSpec((1, tile_h, W, Cout), lambda n, t: (n, t, 0, 0)),
        scratch_shapes=[pltpu.VMEM((tile_h + 2, Wp, Cin), jnp.bfloat16)],
        compiler_params=_COMPILER_PARAMS,
    )(x, x, x, wpk, b.reshape(1, 1, Cout).astype(jnp.float32))


def upsample_tconv_dw(x, wc, *, stride, tile_h):
    """Depthwise ConvTranspose2d(C,C,2s,stride=s,padding=s//2,groups=C,bias=False)."""
    N, H, W, C = x.shape
    s = stride
    tile_h = _pick_tile(H, tile_h)
    Wp = _round_up(_OFF + W + 1, 8)
    main, top, bot = _row_tile_specs(H, W, C, tile_h)
    out = pl.pallas_call(
        _upsample_kernel,
        out_shape=jax.ShapeDtypeStruct((N, H, s, W, s, C), jnp.bfloat16),
        grid=(N, H // tile_h),
        in_specs=[main, top, bot,
                  pl.BlockSpec(wc.shape, lambda n, t: (0, 0, 0, 0, 0))],
        out_specs=pl.BlockSpec((1, tile_h, s, W, s, C),
                               lambda n, t: (n, t, 0, 0, 0, 0)),
        scratch_shapes=[pltpu.VMEM((tile_h + 2, Wp, C), jnp.bfloat16)],
        compiler_params=_COMPILER_PARAMS,
    )(x, x, x, wc)
    # (N, H, s, W, s, C) -> (N, H*s, W*s, C): adjacent-dim merge, layout-free.
    return out.reshape(N, H * s, W * s, C)


def heads_forward_fused(y, wpk, b1, w2bd, b2, *, tile_h):
    """Fused heads: conv3x3(C -> 3*HC)+bias, ReLU, block-diag 1x1 (3*HC -> CLS)+bias."""
    N, H, W, C = y.shape
    HC3 = wpk.shape[2] // 3
    CLS = w2bd.shape[1]
    tile_h = _pick_tile(H, tile_h)
    Wp = _round_up(_OFF + W + 1, 8)
    main, top, bot = _row_tile_specs(H, W, C, tile_h)
    return pl.pallas_call(
        _heads_kernel,
        out_shape=jax.ShapeDtypeStruct((N, H, W, CLS), jnp.float32),
        grid=(N, H // tile_h),
        in_specs=[main, top, bot,
                  pl.BlockSpec(wpk.shape, lambda n, t: (0, 0, 0)),
                  pl.BlockSpec((1, 1, HC3), lambda n, t: (0, 0, 0)),
                  pl.BlockSpec(w2bd.shape, lambda n, t: (0, 0)),
                  pl.BlockSpec((1, 1, CLS), lambda n, t: (0, 0, 0))],
        out_specs=pl.BlockSpec((1, tile_h, W, CLS), lambda n, t: (n, t, 0, 0)),
        scratch_shapes=[pltpu.VMEM((tile_h + 2, Wp, C), jnp.bfloat16)],
        compiler_params=_COMPILER_PARAMS,
    )(y, y, y, wpk, b1, w2bd, b2)


# ---------------------------------------------------------------------------
# transposed-conv phase-weight construction (trace-time, tiny)
# ---------------------------------------------------------------------------

def build_up_phase_weights(w, s):
    """w: (C, K, K) depthwise ConvTranspose2d weight (PyTorch (C,1,K,K) squeezed).

    Returns wc: (2, 2, s, s, C) f32 with
        wc[j, i, r, r', c] = w[c, r + p - s*d, r' + p - s*e],
        d = (-1 if r  < s/2 else 0) + j,
        e = (-1 if r' < s/2 else 0) + i,
    i.e. only the 2x2 taps that are valid for each output phase (r, r').
    """
    C, K, _ = w.shape
    p = s // 2
    half = s // 2
    assert K == 2 * s
    wc = np.zeros((2, 2, s, s, C), np.float32)
    for r in range(s):
        dlo = -1 if r < half else 0
        for rp in range(s):
            elo = -1 if rp < half else 0
            for j in range(2):
                for i in range(2):
                    kh = r + p - s * (dlo + j)
                    kw = rp + p - s * (elo + i)
                    wc[j, i, r, rp, :] = w[:, kh, kw]
    return wc


# ---------------------------------------------------------------------------
# module emulation (SWIN_NONE minus the external Swin backbone)
# ---------------------------------------------------------------------------

class SwinNoneHeadPallas:
    IN_CH = 768     # backbone stage5 channels
    MID_CH = 256    # conv_chans_up output channels
    UP_STRIDE = 8   # ConvTranspose2d(256,256,16,stride=8,padding=4,groups=256)

    def __init__(self, heads, head_conv, key, *, tile_conv=4, tile_up=4,
                 tile_head=16):
        assert head_conv > 0  # TODO(synk): head_conv <= 0 branch (single 1x1 head) not implemented
        self.heads = dict(heads)
        self.head_conv = head_conv
        self.tile_conv, self.tile_up, self.tile_head = tile_conv, tile_up, tile_head

        Cin, Cm, s = self.IN_CH, self.MID_CH, self.UP_STRIDE
        K = 2 * s
        HC = head_conv

        def normal(k, shape, scale):
            # Weights pre-rounded to bf16-representable values so the in-kernel
            # bf16 operands are exact (keeps the reference check tight).
            return _bf16_round(scale * jax.random.normal(k, shape, jnp.float32))

        key, k1, k2, k3 = jax.random.split(key, 4)
        self.cu_w = normal(k1, (3, 3, Cin, Cm), 1.5 / math.sqrt(9 * Cin))
        self.cu_b = normal(k2, (Cm,), 0.5)
        self.cu_wpk = _pack_kw(self.cu_w).astype(jnp.bfloat16)

        # depthwise transposed-conv weight kept in f32 (VPU path, no MXU)
        self.up_w = np.asarray(0.5 * jax.random.normal(k3, (Cm, K, K), jnp.float32))
        self.up_wc = jnp.asarray(build_up_phase_weights(self.up_w, s))

        # per-head parameters (also used by the numpy reference)
        self.head_params = {}
        for head, classes in self.heads.items():
            key, k1, k2, k3 = jax.random.split(key, 4)
            w1 = normal(k1, (3, 3, Cm, HC), 1.5 / math.sqrt(9 * Cm))
            b1 = normal(k2, (HC,), 0.5)
            w2 = normal(k3, (HC, classes), 1.5 / math.sqrt(HC))
            if 'hm' in head:
                b2 = jnp.full((classes,), -2.19, jnp.float32)   # fc[-1].bias.fill_(-2.19)
            else:
                b2 = jnp.zeros((classes,), jnp.float32)         # fill_fc_weights
            self.head_params[head] = (w1, b1, w2, b2)

        # fused-head parameters: one conv3x3 over all heads + block-diagonal 1x1
        n_heads = len(self.heads)
        cls_tot = sum(self.heads.values())
        w2bd = np.zeros((n_heads * HC, cls_tot), np.float32)
        b2cat = np.zeros((cls_tot,), np.float32)
        self.head_slices = {}
        w1_list, b1_list = [], []
        col = 0
        for hi, (head, classes) in enumerate(self.heads.items()):
            w1, b1, w2, _b2 = self.head_params[head]
            w1_list.append(w1)
            b1_list.append(b1)
            w2bd[hi * HC:(hi + 1) * HC, col:col + classes] = np.asarray(w2)
            b2cat[col:col + classes] = np.asarray(self.head_params[head][3])
            self.head_slices[head] = (col, classes)
            col += classes
        w1cat = jnp.concatenate(w1_list, axis=-1)               # (3,3,256,n*HC)
        self.h_wpk = _pack_kw(w1cat).astype(jnp.bfloat16)       # (3,256,3*n*HC)
        self.h_b1 = jnp.concatenate(b1_list).reshape(1, 1, n_heads * HC)
        self.h_w2 = jnp.asarray(w2bd).astype(jnp.bfloat16)      # block diagonal
        self.h_b2 = jnp.asarray(b2cat).reshape(1, 1, cls_tot)

    def forward(self, feat):
        """feat: (N, H, W, 768) NHWC stage5 backbone feature map.
        Returns [dict(head -> (N, 8H, 8W, classes))] in NHWC (PyTorch is NCHW)."""
        feat = feat.astype(jnp.bfloat16)
        y = conv3x3_bias(feat, self.cu_wpk, self.cu_b, tile_h=self.tile_conv)
        y = upsample_tconv_dw(y, self.up_wc, stride=self.UP_STRIDE,
                              tile_h=self.tile_up)
        allz = heads_forward_fused(y, self.h_wpk, self.h_b1, self.h_w2, self.h_b2,
                                   tile_h=self.tile_head)
        z = {}
        for head, (c0, classes) in self.head_slices.items():
            z[head] = allz[..., c0:c0 + classes]
        return [z]


# ---------------------------------------------------------------------------
# NumPy reference with direct PyTorch-op semantics
# ---------------------------------------------------------------------------

def ref_conv3x3(x, w, b):
    N, H, W, Cin = x.shape
    Cout = w.shape[3]
    xp = np.pad(x, ((0, 0), (1, 1), (1, 1), (0, 0)))
    out = np.zeros((N, H, W, Cout), np.float32)
    for kh in range(3):
        for kw in range(3):
            out += np.tensordot(xp[:, kh:kh + H, kw:kw + W, :], w[kh, kw],
                                axes=([3], [0]))
    return out + b


def ref_tconv_dw(x, w, s, p):
    """ConvTranspose2d(C,C,K,stride=s,padding=p,groups=C,bias=False), w: (C,K,K)."""
    N, H, W, C = x.shape
    K = w.shape[1]
    full = np.zeros((N, (H - 1) * s + K, (W - 1) * s + K, C), np.float32)
    for kh in range(K):
        for kw in range(K):
            full[:, kh:kh + (H - 1) * s + 1:s,
                 kw:kw + (W - 1) * s + 1:s, :] += x * w[:, kh, kw]
    Ho = (H - 1) * s - 2 * p + K
    Wo = (W - 1) * s - 2 * p + K
    return full[:, p:p + Ho, p:p + Wo, :]


# ---------------------------------------------------------------------------
# main
# ---------------------------------------------------------------------------

if __name__ == "__main__":
    N, H, W = 2, 8, 8                     # stage5 feature map (small demo size)
    heads = {"hm": 3, "wh": 2, "reg": 2}  # matches SWIN_NONE head dict shape
    head_conv = 128

    key = jax.random.PRNGKey(0)
    key, kx, km = jax.random.split(key, 3)
    feat = jax.random.normal(kx, (N, H, W, SwinNoneHeadPallas.IN_CH),
                             jnp.float32).astype(jnp.bfloat16)

    # Small tiles so every kernel runs several (parallel) grid steps.
    model = SwinNoneHeadPallas(heads, head_conv, km,
                               tile_conv=2, tile_up=2, tile_head=8)
    z = model.forward(feat)[0]
    z = {k: np.asarray(jax.block_until_ready(v)) for k, v in z.items()}

    # ---- reference (PyTorch op semantics, numpy f32, bf16 rounding matched) ----
    feat_np = np.asarray(feat.astype(jnp.float32))
    y_ref = ref_conv3x3(feat_np, np.asarray(model.cu_w), np.asarray(model.cu_b))
    y_ref = bf16_round_np(y_ref)          # conv_chans_up conv output stored in bf16
    y_ref = ref_tconv_dw(y_ref, model.up_w, SwinNoneHeadPallas.UP_STRIDE,
                         SwinNoneHeadPallas.UP_STRIDE // 2)
    y_ref = bf16_round_np(y_ref)          # upsample output stored in bf16

    for head in heads:
        w1, b1, w2, b2 = (np.asarray(a, np.float32) for a in model.head_params[head])
        h = np.maximum(ref_conv3x3(y_ref, w1, b1), 0.0)
        h = bf16_round_np(h)               # kernel feeds the 1x1 conv in bf16
        out_ref = np.tensordot(h, w2, axes=([3], [0])) + b2
        np.testing.assert_allclose(z[head], out_ref, rtol=2e-2, atol=2e-2)

    print("KERNEL_OK")
</pallas_src>

<mosaic_0001>
module attributes {stable_mosaic.version = 11 : i64} {
  func.func @_conv3x3_kernel(%arg0: i32, %arg1: i32, %arg2: memref<1x2x8x768xbf16, #tpu.memory_space<vmem>>, %arg3: memref<1x1x8x768xbf16, #tpu.memory_space<vmem>>, %arg4: memref<1x1x8x768xbf16, #tpu.memory_space<vmem>>, %arg5: memref<3x768x768xbf16, #tpu.memory_space<vmem>>, %arg6: memref<1x1x256xf32, #tpu.memory_space<vmem>>, %arg7: memref<1x2x8x256xbf16, #tpu.memory_space<vmem>>, %arg8: memref<4x24x768xbf16, #tpu.memory_space<vmem>>) attributes {dimension_semantics = [#tpu.dimension_semantics<parallel>, #tpu.dimension_semantics<parallel>], iteration_bounds = array<i64: 2, 4>, scalar_prefetch = 0 : i64, scratch_operands = 1 : i64, tpu.core_type = #tpu.core_type<tc>, window_params = [{transform_indices = @transform_0, window_bounds = array<i64: 1, 2, 8, 768>}, {transform_indices = @transform_1, window_bounds = array<i64: 1, 1, 8, 768>}, {transform_indices = @transform_2, window_bounds = array<i64: 1, 1, 8, 768>}, {pipeline_mode = #tpu.pipeline_mode<synchronous>, transform_indices = @transform_3, window_bounds = array<i64: 3, 768, 768>}, {pipeline_mode = #tpu.pipeline_mode<synchronous>, transform_indices = @transform_4, window_bounds = array<i64: 1, 1, 256>}, {transform_indices = @transform_5, window_bounds = array<i64: 1, 2, 8, 256>}]} {
    %cst = arith.constant 0.000000e+00 : bf16
    %0 = vector.broadcast %cst : bf16 to vector<4x8x768xbf16>
    %c0 = arith.constant 0 : index
    %c0_0 = arith.constant 0 : index
    %c0_1 = arith.constant 0 : index
    %1 = vector.load %arg8[%c0, %c0_0, %c0_1] : memref<4x24x768xbf16, #tpu.memory_space<vmem>>, vector<4x8x768xbf16>
    tpu.vector_store %arg8[%c0, %c0_0, %c0_1], %0 {strides = array<i32>} : memref<4x24x768xbf16, #tpu.memory_space<vmem>>, vector<4x8x768xbf16>,
    %cst_2 = arith.constant 0.000000e+00 : bf16
    %2 = vector.broadcast %cst_2 : bf16 to vector<4x8x768xbf16>
    %c0_3 = arith.constant 0 : index
    %c16 = arith.constant 16 : index
    %c0_4 = arith.constant 0 : index
    %3 = vector.load %arg8[%c0_3, %c16, %c0_4] : memref<4x24x768xbf16, #tpu.memory_space<vmem>>, vector<4x8x768xbf16>
    tpu.vector_store %arg8[%c0_3, %c16, %c0_4], %2 {strides = array<i32>} : memref<4x24x768xbf16, #tpu.memory_space<vmem>>, vector<4x8x768xbf16>,
    %c0_5 = arith.constant 0 : index
    %c0_6 = arith.constant 0 : index
    %c0_7 = arith.constant 0 : index
    %c0_8 = arith.constant 0 : index
    %4 = vector.load %arg2[%c0_5, %c0_6, %c0_7, %c0_8] : memref<1x2x8x768xbf16, #tpu.memory_space<vmem>>, vector<1x2x8x768xbf16>
    %5 = vector.shape_cast %4 : vector<1x2x8x768xbf16> to vector<2x8x768xbf16>
    %c1 = arith.constant 1 : index
    %c8 = arith.constant 8 : index
    %c0_9 = arith.constant 0 : index
    %6 = vector.load %arg8[%c1, %c8, %c0_9] : memref<4x24x768xbf16, #tpu.memory_space<vmem>>, vector<2x8x768xbf16>
    tpu.vector_store %arg8[%c1, %c8, %c0_9], %5 {strides = array<i32>} : memref<4x24x768xbf16, #tpu.memory_space<vmem>>, vector<2x8x768xbf16>,
    %c0_i32 = arith.constant 0 : i32
    %7 = arith.cmpi sgt, %arg1, %c0_i32 : i32
    %8 = arith.extui %7 : i1 to i32
    %c0_i32_10 = arith.constant 0 : i32
    %9 = arith.cmpi ne, %8, %c0_i32_10 : i32
    scf.if %9 {
      %c0_44 = arith.constant 0 : index
      %c0_45 = arith.constant 0 : index
      %c0_46 = arith.constant 0 : index
      %c0_47 = arith.constant 0 : index
      %63 = vector.load %arg3[%c0_44, %c0_45, %c0_46, %c0_47] : memref<1x1x8x768xbf16, #tpu.memory_space<vmem>>, vector<1x1x8x768xbf16>
      %64 = vector.shape_cast %63 : vector<1x1x8x768xbf16> to vector<1x8x768xbf16>
      %c0_48 = arith.constant 0 : index
      %c8_49 = arith.constant 8 : index
      %c0_50 = arith.constant 0 : index
      %65 = vector.load %arg8[%c0_48, %c8_49, %c0_50] : memref<4x24x768xbf16, #tpu.memory_space<vmem>>, vector<1x8x768xbf16>
      tpu.vector_store %arg8[%c0_48, %c8_49, %c0_50], %64 {strides = array<i32>} : memref<4x24x768xbf16, #tpu.memory_space<vmem>>, vector<1x8x768xbf16>,
    } else {
    }
    %c0_i32_11 = arith.constant 0 : i32
    %10 = arith.cmpi eq, %arg1, %c0_i32_11 : i32
    %11 = arith.extui %10 : i1 to i32
    %c0_i32_12 = arith.constant 0 : i32
    %12 = arith.cmpi ne, %11, %c0_i32_12 : i32
    scf.if %12 {
      %cst_44 = arith.constant 0.000000e+00 : bf16
      %63 = vector.broadcast %cst_44 : bf16 to vector<1x8x768xbf16>
      %c0_45 = arith.constant 0 : index
      %c8_46 = arith.constant 8 : index
      %c0_47 = arith.constant 0 : index
      %64 = vector.load %arg8[%c0_45, %c8_46, %c0_47] : memref<4x24x768xbf16, #tpu.memory_space<vmem>>, vector<1x8x768xbf16>
      tpu.vector_store %arg8[%c0_45, %c8_46, %c0_47], %63 {strides = array<i32>} : memref<4x24x768xbf16, #tpu.memory_space<vmem>>, vector<1x8x768xbf16>,
    } else {
    }
    %c3_i32 = arith.constant 3 : i32
    %13 = arith.cmpi slt, %arg1, %c3_i32 : i32
    %14 = arith.extui %13 : i1 to i32
    %c0_i32_13 = arith.constant 0 : i32
    %15 = arith.cmpi ne, %14, %c0_i32_13 : i32
    scf.if %15 {
      %c0_44 = arith.constant 0 : index
      %c0_45 = arith.constant 0 : index
      %c0_46 = arith.constant 0 : index
      %c0_47 = arith.constant 0 : index
      %63 = vector.load %arg4[%c0_44, %c0_45, %c0_46, %c0_47] : memref<1x1x8x768xbf16, #tpu.memory_space<vmem>>, vector<1x1x8x768xbf16>
      %64 = vector.shape_cast %63 : vector<1x1x8x768xbf16> to vector<1x8x768xbf16>
      %c3 = arith.constant 3 : index
      %c8_48 = arith.constant 8 : index
      %c0_49 = arith.constant 0 : index
      %65 = vector.load %arg8[%c3, %c8_48, %c0_49] : memref<4x24x768xbf16, #tpu.memory_space<vmem>>, vector<1x8x768xbf16>
      tpu.vector_store %arg8[%c3, %c8_48, %c0_49], %64 {strides = array<i32>} : memref<4x24x768xbf16, #tpu.memory_space<vmem>>, vector<1x8x768xbf16>,
    } else {
    }
    %c3_i32_14 = arith.constant 3 : i32
    %16 = arith.cmpi eq, %arg1, %c3_i32_14 : i32
    %17 = arith.extui %16 : i1 to i32
    %c0_i32_15 = arith.constant 0 : i32
    %18 = arith.cmpi ne, %17, %c0_i32_15 : i32
    scf.if %18 {
      %cst_44 = arith.constant 0.000000e+00 : bf16
      %63 = vector.broadcast %cst_44 : bf16 to vector<1x8x768xbf16>
      %c3 = arith.constant 3 : index
      %c8_45 = arith.constant 8 : index
      %c0_46 = arith.constant 0 : index
      %64 = vector.load %arg8[%c3, %c8_45, %c0_46] : memref<4x24x768xbf16, #tpu.memory_space<vmem>>, vector<1x8x768xbf16>
      tpu.vector_store %arg8[%c3, %c8_45, %c0_46], %63 {strides = array<i32>} : memref<4x24x768xbf16, #tpu.memory_space<vmem>>, vector<1x8x768xbf16>,
    } else {
    }
    %cst_16 = arith.constant 0.000000e+00 : f32
    %19 = vector.broadcast %cst_16 : f32 to vector<2x8x256xf32>
    %c0_17 = arith.constant 0 : index
    %c0_18 = arith.constant 0 : index
    %c0_19 = arith.constant 0 : index
    %20 = vector.load %arg8[%c0_17, %c0_18, %c0_19] : memref<4x24x768xbf16, #tpu.memory_space<vmem>>, vector<2x24x768xbf16>
    %21 = vector.shape_cast %20 : vector<2x24x768xbf16> to vector<48x768xbf16>
    %c0_20 = arith.constant 0 : index
    %c0_21 = arith.constant 0 : index
    %c0_22 = arith.constant 0 : index
    %22 = vector.load %arg5[%c0_20, %c0_21, %c0_22] : memref<3x768x768xbf16, #tpu.memory_space<vmem>>, vector<1x768x768xbf16>
    %23 = vector.shape_cast %22 : vector<1x768x768xbf16> to vector<768x768xbf16>
    %cst_23 = arith.constant dense<0.000000e+00> : vector<48x768xf32>
    %24 = tpu.matmul %21, %23, %cst_23 {dimension_numbers = #tpu.dot_dimension_numbers<[1], [0], [0], [1], [0, 0, 1, 1], [], []>} : vector<48x768xbf16>, vector<768x768xbf16>, vector<48x768xf32> -> vector<48x768xf32>
    %25 = vector.shape_cast %24 : vector<48x768xf32> to vector<2x24x768xf32>
    %26 = vector.extract_strided_slice %25 {offsets = [0, 7, 0], sizes = [2, 8, 256], strides = [1, 1, 1]} : vector<2x24x768xf32> to vector<2x8x256xf32>
    %27 = arith.addf %19, %26 : vector<2x8x256xf32>
    %28 = vector.extract_strided_slice %25 {offsets = [0, 8, 256], sizes = [2, 8, 256], strides = [1, 1, 1]} : vector<2x24x768xf32> to vector<2x8x256xf32>
    %29 = arith.addf %27, %28 : vector<2x8x256xf32>
    %30 = vector.extract_strided_slice %25 {offsets = [0, 9, 512], sizes = [2, 8, 256], strides = [1, 1, 1]} : vector<2x24x768xf32> to vector<2x8x256xf32>
    %31 = arith.addf %29, %30 : vector<2x8x256xf32>
    %c1_24 = arith.constant 1 : index
    %c0_25 = arith.constant 0 : index
    %c0_26 = arith.constant 0 : index
    %32 = vector.load %arg8[%c1_24, %c0_25, %c0_26] : memref<4x24x768xbf16, #tpu.memory_space<vmem>>, vector<2x24x768xbf16>
    %33 = vector.shape_cast %32 : vector<2x24x768xbf16> to vector<48x768xbf16>
    %c1_27 = arith.constant 1 : index
    %c0_28 = arith.constant 0 : index
    %c0_29 = arith.constant 0 : index
    %34 = vector.load %arg5[%c1_27, %c0_28, %c0_29] : memref<3x768x768xbf16, #tpu.memory_space<vmem>>, vector<1x768x768xbf16>
    %35 = vector.shape_cast %34 : vector<1x768x768xbf16> to vector<768x768xbf16>
    %cst_30 = arith.constant dense<0.000000e+00> : vector<48x768xf32>
    %36 = tpu.matmul %33, %35, %cst_30 {dimension_numbers = #tpu.dot_dimension_numbers<[1], [0], [0], [1], [0, 0, 1, 1], [], []>} : vector<48x768xbf16>, vector<768x768xbf16>, vector<48x768xf32> -> vector<48x768xf32>
    %37 = vector.shape_cast %36 : vector<48x768xf32> to vector<2x24x768xf32>
    %38 = vector.extract_strided_slice %37 {offsets = [0, 7, 0], sizes = [2, 8, 256], strides = [1, 1, 1]} : vector<2x24x768xf32> to vector<2x8x256xf32>
    %39 = arith.addf %31, %38 : vector<2x8x256xf32>
    %40 = vector.extract_strided_slice %37 {offsets = [0, 8, 256], sizes = [2, 8, 256], strides = [1, 1, 1]} : vector<2x24x768xf32> to vector<2x8x256xf32>
    %41 = arith.addf %39, %40 : vector<2x8x256xf32>
    %42 = vector.extract_strided_slice %37 {offsets = [0, 9, 512], sizes = [2, 8, 256], strides = [1, 1, 1]} : vector<2x24x768xf32> to vector<2x8x256xf32>
    %43 = arith.addf %41, %42 : vector<2x8x256xf32>
    %c2 = arith.constant 2 : index
    %c0_31 = arith.constant 0 : index
    %c0_32 = arith.constant 0 : index
    %44 = vector.load %arg8[%c2, %c0_31, %c0_32] : memref<4x24x768xbf16, #tpu.memory_space<vmem>>, vector<2x24x768xbf16>
    %45 = vector.shape_cast %44 : vector<2x24x768xbf16> to vector<48x768xbf16>
    %c2_33 = arith.constant 2 : index
    %c0_34 = arith.constant 0 : index
    %c0_35 = arith.constant 0 : index
    %46 = vector.load %arg5[%c2_33, %c0_34, %c0_35] : memref<3x768x768xbf16, #tpu.memory_space<vmem>>, vector<1x768x768xbf16>
    %47 = vector.shape_cast %46 : vector<1x768x768xbf16> to vector<768x768xbf16>
    %cst_36 = arith.constant dense<0.000000e+00> : vector<48x768xf32>
    %48 = tpu.matmul %45, %47, %cst_36 {dimension_numbers = #tpu.dot_dimension_numbers<[1], [0], [0], [1], [0, 0, 1, 1], [], []>} : vector<48x768xbf16>, vector<768x768xbf16>, vector<48x768xf32> -> vector<48x768xf32>
    %49 = vector.shape_cast %48 : vector<48x768xf32> to vector<2x24x768xf32>
    %50 = vector.extract_strided_slice %49 {offsets = [0, 7, 0], sizes = [2, 8, 256], strides = [1, 1, 1]} : vector<2x24x768xf32> to vector<2x8x256xf32>
    %51 = arith.addf %43, %50 : vector<2x8x256xf32>
    %52 = vector.extract_strided_slice %49 {offsets = [0, 8, 256], sizes = [2, 8, 256], strides = [1, 1, 1]} : vector<2x24x768xf32> to vector<2x8x256xf32>
    %53 = arith.addf %51, %52 : vector<2x8x256xf32>
    %54 = vector.extract_strided_slice %49 {offsets = [0, 9, 512], sizes = [2, 8, 256], strides = [1, 1, 1]} : vector<2x24x768xf32> to vector<2x8x256xf32>
    %55 = arith.addf %53, %54 : vector<2x8x256xf32>
    %c0_37 = arith.constant 0 : index
    %c0_38 = arith.constant 0 : index
    %c0_39 = arith.constant 0 : index
    %56 = vector.load %arg6[%c0_37, %c0_38, %c0_39] : memref<1x1x256xf32, #tpu.memory_space<vmem>>, vector<1x1x256xf32>
    %57 = vector.broadcast %56 : vector<1x1x256xf32> to vector<2x8x256xf32>
    %58 = arith.addf %55, %57 : vector<2x8x256xf32>
    %59 = arith.truncf %58 : vector<2x8x256xf32> to vector<2x8x256xbf16>
    %c0_40 = arith.constant 0 : index
    %c0_41 = arith.constant 0 : index
    %c0_42 = arith.constant 0 : index
    %c0_43 = arith.constant 0 : index
    %60 = vector.load %arg7[%c0_40, %c0_41, %c0_42, %c0_43] : memref<1x2x8x256xbf16, #tpu.memory_space<vmem>>, vector<1x2x8x256xbf16>
    %61 = vector.shape_cast %60 : vector<1x2x8x256xbf16> to vector<2x8x256xbf16>
    %62 = vector.shape_cast %59 : vector<2x8x256xbf16> to vector<1x2x8x256xbf16>
    tpu.vector_store %arg7[%c0_40, %c0_41, %c0_42, %c0_43], %62 {strides = array<i32>} : memref<1x2x8x256xbf16, #tpu.memory_space<vmem>>, vector<1x2x8x256xbf16>,
    return
  }
  func.func @transform_0(%arg0: i32, %arg1: i32) -> (i32, i32, i32, i32) {
    %c0_i32 = arith.constant 0 : i32
    %c0_i32_0 = arith.constant 0 : i32
    %c0_i32_1 = arith.constant 0 : i32
    return %arg0, %arg1, %c0_i32, %c0_i32_0 : i32, i32, i32, i32
  }
  func.func @transform_1(%arg0: i32, %arg1: i32) -> (i32, i32, i32, i32) {
    %c2_i32 = arith.constant 2 : i32
    %0 = arith.muli %arg1, %c2_i32 : i32
    %c1_i32 = arith.constant 1 : i32
    %1 = arith.subi %0, %c1_i32 : i32
    %c0_i32 = arith.constant 0 : i32
    %2 = arith.maxsi %1, %c0_i32 : i32
    %c0_i32_0 = arith.constant 0 : i32
    %c0_i32_1 = arith.constant 0 : i32
    %c0_i32_2 = arith.constant 0 : i32
    return %arg0, %2, %c0_i32_0, %c0_i32_1 : i32, i32, i32, i32
  }
  func.func @transform_2(%arg0: i32, %arg1: i32) -> (i32, i32, i32, i32) {
    %c1_i32 = arith.constant 1 : i32
    %0 = arith.addi %arg1, %c1_i32 : i32
    %c2_i32 = arith.constant 2 : i32
    %1 = arith.muli %0, %c2_i32 : i32
    %c7_i32 = arith.constant 7 : i32
    %2 = arith.minsi %1, %c7_i32 : i32
    %c0_i32 = arith.constant 0 : i32
    %c0_i32_0 = arith.constant 0 : i32
    %c0_i32_1 = arith.constant 0 : i32
    return %arg0, %2, %c0_i32, %c0_i32_0 : i32, i32, i32, i32
  }
  func.func @transform_3(%arg0: i32, %arg1: i32) -> (i32, i32, i32) {
    %c0_i32 = arith.constant 0 : i32
    %c0_i32_0 = arith.constant 0 : i32
    %c0_i32_1 = arith.constant 0 : i32
    %c0_i32_2 = arith.constant 0 : i32
    return %c0_i32, %c0_i32_0, %c0_i32_1 : i32, i32, i32
  }
  func.func @transform_4(%arg0: i32, %arg1: i32) -> (i32, i32, i32) {
    %c0_i32 = arith.constant 0 : i32
    %c0_i32_0 = arith.constant 0 : i32
    %c0_i32_1 = arith.constant 0 : i32
    %c0_i32_2 = arith.constant 0 : i32
    return %c0_i32, %c0_i32_0, %c0_i32_1 : i32, i32, i32
  }
  func.func @transform_5(%arg0: i32, %arg1: i32) -> (i32, i32, i32, i32) {
    %c0_i32 = arith.constant 0 : i32
    %c0_i32_0 = arith.constant 0 : i32
    %c0_i32_1 = arith.constant 0 : i32
    return %arg0, %arg1, %c0_i32, %c0_i32_0 : i32, i32, i32, i32
  }
}

</mosaic_0001>

<llo_original>
// kernel: tpu_custom_call.1
$region0: #{tpu_custom_call.1}
  #allocation0 [shape = 'u32[]', space=smem, size = 0x4, offset = 0x4, fixed_abs, tag = 'smem constant byte address 0x4 - core index']
  #allocation1 [shape = 'u32[144,128]{1,0:T(1,128)}', space=vmem, size = 0x12000, scoped, tag = 'internal scratch']
  #allocation2 [shape = 'bf16[4,24,768]{2,1,0:T(8,128)(2,1)}', space=vmem, size = 0x24000, scoped, tag = 'scratch operand']
  %s0 = inlined_call_operand.hbm [shape: bf16[2,8,8,768], index: 0, kind: input, shape index: {}]
  %s1 = inlined_call_operand.hbm [shape: bf16[2,8,8,768], index: 1, kind: input, shape index: {}]
  %s2 = inlined_call_operand.hbm [shape: bf16[2,8,8,768], index: 2, kind: input, shape index: {}]
  %s3 = inlined_call_operand.hbm [shape: bf16[3,768,768], index: 3, kind: input, shape index: {}]
  %s4 = inlined_call_operand.hbm [shape: f32[1,1,256], index: 4, kind: input, shape index: {}]
  %s5 = inlined_call_operand.hbm [shape: bf16[2,8,8,256], index: 5, kind: output, shape index: {}]
  %s6 = sld [smem:[#allocation0]]
  $region89: #{tpu_custom_call.1} parent=0
    _
  %s8 = ssub.s32 1, %s6
  %s9 = scalar_select 0, %s8, %s6
  $region1: #{tpu_custom_call.1} parent=0
    #allocation3 [shape = 'u8[49152]{0}', space=vmem, size = 0xc000, scoped, tag = 'input window, operand 0']
    #allocation4 [shape = 's32[2]{0}', space=sflag, size = 0x8, scoped, tag = 'scoped memory for tpu_custom_call.1']
    #allocation5 [shape = 's32[2]{0}', space=sflag, size = 0x8, scoped, tag = 'scoped memory for tpu_custom_call.1']
    #allocation6 [shape = 'u8[24576]{0}', space=vmem, size = 0x6000, scoped, tag = 'input window, operand 1']
    #allocation7 [shape = 's32[2]{0}', space=sflag, size = 0x8, scoped, tag = 'scoped memory for tpu_custom_call.1']
    #allocation8 [shape = 'u8[24576]{0}', space=vmem, size = 0x6000, scoped, tag = 'input window, operand 2']
    #allocation9 [shape = 'u8[3538944]{0}', space=vmem, size = 0x360000, scoped, tag = 'input window, operand 3, single buffered']
    #allocation10 [shape = 's32[1]{0}', space=sflag, size = 0x4, scoped, tag = 'scoped memory for tpu_custom_call.1']
    #allocation11 [shape = 'u8[1024]{0}', space=vmem, size = 0x400, scoped, tag = 'input window, operand 4, single buffered']
    #allocation12 [shape = 'u8[16384]{0}', space=vmem, size = 0x4000, scoped, tag = 'output window, operand 0']
    %10 = vsyncpa [#allocation4], 0
    %s11 = scalar_lea.sflag [#allocation4], 1
    %12 = vsyncpa %s11, 0
    %13 = vsyncpa [#allocation7], 0
    %s14 = scalar_lea.sflag [#allocation7], 1
    %15 = vsyncpa %s14, 0
    %16 = vsyncpa [#allocation10], 0
    %17 = vsyncpa [#allocation5], 0
    %s18 = scalar_lea.sflag [#allocation5], 1
    %19 = vsyncpa %s18, 0
    loop: start=0, step=1, limit=10
    $region2: #{tpu_custom_call.1} parent=1 // loop_pre_header
      _
    $region3: #{tpu_custom_call.1} parent=1 // loop_header
      %s21 = sphi 0, %s25
      %p22 = scmp.ge.s32.totalorder %s21, 10
      %s28 = sphi 0, %s40
      %s29 = sphi 0, %s36
      %s30 = sphi 0, %s28
      %s31 = sphi 0, %s29
      %s32 = sphi 0, %s30
      %s33 = sphi 0, %s31
      %s45 = sphi 0, %s47
      %s48 = sphi 0, %s45
      %s49 = sphi 0, %s48
      %s65 = sphi 0, %s49
      %s81 = sphi 0, %s83
      %s84 = sphi 0, %s81
      %s85 = sphi 0, %s84
      %s101 = sphi 0, %s85
      %s117 = sphi 0, %s119
      %s120 = sphi 0, %s117
      %s121 = sphi 0, %s120
      %s137 = sphi 0, %s121
      %s141 = sphi 0, %s141
      %s143 = sphi 0, %s141
      %s144 = sphi 0, %s143
      %s158 = sphi 0, %s144
      %s162 = sphi 0, %s162
      %s164 = sphi 0, %s162
      %s165 = sphi 0, %s164
      %s179 = sphi 0, %s165
      %s187 = sphi 0, %s189
      %s190 = sphi 0, %s187
      %s191 = sphi 0, %s190
      %s207 = sphi 0, %s191
    $region4: #{tpu_custom_call.1} parent=1 // loop_header_branch
      %24 = sbr.rel (%p22) target = $region8
    $region5: #{tpu_custom_call.1} parent=1 // loop_body
      %s26 = ssub.s32 %s21, 1
      %s27 = ssub.s32 %s21, 2
      %s34 = sadd.s32 1, %s29
      %p35 = scmp.ge.s32.totalorder %s34, 4
      %s36 = scalar_select %p35, 0, %s34
      %s37 = sadd.s32 1, %s28
      %s38 = scalar_select %p35, %s37, %s28
      %p39 = scmp.ge.s32.totalorder %s38, 2
      %s40 = scalar_select %p39, 0, %s38
      %s41 = ssub.s32 %s28, %s40
      %s42 = ssub.s32 %s29, %s36
      %s43 = sor.u32 %s41, %s42
      %p44 = scmp.eq.s32.totalorder %s43, 0
      %s46 = sadd.s32 %s45, 1
      %s47 = scalar_select %p44, %s45, %s46
      %p50 = pneg %p44
      %p51 = scmp.eq.s32.totalorder %s21, 7
      %p52 = por %p50, %p51
      %p53 = scmp.ne.s32.totalorder %s45, %s48
      %p54 = scmp.eq.s32.totalorder %s21, 0
      %p55 = por %p53, %p54
      %p56 = scmp.ne.s32.totalorder %s45, %s48
      %p57 = scmp.eq.s32.totalorder %s26, 7
      %p58 = por %p56, %p57
      %p59 = scmp.ne.s32.totalorder %s48, %s49
      %p60 = scmp.eq.s32.totalorder %s26, 0
      %p61 = por %p59, %p60
      %p62 = scmp.ne.s32.totalorder %s48, %s49
      %p63 = scmp.eq.s32.totalorder %s27, 7
      %p64 = por %p62, %p63
      %p66 = scmp.ne.s32.totalorder %s49, %s65
      %p67 = scmp.eq.s32.totalorder %s27, 0
      %p68 = por %p66, %p67
      %s69 = smul.u32 %s29, 2
      %s70 = ssub.s32 %s69, 1
      %p71 = scmp.gt.s32.totalorder %s70, 0
      %s72 = scalar_select %p71, %s70, 0
      %s73 = smul.u32 %s36, 2
      %s74 = ssub.s32 %s73, 1
      %p75 = scmp.gt.s32.totalorder %s74, 0
      %s76 = scalar_select %p75, %s74, 0
      %s77 = ssub.s32 %s28, %s40
      %s78 = ssub.s32 %s72, %s76
      %s79 = sor.u32 %s77, %s78
      %p80 = scmp.eq.s32.totalorder %s79, 0
      %s82 = sadd.s32 %s81, 1
      %s83 = scalar_select %p80, %s81, %s82
      %p86 = pneg %p80
      %p87 = scmp.eq.s32.totalorder %s21, 7
      %p88 = por %p86, %p87
      %p89 = scmp.ne.s32.totalorder %s81, %s84
      %p90 = scmp.eq.s32.totalorder %s21, 0
      %p91 = por %p89, %p90
      %p92 = scmp.ne.s32.totalorder %s81, %s84
      %p93 = scmp.eq.s32.totalorder %s26, 7
      %p94 = por %p92, %p93
      %p95 = scmp.ne.s32.totalorder %s84, %s85
      %p96 = scmp.eq.s32.totalorder %s26, 0
      %p97 = por %p95, %p96
      %p98 = scmp.ne.s32.totalorder %s84, %s85
      %p99 = scmp.eq.s32.totalorder %s27, 7
      %p100 = por %p98, %p99
      %p102 = scmp.ne.s32.totalorder %s85, %s101
      %p103 = scmp.eq.s32.totalorder %s27, 0
      %p104 = por %p102, %p103
      %s105 = sadd.s32 %s29, 1
      %s106 = smul.u32 %s105, 2
      %p107 = scmp.lt.s32.totalorder %s106, 7
      %s108 = scalar_select %p107, %s106, 7
      %s109 = sadd.s32 %s36, 1
      %s110 = smul.u32 %s109, 2
      %p111 = scmp.lt.s32.totalorder %s110, 7
      %s112 = scalar_select %p111, %s110, 7
      %s113 = ssub.s32 %s28, %s40
      %s114 = ssub.s32 %s108, %s112
      %s115 = sor.u32 %s113, %s114
      %p116 = scmp.eq.s32.totalorder %s115, 0
      %s118 = sadd.s32 %s117, 1
      %s119 = scalar_select %p116, %s117, %s118
      %p122 = pneg %p116
      %p123 = scmp.eq.s32.totalorder %s21, 7
      %p124 = por %p122, %p123
      %p125 = scmp.ne.s32.totalorder %s117, %s120
      %p126 = scmp.eq.s32.totalorder %s21, 0
      %p127 = por %p125, %p126
      %p128 = scmp.ne.s32.totalorder %s117, %s120
      %p129 = scmp.eq.s32.totalorder %s26, 7
      %p130 = por %p128, %p129
      %p131 = scmp.ne.s32.totalorder %s120, %s121
      %p132 = scmp.eq.s32.totalorder %s26, 0
      %p133 = por %p131, %p132
      %p134 = scmp.ne.s32.totalorder %s120, %s121
      %p135 = scmp.eq.s32.totalorder %s27, 7
      %p136 = por %p134, %p135
      %p138 = scmp.ne.s32.totalorder %s121, %s137
      %p139 = scmp.eq.s32.totalorder %s27, 0
      %p140 = por %p138, %p139
      %s142 = sadd.s32 %s141, 1
      %p145 = scmp.eq.s32.totalorder %s21, 7
      %p146 = scmp.ne.s32.totalorder %s141, %s143
      %p147 = scmp.eq.s32.totalorder %s21, 0
      %p148 = por %p146, %p147
      %p149 = scmp.ne.s32.totalorder %s141, %s143
      %p150 = scmp.eq.s32.totalorder %s26, 7
      %p151 = por %p149, %p150
      %p152 = scmp.ne.s32.totalorder %s143, %s144
      %p153 = scmp.eq.s32.totalorder %s26, 0
      %p154 = por %p152, %p153
      %p155 = scmp.ne.s32.totalorder %s143, %s144
      %p156 = scmp.eq.s32.totalorder %s27, 7
      %p157 = por %p155, %p156
      %p159 = scmp.ne.s32.totalorder %s144, %s158
      %p160 = scmp.eq.s32.totalorder %s27, 0
      %p161 = por %p159, %p160
      %s163 = sadd.s32 %s162, 1
      %p166 = scmp.eq.s32.totalorder %s21, 7
      %p167 = scmp.ne.s32.totalorder %s162, %s164
      %p168 = scmp.eq.s32.totalorder %s21, 0
      %p169 = por %p167, %p168
      %p170 = scmp.ne.s32.totalorder %s162, %s164
      %p171 = scmp.eq.s32.totalorder %s26, 7
      %p172 = por %p170, %p171
      %p173 = scmp.ne.s32.totalorder %s164, %s165
      %p174 = scmp.eq.s32.totalorder %s26, 0
      %p175 = por %p173, %p174
      %p176 = scmp.ne.s32.totalorder %s164, %s165
      %p177 = scmp.eq.s32.totalorder %s27, 7
      %p178 = por %p176, %p177
      %p180 = scmp.ne.s32.totalorder %s165, %s179
      %p181 = scmp.eq.s32.totalorder %s27, 0
      %p182 = por %p180, %p181
      %s183 = ssub.s32 %s28, %s40
      %s184 = ssub.s32 %s29, %s36
      %s185 = sor.u32 %s183, %s184
      %p186 = scmp.eq.s32.totalorder %s185, 0
      %s188 = sadd.s32 %s187, 1
      %s189 = scalar_select %p186, %s187, %s188
      %p192 = pneg %p186
      %p193 = scmp.eq.s32.totalorder %s21, 7
      %p194 = por %p192, %p193
      %p195 = scmp.ne.s32.totalorder %s187, %s190
      %p196 = scmp.eq.s32.totalorder %s21, 0
      %p197 = por %p195, %p196
      %p198 = scmp.ne.s32.totalorder %s187, %s190
      %p199 = scmp.eq.s32.totalorder %s26, 7
      %p200 = por %p198, %p199
      %p201 = scmp.ne.s32.totalorder %s190, %s191
      %p202 = scmp.eq.s32.totalorder %s26, 0
      %p203 = por %p201, %p202
      %p204 = scmp.ne.s32.totalorder %s190, %s191
      %p205 = scmp.eq.s32.totalorder %s27, 7
      %p206 = por %p204, %p205
      %p208 = scmp.ne.s32.totalorder %s191, %s207
      %p209 = scmp.eq.s32.totalorder %s27, 0
      %p210 = por %p208, %p209
      %p211 = scmp.le.s32.totalorder 1, %s21
      %p212 = scmp.lt.s32.totalorder %s21, 9
      %p213 = pnand %p211, %p212
      %p214 = pneg %p213
      // Predicated region
      $region9: #{tpu_custom_call.1} parent=5 // pred_check
        _
      $region10: #{tpu_custom_call.1} parent=5 // pred_check_branch
        %216 = sbr.rel (%p213) target = $region12
      $region11: #{tpu_custom_call.1} parent=5 // pred_region
        %s217 = ssub.s32 %s21, 1
        // Predicated region
        $region13: #{tpu_custom_call.1} parent=11 // pred_check
          %p218 = pneg %p154
        $region14: #{tpu_custom_call.1} parent=11 // pred_check_branch
          %220 = sbr.rel (%p218) target = $region16
        $region15: #{tpu_custom_call.1} parent=11 // pred_region
          %s222 = ssub.s32 110592, 110592
          %223 = vsyncadd [#allocation10], %s222
          %s224 = sshll.u32 [#allocation9], 4
          %s225 = int_to_ptr.vmem [resolvable:$true] %s224
          %230 = dma.hbm_to_vmem [thread:$0]  %s3, 110592, %s225, [#allocation10], 384, 384, 24
        $region16: #{tpu_custom_call.1} parent=11 // pred_fallthru
          _
        // Predicated region
        $region17: #{tpu_custom_call.1} parent=11 // pred_check
          %p231 = pneg %p175
        $region18: #{tpu_custom_call.1} parent=11 // pred_check_branch
          %233 = sbr.rel (%p231) target = $region20
        $region19: #{tpu_custom_call.1} parent=11 // pred_region
          %s235 = ssub.s32 32, 32
          %236 = vsyncadd [#allocation10], %s235
          %s238 = sshll.u32 [#allocation11], 4
          %s239 = int_to_ptr.vmem [resolvable:$true] %s238
          %241 = dma.hbm_to_vmem [thread:$0]  %s4, 32, %s239, [#allocation10]
        $region20: #{tpu_custom_call.1} parent=11 // pred_fallthru
          _
      $region12: #{tpu_custom_call.1} parent=5 // pred_fallthru
        _
      %p242 = scmp.lt.s32.totalorder %s21, 8
      // Predicated region
      $region21: #{tpu_custom_call.1} parent=5 // pred_check
        %p243 = pneg %p242
      $region22: #{tpu_custom_call.1} parent=5 // pred_check_branch
        %245 = sbr.rel (%p243) target = $region24
      $region23: #{tpu_custom_call.1} parent=5 // pred_region
        // Predicated region
        $region25: #{tpu_custom_call.1} parent=23 // pred_check
          %p246 = pneg %p55
        $region26: #{tpu_custom_call.1} parent=23 // pred_check_branch
          %248 = sbr.rel (%p246) target = $region28
        $region27: #{tpu_custom_call.1} parent=23 // pred_region
          %s249 = sand.u32 %s45, 1
          %s250 = scalar_lea.sflag [#allocation4], %s249
          %s251 = sand.u32 %s45, 1
          %s252 = smul.addr %s251, 48
          %s253 = scalar_lea.vmem [#allocation3], %s252
          %s254 = smul.u32 2, %s29
          %s256 = ssub.s32 768, 768
          %257 = vsyncadd %s250, %s256
          %s258 = smul.addr %s254, 6
          %s259 = smul.addr %s28, 48
          %s260 = sadd.s32 %s258, %s259
          %s261 = smul.addr %s260, 64
          %s262 = scalar_lea.hbm %s0, %s261
          %s263 = sshll.u32 %s253, 4
          %s264 = int_to_ptr.vmem [resolvable:$true] %s263
          %269 = dma.hbm_to_vmem [thread:$0]  %s262, 768, %s264, %s250, 384, 384, 24
        $region28: #{tpu_custom_call.1} parent=23 // pred_fallthru
          _
        // Predicated region
        $region29: #{tpu_custom_call.1} parent=23 // pred_check
          %p270 = pneg %p91
        $region30: #{tpu_custom_call.1} parent=23 // pred_check_branch
          %272 = sbr.rel (%p270) target = $region32
        $region31: #{tpu_custom_call.1} parent=23 // pred_region
          %s273 = sand.u32 %s21, 1
          %s274 = scalar_lea.sflag [#allocation7], %s273
          %s275 = sand.u32 %s81, 1
          %s276 = smul.addr %s275, 24
          %s277 = scalar_lea.vmem [#allocation6], %s276
          %s278 = smul.u32 %s29, 2
          %s279 = ssub.s32 %s278, 1
          %p280 = scmp.gt.s32.totalorder %s279, 0
          %s281 = scalar_select %p280, %s279, 0
          %s283 = ssub.s32 384, 384
          %284 = vsyncadd %s274, %s283
          %s285 = smul.addr %s281, 6
          %s286 = smul.addr %s28, 48
          %s287 = sadd.s32 %s285, %s286
          %s288 = smul.addr %s287, 64
          %s289 = scalar_lea.hbm %s1, %s288
          %s291 = sshll.u32 %s277, 4
          %s292 = int_to_ptr.vmem [resolvable:$true] %s291
          %294 = dma.hbm_to_vmem [thread:$0]  %s289, 384, %s292, %s274
        $region32: #{tpu_custom_call.1} parent=23 // pred_fallthru
          _
        // Predicated region
        $region33: #{tpu_custom_call.1} parent=23 // pred_check
          %p295 = pneg %p127
        $region34: #{tpu_custom_call.1} parent=23 // pred_check_branch
          %297 = sbr.rel (%p295) target = $region36
        $region35: #{tpu_custom_call.1} parent=23 // pred_region
          %s298 = sand.u32 %s21, 1
          %s299 = scalar_lea.sflag [#allocation7], %s298
          %s300 = sand.u32 %s117, 1
          %s301 = smul.addr %s300, 24
          %s302 = scalar_lea.vmem [#allocation8], %s301
          %s303 = sadd.s32 %s29, 1
          %s304 = smul.u32 %s303, 2
          %p305 = scmp.lt.s32.totalorder %s304, 7
          %s306 = scalar_select %p305, %s304, 7
          %s308 = ssub.s32 384, 384
          %309 = vsyncadd %s299, %s308
          %s310 = smul.addr %s306, 6
          %s311 = smul.addr %s28, 48
          %s312 = sadd.s32 %s310, %s311
          %s313 = smul.addr %s312, 64
          %s314 = scalar_lea.hbm %s2, %s313
          %s316 = sshll.u32 %s302, 4
          %s317 = int_to_ptr.vmem [resolvable:$true] %s316
          %319 = dma.hbm_to_vmem [thread:$0]  %s314, 384, %s317, %s299
        $region36: #{tpu_custom_call.1} parent=23 // pred_fallthru
          _
      $region24: #{tpu_custom_call.1} parent=5 // pred_fallthru
        _
      %p320 = scmp.le.s32.totalorder 1, %s21
      %p321 = scmp.lt.s32.totalorder %s21, 9
      %p322 = pnand %p320, %p321
      %p323 = pneg %p322
      // Predicated region
      $region37: #{tpu_custom_call.1} parent=5 // pred_check
        _
      $region38: #{tpu_custom_call.1} parent=5 // pred_check_branch
        %325 = sbr.rel (%p322) target = $region40
      $region39: #{tpu_custom_call.1} parent=5 // pred_region
        %s326 = ssub.s32 %s21, 1
        %s327 = sand.u32 %s48, 1
        %s328 = scalar_lea.sflag [#allocation4], %s327
        %s329 = sand.u32 %s48, 1
        %s330 = smul.addr %s329, 48
        %s331 = scalar_lea.vmem [#allocation3], %s330
        // Predicated region
        $region41: #{tpu_custom_call.1} parent=39 // pred_check
          %p332 = pneg %p61
        $region42: #{tpu_custom_call.1} parent=39 // pred_check_branch
          %334 = sbr.rel (%p332) target = $region44
        $region43: #{tpu_custom_call.1} parent=39 // pred_region
          %335 = dma.done %s328, 768
        $region44: #{tpu_custom_call.1} parent=39 // pred_fallthru
          _
        %s336 = sand.u32 %s26, 1
        %s337 = scalar_lea.sflag [#allocation7], %s336
        %s338 = sand.u32 %s84, 1
        %s339 = smul.addr %s338, 24
        %s340 = scalar_lea.vmem [#allocation6], %s339
        // Predicated region
        $region45: #{tpu_custom_call.1} parent=39 // pred_check
          %p341 = pneg %p97
        $region46: #{tpu_custom_call.1} parent=39 // pred_check_branch
          %343 = sbr.rel (%p341) target = $region48
        $region47: #{tpu_custom_call.1} parent=39 // pred_region
          %344 = dma.done %s337, 384
        $region48: #{tpu_custom_call.1} parent=39 // pred_fallthru
          _
        %s345 = sand.u32 %s26, 1
        %s346 = scalar_lea.sflag [#allocation7], %s345
        %s347 = sand.u32 %s120, 1
        %s348 = smul.addr %s347, 24
        %s349 = scalar_lea.vmem [#allocation8], %s348
        // Predicated region
        $region49: #{tpu_custom_call.1} parent=39 // pred_check
          %p350 = pneg %p133
        $region50: #{tpu_custom_call.1} parent=39 // pred_check_branch
          %352 = sbr.rel (%p350) target = $region52
        $region51: #{tpu_custom_call.1} parent=39 // pred_region
          %353 = dma.done %s346, 384
        $region52: #{tpu_custom_call.1} parent=39 // pred_fallthru
          _
        // Predicated region
        $region53: #{tpu_custom_call.1} parent=39 // pred_check
          %p354 = pneg %p154
        $region54: #{tpu_custom_call.1} parent=39 // pred_check_branch
          %356 = sbr.rel (%p354) target = $region56
        $region55: #{tpu_custom_call.1} parent=39 // pred_region
          %357 = dma.done [#allocation10], 110592
        $region56: #{tpu_custom_call.1} parent=39 // pred_fallthru
          _
        // Predicated region
        $region57: #{tpu_custom_call.1} parent=39 // pred_check
          %p358 = pneg %p175
        $region58: #{tpu_custom_call.1} parent=39 // pred_check_branch
          %360 = sbr.rel (%p358) target = $region60
        $region59: #{tpu_custom_call.1} parent=39 // pred_region
          %361 = dma.done [#allocation10], 32
        $region60: #{tpu_custom_call.1} parent=39 // pred_fallthru
          _
        %s362 = sand.u32 %s48, 1
        %s363 = scalar_lea.sflag [#allocation4], %s362
        %s364 = sand.u32 %s48, 1
        %s365 = smul.addr %s364, 48
        %s366 = scalar_lea.vmem [#allocation3], %s365
        %p367 = pneg %p61
        %p368 = pneg %p58
        %s369 = sand.u32 %s26, 1
        %s370 = scalar_lea.sflag [#allocation7], %s369
        %s371 = sand.u32 %s84, 1
        %s372 = smul.addr %s371, 24
        %s373 = scalar_lea.vmem [#allocation6], %s372
        %p374 = pneg %p97
        %p375 = pneg %p94
        %s376 = sand.u32 %s26, 1
        %s377 = scalar_lea.sflag [#allocation7], %s376
        %s378 = sand.u32 %s120, 1
        %s379 = smul.addr %s378, 24
        %s380 = scalar_lea.vmem [#allocation8], %s379
        %p381 = pneg %p133
        %p382 = pneg %p130
        %p383 = pneg %p154
        %p384 = pneg %p151
        %p385 = pneg %p175
        %p386 = pneg %p172
        %p387 = pneg %p203
        %p388 = pneg %p200
        %s389 = sand.u32 %s190, 1
        %s390 = scalar_lea.sflag [#allocation5], %s389
        %s391 = sand.u32 %s190, 1
        %s392 = smul.addr %s391, 16
        %s393 = scalar_lea.vmem [#allocation12], %s392
        %s394 = smul.u32 2, %s31
        %s395 = smul.u32 %s31, 2
        %s396 = ssub.s32 %s395, 1
        %p397 = scmp.gt.s32.totalorder %s396, 0
        %s398 = scalar_select %p397, %s396, 0
        %s399 = sadd.s32 %s31, 1
        %s400 = smul.u32 %s399, 2
        %p401 = scmp.lt.s32.totalorder %s400, 7
        %s402 = scalar_select %p401, %s400, 7
        %s403 = smul.u32 2, %s31
        %405 = vst [vmem:[#allocation2] sm:$0xff] 0
        %406 = vst [vmem:[#allocation2 + $0x8] sm:$0xff] 0
        %407 = vst [vmem:[#allocation2 + $0x10] sm:$0xff] 0
        %408 = vst [vmem:[#allocation2 + $0x48] sm:$0xff] 0
        %409 = vst [vmem:[#allocation2 + $0x50] sm:$0xff] 0
        %410 = vst [vmem:[#allocation2 + $0x58] sm:$0xff] 0
        %411 = vst [vmem:[#allocation2 + $0x90] sm:$0xff] 0
        %412 = vst [vmem:[#allocation2 + $0x98] sm:$0xff] 0
        %413 = vst [vmem:[#allocation2 + $0xa0] sm:$0xff] 0
        %414 = vst [vmem:[#allocation2 + $0xd8] sm:$0xff] 0
        %415 = vst [vmem:[#allocation2 + $0xe0] sm:$0xff] 0
        %416 = vst [vmem:[#allocation2 + $0xe8] sm:$0xff] 0
        %417 = vst [vmem:[#allocation2 + $0x30] sm:$0xff] 0
        %418 = vst [vmem:[#allocation2 + $0x38] sm:$0xff] 0
        %419 = vst [vmem:[#allocation2 + $0x40] sm:$0xff] 0
        %420 = vst [vmem:[#allocation2 + $0x78] sm:$0xff] 0
        %421 = vst [vmem:[#allocation2 + $0x80] sm:$0xff] 0
        %422 = vst [vmem:[#allocation2 + $0x88] sm:$0xff] 0
        %423 = vst [vmem:[#allocation2 + $0xc0] sm:$0xff] 0
        %424 = vst [vmem:[#allocation2 + $0xc8] sm:$0xff] 0
        %425 = vst [vmem:[#allocation2 + $0xd0] sm:$0xff] 0
        %426 = vst [vmem:[#allocation2 + $0x108] sm:$0xff] 0
        %427 = vst [vmem:[#allocation2 + $0x110] sm:$0xff] 0
        %428 = vst [vmem:[#allocation2 + $0x118] sm:$0xff] 0
        %v429 = vld [vmem:[%s331] sm:$0xff]
        %v430 = vld [vmem:[%s331 + $0x8] sm:$0xff]
        %v431 = vld [vmem:[%s331 + $0x10] sm:$0xff]
        %v432 = vld [vmem:[%s331 + $0x18] sm:$0xff]
        %v433 = vld [vmem:[%s331 + $0x20] sm:$0xff]
        %v434 = vld [vmem:[%s331 + $0x28] sm:$0xff]
        %s435 = scalar_lea.vmem [#allocation2], 72
        %436 = vst [vmem:[%s435 + $0x18] sm:$0xff] %v429
        %437 = vst [vmem:[%s435 + $0x20] sm:$0xff] %v430
        %438 = vst [vmem:[%s435 + $0x28] sm:$0xff] %v431
        %439 = vst [vmem:[%s435 + $0x60] sm:$0xff] %v432
        %440 = vst [vmem:[%s435 + $0x68] sm:$0xff] %v433
        %441 = vst [vmem:[%s435 + $0x70] sm:$0xff] %v434
        %p442 = scmp.gt.s32.totalorder %s31, 0
        // Predicated region
        $region61: #{tpu_custom_call.1} parent=39 // pred_check
          %p443 = pneg %p442
        $region62: #{tpu_custom_call.1} parent=39 // pred_check_branch
          %445 = sbr.rel (%p443) target = $region64
        $region63: #{tpu_custom_call.1} parent=39 // pred_region
          %v446 = vld [vmem:[%s340] sm:$0xff]
          %v447 = vld [vmem:[%s340 + $0x8] sm:$0xff]
          %v448 = vld [vmem:[%s340 + $0x10] sm:$0xff]
          %449 = vst [vmem:[#allocation2 + $0x18] sm:$0xff] %v446
          %450 = vst [vmem:[#allocation2 + $0x20] sm:$0xff] %v447
          %451 = vst [vmem:[#allocation2 + $0x28] sm:$0xff] %v448
        $region64: #{tpu_custom_call.1} parent=39 // pred_fallthru
          _
        %p452 = scmp.eq.s32.totalorder %s31, 0
        // Predicated region
        $region65: #{tpu_custom_call.1} parent=39 // pred_check
          %p453 = pneg %p452
        $region66: #{tpu_custom_call.1} parent=39 // pred_check_branch
          %455 = sbr.rel (%p453) target = $region68
        $region67: #{tpu_custom_call.1} parent=39 // pred_region
          %456 = vst [vmem:[#allocation2 + $0x18] sm:$0xff] 0
          %457 = vst [vmem:[#allocation2 + $0x20] sm:$0xff] 0
          %458 = vst [vmem:[#allocation2 + $0x28] sm:$0xff] 0
        $region68: #{tpu_custom_call.1} parent=39 // pred_fallthru
          _
        %p459 = scmp.lt.s32.totalorder %s31, 3
        // Predicated region
        $region69: #{tpu_custom_call.1} parent=39 // pred_check
          %p460 = pneg %p459
        $region70: #{tpu_custom_call.1} parent=39 // pred_check_branch
          %462 = sbr.rel (%p460) target = $region72
        $region71: #{tpu_custom_call.1} parent=39 // pred_region
          %v463 = vld [vmem:[%s349] sm:$0xff]
          %v464 = vld [vmem:[%s349 + $0x8] sm:$0xff]
          %v465 = vld [vmem:[%s349 + $0x10] sm:$0xff]
          %s466 = scalar_lea.vmem [#allocation2], 216
          %467 = vst [vmem:[%s466 + $0x18] sm:$0xff] %v463
          %468 = vst [vmem:[%s466 + $0x20] sm:$0xff] %v464
          %469 = vst [vmem:[%s466 + $0x28] sm:$0xff] %v465
        $region72: #{tpu_custom_call.1} parent=39 // pred_fallthru
          _
        %p470 = scmp.eq.s32.totalorder %s31, 3
        // Predicated region
        $region73: #{tpu_custom_call.1} parent=39 // pred_check
          %p471 = pneg %p470
        $region74: #{tpu_custom_call.1} parent=39 // pred_check_branch
          %473 = sbr.rel (%p471) target = $region76
        $region75: #{tpu_custom_call.1} parent=39 // pred_region
          %s474 = scalar_lea.vmem [#allocation2], 216
          %475 = vst [vmem:[%s474 + $0x18] sm:$0xff] 0
          %476 = vst [vmem:[%s474 + $0x20] sm:$0xff] 0
          %477 = vst [vmem:[%s474 + $0x28] sm:$0xff] 0
        $region76: #{tpu_custom_call.1} parent=39 // pred_fallthru
          _
        %v478 = vld [vmem:[#allocation2] sm:$0xff]
        %v479 = vld [vmem:[#allocation2 + $0x8] sm:$0xff]
        %v480 = vld [vmem:[#allocation2 + $0x10] sm:$0xff]
        %v481 = vld [vmem:[#allocation2 + $0x18] sm:$0xff]
        %v482 = vld [vmem:[#allocation2 + $0x20] sm:$0xff]
        %v483 = vld [vmem:[#allocation2 + $0x28] sm:$0xff]
        %v484 = vld [vmem:[#allocation2 + $0x30] sm:$0xff]
        %v485 = vld [vmem:[#allocation2 + $0x38] sm:$0xff]
        %v486 = vld [vmem:[#allocation2 + $0x40] sm:$0xff]
        %v487 = vld [vmem:[#allocation2 + $0x48] sm:$0xff]
        %v488 = vld [vmem:[#allocation2 + $0x50] sm:$0xff]
        %v489 = vld [vmem:[#allocation2 + $0x58] sm:$0xff]
        %v490 = vld [vmem:[#allocation2 + $0x60] sm:$0xff]
        %v491 = vld [vmem:[#allocation2 + $0x68] sm:$0xff]
        %v492 = vld [vmem:[#allocation2 + $0x70] sm:$0xff]
        %v493 = vld [vmem:[#allocation2 + $0x78] sm:$0xff]
        %v494 = vld [vmem:[#allocation2 + $0x80] sm:$0xff]
        %v495 = vld [vmem:[#allocation2 + $0x88] sm:$0xff]
        %v496 = vld [vmem:[#allocation9] sm:$0xff]
        %v497 = vld [vmem:[#allocation9 + $0x8] sm:$0xff]
        %v498 = vld [vmem:[#allocation9 + $0x10] sm:$0xff]
        %v499 = vld [vmem:[#allocation9 + $0x18] sm:$0xff]
        %v500 = vld [vmem:[#allocation9 + $0x20] sm:$0xff]
        %v501 = vld [vmem:[#allocation9 + $0x28] sm:$0xff]
        %v502 = vld [vmem:[#allocation9 + $0x30] sm:$0xff]
        %v503 = vld [vmem:[#allocation9 + $0x38] sm:$0xff]
        %v504 = vld [vmem:[#allocation9 + $0x40] sm:$0xff]
        %v505 = vld [vmem:[#allocation9 + $0x48] sm:$0xff]
        %v506 = vld [vmem:[#allocation9 + $0x50] sm:$0xff]
        %v507 = vld [vmem:[#allocation9 + $0x58] sm:$0xff]
        %v508 = vld [vmem:[#allocation9 + $0x60] sm:$0xff]
        %v509 = vld [vmem:[#allocation9 + $0x68] sm:$0xff]
        %v510 = vld [vmem:[#allocation9 + $0x70] sm:$0xff]
        %v511 = vld [vmem:[#allocation9 + $0x78] sm:$0xff]
        %v512 = vld [vmem:[#allocation9 + $0x80] sm:$0xff]
        %v513 = vld [vmem:[#allocation9 + $0x88] sm:$0xff]
        %v514 = vld [vmem:[#allocation9 + $0x90] sm:$0xff]
        %v515 = vld [vmem:[#allocation9 + $0x98] sm:$0xff]
        %v516 = vld [vmem:[#allocation9 + $0xa0] sm:$0xff]
        %v517 = vld [vmem:[#allocation9 + $0xa8] sm:$0xff]
        %v518 = vld [vmem:[#allocation9 + $0xb0] sm:$0xff]
        %v519 = vld [vmem:[#allocation9 + $0xb8] sm:$0xff]
        %v520 = vld [vmem:[#allocation9 + $0xc0] sm:$0xff]
        %v521 = vld [vmem:[#allocation9 + $0xc8] sm:$0xff]
        %v522 = vld [vmem:[#allocation9 + $0xd0] sm:$0xff]
        %v523 = vld [vmem:[#allocation9 + $0xd8] sm:$0xff]
        %v524 = vld [vmem:[#allocation9 + $0xe0] sm:$0xff]
        %v525 = vld [vmem:[#allocation9 + $0xe8] sm:$0xff]
        %v526 = vld [vmem:[#allocation9 + $0xf0] sm:$0xff]
        %v527 = vld [vmem:[#allocation9 + $0xf8] sm:$0xff]
        %v528 = vld [vmem:[#allocation9 + $0x100] sm:$0xff]
        %v529 = vld [vmem:[#allocation9 + $0x108] sm:$0xff]
        %v530 = vld [vmem:[#allocation9 + $0x110] sm:$0xff]
        %v531 = vld [vmem:[#allocation9 + $0x118] sm:$0xff]
        %v532 = vld [vmem:[#allocation9 + $0x120] sm:$0xff]
        %v533 = vld [vmem:[#allocation9 + $0x128] sm:$0xff]
        %v534 = vld [vmem:[#allocation9 + $0x130] sm:$0xff]
        %v535 = vld [vmem:[#allocation9 + $0x138] sm:$0xff]
        %v536 = vld [vmem:[#allocation9 + $0x140] sm:$0xff]
        %v537 = vld [vmem:[#allocation9 + $0x148] sm:$0xff]
        %v538 = vld [vmem:[#allocation9 + $0x150] sm:$0xff]
        %v539 = vld [vmem:[#allocation9 + $0x158] sm:$0xff]
        %v540 = vld [vmem:[#allocation9 + $0x160] sm:$0xff]
        %v541 = vld [vmem:[#allocation9 + $0x168] sm:$0xff]
        %v542 = vld [vmem:[#allocation9 + $0x170] sm:$0xff]
        %v543 = vld [vmem:[#allocation9 + $0x178] sm:$0xff]
        %v544 = vld [vmem:[#allocation9 + $0x180] sm:$0xff]
        %v545 = vld [vmem:[#allocation9 + $0x188] sm:$0xff]
        %v546 = vld [vmem:[#allocation9 + $0x190] sm:$0xff]
        %v547 = vld [vmem:[#allocation9 + $0x198] sm:$0xff]
        %v548 = vld [vmem:[#allocation9 + $0x1a0] sm:$0xff]
        %v549 = vld [vmem:[#allocation9 + $0x1a8] sm:$0xff]
        %v550 = vld [vmem:[#allocation9 + $0x1b0] sm:$0xff]
        %v551 = vld [vmem:[#allocation9 + $0x1b8] sm:$0xff]
        %v552 = vld [vmem:[#allocation9 + $0x1c0] sm:$0xff]
        %v553 = vld [vmem:[#allocation9 + $0x1c8] sm:$0xff]
        %v554 = vld [vmem:[#allocation9 + $0x1d0] sm:$0xff]
        %v555 = vld [vmem:[#allocation9 + $0x1d8] sm:$0xff]
        %v556 = vld [vmem:[#allocation9 + $0x1e0] sm:$0xff]
        %v557 = vld [vmem:[#allocation9 + $0x1e8] sm:$0xff]
        %v558 = vld [vmem:[#allocation9 + $0x1f0] sm:$0xff]
        %v559 = vld [vmem:[#allocation9 + $0x1f8] sm:$0xff]
        %v560 = vld [vmem:[#allocation9 + $0x200] sm:$0xff]
        %v561 = vld [vmem:[#allocation9 + $0x208] sm:$0xff]
        %v562 = vld [vmem:[#allocation9 + $0x210] sm:$0xff]
        %v563 = vld [vmem:[#allocation9 + $0x218] sm:$0xff]
        %v564 = vld [vmem:[#allocation9 + $0x220] sm:$0xff]
        %v565 = vld [vmem:[#allocation9 + $0x228] sm:$0xff]
        %v566 = vld [vmem:[#allocation9 + $0x230] sm:$0xff]
        %v567 = vld [vmem:[#allocation9 + $0x238] sm:$0xff]
        %v568 = vld [vmem:[#allocation9 + $0x240] sm:$0xff]
        %v569 = vld [vmem:[#allocation9 + $0x248] sm:$0xff]
        %v570 = vld [vmem:[#allocation9 + $0x250] sm:$0xff]
        %v571 = vld [vmem:[#allocation9 + $0x258] sm:$0xff]
        %v572 = vld [vmem:[#allocation9 + $0x260] sm:$0xff]
        %v573 = vld [vmem:[#allocation9 + $0x268] sm:$0xff]
        %v574 = vld [vmem:[#allocation9 + $0x270] sm:$0xff]
        %v575 = vld [vmem:[#allocation9 + $0x278] sm:$0xff]
        %v576 = vld [vmem:[#allocation9 + $0x280] sm:$0xff]
        %v577 = vld [vmem:[#allocation9 + $0x288] sm:$0xff]
        %v578 = vld [vmem:[#allocation9 + $0x290] sm:$0xff]
        %v579 = vld [vmem:[#allocation9 + $0x298] sm:$0xff]
        %v580 = vld [vmem:[#allocation9 + $0x2a0] sm:$0xff]
        %v581 = vld [vmem:[#allocation9 + $0x2a8] sm:$0xff]
        %v582 = vld [vmem:[#allocation9 + $0x2b0] sm:$0xff]
        %v583 = vld [vmem:[#allocation9 + $0x2b8] sm:$0xff]
        %v584 = vld [vmem:[#allocation9 + $0x2c0] sm:$0xff]
        %v585 = vld [vmem:[#allocation9 + $0x2c8] sm:$0xff]
        %v586 = vld [vmem:[#allocation9 + $0x2d0] sm:$0xff]
        %v587 = vld [vmem:[#allocation9 + $0x2d8] sm:$0xff]
        %v588 = vld [vmem:[#allocation9 + $0x2e0] sm:$0xff]
        %v589 = vld [vmem:[#allocation9 + $0x2e8] sm:$0xff]
        %v590 = vld [vmem:[#allocation9 + $0x2f0] sm:$0xff]
        %v591 = vld [vmem:[#allocation9 + $0x2f8] sm:$0xff]
        %v592 = vld [vmem:[#allocation9 + $0x300] sm:$0xff]
        %v593 = vld [vmem:[#allocation9 + $0x308] sm:$0xff]
        %v594 = vld [vmem:[#allocation9 + $0x310] sm:$0xff]
        %v595 = vld [vmem:[#allocation9 + $0x318] sm:$0xff]
        %v596 = vld [vmem:[#allocation9 + $0x320] sm:$0xff]
        %v597 = vld [vmem:[#allocation9 + $0x328] sm:$0xff]
        %v598 = vld [vmem:[#allocation9 + $0x330] sm:$0xff]
        %v599 = vld [vmem:[#allocation9 + $0x338] sm:$0xff]
        %v600 = vld [vmem:[#allocation9 + $0x340] sm:$0xff]
        %v601 = vld [vmem:[#allocation9 + $0x348] sm:$0xff]
        %v602 = vld [vmem:[#allocation9 + $0x350] sm:$0xff]
        %v603 = vld [vmem:[#allocation9 + $0x358] sm:$0xff]
        %v604 = vld [vmem:[#allocation9 + $0x360] sm:$0xff]
        %v605 = vld [vmem:[#allocation9 + $0x368] sm:$0xff]
        %v606 = vld [vmem:[#allocation9 + $0x370] sm:$0xff]
        %v607 = vld [vmem:[#allocation9 + $0x378] sm:$0xff]
        %v608 = vld [vmem:[#allocation9 + $0x380] sm:$0xff]
        %v609 = vld [vmem:[#allocation9 + $0x388] sm:$0xff]
        %v610 = vld [vmem:[#allocation9 + $0x390] sm:$0xff]
        %v611 = vld [vmem:[#allocation9 + $0x398] sm:$0xff]
        %v612 = vld [vmem:[#allocation9 + $0x3a0] sm:$0xff]
        %v613 = vld [vmem:[#allocation9 + $0x3a8] sm:$0xff]
        %v614 = vld [vmem:[#allocation9 + $0x3b0] sm:$0xff]
        %v615 = vld [vmem:[#allocation9 + $0x3b8] sm:$0xff]
        %v616 = vld [vmem:[#allocation9 + $0x3c0] sm:$0xff]
        %v617 = vld [vmem:[#allocation9 + $0x3c8] sm:$0xff]
        %v618 = vld [vmem:[#allocation9 + $0x3d0] sm:$0xff]
        %v619 = vld [vmem:[#allocation9 + $0x3d8] sm:$0xff]
        %v620 = vld [vmem:[#allocation9 + $0x3e0] sm:$0xff]
        %v621 = vld [vmem:[#allocation9 + $0x3e8] sm:$0xff]
        %v622 = vld [vmem:[#allocation9 + $0x3f0] sm:$0xff]
        %v623 = vld [vmem:[#allocation9 + $0x3f8] sm:$0xff]
        %v624 = vld [vmem:[#allocation9 + $0x400] sm:$0xff]
        %v625 = vld [vmem:[#allocation9 + $0x408] sm:$0xff]
        %v626 = vld [vmem:[#allocation9 + $0x410] sm:$0xff]
        %v627 = vld [vmem:[#allocation9 + $0x418] sm:$0xff]
        %v628 = vld [vmem:[#allocation9 + $0x420] sm:$0xff]
        %v629 = vld [vmem:[#allocation9 + $0x428] sm:$0xff]
        %v630 = vld [vmem:[#allocation9 + $0x430] sm:$0xff]
        %v631 = vld [vmem:[#allocation9 + $0x438] sm:$0xff]
        %v632 = vld [vmem:[#allocation9 + $0x440] sm:$0xff]
        %v633 = vld [vmem:[#allocation9 + $0x448] sm:$0xff]
        %v634 = vld [vmem:[#allocation9 + $0x450] sm:$0xff]
        %v635 = vld [vmem:[#allocation9 + $0x458] sm:$0xff]
        %v636 = vld [vmem:[#allocation9 + $0x460] sm:$0xff]
        %v637 = vld [vmem:[#allocation9 + $0x468] sm:$0xff]
        %v638 = vld [vmem:[#allocation9 + $0x470] sm:$0xff]
        %v639 = vld [vmem:[#allocation9 + $0x478] sm:$0xff]
        %v640 = vld [vmem:[#allocation9 + $0x480] sm:$0xff]
        %v641 = vld [vmem:[#allocation9 + $0x488] sm:$0xff]
        %v642 = vld [vmem:[#allocation9 + $0x490] sm:$0xff]
        %v643 = vld [vmem:[#allocation9 + $0x498] sm:$0xff]
        %v644 = vld [vmem:[#allocation9 + $0x4a0] sm:$0xff]
        %v645 = vld [vmem:[#allocation9 + $0x4a8] sm:$0xff]
        %v646 = vld [vmem:[#allocation9 + $0x4b0] sm:$0xff]
        %v647 = vld [vmem:[#allocation9 + $0x4b8] sm:$0xff]
        %v648 = vld [vmem:[#allocation9 + $0x4c0] sm:$0xff]
        %v649 = vld [vmem:[#allocation9 + $0x4c8] sm:$0xff]
        %v650 = vld [vmem:[#allocation9 + $0x4d0] sm:$0xff]
        %v651 = vld [vmem:[#allocation9 + $0x4d8] sm:$0xff]
        %v652 = vld [vmem:[#allocation9 + $0x4e0] sm:$0xff]
        %v653 = vld [vmem:[#allocation9 + $0x4e8] sm:$0xff]
        %v654 = vld [vmem:[#allocation9 + $0x4f0] sm:$0xff]
        %v655 = vld [vmem:[#allocation9 + $0x4f8] sm:$0xff]
        %v656 = vld [vmem:[#allocation9 + $0x500] sm:$0xff]
        %v657 = vld [vmem:[#allocation9 + $0x508] sm:$0xff]
        %v658 = vld [vmem:[#allocation9 + $0x510] sm:$0xff]
        %v659 = vld [vmem:[#allocation9 + $0x518] sm:$0xff]
        %v660 = vld [vmem:[#allocation9 + $0x520] sm:$0xff]
        %v661 = vld [vmem:[#allocation9 + $0x528] sm:$0xff]
        %v662 = vld [vmem:[#allocation9 + $0x530] sm:$0xff]
        %v663 = vld [vmem:[#allocation9 + $0x538] sm:$0xff]
        %v664 = vld [vmem:[#allocation9 + $0x540] sm:$0xff]
        %v665 = vld [vmem:[#allocation9 + $0x548] sm:$0xff]
        %v666 = vld [vmem:[#allocation9 + $0x550] sm:$0xff]
        %v667 = vld [vmem:[#allocation9 + $0x558] sm:$0xff]
        %v668 = vld [vmem:[#allocation9 + $0x560] sm:$0xff]
        %v669 = vld [vmem:[#allocation9 + $0x568] sm:$0xff]
        %v670 = vld [vmem:[#allocation9 + $0x570] sm:$0xff]
        %v671 = vld [vmem:[#allocation9 + $0x578] sm:$0xff]
        %v672 = vld [vmem:[#allocation9 + $0x580] sm:$0xff]
        %v673 = vld [vmem:[#allocation9 + $0x588] sm:$0xff]
        %v674 = vld [vmem:[#allocation9 + $0x590] sm:$0xff]
        %v675 = vld [vmem:[#allocation9 + $0x598] sm:$0xff]
        %v676 = vld [vmem:[#allocation9 + $0x5a0] sm:$0xff]
        %v677 = vld [vmem:[#allocation9 + $0x5a8] sm:$0xff]
        %v678 = vld [vmem:[#allocation9 + $0x5b0] sm:$0xff]
        %v679 = vld [vmem:[#allocation9 + $0x5b8] sm:$0xff]
        %v680 = vld [vmem:[#allocation9 + $0x5c0] sm:$0xff]
        %v681 = vld [vmem:[#allocation9 + $0x5c8] sm:$0xff]
        %v682 = vld [vmem:[#allocation9 + $0x5d0] sm:$0xff]
        %v683 = vld [vmem:[#allocation9 + $0x5d8] sm:$0xff]
        %v684 = vld [vmem:[#allocation9 + $0x5e0] sm:$0xff]
        %v685 = vld [vmem:[#allocation9 + $0x5e8] sm:$0xff]
        %v686 = vld [vmem:[#allocation9 + $0x5f0] sm:$0xff]
        %v687 = vld [vmem:[#allocation9 + $0x5f8] sm:$0xff]
        %v688 = vld [vmem:[#allocation9 + $0x600] sm:$0xff]
        %v689 = vld [vmem:[#allocation9 + $0x608] sm:$0xff]
        %v690 = vld [vmem:[#allocation9 + $0x610] sm:$0xff]
        %v691 = vld [vmem:[#allocation9 + $0x618] sm:$0xff]
        %v692 = vld [vmem:[#allocation9 + $0x620] sm:$0xff]
        %v693 = vld [vmem:[#allocation9 + $0x628] sm:$0xff]
        %v694 = vld [vmem:[#allocation9 + $0x630] sm:$0xff]
        %v695 = vld [vmem:[#allocation9 + $0x638] sm:$0xff]
        %v696 = vld [vmem:[#allocation9 + $0x640] sm:$0xff]
        %v697 = vld [vmem:[#allocation9 + $0x648] sm:$0xff]
        %v698 = vld [vmem:[#allocation9 + $0x650] sm:$0xff]
        %v699 = vld [vmem:[#allocation9 + $0x658] sm:$0xff]
        %v700 = vld [vmem:[#allocation9 + $0x660] sm:$0xff]
        %v701 = vld [vmem:[#allocation9 + $0x668] sm:$0xff]
        %v702 = vld [vmem:[#allocation9 + $0x670] sm:$0xff]
        %v703 = vld [vmem:[#allocation9 + $0x678] sm:$0xff]
        %v704 = vld [vmem:[#allocation9 + $0x680] sm:$0xff]
        %v705 = vld [vmem:[#allocation9 + $0x688] sm:$0xff]
        %v706 = vld [vmem:[#allocation9 + $0x690] sm:$0xff]
        %v707 = vld [vmem:[#allocation9 + $0x698] sm:$0xff]
        %v708 = vld [vmem:[#allocation9 + $0x6a0] sm:$0xff]
        %v709 = vld [vmem:[#allocation9 + $0x6a8] sm:$0xff]
        %v710 = vld [vmem:[#allocation9 + $0x6b0] sm:$0xff]
        %v711 = vld [vmem:[#allocation9 + $0x6b8] sm:$0xff]
        %v712 = vld [vmem:[#allocation9 + $0x6c0] sm:$0xff]
        %v713 = vld [vmem:[#allocation9 + $0x6c8] sm:$0xff]
        %v714 = vld [vmem:[#allocation9 + $0x6d0] sm:$0xff]
        %v715 = vld [vmem:[#allocation9 + $0x6d8] sm:$0xff]
        %v716 = vld [vmem:[#allocation9 + $0x6e0] sm:$0xff]
        %v717 = vld [vmem:[#allocation9 + $0x6e8] sm:$0xff]
        %v718 = vld [vmem:[#allocation9 + $0x6f0] sm:$0xff]
        %v719 = vld [vmem:[#allocation9 + $0x6f8] sm:$0xff]
        %v720 = vld [vmem:[#allocation9 + $0x700] sm:$0xff]
        %v721 = vld [vmem:[#allocation9 + $0x708] sm:$0xff]
        %v722 = vld [vmem:[#allocation9 + $0x710] sm:$0xff]
        %v723 = vld [vmem:[#allocation9 + $0x718] sm:$0xff]
        %v724 = vld [vmem:[#allocation9 + $0x720] sm:$0xff]
        %v725 = vld [vmem:[#allocation9 + $0x728] sm:$0xff]
        %v726 = vld [vmem:[#allocation9 + $0x730] sm:$0xff]
        %v727 = vld [vmem:[#allocation9 + $0x738] sm:$0xff]
        %v728 = vld [vmem:[#allocation9 + $0x740] sm:$0xff]
        %v729 = vld [vmem:[#allocation9 + $0x748] sm:$0xff]
        %v730 = vld [vmem:[#allocation9 + $0x750] sm:$0xff]
        %v731 = vld [vmem:[#allocation9 + $0x758] sm:$0xff]
        %v732 = vld [vmem:[#allocation9 + $0x760] sm:$0xff]
        %v733 = vld [vmem:[#allocation9 + $0x768] sm:$0xff]
        %v734 = vld [vmem:[#allocation9 + $0x770] sm:$0xff]
        %v735 = vld [vmem:[#allocation9 + $0x778] sm:$0xff]
        %v736 = vld [vmem:[#allocation9 + $0x780] sm:$0xff]
        %v737 = vld [vmem:[#allocation9 + $0x788] sm:$0xff]
        %v738 = vld [vmem:[#allocation9 + $0x790] sm:$0xff]
        %v739 = vld [vmem:[#allocation9 + $0x798] sm:$0xff]
        %v740 = vld [vmem:[#allocation9 + $0x7a0] sm:$0xff]
        %v741 = vld [vmem:[#allocation9 + $0x7a8] sm:$0xff]
        %v742 = vld [vmem:[#allocation9 + $0x7b0] sm:$0xff]
        %v743 = vld [vmem:[#allocation9 + $0x7b8] sm:$0xff]
        %v744 = vld [vmem:[#allocation9 + $0x7c0] sm:$0xff]
        %v745 = vld [vmem:[#allocation9 + $0x7c8] sm:$0xff]
        %v746 = vld [vmem:[#allocation9 + $0x7d0] sm:$0xff]
        %v747 = vld [vmem:[#allocation9 + $0x7d8] sm:$0xff]
        %v748 = vld [vmem:[#allocation9 + $0x7e0] sm:$0xff]
        %v749 = vld [vmem:[#allocation9 + $0x7e8] sm:$0xff]
        %v750 = vld [vmem:[#allocation9 + $0x7f0] sm:$0xff]
        %v751 = vld [vmem:[#allocation9 + $0x7f8] sm:$0xff]
        %v752 = vld [vmem:[#allocation9 + $0x800] sm:$0xff]
        %v753 = vld [vmem:[#allocation9 + $0x808] sm:$0xff]
        %v754 = vld [vmem:[#allocation9 + $0x810] sm:$0xff]
        %v755 = vld [vmem:[#allocation9 + $0x818] sm:$0xff]
        %v756 = vld [vmem:[#allocation9 + $0x820] sm:$0xff]
        %v757 = vld [vmem:[#allocation9 + $0x828] sm:$0xff]
        %v758 = vld [vmem:[#allocation9 + $0x830] sm:$0xff]
        %v759 = vld [vmem:[#allocation9 + $0x838] sm:$0xff]
        %v760 = vld [vmem:[#allocation9 + $0x840] sm:$0xff]
        %v761 = vld [vmem:[#allocation9 + $0x848] sm:$0xff]
        %v762 = vld [vmem:[#allocation9 + $0x850] sm:$0xff]
        %v763 = vld [vmem:[#allocation9 + $0x858] sm:$0xff]
        %v764 = vld [vmem:[#allocation9 + $0x860] sm:$0xff]
        %v765 = vld [vmem:[#allocation9 + $0x868] sm:$0xff]
        %v766 = vld [vmem:[#allocation9 + $0x870] sm:$0xff]
        %v767 = vld [vmem:[#allocation9 + $0x878] sm:$0xff]
        %v768 = vld [vmem:[#allocation9 + $0x880] sm:$0xff]
        %v769 = vld [vmem:[#allocation9 + $0x888] sm:$0xff]
        %v770 = vld [vmem:[#allocation9 + $0x890] sm:$0xff]
        %v771 = vld [vmem:[#allocation9 + $0x898] sm:$0xff]
        %v772 = vld [vmem:[#allocation9 + $0x8a0] sm:$0xff]
        %v773 = vld [vmem:[#allocation9 + $0x8a8] sm:$0xff]
        %v774 = vld [vmem:[#allocation9 + $0x8b0] sm:$0xff]
        %v775 = vld [vmem:[#allocation9 + $0x8b8] sm:$0xff]
        %v776 = vld [vmem:[#allocation9 + $0x8c0] sm:$0xff]
        %v777 = vld [vmem:[#allocation9 + $0x8c8] sm:$0xff]
        %v778 = vld [vmem:[#allocation9 + $0x8d0] sm:$0xff]
        %v779 = vld [vmem:[#allocation9 + $0x8d8] sm:$0xff]
        %v780 = vld [vmem:[#allocation9 + $0x8e0] sm:$0xff]
        %v781 = vld [vmem:[#allocation9 + $0x8e8] sm:$0xff]
        %v782 = vld [vmem:[#allocation9 + $0x8f0] sm:$0xff]
        %v783 = vld [vmem:[#allocation9 + $0x8f8] sm:$0xff]
        %v802 = vunpack.c.l.b16 %v478
        %v803 = vunpack.c.h.b16 %v478
        %v804 = vunpack.c.l.b16 %v479
        %v805 = vunpack.c.h.b16 %v479
        %v806 = vunpack.c.l.b16 %v480
        %v807 = vunpack.c.h.b16 %v480
        %v808 = vunpack.c.l.b16 %v481
        %v809 = vunpack.c.h.b16 %v481
        %v810 = vunpack.c.l.b16 %v482
        %v811 = vunpack.c.h.b16 %v482
        %v812 = vunpack.c.l.b16 %v483
        %v813 = vunpack.c.h.b16 %v483
        %v814 = vunpack.c.l.b16 %v484
        %v815 = vunpack.c.h.b16 %v484
        %v816 = vunpack.c.l.b16 %v485
        %v817 = vunpack.c.h.b16 %v485
        %v818 = vunpack.c.l.b16 %v486
        %v819 = vunpack.c.h.b16 %v486
        %v820 = vunpack.c.l.b16 %v487
        %v821 = vunpack.c.h.b16 %v487
        %v822 = vunpack.c.l.b16 %v488
        %v823 = vunpack.c.h.b16 %v488
        %v824 = vunpack.c.l.b16 %v489
        %v825 = vunpack.c.h.b16 %v489
        %v826 = vunpack.c.l.b16 %v490
        %v827 = vunpack.c.h.b16 %v490
        %v828 = vunpack.c.l.b16 %v491
        %v829 = vunpack.c.h.b16 %v491
        %v830 = vunpack.c.l.b16 %v492
        %v831 = vunpack.c.h.b16 %v492
        %v832 = vunpack.c.l.b16 %v493
        %v833 = vunpack.c.h.b16 %v493
        %v834 = vunpack.c.l.b16 %v494
        %v835 = vunpack.c.h.b16 %v494
        %v836 = vunpack.c.l.b16 %v495
        %v837 = vunpack.c.h.b16 %v495
        %v838 = vpack.c.b16 %v808, %v802
        %v839 = vpack.c.b16 %v809, %v803
        %v840 = vpack.c.b16 %v810, %v804
        %v841 = vpack.c.b16 %v811, %v805
        %v842 = vpack.c.b16 %v812, %v806
        %v843 = vpack.c.b16 %v813, %v807
        %v844 = vpack.c.b16 %v820, %v814
        %v845 = vpack.c.b16 %v821, %v815
        %v846 = vpack.c.b16 %v822, %v816
        %v847 = vpack.c.b16 %v823, %v817
        %v848 = vpack.c.b16 %v824, %v818
        %v849 = vpack.c.b16 %v825, %v819
        %v850 = vpack.c.b16 %v832, %v826
        %v851 = vpack.c.b16 %v833, %v827
        %v852 = vpack.c.b16 %v834, %v828
        %v853 = vpack.c.b16 %v835, %v829
        %v854 = vpack.c.b16 %v836, %v830
        %v855 = vpack.c.b16 %v837, %v831
        %v1162 = vunpack.c.l.b16 %v496
        %v1163 = vunpack.c.h.b16 %v496
        %v1164 = vunpack.c.l.b16 %v497
        %v1165 = vunpack.c.h.b16 %v497
        %v1166 = vunpack.c.l.b16 %v498
        %v1167 = vunpack.c.h.b16 %v498
        %v1168 = vunpack.c.l.b16 %v499
        %v1169 = vunpack.c.h.b16 %v499
        %v1170 = vunpack.c.l.b16 %v500
        %v1171 = vunpack.c.h.b16 %v500
        %v1172 = vunpack.c.l.b16 %v501
        %v1173 = vunpack.c.h.b16 %v501
        %v1174 = vunpack.c.l.b16 %v502
        %v1175 = vunpack.c.h.b16 %v502
        %v1176 = vunpack.c.l.b16 %v503
        %v1177 = vunpack.c.h.b16 %v503
        %v1178 = vunpack.c.l.b16 %v504
        %v1179 = vunpack.c.h.b16 %v504
        %v1180 = vunpack.c.l.b16 %v505
        %v1181 = vunpack.c.h.b16 %v505
        %v1182 = vunpack.c.l.b16 %v506
        %v1183 = vunpack.c.h.b16 %v506
        %v1184 = vunpack.c.l.b16 %v507
        %v1185 = vunpack.c.h.b16 %v507
        %v1186 = vunpack.c.l.b16 %v508
        %v1187 = vunpack.c.h.b16 %v508
        %v1188 = vunpack.c.l.b16 %v509
        %v1189 = vunpack.c.h.b16 %v509
        %v1190 = vunpack.c.l.b16 %v510
        %v1191 = vunpack.c.h.b16 %v510
        %v1192 = vunpack.c.l.b16 %v511
        %v1193 = vunpack.c.h.b16 %v511
        %v1194 = vunpack.c.l.b16 %v512
        %v1195 = vunpack.c.h.b16 %v512
        %v1196 = vunpack.c.l.b16 %v513
        %v1197 = vunpack.c.h.b16 %v513
        %v1198 = vunpack.c.l.b16 %v514
        %v1199 = vunpack.c.h.b16 %v514
        %v1200 = vunpack.c.l.b16 %v515
        %v1201 = vunpack.c.h.b16 %v515
        %v1202 = vunpack.c.l.b16 %v516
        %v1203 = vunpack.c.h.b16 %v516
        %v1204 = vunpack.c.l.b16 %v517
        %v1205 = vunpack.c.h.b16 %v517
        %v1206 = vunpack.c.l.b16 %v518
        %v1207 = vunpack.c.h.b16 %v518
        %v1208 = vunpack.c.l.b16 %v519
        %v1209 = vunpack.c.h.b16 %v519
        %v1210 = vunpack.c.l.b16 %v520
        %v1211 = vunpack.c.h.b16 %v520
        %v1212 = vunpack.c.l.b16 %v521
        %v1213 = vunpack.c.h.b16 %v521
        %v1214 = vunpack.c.l.b16 %v522
        %v1215 = vunpack.c.h.b16 %v522
        %v1216 = vunpack.c.l.b16 %v523
        %v1217 = vunpack.c.h.b16 %v523
        %v1218 = vunpack.c.l.b16 %v524
        %v1219 = vunpack.c.h.b16 %v524
        %v1220 = vunpack.c.l.b16 %v525
        %v1221 = vunpack.c.h.b16 %v525
        %v1222 = vunpack.c.l.b16 %v526
        %v1223 = vunpack.c.h.b16 %v526
        %v1224 = vunpack.c.l.b16 %v527
        %v1225 = vunpack.c.h.b16 %v527
        %v1226 = vunpack.c.l.b16 %v528
        %v1227 = vunpack.c.h.b16 %v528
        %v1228 = vunpack.c.l.b16 %v529
        %v1229 = vunpack.c.h.b16 %v529
        %v1230 = vunpack.c.l.b16 %v530
        %v1231 = vunpack.c.h.b16 %v530
        %v1232 = vunpack.c.l.b16 %v531
        %v1233 = vunpack.c.h.b16 %v531
        %v1234 = vunpack.c.l.b16 %v532
        %v1235 = vunpack.c.h.b16 %v532
        %v1236 = vunpack.c.l.b16 %v533
        %v1237 = vunpack.c.h.b16 %v533
        %v1238 = vunpack.c.l.b16 %v534
        %v1239 = vunpack.c.h.b16 %v534
        %v1240 = vunpack.c.l.b16 %v535
        %v1241 = vunpack.c.h.b16 %v535
        %v1242 = vunpack.c.l.b16 %v536
        %v1243 = vunpack.c.h.b16 %v536
        %v1244 = vunpack.c.l.b16 %v537
        %v1245 = vunpack.c.h.b16 %v537
        %v1246 = vunpack.c.l.b16 %v538
        %v1247 = vunpack.c.h.b16 %v538
        %v1248 = vunpack.c.l.b16 %v539
        %v1249 = vunpack.c.h.b16 %v539
        %v1250 = vunpack.c.l.b16 %v540
        %v1251 = vunpack.c.h.b16 %v540
        %v1252 = vunpack.c.l.b16 %v541
        %v1253 = vunpack.c.h.b16 %v541
        %v1254 = vunpack.c.l.b16 %v542
        %v1255 = vunpack.c.h.b16 %v542
        %v1256 = vunpack.c.l.b16 %v543
        %v1257 = vunpack.c.h.b16 %v543
        %v1258 = vunpack.c.l.b16 %v544
        %v1259 = vunpack.c.h.b16 %v544
        %v1260 = vunpack.c.l.b16 %v545
        %v1261 = vunpack.c.h.b16 %v545
        %v1262 = vunpack.c.l.b16 %v546
        %v1263 = vunpack.c.h.b16 %v546
        %v1264 = vunpack.c.l.b16 %v547
        %v1265 = vunpack.c.h.b16 %v547
        %v1266 = vunpack.c.l.b16 %v548
        %v1267 = vunpack.c.h.b16 %v548
        %v1268 = vunpack.c.l.b16 %v549
        %v1269 = vunpack.c.h.b16 %v549
        %v1270 = vunpack.c.l.b16 %v550
        %v1271 = vunpack.c.h.b16 %v550
        %v1272 = vunpack.c.l.b16 %v551
        %v1273 = vunpack.c.h.b16 %v551
        %v1274 = vunpack.c.l.b16 %v552
        %v1275 = vunpack.c.h.b16 %v552
        %v1276 = vunpack.c.l.b16 %v553
        %v1277 = vunpack.c.h.b16 %v553
        %v1278 = vunpack.c.l.b16 %v554
        %v1279 = vunpack.c.h.b16 %v554
        %v1280 = vunpack.c.l.b16 %v555
        %v1281 = vunpack.c.h.b16 %v555
        %v1282 = vunpack.c.l.b16 %v556
        %v1283 = vunpack.c.h.b16 %v556
        %v1284 = vunpack.c.l.b16 %v557
        %v1285 = vunpack.c.h.b16 %v557
        %v1286 = vunpack.c.l.b16 %v558
        %v1287 = vunpack.c.h.b16 %v558
        %v1288 = vunpack.c.l.b16 %v559
        %v1289 = vunpack.c.h.b16 %v559
        %v1290 = vunpack.c.l.b16 %v560
        %v1291 = vunpack.c.h.b16 %v560
        %v1292 = vunpack.c.l.b16 %v561
        %v1293 = vunpack.c.h.b16 %v561
        %v1294 = vunpack.c.l.b16 %v562
        %v1295 = vunpack.c.h.b16 %v562
        %v1296 = vunpack.c.l.b16 %v563
        %v1297 = vunpack.c.h.b16 %v563
        %v1298 = vunpack.c.l.b16 %v564
        %v1299 = vunpack.c.h.b16 %v564
        %v1300 = vunpack.c.l.b16 %v565
        %v1301 = vunpack.c.h.b16 %v565
        %v1302 = vunpack.c.l.b16 %v566
        %v1303 = vunpack.c.h.b16 %v566
        %v1304 = vunpack.c.l.b16 %v567
        %v1305 = vunpack.c.h.b16 %v567
        %v1306 = vunpack.c.l.b16 %v568
        %v1307 = vunpack.c.h.b16 %v568
        %v1308 = vunpack.c.l.b16 %v569
        %v1309 = vunpack.c.h.b16 %v569
        %v1310 = vunpack.c.l.b16 %v570
        %v1311 = vunpack.c.h.b16 %v570
        %v1312 = vunpack.c.l.b16 %v571
        %v1313 = vunpack.c.h.b16 %v571
        %v1314 = vunpack.c.l.b16 %v572
        %v1315 = vunpack.c.h.b16 %v572
        %v1316 = vunpack.c.l.b16 %v573
        %v1317 = vunpack.c.h.b16 %v573
        %v1318 = vunpack.c.l.b16 %v574
        %v1319 = vunpack.c.h.b16 %v574
        %v1320 = vunpack.c.l.b16 %v575
        %v1321 = vunpack.c.h.b16 %v575
        %v1322 = vunpack.c.l.b16 %v576
        %v1323 = vunpack.c.h.b16 %v576
        %v1324 = vunpack.c.l.b16 %v577
        %v1325 = vunpack.c.h.b16 %v577
        %v1326 = vunpack.c.l.b16 %v578
        %v1327 = vunpack.c.h.b16 %v578
        %v1328 = vunpack.c.l.b16 %v579
        %v1329 = vunpack.c.h.b16 %v579
        %v1330 = vunpack.c.l.b16 %v580
        %v1331 = vunpack.c.h.b16 %v580
        %v1332 = vunpack.c.l.b16 %v581
        %v1333 = vunpack.c.h.b16 %v581
        %v1334 = vunpack.c.l.b16 %v582
        %v1335 = vunpack.c.h.b16 %v582
        %v1336 = vunpack.c.l.b16 %v583
        %v1337 = vunpack.c.h.b16 %v583
        %v1338 = vunpack.c.l.b16 %v584
        %v1339 = vunpack.c.h.b16 %v584
        %v1340 = vunpack.c.l.b16 %v585
        %v1341 = vunpack.c.h.b16 %v585
        %v1342 = vunpack.c.l.b16 %v586
        %v1343 = vunpack.c.h.b16 %v586
        %v1344 = vunpack.c.l.b16 %v587
        %v1345 = vunpack.c.h.b16 %v587
        %v1346 = vunpack.c.l.b16 %v588
        %v1347 = vunpack.c.h.b16 %v588
        %v1348 = vunpack.c.l.b16 %v589
        %v1349 = vunpack.c.h.b16 %v589
        %v1350 = vunpack.c.l.b16 %v590
        %v1351 = vunpack.c.h.b16 %v590
        %v1352 = vunpack.c.l.b16 %v591
        %v1353 = vunpack.c.h.b16 %v591
        %v1354 = vunpack.c.l.b16 %v592
        %v1355 = vunpack.c.h.b16 %v592
        %v1356 = vunpack.c.l.b16 %v593
        %v1357 = vunpack.c.h.b16 %v593
        %v1358 = vunpack.c.l.b16 %v594
        %v1359 = vunpack.c.h.b16 %v594
        %v1360 = vunpack.c.l.b16 %v595
        %v1361 = vunpack.c.h.b16 %v595
        %v1362 = vunpack.c.l.b16 %v596
        %v1363 = vunpack.c.h.b16 %v596
        %v1364 = vunpack.c.l.b16 %v597
        %v1365 = vunpack.c.h.b16 %v597
        %v1366 = vunpack.c.l.b16 %v598
        %v1367 = vunpack.c.h.b16 %v598
        %v1368 = vunpack.c.l.b16 %v599
        %v1369 = vunpack.c.h.b16 %v599
        %v1370 = vunpack.c.l.b16 %v600
        %v1371 = vunpack.c.h.b16 %v600
        %v1372 = vunpack.c.l.b16 %v601
        %v1373 = vunpack.c.h.b16 %v601
        %v1374 = vunpack.c.l.b16 %v602
        %v1375 = vunpack.c.h.b16 %v602
        %v1376 = vunpack.c.l.b16 %v603
        %v1377 = vunpack.c.h.b16 %v603
        %v1378 = vunpack.c.l.b16 %v604
        %v1379 = vunpack.c.h.b16 %v604
        %v1380 = vunpack.c.l.b16 %v605
        %v1381 = vunpack.c.h.b16 %v605
        %v1382 = vunpack.c.l.b16 %v606
        %v1383 = vunpack.c.h.b16 %v606
        %v1384 = vunpack.c.l.b16 %v607
        %v1385 = vunpack.c.h.b16 %v607
        %v1386 = vunpack.c.l.b16 %v608
        %v1387 = vunpack.c.h.b16 %v608
        %v1388 = vunpack.c.l.b16 %v609
        %v1389 = vunpack.c.h.b16 %v609
        %v1390 = vunpack.c.l.b16 %v610
        %v1391 = vunpack.c.h.b16 %v610
        %v1392 = vunpack.c.l.b16 %v611
        %v1393 = vunpack.c.h.b16 %v611
        %v1394 = vunpack.c.l.b16 %v612
        %v1395 = vunpack.c.h.b16 %v612
        %v1396 = vunpack.c.l.b16 %v613
        %v1397 = vunpack.c.h.b16 %v613
        %v1398 = vunpack.c.l.b16 %v614
        %v1399 = vunpack.c.h.b16 %v614
        %v1400 = vunpack.c.l.b16 %v615
        %v1401 = vunpack.c.h.b16 %v615
        %v1402 = vunpack.c.l.b16 %v616
        %v1403 = vunpack.c.h.b16 %v616
        %v1404 = vunpack.c.l.b16 %v617
        %v1405 = vunpack.c.h.b16 %v617
        %v1406 = vunpack.c.l.b16 %v618
        %v1407 = vunpack.c.h.b16 %v618
        %v1408 = vunpack.c.l.b16 %v619
        %v1409 = vunpack.c.h.b16 %v619
        %v1410 = vunpack.c.l.b16 %v620
        %v1411 = vunpack.c.h.b16 %v620
        %v1412 = vunpack.c.l.b16 %v621
        %v1413 = vunpack.c.h.b16 %v621
        %v1414 = vunpack.c.l.b16 %v622
        %v1415 = vunpack.c.h.b16 %v622
        %v1416 = vunpack.c.l.b16 %v623
        %v1417 = vunpack.c.h.b16 %v623
        %v1418 = vunpack.c.l.b16 %v624
        %v1419 = vunpack.c.h.b16 %v624
        %v1420 = vunpack.c.l.b16 %v625
        %v1421 = vunpack.c.h.b16 %v625
        %v1422 = vunpack.c.l.b16 %v626
        %v1423 = vunpack.c.h.b16 %v626
        %v1424 = vunpack.c.l.b16 %v627
        %v1425 = vunpack.c.h.b16 %v627
        %v1426 = vunpack.c.l.b16 %v628
        %v1427 = vunpack.c.h.b16 %v628
        %v1428 = vunpack.c.l.b16 %v629
        %v1429 = vunpack.c.h.b16 %v629
        %v1430 = vunpack.c.l.b16 %v630
        %v1431 = vunpack.c.h.b16 %v630
        %v1432 = vunpack.c.l.b16 %v631
        %v1433 = vunpack.c.h.b16 %v631
        %v1434 = vunpack.c.l.b16 %v632
        %v1435 = vunpack.c.h.b16 %v632
        %v1436 = vunpack.c.l.b16 %v633
        %v1437 = vunpack.c.h.b16 %v633
        %v1438 = vunpack.c.l.b16 %v634
        %v1439 = vunpack.c.h.b16 %v634
        %v1440 = vunpack.c.l.b16 %v635
        %v1441 = vunpack.c.h.b16 %v635
        %v1442 = vunpack.c.l.b16 %v636
        %v1443 = vunpack.c.h.b16 %v636
        %v1444 = vunpack.c.l.b16 %v637
        %v1445 = vunpack.c.h.b16 %v637
        %v1446 = vunpack.c.l.b16 %v638
        %v1447 = vunpack.c.h.b16 %v638
        %v1448 = vunpack.c.l.b16 %v639
        %v1449 = vunpack.c.h.b16 %v639
        %v1450 = vunpack.c.l.b16 %v640
        %v1451 = vunpack.c.h.b16 %v640
        %v1452 = vunpack.c.l.b16 %v641
        %v1453 = vunpack.c.h.b16 %v641
        %v1454 = vunpack.c.l.b16 %v642
        %v1455 = vunpack.c.h.b16 %v642
        %v1456 = vunpack.c.l.b16 %v643
        %v1457 = vunpack.c.h.b16 %v643
        %v1458 = vunpack.c.l.b16 %v644
        %v1459 = vunpack.c.h.b16 %v644
        %v1460 = vunpack.c.l.b16 %v645
        %v1461 = vunpack.c.h.b16 %v645
        %v1462 = vunpack.c.l.b16 %v646
        %v1463 = vunpack.c.h.b16 %v646
        %v1464 = vunpack.c.l.b16 %v647
        %v1465 = vunpack.c.h.b16 %v647
        %v1466 = vunpack.c.l.b16 %v648
        %v1467 = vunpack.c.h.b16 %v648
        %v1468 = vunpack.c.l.b16 %v649
        %v1469 = vunpack.c.h.b16 %v649
        %v1470 = vunpack.c.l.b16 %v650
        %v1471 = vunpack.c.h.b16 %v650
        %v1472 = vunpack.c.l.b16 %v651
        %v1473 = vunpack.c.h.b16 %v651
        %v1474 = vunpack.c.l.b16 %v652
        %v1475 = vunpack.c.h.b16 %v652
        %v1476 = vunpack.c.l.b16 %v653
        %v1477 = vunpack.c.h.b16 %v653
        %v1478 = vunpack.c.l.b16 %v654
        %v1479 = vunpack.c.h.b16 %v654
        %v1480 = vunpack.c.l.b16 %v655
        %v1481 = vunpack.c.h.b16 %v655
        %v1482 = vunpack.c.l.b16 %v656
        %v1483 = vunpack.c.h.b16 %v656
        %v1484 = vunpack.c.l.b16 %v657
        %v1485 = vunpack.c.h.b16 %v657
        %v1486 = vunpack.c.l.b16 %v658
        %v1487 = vunpack.c.h.b16 %v658
        %v1488 = vunpack.c.l.b16 %v659
        %v1489 = vunpack.c.h.b16 %v659
        %v1490 = vunpack.c.l.b16 %v660
        %v1491 = vunpack.c.h.b16 %v660
        %v1492 = vunpack.c.l.b16 %v661
        %v1493 = vunpack.c.h.b16 %v661
        %v1494 = vunpack.c.l.b16 %v662
        %v1495 = vunpack.c.h.b16 %v662
        %v1496 = vunpack.c.l.b16 %v663
        %v1497 = vunpack.c.h.b16 %v663
        %v1498 = vunpack.c.l.b16 %v664
        %v1499 = vunpack.c.h.b16 %v664
        %v1500 = vunpack.c.l.b16 %v665
        %v1501 = vunpack.c.h.b16 %v665
        %v1502 = vunpack.c.l.b16 %v666
        %v1503 = vunpack.c.h.b16 %v666
        %v1504 = vunpack.c.l.b16 %v667
        %v1505 = vunpack.c.h.b16 %v667
        %v1506 = vunpack.c.l.b16 %v668
        %v1507 = vunpack.c.h.b16 %v668
        %v1508 = vunpack.c.l.b16 %v669
        %v1509 = vunpack.c.h.b16 %v669
        %v1510 = vunpack.c.l.b16 %v670
        %v1511 = vunpack.c.h.b16 %v670
        %v1512 = vunpack.c.l.b16 %v671
        %v1513 = vunpack.c.h.b16 %v671
        %v1514 = vunpack.c.l.b16 %v672
        %v1515 = vunpack.c.h.b16 %v672
        %v1516 = vunpack.c.l.b16 %v673
        %v1517 = vunpack.c.h.b16 %v673
        %v1518 = vunpack.c.l.b16 %v674
        %v1519 = vunpack.c.h.b16 %v674
        %v1520 = vunpack.c.l.b16 %v675
        %v1521 = vunpack.c.h.b16 %v675
        %v1522 = vunpack.c.l.b16 %v676
        %v1523 = vunpack.c.h.b16 %v676
        %v1524 = vunpack.c.l.b16 %v677
        %v1525 = vunpack.c.h.b16 %v677
        %v1526 = vunpack.c.l.b16 %v678
        %v1527 = vunpack.c.h.b16 %v678
        %v1528 = vunpack.c.l.b16 %v679
        %v1529 = vunpack.c.h.b16 %v679
        %v1530 = vunpack.c.l.b16 %v680
        %v1531 = vunpack.c.h.b16 %v680
        %v1532 = vunpack.c.l.b16 %v681
        %v1533 = vunpack.c.h.b16 %v681
        %v1534 = vunpack.c.l.b16 %v682
        %v1535 = vunpack.c.h.b16 %v682
        %v1536 = vunpack.c.l.b16 %v683
        %v1537 = vunpack.c.h.b16 %v683
        %v1538 = vunpack.c.l.b16 %v684
        %v1539 = vunpack.c.h.b16 %v684
        %v1540 = vunpack.c.l.b16 %v685
        %v1541 = vunpack.c.h.b16 %v685
        %v1542 = vunpack.c.l.b16 %v686
        %v1543 = vunpack.c.h.b16 %v686
        %v1544 = vunpack.c.l.b16 %v687
        %v1545 = vunpack.c.h.b16 %v687
        %v1546 = vunpack.c.l.b16 %v688
        %v1547 = vunpack.c.h.b16 %v688
        %v1548 = vunpack.c.l.b16 %v689
        %v1549 = vunpack.c.h.b16 %v689
        %v1550 = vunpack.c.l.b16 %v690
        %v1551 = vunpack.c.h.b16 %v690
        %v1552 = vunpack.c.l.b16 %v691
        %v1553 = vunpack.c.h.b16 %v691
        %v1554 = vunpack.c.l.b16 %v692
        %v1555 = vunpack.c.h.b16 %v692
        %v1556 = vunpack.c.l.b16 %v693
        %v1557 = vunpack.c.h.b16 %v693
        %v1558 = vunpack.c.l.b16 %v694
        %v1559 = vunpack.c.h.b16 %v694
        %v1560 = vunpack.c.l.b16 %v695
        %v1561 = vunpack.c.h.b16 %v695
        %v1562 = vunpack.c.l.b16 %v696
        %v1563 = vunpack.c.h.b16 %v696
        %v1564 = vunpack.c.l.b16 %v697
        %v1565 = vunpack.c.h.b16 %v697
        %v1566 = vunpack.c.l.b16 %v698
        %v1567 = vunpack.c.h.b16 %v698
        %v1568 = vunpack.c.l.b16 %v699
        %v1569 = vunpack.c.h.b16 %v699
        %v1570 = vunpack.c.l.b16 %v700
        %v1571 = vunpack.c.h.b16 %v700
        %v1572 = vunpack.c.l.b16 %v701
        %v1573 = vunpack.c.h.b16 %v701
        %v1574 = vunpack.c.l.b16 %v702
        %v1575 = vunpack.c.h.b16 %v702
        %v1576 = vunpack.c.l.b16 %v703
        %v1577 = vunpack.c.h.b16 %v703
        %v1578 = vunpack.c.l.b16 %v704
        %v1579 = vunpack.c.h.b16 %v704
        %v1580 = vunpack.c.l.b16 %v705
        %v1581 = vunpack.c.h.b16 %v705
        %v1582 = vunpack.c.l.b16 %v706
        %v1583 = vunpack.c.h.b16 %v706
        %v1584 = vunpack.c.l.b16 %v707
        %v1585 = vunpack.c.h.b16 %v707
        %v1586 = vunpack.c.l.b16 %v708
        %v1587 = vunpack.c.h.b16 %v708
        %v1588 = vunpack.c.l.b16 %v709
        %v1589 = vunpack.c.h.b16 %v709
        %v1590 = vunpack.c.l.b16 %v710
        %v1591 = vunpack.c.h.b16 %v710
        %v1592 = vunpack.c.l.b16 %v711
        %v1593 = vunpack.c.h.b16 %v711
        %v1594 = vunpack.c.l.b16 %v712
        %v1595 = vunpack.c.h.b16 %v712
        %v1596 = vunpack.c.l.b16 %v713
        %v1597 = vunpack.c.h.b16 %v713
        %v1598 = vunpack.c.l.b16 %v714
        %v1599 = vunpack.c.h.b16 %v714
        %v1600 = vunpack.c.l.b16 %v715
        %v1601 = vunpack.c.h.b16 %v715
        %v1602 = vunpack.c.l.b16 %v716
        %v1603 = vunpack.c.h.b16 %v716
        %v1604 = vunpack.c.l.b16 %v717
        %v1605 = vunpack.c.h.b16 %v717
        %v1606 = vunpack.c.l.b16 %v718
        %v1607 = vunpack.c.h.b16 %v718
        %v1608 = vunpack.c.l.b16 %v719
        %v1609 = vunpack.c.h.b16 %v719
        %v1610 = vunpack.c.l.b16 %v720
        %v1611 = vunpack.c.h.b16 %v720
        %v1612 = vunpack.c.l.b16 %v721
        %v1613 = vunpack.c.h.b16 %v721
        %v1614 = vunpack.c.l.b16 %v722
        %v1615 = vunpack.c.h.b16 %v722
        %v1616 = vunpack.c.l.b16 %v723
        %v1617 = vunpack.c.h.b16 %v723
        %v1618 = vunpack.c.l.b16 %v724
        %v1619 = vunpack.c.h.b16 %v724
        %v1620 = vunpack.c.l.b16 %v725
        %v1621 = vunpack.c.h.b16 %v725
        %v1622 = vunpack.c.l.b16 %v726
        %v1623 = vunpack.c.h.b16 %v726
        %v1624 = vunpack.c.l.b16 %v727
        %v1625 = vunpack.c.h.b16 %v727
        %v1626 = vunpack.c.l.b16 %v728
        %v1627 = vunpack.c.h.b16 %v728
        %v1628 = vunpack.c.l.b16 %v729
        %v1629 = vunpack.c.h.b16 %v729
        %v1630 = vunpack.c.l.b16 %v730
        %v1631 = vunpack.c.h.b16 %v730
        %v1632 = vunpack.c.l.b16 %v731
        %v1633 = vunpack.c.h.b16 %v731
        %v1634 = vunpack.c.l.b16 %v732
        %v1635 = vunpack.c.h.b16 %v732
        %v1636 = vunpack.c.l.b16 %v733
        %v1637 = vunpack.c.h.b16 %v733
        %v1638 = vunpack.c.l.b16 %v734
        %v1639 = vunpack.c.h.b16 %v734
        %v1640 = vunpack.c.l.b16 %v735
        %v1641 = vunpack.c.h.b16 %v735
        %v1642 = vunpack.c.l.b16 %v736
        %v1643 = vunpack.c.h.b16 %v736
        %v1644 = vunpack.c.l.b16 %v737
        %v1645 = vunpack.c.h.b16 %v737
        %v1646 = vunpack.c.l.b16 %v738
        %v1647 = vunpack.c.h.b16 %v738
        %v1648 = vunpack.c.l.b16 %v739
        %v1649 = vunpack.c.h.b16 %v739
        %v1650 = vunpack.c.l.b16 %v740
        %v1651 = vunpack.c.h.b16 %v740
        %v1652 = vunpack.c.l.b16 %v741
        %v1653 = vunpack.c.h.b16 %v741
        %v1654 = vunpack.c.l.b16 %v742
        %v1655 = vunpack.c.h.b16 %v742
        %v1656 = vunpack.c.l.b16 %v743
        %v1657 = vunpack.c.h.b16 %v743
        %v1658 = vunpack.c.l.b16 %v744
        %v1659 = vunpack.c.h.b16 %v744
        %v1660 = vunpack.c.l.b16 %v745
        %v1661 = vunpack.c.h.b16 %v745
        %v1662 = vunpack.c.l.b16 %v746
        %v1663 = vunpack.c.h.b16 %v746
        %v1664 = vunpack.c.l.b16 %v747
        %v1665 = vunpack.c.h.b16 %v747
        %v1666 = vunpack.c.l.b16 %v748
        %v1667 = vunpack.c.h.b16 %v748
        %v1668 = vunpack.c.l.b16 %v749
        %v1669 = vunpack.c.h.b16 %v749
        %v1670 = vunpack.c.l.b16 %v750
        %v1671 = vunpack.c.h.b16 %v750
        %v1672 = vunpack.c.l.b16 %v751
        %v1673 = vunpack.c.h.b16 %v751
        %v1674 = vunpack.c.l.b16 %v752
        %v1675 = vunpack.c.h.b16 %v752
        %v1676 = vunpack.c.l.b16 %v753
        %v1677 = vunpack.c.h.b16 %v753
        %v1678 = vunpack.c.l.b16 %v754
        %v1679 = vunpack.c.h.b16 %v754
        %v1680 = vunpack.c.l.b16 %v755
        %v1681 = vunpack.c.h.b16 %v755
        %v1682 = vunpack.c.l.b16 %v756
        %v1683 = vunpack.c.h.b16 %v756
        %v1684 = vunpack.c.l.b16 %v757
        %v1685 = vunpack.c.h.b16 %v757
        %v1686 = vunpack.c.l.b16 %v758
        %v1687 = vunpack.c.h.b16 %v758
        %v1688 = vunpack.c.l.b16 %v759
        %v1689 = vunpack.c.h.b16 %v759
        %v1690 = vunpack.c.l.b16 %v760
        %v1691 = vunpack.c.h.b16 %v760
        %v1692 = vunpack.c.l.b16 %v761
        %v1693 = vunpack.c.h.b16 %v761
        %v1694 = vunpack.c.l.b16 %v762
        %v1695 = vunpack.c.h.b16 %v762
        %v1696 = vunpack.c.l.b16 %v763
        %v1697 = vunpack.c.h.b16 %v763
        %v1698 = vunpack.c.l.b16 %v764
        %v1699 = vunpack.c.h.b16 %v764
        %v1700 = vunpack.c.l.b16 %v765
        %v1701 = vunpack.c.h.b16 %v765
        %v1702 = vunpack.c.l.b16 %v766
        %v1703 = vunpack.c.h.b16 %v766
        %v1704 = vunpack.c.l.b16 %v767
        %v1705 = vunpack.c.h.b16 %v767
        %v1706 = vunpack.c.l.b16 %v768
        %v1707 = vunpack.c.h.b16 %v768
        %v1708 = vunpack.c.l.b16 %v769
        %v1709 = vunpack.c.h.b16 %v769
        %v1710 = vunpack.c.l.b16 %v770
        %v1711 = vunpack.c.h.b16 %v770
        %v1712 = vunpack.c.l.b16 %v771
        %v1713 = vunpack.c.h.b16 %v771
        %v1714 = vunpack.c.l.b16 %v772
        %v1715 = vunpack.c.h.b16 %v772
        %v1716 = vunpack.c.l.b16 %v773
        %v1717 = vunpack.c.h.b16 %v773
        %v1718 = vunpack.c.l.b16 %v774
        %v1719 = vunpack.c.h.b16 %v774
        %v1720 = vunpack.c.l.b16 %v775
        %v1721 = vunpack.c.h.b16 %v775
        %v1722 = vunpack.c.l.b16 %v776
        %v1723 = vunpack.c.h.b16 %v776
        %v1724 = vunpack.c.l.b16 %v777
        %v1725 = vunpack.c.h.b16 %v777
        %v1726 = vunpack.c.l.b16 %v778
        %v1727 = vunpack.c.h.b16 %v778
        %v1728 = vunpack.c.l.b16 %v779
        %v1729 = vunpack.c.h.b16 %v779
        %v1730 = vunpack.c.l.b16 %v780
        %v1731 = vunpack.c.h.b16 %v780
        %v1732 = vunpack.c.l.b16 %v781
        %v1733 = vunpack.c.h.b16 %v781
        %v1734 = vunpack.c.l.b16 %v782
        %v1735 = vunpack.c.h.b16 %v782
        %v1736 = vunpack.c.l.b16 %v783
        %v1737 = vunpack.c.h.b16 %v783
        %v1738 = vpack.c.b16 %v1168, %v1162
        %v1739 = vpack.c.b16 %v1169, %v1163
        %v1740 = vpack.c.b16 %v1170, %v1164
        %v1741 = vpack.c.b16 %v1171, %v1165
        %v1742 = vpack.c.b16 %v1172, %v1166
        %v1743 = vpack.c.b16 %v1173, %v1167
        %v1744 = vpack.c.b16 %v1180, %v1174
        %v1745 = vpack.c.b16 %v1181, %v1175
        %v1746 = vpack.c.b16 %v1182, %v1176
        %v1747 = vpack.c.b16 %v1183, %v1177
        %v1748 = vpack.c.b16 %v1184, %v1178
        %v1749 = vpack.c.b16 %v1185, %v1179
        %v1750 = vpack.c.b16 %v1192, %v1186
        %v1751 = vpack.c.b16 %v1193, %v1187
        %v1752 = vpack.c.b16 %v1194, %v1188
        %v1753 = vpack.c.b16 %v1195, %v1189
        %v1754 = vpack.c.b16 %v1196, %v1190
        %v1755 = vpack.c.b16 %v1197, %v1191
        %v1756 = vpack.c.b16 %v1204, %v1198
        %v1757 = vpack.c.b16 %v1205, %v1199
        %v1758 = vpack.c.b16 %v1206, %v1200
        %v1759 = vpack.c.b16 %v1207, %v1201
        %v1760 = vpack.c.b16 %v1208, %v1202
        %v1761 = vpack.c.b16 %v1209, %v1203
        %v1762 = vpack.c.b16 %v1216, %v1210
        %v1763 = vpack.c.b16 %v1217, %v1211
        %v1764 = vpack.c.b16 %v1218, %v1212
        %v1765 = vpack.c.b16 %v1219, %v1213
        %v1766 = vpack.c.b16 %v1220, %v1214
        %v1767 = vpack.c.b16 %v1221, %v1215
        %v1768 = vpack.c.b16 %v1228, %v1222
        %v1769 = vpack.c.b16 %v1229, %v1223
        %v1770 = vpack.c.b16 %v1230, %v1224
        %v1771 = vpack.c.b16 %v1231, %v1225
        %v1772 = vpack.c.b16 %v1232, %v1226
        %v1773 = vpack.c.b16 %v1233, %v1227
        %v1774 = vpack.c.b16 %v1240, %v1234
        %v1775 = vpack.c.b16 %v1241, %v1235
        %v1776 = vpack.c.b16 %v1242, %v1236
        %v1777 = vpack.c.b16 %v1243, %v1237
        %v1778 = vpack.c.b16 %v1244, %v1238
        %v1779 = vpack.c.b16 %v1245, %v1239
        %v1780 = vpack.c.b16 %v1252, %v1246
        %v1781 = vpack.c.b16 %v1253, %v1247
        %v1782 = vpack.c.b16 %v1254, %v1248
        %v1783 = vpack.c.b16 %v1255, %v1249
        %v1784 = vpack.c.b16 %v1256, %v1250
        %v1785 = vpack.c.b16 %v1257, %v1251
        %v1786 = vpack.c.b16 %v1264, %v1258
        %v1787 = vpack.c.b16 %v1265, %v1259
        %v1788 = vpack.c.b16 %v1266, %v1260
        %v1789 = vpack.c.b16 %v1267, %v1261
        %v1790 = vpack.c.b16 %v1268, %v1262
        %v1791 = vpack.c.b16 %v1269, %v1263
        %v1792 = vpack.c.b16 %v1276, %v1270
        %v1793 = vpack.c.b16 %v1277, %v1271
        %v1794 = vpack.c.b16 %v1278, %v1272
        %v1795 = vpack.c.b16 %v1279, %v1273
        %v1796 = vpack.c.b16 %v1280, %v1274
        %v1797 = vpack.c.b16 %v1281, %v1275
        %v1798 = vpack.c.b16 %v1288, %v1282
        %v1799 = vpack.c.b16 %v1289, %v1283
        %v1800 = vpack.c.b16 %v1290, %v1284
        %v1801 = vpack.c.b16 %v1291, %v1285
        %v1802 = vpack.c.b16 %v1292, %v1286
        %v1803 = vpack.c.b16 %v1293, %v1287
        %v1804 = vpack.c.b16 %v1300, %v1294
        %v1805 = vpack.c.b16 %v1301, %v1295
        %v1806 = vpack.c.b16 %v1302, %v1296
        %v1807 = vpack.c.b16 %v1303, %v1297
        %v1808 = vpack.c.b16 %v1304, %v1298
        %v1809 = vpack.c.b16 %v1305, %v1299
        %v1810 = vpack.c.b16 %v1312, %v1306
        %v1811 = vpack.c.b16 %v1313, %v1307
        %v1812 = vpack.c.b16 %v1314, %v1308
        %v1813 = vpack.c.b16 %v1315, %v1309
        %v1814 = vpack.c.b16 %v1316, %v1310
        %v1815 = vpack.c.b16 %v1317, %v1311
        %v1816 = vpack.c.b16 %v1324, %v1318
        %v1817 = vpack.c.b16 %v1325, %v1319
        %v1818 = vpack.c.b16 %v1326, %v1320
        %v1819 = vpack.c.b16 %v1327, %v1321
        %v1820 = vpack.c.b16 %v1328, %v1322
        %v1821 = vpack.c.b16 %v1329, %v1323
        %v1822 = vpack.c.b16 %v1336, %v1330
        %v1823 = vpack.c.b16 %v1337, %v1331
        %v1824 = vpack.c.b16 %v1338, %v1332
        %v1825 = vpack.c.b16 %v1339, %v1333
        %v1826 = vpack.c.b16 %v1340, %v1334
        %v1827 = vpack.c.b16 %v1341, %v1335
        %v1828 = vpack.c.b16 %v1348, %v1342
        %v1829 = vpack.c.b16 %v1349, %v1343
        %v1830 = vpack.c.b16 %v1350, %v1344
        %v1831 = vpack.c.b16 %v1351, %v1345
        %v1832 = vpack.c.b16 %v1352, %v1346
        %v1833 = vpack.c.b16 %v1353, %v1347
        %v1834 = vpack.c.b16 %v1360, %v1354
        %v1835 = vpack.c.b16 %v1361, %v1355
        %v1836 = vpack.c.b16 %v1362, %v1356
        %v1837 = vpack.c.b16 %v1363, %v1357
        %v1838 = vpack.c.b16 %v1364, %v1358
        %v1839 = vpack.c.b16 %v1365, %v1359
        %v1840 = vpack.c.b16 %v1372, %v1366
        %v1841 = vpack.c.b16 %v1373, %v1367
        %v1842 = vpack.c.b16 %v1374, %v1368
        %v1843 = vpack.c.b16 %v1375, %v1369
        %v1844 = vpack.c.b16 %v1376, %v1370
        %v1845 = vpack.c.b16 %v1377, %v1371
        %v1846 = vpack.c.b16 %v1384, %v1378
        %v1847 = vpack.c.b16 %v1385, %v1379
        %v1848 = vpack.c.b16 %v1386, %v1380
        %v1849 = vpack.c.b16 %v1387, %v1381
        %v1850 = vpack.c.b16 %v1388, %v1382
        %v1851 = vpack.c.b16 %v1389, %v1383
        %v1852 = vpack.c.b16 %v1396, %v1390
        %v1853 = vpack.c.b16 %v1397, %v1391
        %v1854 = vpack.c.b16 %v1398, %v1392
        %v1855 = vpack.c.b16 %v1399, %v1393
        %v1856 = vpack.c.b16 %v1400, %v1394
        %v1857 = vpack.c.b16 %v1401, %v1395
        %v1858 = vpack.c.b16 %v1408, %v1402
        %v1859 = vpack.c.b16 %v1409, %v1403
        %v1860 = vpack.c.b16 %v1410, %v1404
        %v1861 = vpack.c.b16 %v1411, %v1405
        %v1862 = vpack.c.b16 %v1412, %v1406
        %v1863 = vpack.c.b16 %v1413, %v1407
        %v1864 = vpack.c.b16 %v1420, %v1414
        %v1865 = vpack.c.b16 %v1421, %v1415
        %v1866 = vpack.c.b16 %v1422, %v1416
        %v1867 = vpack.c.b16 %v1423, %v1417
        %v1868 = vpack.c.b16 %v1424, %v1418
        %v1869 = vpack.c.b16 %v1425, %v1419
        %v1870 = vpack.c.b16 %v1432, %v1426
        %v1871 = vpack.c.b16 %v1433, %v1427
        %v1872 = vpack.c.b16 %v1434, %v1428
        %v1873 = vpack.c.b16 %v1435, %v1429
        %v1874 = vpack.c.b16 %v1436, %v1430
        %v1875 = vpack.c.b16 %v1437, %v1431
        %v1876 = vpack.c.b16 %v1444, %v1438
        %v1877 = vpack.c.b16 %v1445, %v1439
        %v1878 = vpack.c.b16 %v1446, %v1440
        %v1879 = vpack.c.b16 %v1447, %v1441
        %v1880 = vpack.c.b16 %v1448, %v1442
        %v1881 = vpack.c.b16 %v1449, %v1443
        %v1882 = vpack.c.b16 %v1456, %v1450
        %v1883 = vpack.c.b16 %v1457, %v1451
        %v1884 = vpack.c.b16 %v1458, %v1452
        %v1885 = vpack.c.b16 %v1459, %v1453
        %v1886 = vpack.c.b16 %v1460, %v1454
        %v1887 = vpack.c.b16 %v1461, %v1455
        %v1888 = vpack.c.b16 %v1468, %v1462
        %v1889 = vpack.c.b16 %v1469, %v1463
        %v1890 = vpack.c.b16 %v1470, %v1464
        %v1891 = vpack.c.b16 %v1471, %v1465
        %v1892 = vpack.c.b16 %v1472, %v1466
        %v1893 = vpack.c.b16 %v1473, %v1467
        %v1894 = vpack.c.b16 %v1480, %v1474
        %v1895 = vpack.c.b16 %v1481, %v1475
        %v1896 = vpack.c.b16 %v1482, %v1476
        %v1897 = vpack.c.b16 %v1483, %v1477
        %v1898 = vpack.c.b16 %v1484, %v1478
        %v1899 = vpack.c.b16 %v1485, %v1479
        %v1900 = vpack.c.b16 %v1492, %v1486
        %v1901 = vpack.c.b16 %v1493, %v1487
        %v1902 = vpack.c.b16 %v1494, %v1488
        %v1903 = vpack.c.b16 %v1495, %v1489
        %v1904 = vpack.c.b16 %v1496, %v1490
        %v1905 = vpack.c.b16 %v1497, %v1491
        %v1906 = vpack.c.b16 %v1504, %v1498
        %v1907 = vpack.c.b16 %v1505, %v1499
        %v1908 = vpack.c.b16 %v1506, %v1500
        %v1909 = vpack.c.b16 %v1507, %v1501
        %v1910 = vpack.c.b16 %v1508, %v1502
        %v1911 = vpack.c.b16 %v1509, %v1503
        %v1912 = vpack.c.b16 %v1516, %v1510
        %v1913 = vpack.c.b16 %v1517, %v1511
        %v1914 = vpack.c.b16 %v1518, %v1512
        %v1915 = vpack.c.b16 %v1519, %v1513
        %v1916 = vpack.c.b16 %v1520, %v1514
        %v1917 = vpack.c.b16 %v1521, %v1515
        %v1918 = vpack.c.b16 %v1528, %v1522
        %v1919 = vpack.c.b16 %v1529, %v1523
        %v1920 = vpack.c.b16 %v1530, %v1524
        %v1921 = vpack.c.b16 %v1531, %v1525
        %v1922 = vpack.c.b16 %v1532, %v1526
        %v1923 = vpack.c.b16 %v1533, %v1527
        %v1924 = vpack.c.b16 %v1540, %v1534
        %v1925 = vpack.c.b16 %v1541, %v1535
        %v1926 = vpack.c.b16 %v1542, %v1536
        %v1927 = vpack.c.b16 %v1543, %v1537
        %v1928 = vpack.c.b16 %v1544, %v1538
        %v1929 = vpack.c.b16 %v1545, %v1539
        %v1930 = vpack.c.b16 %v1552, %v1546
        %v1931 = vpack.c.b16 %v1553, %v1547
        %v1932 = vpack.c.b16 %v1554, %v1548
        %v1933 = vpack.c.b16 %v1555, %v1549
        %v1934 = vpack.c.b16 %v1556, %v1550
        %v1935 = vpack.c.b16 %v1557, %v1551
        %v1936 = vpack.c.b16 %v1564, %v1558
        %v1937 = vpack.c.b16 %v1565, %v1559
        %v1938 = vpack.c.b16 %v1566, %v1560
        %v1939 = vpack.c.b16 %v1567, %v1561
        %v1940 = vpack.c.b16 %v1568, %v1562
        %v1941 = vpack.c.b16 %v1569, %v1563
        %v1942 = vpack.c.b16 %v1576, %v1570
        %v1943 = vpack.c.b16 %v1577, %v1571
        %v1944 = vpack.c.b16 %v1578, %v1572
        %v1945 = vpack.c.b16 %v1579, %v1573
        %v1946 = vpack.c.b16 %v1580, %v1574
        %v1947 = vpack.c.b16 %v1581, %v1575
        %v1948 = vpack.c.b16 %v1588, %v1582
        %v1949 = vpack.c.b16 %v1589, %v1583
        %v1950 = vpack.c.b16 %v1590, %v1584
        %v1951 = vpack.c.b16 %v1591, %v1585
        %v1952 = vpack.c.b16 %v1592, %v1586
        %v1953 = vpack.c.b16 %v1593, %v1587
        %v1954 = vpack.c.b16 %v1600, %v1594
        %v1955 = vpack.c.b16 %v1601, %v1595
        %v1956 = vpack.c.b16 %v1602, %v1596
        %v1957 = vpack.c.b16 %v1603, %v1597
        %v1958 = vpack.c.b16 %v1604, %v1598
        %v1959 = vpack.c.b16 %v1605, %v1599
        %v1960 = vpack.c.b16 %v1612, %v1606
        %v1961 = vpack.c.b16 %v1613, %v1607
        %v1962 = vpack.c.b16 %v1614, %v1608
        %v1963 = vpack.c.b16 %v1615, %v1609
        %v1964 = vpack.c.b16 %v1616, %v1610
        %v1965 = vpack.c.b16 %v1617, %v1611
        %v1966 = vpack.c.b16 %v1624, %v1618
        %v1967 = vpack.c.b16 %v1625, %v1619
        %v1968 = vpack.c.b16 %v1626, %v1620
        %v1969 = vpack.c.b16 %v1627, %v1621
        %v1970 = vpack.c.b16 %v1628, %v1622
        %v1971 = vpack.c.b16 %v1629, %v1623
        %v1972 = vpack.c.b16 %v1636, %v1630
        %v1973 = vpack.c.b16 %v1637, %v1631
        %v1974 = vpack.c.b16 %v1638, %v1632
        %v1975 = vpack.c.b16 %v1639, %v1633
        %v1976 = vpack.c.b16 %v1640, %v1634
        %v1977 = vpack.c.b16 %v1641, %v1635
        %v1978 = vpack.c.b16 %v1648, %v1642
        %v1979 = vpack.c.b16 %v1649, %v1643
        %v1980 = vpack.c.b16 %v1650, %v1644
        %v1981 = vpack.c.b16 %v1651, %v1645
        %v1982 = vpack.c.b16 %v1652, %v1646
        %v1983 = vpack.c.b16 %v1653, %v1647
        %v1984 = vpack.c.b16 %v1660, %v1654
        %v1985 = vpack.c.b16 %v1661, %v1655
        %v1986 = vpack.c.b16 %v1662, %v1656
        %v1987 = vpack.c.b16 %v1663, %v1657
        %v1988 = vpack.c.b16 %v1664, %v1658
        %v1989 = vpack.c.b16 %v1665, %v1659
        %v1990 = vpack.c.b16 %v1672, %v1666
        %v1991 = vpack.c.b16 %v1673, %v1667
        %v1992 = vpack.c.b16 %v1674, %v1668
        %v1993 = vpack.c.b16 %v1675, %v1669
        %v1994 = vpack.c.b16 %v1676, %v1670
        %v1995 = vpack.c.b16 %v1677, %v1671
        %v1996 = vpack.c.b16 %v1684, %v1678
        %v1997 = vpack.c.b16 %v1685, %v1679
        %v1998 = vpack.c.b16 %v1686, %v1680
        %v1999 = vpack.c.b16 %v1687, %v1681
        %v2000 = vpack.c.b16 %v1688, %v1682
        %v2001 = vpack.c.b16 %v1689, %v1683
        %v2002 = vpack.c.b16 %v1696, %v1690
        %v2003 = vpack.c.b16 %v1697, %v1691
        %v2004 = vpack.c.b16 %v1698, %v1692
        %v2005 = vpack.c.b16 %v1699, %v1693
        %v2006 = vpack.c.b16 %v1700, %v1694
        %v2007 = vpack.c.b16 %v1701, %v1695
        %v2008 = vpack.c.b16 %v1708, %v1702
        %v2009 = vpack.c.b16 %v1709, %v1703
        %v2010 = vpack.c.b16 %v1710, %v1704
        %v2011 = vpack.c.b16 %v1711, %v1705
        %v2012 = vpack.c.b16 %v1712, %v1706
        %v2013 = vpack.c.b16 %v1713, %v1707
        %v2014 = vpack.c.b16 %v1720, %v1714
        %v2015 = vpack.c.b16 %v1721, %v1715
        %v2016 = vpack.c.b16 %v1722, %v1716
        %v2017 = vpack.c.b16 %v1723, %v1717
        %v2018 = vpack.c.b16 %v1724, %v1718
        %v2019 = vpack.c.b16 %v1725, %v1719
        %v2020 = vpack.c.b16 %v1732, %v1726
        %v2021 = vpack.c.b16 %v1733, %v1727
        %v2022 = vpack.c.b16 %v1734, %v1728
        %v2023 = vpack.c.b16 %v1735, %v1729
        %v2024 = vpack.c.b16 %v1736, %v1730
        %v2025 = vpack.c.b16 %v1737, %v1731
        %2314 = vmatprep.subr.bf16.mxu0 %v1739
        %2315 = vmatpush1.bf16.msra.mxu0 %v1738
        %2316 = vmatprep.subr.bf16.mxu0 %v1745
        %2317 = vmatpush1.bf16.msra.mxu0 %v1744
        %2318 = vmatprep.subr.bf16.mxu0 %v1751
        %2319 = vmatpush1.bf16.msra.mxu0 %v1750
        %2320 = vmatprep.subr.bf16.mxu0 %v1757
        %2321 = vmatpush1.bf16.msra.mxu0 %v1756
        %2322 = vmatprep.subr.bf16.mxu0 %v1763
        %2323 = vmatpush1.bf16.msra.mxu0 %v1762
        %2324 = vmatprep.subr.bf16.mxu0 %v1769
        %2325 = vmatpush1.bf16.msra.mxu0 %v1768
        %2326 = vmatprep.subr.bf16.mxu0 %v1775
        %2327 = vmatpush1.bf16.msra.mxu0 %v1774
        %2328 = vmatprep.subr.bf16.mxu0 %v1781
        %2329 = vmatpush1.bf16.msra.mxu0 %v1780
        %2330 = vmatprep.subr.bf16.mxu0 %v1787
        %2331 = vmatpush1.bf16.msra.mxu0 %v1786
        %2332 = vmatprep.subr.bf16.mxu0 %v1793
        %2333 = vmatpush1.bf16.msra.mxu0 %v1792
        %2334 = vmatprep.subr.bf16.mxu0 %v1799
        %2335 = vmatpush1.bf16.msra.mxu0 %v1798
        %2336 = vmatprep.subr.bf16.mxu0 %v1805
        %2337 = vmatpush1.bf16.msra.mxu0 %v1804
        %2338 = vmatprep.subr.bf16.mxu0 %v1811
        %2339 = vmatpush1.bf16.msra.mxu0 %v1810
        %2340 = vmatprep.subr.bf16.mxu0 %v1817
        %2341 = vmatpush1.bf16.msra.mxu0 %v1816
        %2342 = vmatprep.subr.bf16.mxu0 %v1823
        %2343 = vmatpush1.bf16.msra.mxu0 %v1822
        %2344 = vmatprep.subr.bf16.mxu0 %v1829
        %2345 = vmatpush1.bf16.msra.mxu0 %v1828
        %2346 = vmatprep.mubr.bf16.mxu0 %v839
        %2347 = vmatmul.mubr.bf16.gmra.mrb[0].mxu0 %v838
        %v2348 = vpop.f32.mrb[0].mxu0
        %v2349 = vadd.f32 0.0, %v2348
        %v2350 = vpop.f32.mrb[0].mxu0
        %v2351 = vadd.f32 0.0, %v2350
        %v2352 = vpop.f32.mrb[0].mxu0
        %v2353 = vadd.f32 0.0, %v2352
        %v2354 = vpop.f32.mrb[0].mxu0
        %v2355 = vadd.f32 0.0, %v2354
        %2356 = vmatprep.mubr.bf16.mxu0 %v845
        %2357 = vmatmul.mubr.bf16.gmra.mrb[0].mxu0 %v844
        %v2358 = vpop.f32.mrb[0].mxu0
        %v2359 = vpop.f32.mrb[0].mxu0
        %v2360 = vpop.f32.mrb[0].mxu0
        %v2361 = vadd.f32 0.0, %v2360
        %v2362 = vpop.f32.mrb[0].mxu0
        %v2363 = vadd.f32 0.0, %v2362
        %2364 = vmatprep.mubr.bf16.mxu0 %v851
        %2365 = vmatmul.mubr.bf16.gmra.mrb[0].mxu0 %v850
        %v2366 = vpop.f32.mrb[0].mxu0
        %v2367 = vadd.f32 0.0, %v2366
        %v2368 = vpop.f32.mrb[0].mxu0
        %v2369 = vadd.f32 0.0, %v2368
        %v2370 = vpop.f32.mrb[0].mxu0
        %v2371 = vpop.f32.mrb[0].mxu0
        %2372 = vdwg.mxu0
        %2373 = vmatprep.subr.bf16.mxu0 %v1835
        %2374 = vmatpush1.bf16.msra.mxu0 %v1834
        %2375 = vmatprep.subr.bf16.mxu0 %v1841
        %2376 = vmatpush1.bf16.msra.mxu0 %v1840
        %2377 = vmatprep.subr.bf16.mxu0 %v1847
        %2378 = vmatpush1.bf16.msra.mxu0 %v1846
        %2379 = vmatprep.subr.bf16.mxu0 %v1853
        %2380 = vmatpush1.bf16.msra.mxu0 %v1852
        %2381 = vmatprep.subr.bf16.mxu0 %v1859
        %2382 = vmatpush1.bf16.msra.mxu0 %v1858
        %2383 = vmatprep.subr.bf16.mxu0 %v1865
        %2384 = vmatpush1.bf16.msra.mxu0 %v1864
        %2385 = vmatprep.subr.bf16.mxu0 %v1871
        %2386 = vmatpush1.bf16.msra.mxu0 %v1870
        %2387 = vmatprep.subr.bf16.mxu0 %v1877
        %2388 = vmatpush1.bf16.msra.mxu0 %v1876
        %2389 = vmatprep.subr.bf16.mxu0 %v1883
        %2390 = vmatpush1.bf16.msra.mxu0 %v1882
        %2391 = vmatprep.subr.bf16.mxu0 %v1889
        %2392 = vmatpush1.bf16.msra.mxu0 %v1888
        %2393 = vmatprep.subr.bf16.mxu0 %v1895
        %2394 = vmatpush1.bf16.msra.mxu0 %v1894
        %2395 = vmatprep.subr.bf16.mxu0 %v1901
        %2396 = vmatpush1.bf16.msra.mxu0 %v1900
        %2397 = vmatprep.subr.bf16.mxu0 %v1907
        %2398 = vmatpush1.bf16.msra.mxu0 %v1906
        %2399 = vmatprep.subr.bf16.mxu0 %v1913
        %2400 = vmatpush1.bf16.msra.mxu0 %v1912
        %2401 = vmatprep.subr.bf16.mxu0 %v1919
        %2402 = vmatpush1.bf16.msra.mxu0 %v1918
        %2403 = vmatprep.subr.bf16.mxu0 %v1925
        %2404 = vmatpush1.bf16.msra.mxu0 %v1924
        %2405 = vmatprep.mubr.bf16.mxu0 %v841
        %2406 = vmatmul.mubr.bf16.gmra.mrb[0].mxu0 %v840
        %v2407 = vpop.f32.mrb[0].mxu0
        %v2408 = vadd.f32 %v2349, %v2407
        %v2409 = vpop.f32.mrb[0].mxu0
        %v2410 = vadd.f32 %v2351, %v2409
        %v2411 = vpop.f32.mrb[0].mxu0
        %v2412 = vadd.f32 %v2353, %v2411
        %v2413 = vpop.f32.mrb[0].mxu0
        %v2414 = vadd.f32 %v2355, %v2413
        %2415 = vmatprep.mubr.bf16.mxu0 %v847
        %2416 = vmatmul.mubr.bf16.gmra.mrb[0].mxu0 %v846
        %v2417 = vpop.f32.mrb[0].mxu0
        %v2418 = vpop.f32.mrb[0].mxu0
        %v2419 = vpop.f32.mrb[0].mxu0
        %v2420 = vadd.f32 %v2361, %v2419
        %v2421 = vpop.f32.mrb[0].mxu0
        %v2422 = vadd.f32 %v2363, %v2421
        %2423 = vmatprep.mubr.bf16.mxu0 %v853
        %2424 = vmatmul.mubr.bf16.gmra.mrb[0].mxu0 %v852
        %v2425 = vpop.f32.mrb[0].mxu0
        %v2426 = vadd.f32 %v2367, %v2425
        %v2427 = vpop.f32.mrb[0].mxu0
        %v2428 = vadd.f32 %v2369, %v2427
        %v2429 = vpop.f32.mrb[0].mxu0
        %v2430 = vpop.f32.mrb[0].mxu0
        %2431 = vdwg.mxu0
        %2432 = vmatprep.subr.bf16.mxu0 %v1931
        %2433 = vmatpush1.bf16.msra.mxu0 %v1930
        %2434 = vmatprep.subr.bf16.mxu0 %v1937
        %2435 = vmatpush1.bf16.msra.mxu0 %v1936
        %2436 = vmatprep.subr.bf16.mxu0 %v1943
        %2437 = vmatpush1.bf16.msra.mxu0 %v1942
        %2438 = vmatprep.subr.bf16.mxu0 %v1949
        %2439 = vmatpush1.bf16.msra.mxu0 %v1948
        %2440 = vmatprep.subr.bf16.mxu0 %v1955
        %2441 = vmatpush1.bf16.msra.mxu0 %v1954
        %2442 = vmatprep.subr.bf16.mxu0 %v1961
        %2443 = vmatpush1.bf16.msra.mxu0 %v1960
        %2444 = vmatprep.subr.bf16.mxu0 %v1967
        %2445 = vmatpush1.bf16.msra.mxu0 %v1966
        %2446 = vmatprep.subr.bf16.mxu0 %v1973
        %2447 = vmatpush1.bf16.msra.mxu0 %v1972
        %2448 = vmatprep.subr.bf16.mxu0 %v1979
        %2449 = vmatpush1.bf16.msra.mxu0 %v1978
        %2450 = vmatprep.subr.bf16.mxu0 %v1985
        %2451 = vmatpush1.bf16.msra.mxu0 %v1984
        %2452 = vmatprep.subr.bf16.mxu0 %v1991
        %2453 = vmatpush1.bf16.msra.mxu0 %v1990
        %2454 = vmatprep.subr.bf16.mxu0 %v1997
        %2455 = vmatpush1.bf16.msra.mxu0 %v1996
        %2456 = vmatprep.subr.bf16.mxu0 %v2003
        %2457 = vmatpush1.bf16.msra.mxu0 %v2002
        %2458 = vmatprep.subr.bf16.mxu0 %v2009
        %2459 = vmatpush1.bf16.msra.mxu0 %v2008
        %2460 = vmatprep.subr.bf16.mxu0 %v2015
        %2461 = vmatpush1.bf16.msra.mxu0 %v2014
        %2462 = vmatprep.subr.bf16.mxu0 %v2021
        %2463 = vmatpush1.bf16.msra.mxu0 %v2020
        %2464 = vmatprep.mubr.bf16.mxu0 %v843
        %2465 = vmatmul.mubr.bf16.gmra.mrb[0].mxu0 %v842
        %v2466 = vpop.f32.mrb[0].mxu0
        %v2467 = vadd.f32 %v2408, %v2466
        %v2468 = vpop.f32.mrb[0].mxu0
        %v2469 = vadd.f32 %v2410, %v2468
        %v2470 = vpop.f32.mrb[0].mxu0
        %v2471 = vadd.f32 %v2412, %v2470
        %v2472 = vpop.f32.mrb[0].mxu0
        %v2473 = vadd.f32 %v2414, %v2472
        %2474 = vmatprep.mubr.bf16.mxu0 %v849
        %2475 = vmatmul.mubr.bf16.gmra.mrb[0].mxu0 %v848
        %v2476 = vpop.f32.mrb[0].mxu0
        %v2477 = vpop.f32.mrb[0].mxu0
        %v2478 = vpop.f32.mrb[0].mxu0
        %v2479 = vadd.f32 %v2420, %v2478
        %v2480 = vpop.f32.mrb[0].mxu0
        %v2481 = vadd.f32 %v2422, %v2480
        %2482 = vmatprep.mubr.bf16.mxu0 %v855
        %2483 = vmatmul.mubr.bf16.gmra.mrb[0].mxu0 %v854
        %v2484 = vpop.f32.mrb[0].mxu0
        %v2485 = vadd.f32 %v2426, %v2484
        %v2486 = vpop.f32.mrb[0].mxu0
        %v2487 = vadd.f32 %v2428, %v2486
        %v2488 = vpop.f32.mrb[0].mxu0
        %v2489 = vpop.f32.mrb[0].mxu0
        %2490 = vdwg.mxu0
        %2491 = vmatprep.subr.bf16.mxu0 %v1741
        %2492 = vmatpush1.bf16.msra.mxu0 %v1740
        %2493 = vmatprep.subr.bf16.mxu0 %v1747
        %2494 = vmatpush1.bf16.msra.mxu0 %v1746
        %2495 = vmatprep.subr.bf16.mxu0 %v1753
        %2496 = vmatpush1.bf16.msra.mxu0 %v1752
        %2497 = vmatprep.subr.bf16.mxu0 %v1759
        %2498 = vmatpush1.bf16.msra.mxu0 %v1758
        %2499 = vmatprep.subr.bf16.mxu0 %v1765
        %2500 = vmatpush1.bf16.msra.mxu0 %v1764
        %2501 = vmatprep.subr.bf16.mxu0 %v1771
        %2502 = vmatpush1.bf16.msra.mxu0 %v1770
        %2503 = vmatprep.subr.bf16.mxu0 %v1777
        %2504 = vmatpush1.bf16.msra.mxu0 %v1776
        %2505 = vmatprep.subr.bf16.mxu0 %v1783
        %2506 = vmatpush1.bf16.msra.mxu0 %v1782
        %2507 = vmatprep.subr.bf16.mxu0 %v1789
        %2508 = vmatpush1.bf16.msra.mxu0 %v1788
        %2509 = vmatprep.subr.bf16.mxu0 %v1795
        %2510 = vmatpush1.bf16.msra.mxu0 %v1794
        %2511 = vmatprep.subr.bf16.mxu0 %v1801
        %2512 = vmatpush1.bf16.msra.mxu0 %v1800
        %2513 = vmatprep.subr.bf16.mxu0 %v1807
        %2514 = vmatpush1.bf16.msra.mxu0 %v1806
        %2515 = vmatprep.subr.bf16.mxu0 %v1813
        %2516 = vmatpush1.bf16.msra.mxu0 %v1812
        %2517 = vmatprep.subr.bf16.mxu0 %v1819
        %2518 = vmatpush1.bf16.msra.mxu0 %v1818
        %2519 = vmatprep.subr.bf16.mxu0 %v1825
        %2520 = vmatpush1.bf16.msra.mxu0 %v1824
        %2521 = vmatprep.subr.bf16.mxu0 %v1831
        %2522 = vmatpush1.bf16.msra.mxu0 %v1830
        %2523 = vmatprep.mubr.bf16.mxu0 %v839
        %2524 = vmatmul.mubr.bf16.gmra.mrb[0].mxu0 %v838
        %v2525 = vpop.f32.mrb[0].mxu0
        %v2526 = vpop.f32.mrb[0].mxu0
        %v2527 = vpop.f32.mrb[0].mxu0
        %v2528 = vadd.f32 0.0, %v2527
        %v2529 = vpop.f32.mrb[0].mxu0
        %v2530 = vadd.f32 0.0, %v2529
        %2531 = vmatprep.mubr.bf16.mxu0 %v845
        %2532 = vmatmul.mubr.bf16.gmra.mrb[0].mxu0 %v844
        %v2533 = vpop.f32.mrb[0].mxu0
        %v2534 = vpop.f32.mrb[0].mxu0
        %v2535 = vpop.f32.mrb[0].mxu0
        %v2536 = vpop.f32.mrb[0].mxu0
        %2537 = vmatprep.mubr.bf16.mxu0 %v851
        %2538 = vmatmul.mubr.bf16.gmra.mrb[0].mxu0 %v850
        %v2539 = vpop.f32.mrb[0].mxu0
        %v2540 = vadd.f32 0.0, %v2539
        %v2541 = vpop.f32.mrb[0].mxu0
        %v2542 = vadd.f32 0.0, %v2541
        %v2543 = vpop.f32.mrb[0].mxu0
        %v2544 = vpop.f32.mrb[0].mxu0
        %2545 = vdwg.mxu0
        %2546 = vmatprep.subr.bf16.mxu0 %v1837
        %2547 = vmatpush1.bf16.msra.mxu0 %v1836
        %2548 = vmatprep.subr.bf16.mxu0 %v1843
        %2549 = vmatpush1.bf16.msra.mxu0 %v1842
        %2550 = vmatprep.subr.bf16.mxu0 %v1849
        %2551 = vmatpush1.bf16.msra.mxu0 %v1848
        %2552 = vmatprep.subr.bf16.mxu0 %v1855
        %2553 = vmatpush1.bf16.msra.mxu0 %v1854
        %2554 = vmatprep.subr.bf16.mxu0 %v1861
        %2555 = vmatpush1.bf16.msra.mxu0 %v1860
        %2556 = vmatprep.subr.bf16.mxu0 %v1867
        %2557 = vmatpush1.bf16.msra.mxu0 %v1866
        %2558 = vmatprep.subr.bf16.mxu0 %v1873
        %2559 = vmatpush1.bf16.msra.mxu0 %v1872
        %2560 = vmatprep.subr.bf16.mxu0 %v1879
        %2561 = vmatpush1.bf16.msra.mxu0 %v1878
        %2562 = vmatprep.subr.bf16.mxu0 %v1885
        %2563 = vmatpush1.bf16.msra.mxu0 %v1884
        %2564 = vmatprep.subr.bf16.mxu0 %v1891
        %2565 = vmatpush1.bf16.msra.mxu0 %v1890
        %2566 = vmatprep.subr.bf16.mxu0 %v1897
        %2567 = vmatpush1.bf16.msra.mxu0 %v1896
        %2568 = vmatprep.subr.bf16.mxu0 %v1903
        %2569 = vmatpush1.bf16.msra.mxu0 %v1902
        %2570 = vmatprep.subr.bf16.mxu0 %v1909
        %2571 = vmatpush1.bf16.msra.mxu0 %v1908
        %2572 = vmatprep.subr.bf16.mxu0 %v1915
        %2573 = vmatpush1.bf16.msra.mxu0 %v1914
        %2574 = vmatprep.subr.bf16.mxu0 %v1921
        %2575 = vmatpush1.bf16.msra.mxu0 %v1920
        %2576 = vmatprep.subr.bf16.mxu0 %v1927
        %2577 = vmatpush1.bf16.msra.mxu0 %v1926
        %2578 = vmatprep.mubr.bf16.mxu0 %v841
        %2579 = vmatmul.mubr.bf16.gmra.mrb[0].mxu0 %v840
        %v2580 = vpop.f32.mrb[0].mxu0
        %v2581 = vpop.f32.mrb[0].mxu0
        %v2582 = vpop.f32.mrb[0].mxu0
        %v2583 = vadd.f32 %v2528, %v2582
        %v2584 = vpop.f32.mrb[0].mxu0
        %v2585 = vadd.f32 %v2530, %v2584
        %2586 = vmatprep.mubr.bf16.mxu0 %v847
        %2587 = vmatmul.mubr.bf16.gmra.mrb[0].mxu0 %v846
        %v2588 = vpop.f32.mrb[0].mxu0
        %v2589 = vpop.f32.mrb[0].mxu0
        %v2590 = vpop.f32.mrb[0].mxu0
        %v2591 = vpop.f32.mrb[0].mxu0
        %2592 = vmatprep.mubr.bf16.mxu0 %v853
        %2593 = vmatmul.mubr.bf16.gmra.mrb[0].mxu0 %v852
        %v2594 = vpop.f32.mrb[0].mxu0
        %v2595 = vadd.f32 %v2540, %v2594
        %v2596 = vpop.f32.mrb[0].mxu0
        %v2597 = vadd.f32 %v2542, %v2596
        %v2598 = vpop.f32.mrb[0].mxu0
        %v2599 = vpop.f32.mrb[0].mxu0
        %2600 = vdwg.mxu0
        %2601 = vmatprep.subr.bf16.mxu0 %v1933
        %2602 = vmatpush1.bf16.msra.mxu0 %v1932
        %2603 = vmatprep.subr.bf16.mxu0 %v1939
        %2604 = vmatpush1.bf16.msra.mxu0 %v1938
        %2605 = vmatprep.subr.bf16.mxu0 %v1945
        %2606 = vmatpush1.bf16.msra.mxu0 %v1944
        %2607 = vmatprep.subr.bf16.mxu0 %v1951
        %2608 = vmatpush1.bf16.msra.mxu0 %v1950
        %2609 = vmatprep.subr.bf16.mxu0 %v1957
        %2610 = vmatpush1.bf16.msra.mxu0 %v1956
        %2611 = vmatprep.subr.bf16.mxu0 %v1963
        %2612 = vmatpush1.bf16.msra.mxu0 %v1962
        %2613 = vmatprep.subr.bf16.mxu0 %v1969
        %2614 = vmatpush1.bf16.msra.mxu0 %v1968
        %2615 = vmatprep.subr.bf16.mxu0 %v1975
        %2616 = vmatpush1.bf16.msra.mxu0 %v1974
        %2617 = vmatprep.subr.bf16.mxu0 %v1981
        %2618 = vmatpush1.bf16.msra.mxu0 %v1980
        %2619 = vmatprep.subr.bf16.mxu0 %v1987
        %2620 = vmatpush1.bf16.msra.mxu0 %v1986
        %2621 = vmatprep.subr.bf16.mxu0 %v1993
        %2622 = vmatpush1.bf16.msra.mxu0 %v1992
        %2623 = vmatprep.subr.bf16.mxu0 %v1999
        %2624 = vmatpush1.bf16.msra.mxu0 %v1998
        %2625 = vmatprep.subr.bf16.mxu0 %v2005
        %2626 = vmatpush1.bf16.msra.mxu0 %v2004
        %2627 = vmatprep.subr.bf16.mxu0 %v2011
        %2628 = vmatpush1.bf16.msra.mxu0 %v2010
        %2629 = vmatprep.subr.bf16.mxu0 %v2017
        %2630 = vmatpush1.bf16.msra.mxu0 %v2016
        %2631 = vmatprep.subr.bf16.mxu0 %v2023
        %2632 = vmatpush1.bf16.msra.mxu0 %v2022
        %2633 = vmatprep.mubr.bf16.mxu0 %v843
        %2634 = vmatmul.mubr.bf16.gmra.mrb[0].mxu0 %v842
        %v2635 = vpop.f32.mrb[0].mxu0
        %v2636 = vpop.f32.mrb[0].mxu0
        %v2637 = vpop.f32.mrb[0].mxu0
        %v2638 = vadd.f32 %v2583, %v2637
        %v2639 = vpop.f32.mrb[0].mxu0
        %v2640 = vadd.f32 %v2585, %v2639
        %2641 = vmatprep.mubr.bf16.mxu0 %v849
        %2642 = vmatmul.mubr.bf16.gmra.mrb[0].mxu0 %v848
        %v2643 = vpop.f32.mrb[0].mxu0
        %v2644 = vpop.f32.mrb[0].mxu0
        %v2645 = vpop.f32.mrb[0].mxu0
        %v2646 = vpop.f32.mrb[0].mxu0
        %2647 = vmatprep.mubr.bf16.mxu0 %v855
        %2648 = vmatmul.mubr.bf16.gmra.mrb[0].mxu0 %v854
        %v2649 = vpop.f32.mrb[0].mxu0
        %v2650 = vadd.f32 %v2595, %v2649
        %v2651 = vpop.f32.mrb[0].mxu0
        %v2652 = vadd.f32 %v2597, %v2651
        %v2653 = vpop.f32.mrb[0].mxu0
        %v2654 = vpop.f32.mrb[0].mxu0
        %2655 = vdwg.mxu0
        %2656 = vmatprep.subr.bf16.mxu0 %v1743
        %2657 = vmatpush1.bf16.msra.mxu0 %v1742
        %2658 = vmatprep.subr.bf16.mxu0 %v1749
        %2659 = vmatpush1.bf16.msra.mxu0 %v1748
        %2660 = vmatprep.subr.bf16.mxu0 %v1755
        %2661 = vmatpush1.bf16.msra.mxu0 %v1754
        %2662 = vmatprep.subr.bf16.mxu0 %v1761
        %2663 = vmatpush1.bf16.msra.mxu0 %v1760
        %2664 = vmatprep.subr.bf16.mxu0 %v1767
        %2665 = vmatpush1.bf16.msra.mxu0 %v1766
        %2666 = vmatprep.subr.bf16.mxu0 %v1773
        %2667 = vmatpush1.bf16.msra.mxu0 %v1772
        %2668 = vmatprep.subr.bf16.mxu0 %v1779
        %2669 = vmatpush1.bf16.msra.mxu0 %v1778
        %2670 = vmatprep.subr.bf16.mxu0 %v1785
        %2671 = vmatpush1.bf16.msra.mxu0 %v1784
        %2672 = vmatprep.subr.bf16.mxu0 %v1791
        %2673 = vmatpush1.bf16.msra.mxu0 %v1790
        %2674 = vmatprep.subr.bf16.mxu0 %v1797
        %2675 = vmatpush1.bf16.msra.mxu0 %v1796
        %2676 = vmatprep.subr.bf16.mxu0 %v1803
        %2677 = vmatpush1.bf16.msra.mxu0 %v1802
        %2678 = vmatprep.subr.bf16.mxu0 %v1809
        %2679 = vmatpush1.bf16.msra.mxu0 %v1808
        %2680 = vmatprep.subr.bf16.mxu0 %v1815
        %2681 = vmatpush1.bf16.msra.mxu0 %v1814
        %2682 = vmatprep.subr.bf16.mxu0 %v1821
        %2683 = vmatpush1.bf16.msra.mxu0 %v1820
        %2684 = vmatprep.subr.bf16.mxu0 %v1827
        %2685 = vmatpush1.bf16.msra.mxu0 %v1826
        %2686 = vmatprep.subr.bf16.mxu0 %v1833
        %2687 = vmatpush1.bf16.msra.mxu0 %v1832
        %2688 = vmatprep.mubr.bf16.mxu0 %v839
        %2689 = vmatmul.mubr.bf16.gmra.mrb[0].mxu0 %v838
        %v2690 = vpop.f32.mrb[0].mxu0
        %v2691 = vpop.f32.mrb[0].mxu0
        %v2692 = vpop.f32.mrb[0].mxu0
        %v2693 = vadd.f32 0.0, %v2692
        %v2694 = vpop.f32.mrb[0].mxu0
        %v2695 = vadd.f32 0.0, %v2694
        %2696 = vmatprep.mubr.bf16.mxu0 %v845
        %2697 = vmatmul.mubr.bf16.gmra.mrb[0].mxu0 %v844
        %v2698 = vpop.f32.mrb[0].mxu0
        %v2699 = vadd.f32 0.0, %v2698
        %v2700 = vpop.f32.mrb[0].mxu0
        %v2701 = vadd.f32 0.0, %v2700
        %v2702 = vpop.f32.mrb[0].mxu0
        %v2703 = vpop.f32.mrb[0].mxu0
        %2704 = vmatprep.mubr.bf16.mxu0 %v851
        %2705 = vmatmul.mubr.bf16.gmra.mrb[0].mxu0 %v850
        %v2706 = vpop.f32.mrb[0].mxu0
        %v2707 = vadd.f32 0.0, %v2706
        %v2708 = vpop.f32.mrb[0].mxu0
        %v2709 = vadd.f32 0.0, %v2708
        %v2710 = vpop.f32.mrb[0].mxu0
        %v2711 = vadd.f32 0.0, %v2710
        %v2712 = vpop.f32.mrb[0].mxu0
        %v2713 = vadd.f32 0.0, %v2712
        %2714 = vdwg.mxu0
        %2715 = vmatprep.subr.bf16.mxu0 %v1839
        %2716 = vmatpush1.bf16.msra.mxu0 %v1838
        %2717 = vmatprep.subr.bf16.mxu0 %v1845
        %2718 = vmatpush1.bf16.msra.mxu0 %v1844
        %2719 = vmatprep.subr.bf16.mxu0 %v1851
        %2720 = vmatpush1.bf16.msra.mxu0 %v1850
        %2721 = vmatprep.subr.bf16.mxu0 %v1857
        %2722 = vmatpush1.bf16.msra.mxu0 %v1856
        %2723 = vmatprep.subr.bf16.mxu0 %v1863
        %2724 = vmatpush1.bf16.msra.mxu0 %v1862
        %2725 = vmatprep.subr.bf16.mxu0 %v1869
        %2726 = vmatpush1.bf16.msra.mxu0 %v1868
        %2727 = vmatprep.subr.bf16.mxu0 %v1875
        %2728 = vmatpush1.bf16.msra.mxu0 %v1874
        %2729 = vmatprep.subr.bf16.mxu0 %v1881
        %2730 = vmatpush1.bf16.msra.mxu0 %v1880
        %2731 = vmatprep.subr.bf16.mxu0 %v1887
        %2732 = vmatpush1.bf16.msra.mxu0 %v1886
        %2733 = vmatprep.subr.bf16.mxu0 %v1893
        %2734 = vmatpush1.bf16.msra.mxu0 %v1892
        %2735 = vmatprep.subr.bf16.mxu0 %v1899
        %2736 = vmatpush1.bf16.msra.mxu0 %v1898
        %2737 = vmatprep.subr.bf16.mxu0 %v1905
        %2738 = vmatpush1.bf16.msra.mxu0 %v1904
        %2739 = vmatprep.subr.bf16.mxu0 %v1911
        %2740 = vmatpush1.bf16.msra.mxu0 %v1910
        %2741 = vmatprep.subr.bf16.mxu0 %v1917
        %2742 = vmatpush1.bf16.msra.mxu0 %v1916
        %2743 = vmatprep.subr.bf16.mxu0 %v1923
        %2744 = vmatpush1.bf16.msra.mxu0 %v1922
        %2745 = vmatprep.subr.bf16.mxu0 %v1929
        %2746 = vmatpush1.bf16.msra.mxu0 %v1928
        %2747 = vmatprep.mubr.bf16.mxu0 %v841
        %2748 = vmatmul.mubr.bf16.gmra.mrb[0].mxu0 %v840
        %v2749 = vpop.f32.mrb[0].mxu0
        %v2750 = vpop.f32.mrb[0].mxu0
        %v2751 = vpop.f32.mrb[0].mxu0
        %v2752 = vadd.f32 %v2693, %v2751
        %v2753 = vpop.f32.mrb[0].mxu0
        %v2754 = vadd.f32 %v2695, %v2753
        %2755 = vmatprep.mubr.bf16.mxu0 %v847
        %2756 = vmatmul.mubr.bf16.gmra.mrb[0].mxu0 %v846
        %v2757 = vpop.f32.mrb[0].mxu0
        %v2758 = vadd.f32 %v2699, %v2757
        %v2759 = vpop.f32.mrb[0].mxu0
        %v2760 = vadd.f32 %v2701, %v2759
        %v2761 = vpop.f32.mrb[0].mxu0
        %v2762 = vpop.f32.mrb[0].mxu0
        %2763 = vmatprep.mubr.bf16.mxu0 %v853
        %2764 = vmatmul.mubr.bf16.gmra.mrb[0].mxu0 %v852
        %v2765 = vpop.f32.mrb[0].mxu0
        %v2766 = vadd.f32 %v2707, %v2765
        %v2767 = vpop.f32.mrb[0].mxu0
        %v2768 = vadd.f32 %v2709, %v2767
        %v2769 = vpop.f32.mrb[0].mxu0
        %v2770 = vadd.f32 %v2711, %v2769
        %v2771 = vpop.f32.mrb[0].mxu0
        %v2772 = vadd.f32 %v2713, %v2771
        %2773 = vdwg.mxu0
        %2774 = vmatprep.subr.bf16.mxu0 %v1935
        %2775 = vmatpush1.bf16.msra.mxu0 %v1934
        %2776 = vmatprep.subr.bf16.mxu0 %v1941
        %2777 = vmatpush1.bf16.msra.mxu0 %v1940
        %2778 = vmatprep.subr.bf16.mxu0 %v1947
        %2779 = vmatpush1.bf16.msra.mxu0 %v1946
        %2780 = vmatprep.subr.bf16.mxu0 %v1953
        %2781 = vmatpush1.bf16.msra.mxu0 %v1952
        %2782 = vmatprep.subr.bf16.mxu0 %v1959
        %2783 = vmatpush1.bf16.msra.mxu0 %v1958
        %2784 = vmatprep.subr.bf16.mxu0 %v1965
        %2785 = vmatpush1.bf16.msra.mxu0 %v1964
        %2786 = vmatprep.subr.bf16.mxu0 %v1971
        %2787 = vmatpush1.bf16.msra.mxu0 %v1970
        %2788 = vmatprep.subr.bf16.mxu0 %v1977
        %2789 = vmatpush1.bf16.msra.mxu0 %v1976
        %2790 = vmatprep.subr.bf16.mxu0 %v1983
        %2791 = vmatpush1.bf16.msra.mxu0 %v1982
        %2792 = vmatprep.subr.bf16.mxu0 %v1989
        %2793 = vmatpush1.bf16.msra.mxu0 %v1988
        %2794 = vmatprep.subr.bf16.mxu0 %v1995
        %2795 = vmatpush1.bf16.msra.mxu0 %v1994
        %2796 = vmatprep.subr.bf16.mxu0 %v2001
        %2797 = vmatpush1.bf16.msra.mxu0 %v2000
        %2798 = vmatprep.subr.bf16.mxu0 %v2007
        %2799 = vmatpush1.bf16.msra.mxu0 %v2006
        %2800 = vmatprep.subr.bf16.mxu0 %v2013
        %2801 = vmatpush1.bf16.msra.mxu0 %v2012
        %2802 = vmatprep.subr.bf16.mxu0 %v2019
        %2803 = vmatpush1.bf16.msra.mxu0 %v2018
        %2804 = vmatprep.subr.bf16.mxu0 %v2025
        %2805 = vmatpush1.bf16.msra.mxu0 %v2024
        %2806 = vmatprep.mubr.bf16.mxu0 %v843
        %2807 = vmatmul.mubr.bf16.gmra.mrb[0].mxu0 %v842
        %v2808 = vpop.f32.mrb[0].mxu0
        %v2809 = vpop.f32.mrb[0].mxu0
        %v2810 = vpop.f32.mrb[0].mxu0
        %v2811 = vadd.f32 %v2752, %v2810
        %v2812 = vpop.f32.mrb[0].mxu0
        %v2813 = vadd.f32 %v2754, %v2812
        %2814 = vmatprep.mubr.bf16.mxu0 %v849
        %2815 = vmatmul.mubr.bf16.gmra.mrb[0].mxu0 %v848
        %v2816 = vpop.f32.mrb[0].mxu0
        %v2817 = vadd.f32 %v2758, %v2816
        %v2818 = vpop.f32.mrb[0].mxu0
        %v2819 = vadd.f32 %v2760, %v2818
        %v2820 = vpop.f32.mrb[0].mxu0
        %v2821 = vpop.f32.mrb[0].mxu0
        %2822 = vmatprep.mubr.bf16.mxu0 %v855
        %2823 = vmatmul.mubr.bf16.gmra.mrb[0].mxu0 %v854
        %v2824 = vpop.f32.mrb[0].mxu0
        %v2825 = vadd.f32 %v2766, %v2824
        %v2826 = vpop.f32.mrb[0].mxu0
        %v2827 = vadd.f32 %v2768, %v2826
        %v2828 = vpop.f32.mrb[0].mxu0
        %v2829 = vadd.f32 %v2770, %v2828
        %v2830 = vpop.f32.mrb[0].mxu0
        %v2831 = vadd.f32 %v2772, %v2830
        %2832 = vdwg.mxu0
        %v2833 = vadd.f32 %v2467, 0.0
        %v2834 = vadd.f32 %v2469, 0.0
        %v2835 = vadd.f32 %v2471, 0.0
        %v2836 = vadd.f32 %v2473, 0.0
        %v2837 = vadd.f32 %v2479, 0.0
        %v2838 = vadd.f32 %v2481, 0.0
        %v2839 = vadd.f32 %v2485, 0.0
        %v2840 = vadd.f32 %v2487, 0.0
        %v2845 = vrot.slane %v2638, 1
        %v2846 = vrot.slane %v2640, 1
        %v2847 = vrot.slane %v2650, 1
        %v2848 = vrot.slane %v2652, 1
        %v2853 = vadd.f32 %v2833, %v2845
        %v2854 = vadd.f32 %v2834, %v2846
        %v2855 = vadd.f32 %v2835, %v2845
        %v2856 = vadd.f32 %v2836, %v2846
        %v2857 = vadd.f32 %v2837, %v2847
        %v2858 = vadd.f32 %v2838, %v2848
        %v2859 = vadd.f32 %v2839, %v2847
        %v2860 = vadd.f32 %v2840, %v2848
        %vm2869 = vcmask 1045504
        %v2870 = vrot.slane %v2811, 2
        %v2871 = vrot.slane %v2813, 2
        %v2872 = vrot.slane %v2817, 2
        %v2873 = vsel %vm2869, %v2870, %v2872
        %v2874 = vrot.slane %v2819, 2
        %v2875 = vsel %vm2869, %v2871, %v2874
        %v2876 = vrot.slane %v2825, 2
        %v2877 = vrot.slane %v2827, 2
        %v2878 = vrot.slane %v2829, 2
        %v2879 = vsel %vm2869, %v2876, %v2878
        %v2880 = vrot.slane %v2831, 2
        %v2881 = vsel %vm2869, %v2877, %v2880
        %v2890 = vadd.f32 %v2853, %v2870
        %v2891 = vadd.f32 %v2854, %v2871
        %v2892 = vadd.f32 %v2855, %v2873
        %v2893 = vadd.f32 %v2856, %v2875
        %v2894 = vadd.f32 %v2857, %v2876
        %v2895 = vadd.f32 %v2858, %v2877
        %v2896 = vadd.f32 %v2859, %v2879
        %v2897 = vadd.f32 %v2860, %v2881
        %v2898 = vld [vmem:[%s435] sm:$0xff]
        %v2899 = vld [vmem:[%s435 + $0x8] sm:$0xff]
        %v2900 = vld [vmem:[%s435 + $0x10] sm:$0xff]
        %v2901 = vld [vmem:[%s435 + $0x18] sm:$0xff]
        %v2902 = vld [vmem:[%s435 + $0x20] sm:$0xff]
        %v2903 = vld [vmem:[%s435 + $0x28] sm:$0xff]
        %v2904 = vld [vmem:[%s435 + $0x30] sm:$0xff]
        %v2905 = vld [vmem:[%s435 + $0x38] sm:$0xff]
        %v2906 = vld [vmem:[%s435 + $0x40] sm:$0xff]
        %v2907 = vld [vmem:[%s435 + $0x48] sm:$0xff]
        %v2908 = vld [vmem:[%s435 + $0x50] sm:$0xff]
        %v2909 = vld [vmem:[%s435 + $0x58] sm:$0xff]
        %v2910 = vld [vmem:[%s435 + $0x60] sm:$0xff]
        %v2911 = vld [vmem:[%s435 + $0x68] sm:$0xff]
        %v2912 = vld [vmem:[%s435 + $0x70] sm:$0xff]
        %v2913 = vld [vmem:[%s435 + $0x78] sm:$0xff]
        %v2914 = vld [vmem:[%s435 + $0x80] sm:$0xff]
        %v2915 = vld [vmem:[%s435 + $0x88] sm:$0xff]
        %s2916 = scalar_lea.vmem [#allocation9], 2304
        %v2917 = vld [vmem:[%s2916] sm:$0xff]
        %v2918 = vld [vmem:[%s2916 + $0x8] sm:$0xff]
        %v2919 = vld [vmem:[%s2916 + $0x10] sm:$0xff]
        %v2920 = vld [vmem:[%s2916 + $0x18] sm:$0xff]
        %v2921 = vld [vmem:[%s2916 + $0x20] sm:$0xff]
        %v2922 = vld [vmem:[%s2916 + $0x28] sm:$0xff]
        %v2923 = vld [vmem:[%s2916 + $0x30] sm:$0xff]
        %v2924 = vld [vmem:[%s2916 + $0x38] sm:$0xff]
        %v2925 = vld [vmem:[%s2916 + $0x40] sm:$0xff]
        %v2926 = vld [vmem:[%s2916 + $0x48] sm:$0xff]
        %v2927 = vld [vmem:[%s2916 + $0x50] sm:$0xff]
        %v2928 = vld [vmem:[%s2916 + $0x58] sm:$0xff]
        %v2929 = vld [vmem:[%s2916 + $0x60] sm:$0xff]
        %v2930 = vld [vmem:[%s2916 + $0x68] sm:$0xff]
        %v2931 = vld [vmem:[%s2916 + $0x70] sm:$0xff]
        %v2932 = vld [vmem:[%s2916 + $0x78] sm:$0xff]
        %v2933 = vld [vmem:[%s2916 + $0x80] sm:$0xff]
        %v2934 = vld [vmem:[%s2916 + $0x88] sm:$0xff]
        %v2935 = vld [vmem:[%s2916 + $0x90] sm:$0xff]
        %v2936 = vld [vmem:[%s2916 + $0x98] sm:$0xff]
        %v2937 = vld [vmem:[%s2916 + $0xa0] sm:$0xff]
        %v2938 = vld [vmem:[%s2916 + $0xa8] sm:$0xff]
        %v2939 = vld [vmem:[%s2916 + $0xb0] sm:$0xff]
        %v2940 = vld [vmem:[%s2916 + $0xb8] sm:$0xff]
        %v2941 = vld [vmem:[%s2916 + $0xc0] sm:$0xff]
        %v2942 = vld [vmem:[%s2916 + $0xc8] sm:$0xff]
        %v2943 = vld [vmem:[%s2916 + $0xd0] sm:$0xff]
        %v2944 = vld [vmem:[%s2916 + $0xd8] sm:$0xff]
        %v2945 = vld [vmem:[%s2916 + $0xe0] sm:$0xff]
        %v2946 = vld [vmem:[%s2916 + $0xe8] sm:$0xff]
        %v2947 = vld [vmem:[%s2916 + $0xf0] sm:$0xff]
        %v2948 = vld [vmem:[%s2916 + $0xf8] sm:$0xff]
        %v2949 = vld [vmem:[%s2916 + $0x100] sm:$0xff]
        %v2950 = vld [vmem:[%s2916 + $0x108] sm:$0xff]
        %v2951 = vld [vmem:[%s2916 + $0x110] sm:$0xff]
        %v2952 = vld [vmem:[%s2916 + $0x118] sm:$0xff]
        %v2953 = vld [vmem:[%s2916 + $0x120] sm:$0xff]
        %v2954 = vld [vmem:[%s2916 + $0x128] sm:$0xff]
        %v2955 = vld [vmem:[%s2916 + $0x130] sm:$0xff]
        %v2956 = vld [vmem:[%s2916 + $0x138] sm:$0xff]
        %v2957 = vld [vmem:[%s2916 + $0x140] sm:$0xff]
        %v2958 = vld [vmem:[%s2916 + $0x148] sm:$0xff]
        %v2959 = vld [vmem:[%s2916 + $0x150] sm:$0xff]
        %v2960 = vld [vmem:[%s2916 + $0x158] sm:$0xff]
        %v2961 = vld [vmem:[%s2916 + $0x160] sm:$0xff]
        %v2962 = vld [vmem:[%s2916 + $0x168] sm:$0xff]
        %v2963 = vld [vmem:[%s2916 + $0x170] sm:$0xff]
        %v2964 = vld [vmem:[%s2916 + $0x178] sm:$0xff]
        %v2965 = vld [vmem:[%s2916 + $0x180] sm:$0xff]
        %v2966 = vld [vmem:[%s2916 + $0x188] sm:$0xff]
        %v2967 = vld [vmem:[%s2916 + $0x190] sm:$0xff]
        %v2968 = vld [vmem:[%s2916 + $0x198] sm:$0xff]
        %v2969 = vld [vmem:[%s2916 + $0x1a0] sm:$0xff]
        %v2970 = vld [vmem:[%s2916 + $0x1a8] sm:$0xff]
        %v2971 = vld [vmem:[%s2916 + $0x1b0] sm:$0xff]
        %v2972 = vld [vmem:[%s2916 + $0x1b8] sm:$0xff]
        %v2973 = vld [vmem:[%s2916 + $0x1c0] sm:$0xff]
        %v2974 = vld [vmem:[%s2916 + $0x1c8] sm:$0xff]
        %v2975 = vld [vmem:[%s2916 + $0x1d0] sm:$0xff]
        %v2976 = vld [vmem:[%s2916 + $0x1d8] sm:$0xff]
        %v2977 = vld [vmem:[%s2916 + $0x1e0] sm:$0xff]
        %v2978 = vld [vmem:[%s2916 + $0x1e8] sm:$0xff]
        %v2979 = vld [vmem:[%s2916 + $0x1f0] sm:$0xff]
        %v2980 = vld [vmem:[%s2916 + $0x1f8] sm:$0xff]
        %v2981 = vld [vmem:[%s2916 + $0x200] sm:$0xff]
        %v2982 = vld [vmem:[%s2916 + $0x208] sm:$0xff]
        %v2983 = vld [vmem:[%s2916 + $0x210] sm:$0xff]
        %v2984 = vld [vmem:[%s2916 + $0x218] sm:$0xff]
        %v2985 = vld [vmem:[%s2916 + $0x220] sm:$0xff]
        %v2986 = vld [vmem:[%s2916 + $0x228] sm:$0xff]
        %v2987 = vld [vmem:[%s2916 + $0x230] sm:$0xff]
        %v2988 = vld [vmem:[%s2916 + $0x238] sm:$0xff]
        %v2989 = vld [vmem:[%s2916 + $0x240] sm:$0xff]
        %v2990 = vld [vmem:[%s2916 + $0x248] sm:$0xff]
        %v2991 = vld [vmem:[%s2916 + $0x250] sm:$0xff]
        %v2992 = vld [vmem:[%s2916 + $0x258] sm:$0xff]
        %v2993 = vld [vmem:[%s2916 + $0x260] sm:$0xff]
        %v2994 = vld [vmem:[%s2916 + $0x268] sm:$0xff]
        %v2995 = vld [vmem:[%s2916 + $0x270] sm:$0xff]
        %v2996 = vld [vmem:[%s2916 + $0x278] sm:$0xff]
        %v2997 = vld [vmem:[%s2916 + $0x280] sm:$0xff]
        %v2998 = vld [vmem:[%s2916 + $0x288] sm:$0xff]
        %v2999 = vld [vmem:[%s2916 + $0x290] sm:$0xff]
        %v3000 = vld [vmem:[%s2916 + $0x298] sm:$0xff]
        %v3001 = vld [vmem:[%s2916 + $0x2a0] sm:$0xff]
        %v3002 = vld [vmem:[%s2916 + $0x2a8] sm:$0xff]
        %v3003 = vld [vmem:[%s2916 + $0x2b0] sm:$0xff]
        %v3004 = vld [vmem:[%s2916 + $0x2b8] sm:$0xff]
        %v3005 = vld [vmem:[%s2916 + $0x2c0] sm:$0xff]
        %v3006 = vld [vmem:[%s2916 + $0x2c8] sm:$0xff]
        %v3007 = vld [vmem:[%s2916 + $0x2d0] sm:$0xff]
        %v3008 = vld [vmem:[%s2916 + $0x2d8] sm:$0xff]
        %v3009 = vld [vmem:[%s2916 + $0x2e0] sm:$0xff]
        %v3010 = vld [vmem:[%s2916 + $0x2e8] sm:$0xff]
        %v3011 = vld [vmem:[%s2916 + $0x2f0] sm:$0xff]
        %v3012 = vld [vmem:[%s2916 + $0x2f8] sm:$0xff]
        %v3013 = vld [vmem:[%s2916 + $0x300] sm:$0xff]
        %v3014 = vld [vmem:[%s2916 + $0x308] sm:$0xff]
        %v3015 = vld [vmem:[%s2916 + $0x310] sm:$0xff]
        %v3016 = vld [vmem:[%s2916 + $0x318] sm:$0xff]
        %v3017 = vld [vmem:[%s2916 + $0x320] sm:$0xff]
        %v3018 = vld [vmem:[%s2916 + $0x328] sm:$0xff]
        %v3019 = vld [vmem:[%s2916 + $0x330] sm:$0xff]
        %v3020 = vld [vmem:[%s2916 + $0x338] sm:$0xff]
        %v3021 = vld [vmem:[%s2916 + $0x340] sm:$0xff]
        %v3022 = vld [vmem:[%s2916 + $0x348] sm:$0xff]
        %v3023 = vld [vmem:[%s2916 + $0x350] sm:$0xff]
        %v3024 = vld [vmem:[%s2916 + $0x358] sm:$0xff]
        %v3025 = vld [vmem:[%s2916 + $0x360] sm:$0xff]
        %v3026 = vld [vmem:[%s2916 + $0x368] sm:$0xff]
        %v3027 = vld [vmem:[%s2916 + $0x370] sm:$0xff]
        %v3028 = vld [vmem:[%s2916 + $0x378] sm:$0xff]
        %v3029 = vld [vmem:[%s2916 + $0x380] sm:$0xff]
        %v3030 = vld [vmem:[%s2916 + $0x388] sm:$0xff]
        %v3031 = vld [vmem:[%s2916 + $0x390] sm:$0xff]
        %v3032 = vld [vmem:[%s2916 + $0x398] sm:$0xff]
        %v3033 = vld [vmem:[%s2916 + $0x3a0] sm:$0xff]
        %v3034 = vld [vmem:[%s2916 + $0x3a8] sm:$0xff]
        %v3035 = vld [vmem:[%s2916 + $0x3b0] sm:$0xff]
        %v3036 = vld [vmem:[%s2916 + $0x3b8] sm:$0xff]
        %v3037 = vld [vmem:[%s2916 + $0x3c0] sm:$0xff]
        %v3038 = vld [vmem:[%s2916 + $0x3c8] sm:$0xff]
        %v3039 = vld [vmem:[%s2916 + $0x3d0] sm:$0xff]
        %v3040 = vld [vmem:[%s2916 + $0x3d8] sm:$0xff]
        %v3041 = vld [vmem:[%s2916 + $0x3e0] sm:$0xff]
        %v3042 = vld [vmem:[%s2916 + $0x3e8] sm:$0xff]
        %v3043 = vld [vmem:[%s2916 + $0x3f0] sm:$0xff]
        %v3044 = vld [vmem:[%s2916 + $0x3f8] sm:$0xff]
        %v3045 = vld [vmem:[%s2916 + $0x400] sm:$0xff]
        %v3046 = vld [vmem:[%s2916 + $0x408] sm:$0xff]
        %v3047 = vld [vmem:[%s2916 + $0x410] sm:$0xff]
        %v3048 = vld [vmem:[%s2916 + $0x418] sm:$0xff]
        %v3049 = vld [vmem:[%s2916 + $0x420] sm:$0xff]
        %v3050 = vld [vmem:[%s2916 + $0x428] sm:$0xff]
        %v3051 = vld [vmem:[%s2916 + $0x430] sm:$0xff]
        %v3052 = vld [vmem:[%s2916 + $0x438] sm:$0xff]
        %v3053 = vld [vmem:[%s2916 + $0x440] sm:$0xff]
        %v3054 = vld [vmem:[%s2916 + $0x448] sm:$0xff]
        %v3055 = vld [vmem:[%s2916 + $0x450] sm:$0xff]
        %v3056 = vld [vmem:[%s2916 + $0x458] sm:$0xff]
        %v3057 = vld [vmem:[%s2916 + $0x460] sm:$0xff]
        %v3058 = vld [vmem:[%s2916 + $0x468] sm:$0xff]
        %v3059 = vld [vmem:[%s2916 + $0x470] sm:$0xff]
        %v3060 = vld [vmem:[%s2916 + $0x478] sm:$0xff]
        %v3061 = vld [vmem:[%s2916 + $0x480] sm:$0xff]
        %v3062 = vld [vmem:[%s2916 + $0x488] sm:$0xff]
        %v3063 = vld [vmem:[%s2916 + $0x490] sm:$0xff]
        %v3064 = vld [vmem:[%s2916 + $0x498] sm:$0xff]
        %v3065 = vld [vmem:[%s2916 + $0x4a0] sm:$0xff]
        %v3066 = vld [vmem:[%s2916 + $0x4a8] sm:$0xff]
        %v3067 = vld [vmem:[%s2916 + $0x4b0] sm:$0xff]
        %v3068 = vld [vmem:[%s2916 + $0x4b8] sm:$0xff]
        %v3069 = vld [vmem:[%s2916 + $0x4c0] sm:$0xff]
        %v3070 = vld [vmem:[%s2916 + $0x4c8] sm:$0xff]
        %v3071 = vld [vmem:[%s2916 + $0x4d0] sm:$0xff]
        %v3072 = vld [vmem:[%s2916 + $0x4d8] sm:$0xff]
        %v3073 = vld [vmem:[%s2916 + $0x4e0] sm:$0xff]
        %v3074 = vld [vmem:[%s2916 + $0x4e8] sm:$0xff]
        %v3075 = vld [vmem:[%s2916 + $0x4f0] sm:$0xff]
        %v3076 = vld [vmem:[%s2916 + $0x4f8] sm:$0xff]
        %v3077 = vld [vmem:[%s2916 + $0x500] sm:$0xff]
        %v3078 = vld [vmem:[%s2916 + $0x508] sm:$0xff]
        %v3079 = vld [vmem:[%s2916 + $0x510] sm:$0xff]
        %v3080 = vld [vmem:[%s2916 + $0x518] sm:$0xff]
        %v3081 = vld [vmem:[%s2916 + $0x520] sm:$0xff]
        %v3082 = vld [vmem:[%s2916 + $0x528] sm:$0xff]
        %v3083 = vld [vmem:[%s2916 + $0x530] sm:$0xff]
        %v3084 = vld [vmem:[%s2916 + $0x538] sm:$0xff]
        %v3085 = vld [vmem:[%s2916 + $0x540] sm:$0xff]
        %v3086 = vld [vmem:[%s2916 + $0x548] sm:$0xff]
        %v3087 = vld [vmem:[%s2916 + $0x550] sm:$0xff]
        %v3088 = vld [vmem:[%s2916 + $0x558] sm:$0xff]
        %v3089 = vld [vmem:[%s2916 + $0x560] sm:$0xff]
        %v3090 = vld [vmem:[%s2916 + $0x568] sm:$0xff]
        %v3091 = vld [vmem:[%s2916 + $0x570] sm:$0xff]
        %v3092 = vld [vmem:[%s2916 + $0x578] sm:$0xff]
        %v3093 = vld [vmem:[%s2916 + $0x580] sm:$0xff]
        %v3094 = vld [vmem:[%s2916 + $0x588] sm:$0xff]
        %v3095 = vld [vmem:[%s2916 + $0x590] sm:$0xff]
        %v3096 = vld [vmem:[%s2916 + $0x598] sm:$0xff]
        %v3097 = vld [vmem:[%s2916 + $0x5a0] sm:$0xff]
        %v3098 = vld [vmem:[%s2916 + $0x5a8] sm:$0xff]
        %v3099 = vld [vmem:[%s2916 + $0x5b0] sm:$0xff]
        %v3100 = vld [vmem:[%s2916 + $0x5b8] sm:$0xff]
        %v3101 = vld [vmem:[%s2916 + $0x5c0] sm:$0xff]
        %v3102 = vld [vmem:[%s2916 + $0x5c8] sm:$0xff]
        %v3103 = vld [vmem:[%s2916 + $0x5d0] sm:$0xff]
        %v3104 = vld [vmem:[%s2916 + $0x5d8] sm:$0xff]
        %v3105 = vld [vmem:[%s2916 + $0x5e0] sm:$0xff]
        %v3106 = vld [vmem:[%s2916 + $0x5e8] sm:$0xff]
        %v3107 = vld [vmem:[%s2916 + $0x5f0] sm:$0xff]
        %v3108 = vld [vmem:[%s2916 + $0x5f8] sm:$0xff]
        %v3109 = vld [vmem:[%s2916 + $0x600] sm:$0xff]
        %v3110 = vld [vmem:[%s2916 + $0x608] sm:$0xff]
        %v3111 = vld [vmem:[%s2916 + $0x610] sm:$0xff]
        %v3112 = vld [vmem:[%s2916 + $0x618] sm:$0xff]
        %v3113 = vld [vmem:[%s2916 + $0x620] sm:$0xff]
        %v3114 = vld [vmem:[%s2916 + $0x628] sm:$0xff]
        %v3115 = vld [vmem:[%s2916 + $0x630] sm:$0xff]
        %v3116 = vld [vmem:[%s2916 + $0x638] sm:$0xff]
        %v3117 = vld [vmem:[%s2916 + $0x640] sm:$0xff]
        %v3118 = vld [vmem:[%s2916 + $0x648] sm:$0xff]
        %v3119 = vld [vmem:[%s2916 + $0x650] sm:$0xff]
        %v3120 = vld [vmem:[%s2916 + $0x658] sm:$0xff]
        %v3121 = vld [vmem:[%s2916 + $0x660] sm:$0xff]
        %v3122 = vld [vmem:[%s2916 + $0x668] sm:$0xff]
        %v3123 = vld [vmem:[%s2916 + $0x670] sm:$0xff]
        %v3124 = vld [vmem:[%s2916 + $0x678] sm:$0xff]
        %v3125 = vld [vmem:[%s2916 + $0x680] sm:$0xff]
        %v3126 = vld [vmem:[%s2916 + $0x688] sm:$0xff]
        %v3127 = vld [vmem:[%s2916 + $0x690] sm:$0xff]
        %v3128 = vld [vmem:[%s2916 + $0x698] sm:$0xff]
        %v3129 = vld [vmem:[%s2916 + $0x6a0] sm:$0xff]
        %v3130 = vld [vmem:[%s2916 + $0x6a8] sm:$0xff]
        %v3131 = vld [vmem:[%s2916 + $0x6b0] sm:$0xff]
        %v3132 = vld [vmem:[%s2916 + $0x6b8] sm:$0xff]
        %v3133 = vld [vmem:[%s2916 + $0x6c0] sm:$0xff]
        %v3134 = vld [vmem:[%s2916 + $0x6c8] sm:$0xff]
        %v3135 = vld [vmem:[%s2916 + $0x6d0] sm:$0xff]
        %v3136 = vld [vmem:[%s2916 + $0x6d8] sm:$0xff]
        %v3137 = vld [vmem:[%s2916 + $0x6e0] sm:$0xff]
        %v3138 = vld [vmem:[%s2916 + $0x6e8] sm:$0xff]
        %v3139 = vld [vmem:[%s2916 + $0x6f0] sm:$0xff]
        %v3140 = vld [vmem:[%s2916 + $0x6f8] sm:$0xff]
        %v3141 = vld [vmem:[%s2916 + $0x700] sm:$0xff]
        %v3142 = vld [vmem:[%s2916 + $0x708] sm:$0xff]
        %v3143 = vld [vmem:[%s2916 + $0x710] sm:$0xff]
        %v3144 = vld [vmem:[%s2916 + $0x718] sm:$0xff]
        %v3145 = vld [vmem:[%s2916 + $0x720] sm:$0xff]
        %v3146 = vld [vmem:[%s2916 + $0x728] sm:$0xff]
        %v3147 = vld [vmem:[%s2916 + $0x730] sm:$0xff]
        %v3148 = vld [vmem:[%s2916 + $0x738] sm:$0xff]
        %v3149 = vld [vmem:[%s2916 + $0x740] sm:$0xff]
        %v3150 = vld [vmem:[%s2916 + $0x748] sm:$0xff]
        %v3151 = vld [vmem:[%s2916 + $0x750] sm:$0xff]
        %v3152 = vld [vmem:[%s2916 + $0x758] sm:$0xff]
        %v3153 = vld [vmem:[%s2916 + $0x760] sm:$0xff]
        %v3154 = vld [vmem:[%s2916 + $0x768] sm:$0xff]
        %v3155 = vld [vmem:[%s2916 + $0x770] sm:$0xff]
        %v3156 = vld [vmem:[%s2916 + $0x778] sm:$0xff]
        %v3157 = vld [vmem:[%s2916 + $0x780] sm:$0xff]
        %v3158 = vld [vmem:[%s2916 + $0x788] sm:$0xff]
        %v3159 = vld [vmem:[%s2916 + $0x790] sm:$0xff]
        %v3160 = vld [vmem:[%s2916 + $0x798] sm:$0xff]
        %v3161 = vld [vmem:[%s2916 + $0x7a0] sm:$0xff]
        %v3162 = vld [vmem:[%s2916 + $0x7a8] sm:$0xff]
        %v3163 = vld [vmem:[%s2916 + $0x7b0] sm:$0xff]
        %v3164 = vld [vmem:[%s2916 + $0x7b8] sm:$0xff]
        %v3165 = vld [vmem:[%s2916 + $0x7c0] sm:$0xff]
        %v3166 = vld [vmem:[%s2916 + $0x7c8] sm:$0xff]
        %v3167 = vld [vmem:[%s2916 + $0x7d0] sm:$0xff]
        %v3168 = vld [vmem:[%s2916 + $0x7d8] sm:$0xff]
        %v3169 = vld [vmem:[%s2916 + $0x7e0] sm:$0xff]
        %v3170 = vld [vmem:[%s2916 + $0x7e8] sm:$0xff]
        %v3171 = vld [vmem:[%s2916 + $0x7f0] sm:$0xff]
        %v3172 = vld [vmem:[%s2916 + $0x7f8] sm:$0xff]
        %v3173 = vld [vmem:[%s2916 + $0x800] sm:$0xff]
        %v3174 = vld [vmem:[%s2916 + $0x808] sm:$0xff]
        %v3175 = vld [vmem:[%s2916 + $0x810] sm:$0xff]
        %v3176 = vld [vmem:[%s2916 + $0x818] sm:$0xff]
        %v3177 = vld [vmem:[%s2916 + $0x820] sm:$0xff]
        %v3178 = vld [vmem:[%s2916 + $0x828] sm:$0xff]
        %v3179 = vld [vmem:[%s2916 + $0x830] sm:$0xff]
        %v3180 = vld [vmem:[%s2916 + $0x838] sm:$0xff]
        %v3181 = vld [vmem:[%s2916 + $0x840] sm:$0xff]
        %v3182 = vld [vmem:[%s2916 + $0x848] sm:$0xff]
        %v3183 = vld [vmem:[%s2916 + $0x850] sm:$0xff]
        %v3184 = vld [vmem:[%s2916 + $0x858] sm:$0xff]
        %v3185 = vld [vmem:[%s2916 + $0x860] sm:$0xff]
        %v3186 = vld [vmem:[%s2916 + $0x868] sm:$0xff]
        %v3187 = vld [vmem:[%s2916 + $0x870] sm:$0xff]
        %v3188 = vld [vmem:[%s2916 + $0x878] sm:$0xff]
        %v3189 = vld [vmem:[%s2916 + $0x880] sm:$0xff]
        %v3190 = vld [vmem:[%s2916 + $0x888] sm:$0xff]
        %v3191 = vld [vmem:[%s2916 + $0x890] sm:$0xff]
        %v3192 = vld [vmem:[%s2916 + $0x898] sm:$0xff]
        %v3193 = vld [vmem:[%s2916 + $0x8a0] sm:$0xff]
        %v3194 = vld [vmem:[%s2916 + $0x8a8] sm:$0xff]
        %v3195 = vld [vmem:[%s2916 + $0x8b0] sm:$0xff]
        %v3196 = vld [vmem:[%s2916 + $0x8b8] sm:$0xff]
        %v3197 = vld [vmem:[%s2916 + $0x8c0] sm:$0xff]
        %v3198 = vld [vmem:[%s2916 + $0x8c8] sm:$0xff]
        %v3199 = vld [vmem:[%s2916 + $0x8d0] sm:$0xff]
        %v3200 = vld [vmem:[%s2916 + $0x8d8] sm:$0xff]
        %v3201 = vld [vmem:[%s2916 + $0x8e0] sm:$0xff]
        %v3202 = vld [vmem:[%s2916 + $0x8e8] sm:$0xff]
        %v3203 = vld [vmem:[%s2916 + $0x8f0] sm:$0xff]
        %v3204 = vld [vmem:[%s2916 + $0x8f8] sm:$0xff]
        %v3223 = vunpack.c.l.b16 %v2898
        %v3224 = vunpack.c.h.b16 %v2898
        %v3225 = vunpack.c.l.b16 %v2899
        %v3226 = vunpack.c.h.b16 %v2899
        %v3227 = vunpack.c.l.b16 %v2900
        %v3228 = vunpack.c.h.b16 %v2900
        %v3229 = vunpack.c.l.b16 %v2901
        %v3230 = vunpack.c.h.b16 %v2901
        %v3231 = vunpack.c.l.b16 %v2902
        %v3232 = vunpack.c.h.b16 %v2902
        %v3233 = vunpack.c.l.b16 %v2903
        %v3234 = vunpack.c.h.b16 %v2903
        %v3235 = vunpack.c.l.b16 %v2904
        %v3236 = vunpack.c.h.b16 %v2904
        %v3237 = vunpack.c.l.b16 %v2905
        %v3238 = vunpack.c.h.b16 %v2905
        %v3239 = vunpack.c.l.b16 %v2906
        %v3240 = vunpack.c.h.b16 %v2906
        %v3241 = vunpack.c.l.b16 %v2907
        %v3242 = vunpack.c.h.b16 %v2907
        %v3243 = vunpack.c.l.b16 %v2908
        %v3244 = vunpack.c.h.b16 %v2908
        %v3245 = vunpack.c.l.b16 %v2909
        %v3246 = vunpack.c.h.b16 %v2909
        %v3247 = vunpack.c.l.b16 %v2910
        %v3248 = vunpack.c.h.b16 %v2910
        %v3249 = vunpack.c.l.b16 %v2911
        %v3250 = vunpack.c.h.b16 %v2911
        %v3251 = vunpack.c.l.b16 %v2912
        %v3252 = vunpack.c.h.b16 %v2912
        %v3253 = vunpack.c.l.b16 %v2913
        %v3254 = vunpack.c.h.b16 %v2913
        %v3255 = vunpack.c.l.b16 %v2914
        %v3256 = vunpack.c.h.b16 %v2914
        %v3257 = vunpack.c.l.b16 %v2915
        %v3258 = vunpack.c.h.b16 %v2915
        %v3259 = vpack.c.b16 %v3229, %v3223
        %v3260 = vpack.c.b16 %v3230, %v3224
        %v3261 = vpack.c.b16 %v3231, %v3225
        %v3262 = vpack.c.b16 %v3232, %v3226
        %v3263 = vpack.c.b16 %v3233, %v3227
        %v3264 = vpack.c.b16 %v3234, %v3228
        %v3265 = vpack.c.b16 %v3241, %v3235
        %v3266 = vpack.c.b16 %v3242, %v3236
        %v3267 = vpack.c.b16 %v3243, %v3237
        %v3268 = vpack.c.b16 %v3244, %v3238
        %v3269 = vpack.c.b16 %v3245, %v3239
        %v3270 = vpack.c.b16 %v3246, %v3240
        %v3271 = vpack.c.b16 %v3253, %v3247
        %v3272 = vpack.c.b16 %v3254, %v3248
        %v3273 = vpack.c.b16 %v3255, %v3249
        %v3274 = vpack.c.b16 %v3256, %v3250
        %v3275 = vpack.c.b16 %v3257, %v3251
        %v3276 = vpack.c.b16 %v3258, %v3252
        %v3583 = vunpack.c.l.b16 %v2917
        %v3584 = vunpack.c.h.b16 %v2917
        %v3585 = vunpack.c.l.b16 %v2918
        %v3586 = vunpack.c.h.b16 %v2918
        %v3587 = vunpack.c.l.b16 %v2919
        %v3588 = vunpack.c.h.b16 %v2919
        %v3589 = vunpack.c.l.b16 %v2920
        %v3590 = vunpack.c.h.b16 %v2920
        %v3591 = vunpack.c.l.b16 %v2921
        %v3592 = vunpack.c.h.b16 %v2921
        %v3593 = vunpack.c.l.b16 %v2922
        %v3594 = vunpack.c.h.b16 %v2922
        %v3595 = vunpack.c.l.b16 %v2923
        %v3596 = vunpack.c.h.b16 %v2923
        %v3597 = vunpack.c.l.b16 %v2924
        %v3598 = vunpack.c.h.b16 %v2924
        %v3599 = vunpack.c.l.b16 %v2925
        %v3600 = vunpack.c.h.b16 %v2925
        %v3601 = vunpack.c.l.b16 %v2926
        %v3602 = vunpack.c.h.b16 %v2926
        %v3603 = vunpack.c.l.b16 %v2927
        %v3604 = vunpack.c.h.b16 %v2927
        %v3605 = vunpack.c.l.b16 %v2928
        %v3606 = vunpack.c.h.b16 %v2928
        %v3607 = vunpack.c.l.b16 %v2929
        %v3608 = vunpack.c.h.b16 %v2929
        %v3609 = vunpack.c.l.b16 %v2930
        %v3610 = vunpack.c.h.b16 %v2930
        %v3611 = vunpack.c.l.b16 %v2931
        %v3612 = vunpack.c.h.b16 %v2931
        %v3613 = vunpack.c.l.b16 %v2932
        %v3614 = vunpack.c.h.b16 %v2932
        %v3615 = vunpack.c.l.b16 %v2933
        %v3616 = vunpack.c.h.b16 %v2933
        %v3617 = vunpack.c.l.b16 %v2934
        %v3618 = vunpack.c.h.b16 %v2934
        %v3619 = vunpack.c.l.b16 %v2935
        %v3620 = vunpack.c.h.b16 %v2935
        %v3621 = vunpack.c.l.b16 %v2936
        %v3622 = vunpack.c.h.b16 %v2936
        %v3623 = vunpack.c.l.b16 %v2937
        %v3624 = vunpack.c.h.b16 %v2937
        %v3625 = vunpack.c.l.b16 %v2938
        %v3626 = vunpack.c.h.b16 %v2938
        %v3627 = vunpack.c.l.b16 %v2939
        %v3628 = vunpack.c.h.b16 %v2939
        %v3629 = vunpack.c.l.b16 %v2940
        %v3630 = vunpack.c.h.b16 %v2940
        %v3631 = vunpack.c.l.b16 %v2941
        %v3632 = vunpack.c.h.b16 %v2941
        %v3633 = vunpack.c.l.b16 %v2942
        %v3634 = vunpack.c.h.b16 %v2942
        %v3635 = vunpack.c.l.b16 %v2943
        %v3636 = vunpack.c.h.b16 %v2943
        %v3637 = vunpack.c.l.b16 %v2944
        %v3638 = vunpack.c.h.b16 %v2944
        %v3639 = vunpack.c.l.b16 %v2945
        %v3640 = vunpack.c.h.b16 %v2945
        %v3641 = vunpack.c.l.b16 %v2946
        %v3642 = vunpack.c.h.b16 %v2946
        %v3643 = vunpack.c.l.b16 %v2947
        %v3644 = vunpack.c.h.b16 %v2947
        %v3645 = vunpack.c.l.b16 %v2948
        %v3646 = vunpack.c.h.b16 %v2948
        %v3647 = vunpack.c.l.b16 %v2949
        %v3648 = vunpack.c.h.b16 %v2949
        %v3649 = vunpack.c.l.b16 %v2950
        %v3650 = vunpack.c.h.b16 %v2950
        %v3651 = vunpack.c.l.b16 %v2951
        %v3652 = vunpack.c.h.b16 %v2951
        %v3653 = vunpack.c.l.b16 %v2952
        %v3654 = vunpack.c.h.b16 %v2952
        %v3655 = vunpack.c.l.b16 %v2953
        %v3656 = vunpack.c.h.b16 %v2953
        %v3657 = vunpack.c.l.b16 %v2954
        %v3658 = vunpack.c.h.b16 %v2954
        %v3659 = vunpack.c.l.b16 %v2955
        %v3660 = vunpack.c.h.b16 %v2955
        %v3661 = vunpack.c.l.b16 %v2956
        %v3662 = vunpack.c.h.b16 %v2956
        %v3663 = vunpack.c.l.b16 %v2957
        %v3664 = vunpack.c.h.b16 %v2957
        %v3665 = vunpack.c.l.b16 %v2958
        %v3666 = vunpack.c.h.b16 %v2958
        %v3667 = vunpack.c.l.b16 %v2959
        %v3668 = vunpack.c.h.b16 %v2959
        %v3669 = vunpack.c.l.b16 %v2960
        %v3670 = vunpack.c.h.b16 %v2960
        %v3671 = vunpack.c.l.b16 %v2961
        %v3672 = vunpack.c.h.b16 %v2961
        %v3673 = vunpack.c.l.b16 %v2962
        %v3674 = vunpack.c.h.b16 %v2962
        %v3675 = vunpack.c.l.b16 %v2963
        %v3676 = vunpack.c.h.b16 %v2963
        %v3677 = vunpack.c.l.b16 %v2964
        %v3678 = vunpack.c.h.b16 %v2964
        %v3679 = vunpack.c.l.b16 %v2965
        %v3680 = vunpack.c.h.b16 %v2965
        %v3681 = vunpack.c.l.b16 %v2966
        %v3682 = vunpack.c.h.b16 %v2966
        %v3683 = vunpack.c.l.b16 %v2967
        %v3684 = vunpack.c.h.b16 %v2967
        %v3685 = vunpack.c.l.b16 %v2968
        %v3686 = vunpack.c.h.b16 %v2968
        %v3687 = vunpack.c.l.b16 %v2969
        %v3688 = vunpack.c.h.b16 %v2969
        %v3689 = vunpack.c.l.b16 %v2970
        %v3690 = vunpack.c.h.b16 %v2970
        %v3691 = vunpack.c.l.b16 %v2971
        %v3692 = vunpack.c.h.b16 %v2971
        %v3693 = vunpack.c.l.b16 %v2972
        %v3694 = vunpack.c.h.b16 %v2972
        %v3695 = vunpack.c.l.b16 %v2973
        %v3696 = vunpack.c.h.b16 %v2973
        %v3697 = vunpack.c.l.b16 %v2974
        %v3698 = vunpack.c.h.b16 %v2974
        %v3699 = vunpack.c.l.b16 %v2975
        %v3700 = vunpack.c.h.b16 %v2975
        %v3701 = vunpack.c.l.b16 %v2976
        %v3702 = vunpack.c.h.b16 %v2976
        %v3703 = vunpack.c.l.b16 %v2977
        %v3704 = vunpack.c.h.b16 %v2977
        %v3705 = vunpack.c.l.b16 %v2978
        %v3706 = vunpack.c.h.b16 %v2978
        %v3707 = vunpack.c.l.b16 %v2979
        %v3708 = vunpack.c.h.b16 %v2979
        %v3709 = vunpack.c.l.b16 %v2980
        %v3710 = vunpack.c.h.b16 %v2980
        %v3711 = vunpack.c.l.b16 %v2981
        %v3712 = vunpack.c.h.b16 %v2981
        %v3713 = vunpack.c.l.b16 %v2982
        %v3714 = vunpack.c.h.b16 %v2982
        %v3715 = vunpack.c.l.b16 %v2983
        %v3716 = vunpack.c.h.b16 %v2983
        %v3717 = vunpack.c.l.b16 %v2984
        %v3718 = vunpack.c.h.b16 %v2984
        %v3719 = vunpack.c.l.b16 %v2985
        %v3720 = vunpack.c.h.b16 %v2985
        %v3721 = vunpack.c.l.b16 %v2986
        %v3722 = vunpack.c.h.b16 %v2986
        %v3723 = vunpack.c.l.b16 %v2987
        %v3724 = vunpack.c.h.b16 %v2987
        %v3725 = vunpack.c.l.b16 %v2988
        %v3726 = vunpack.c.h.b16 %v2988
        %v3727 = vunpack.c.l.b16 %v2989
        %v3728 = vunpack.c.h.b16 %v2989
        %v3729 = vunpack.c.l.b16 %v2990
        %v3730 = vunpack.c.h.b16 %v2990
        %v3731 = vunpack.c.l.b16 %v2991
        %v3732 = vunpack.c.h.b16 %v2991
        %v3733 = vunpack.c.l.b16 %v2992
        %v3734 = vunpack.c.h.b16 %v2992
        %v3735 = vunpack.c.l.b16 %v2993
        %v3736 = vunpack.c.h.b16 %v2993
        %v3737 = vunpack.c.l.b16 %v2994
        %v3738 = vunpack.c.h.b16 %v2994
        %v3739 = vunpack.c.l.b16 %v2995
        %v3740 = vunpack.c.h.b16 %v2995
        %v3741 = vunpack.c.l.b16 %v2996
        %v3742 = vunpack.c.h.b16 %v2996
        %v3743 = vunpack.c.l.b16 %v2997
        %v3744 = vunpack.c.h.b16 %v2997
        %v3745 = vunpack.c.l.b16 %v2998
        %v3746 = vunpack.c.h.b16 %v2998
        %v3747 = vunpack.c.l.b16 %v2999
        %v3748 = vunpack.c.h.b16 %v2999
        %v3749 = vunpack.c.l.b16 %v3000
        %v3750 = vunpack.c.h.b16 %v3000
        %v3751 = vunpack.c.l.b16 %v3001
        %v3752 = vunpack.c.h.b16 %v3001
        %v3753 = vunpack.c.l.b16 %v3002
        %v3754 = vunpack.c.h.b16 %v3002
        %v3755 = vunpack.c.l.b16 %v3003
        %v3756 = vunpack.c.h.b16 %v3003
        %v3757 = vunpack.c.l.b16 %v3004
        %v3758 = vunpack.c.h.b16 %v3004
        %v3759 = vunpack.c.l.b16 %v3005
        %v3760 = vunpack.c.h.b16 %v3005
        %v3761 = vunpack.c.l.b16 %v3006
        %v3762 = vunpack.c.h.b16 %v3006
        %v3763 = vunpack.c.l.b16 %v3007
        %v3764 = vunpack.c.h.b16 %v3007
        %v3765 = vunpack.c.l.b16 %v3008
        %v3766 = vunpack.c.h.b16 %v3008
        %v3767 = vunpack.c.l.b16 %v3009
        %v3768 = vunpack.c.h.b16 %v3009
        %v3769 = vunpack.c.l.b16 %v3010
        %v3770 = vunpack.c.h.b16 %v3010
        %v3771 = vunpack.c.l.b16 %v3011
        %v3772 = vunpack.c.h.b16 %v3011
        %v3773 = vunpack.c.l.b16 %v3012
        %v3774 = vunpack.c.h.b16 %v3012
        %v3775 = vunpack.c.l.b16 %v3013
        %v3776 = vunpack.c.h.b16 %v3013
        %v3777 = vunpack.c.l.b16 %v3014
        %v3778 = vunpack.c.h.b16 %v3014
        %v3779 = vunpack.c.l.b16 %v3015
        %v3780 = vunpack.c.h.b16 %v3015
        %v3781 = vunpack.c.l.b16 %v3016
        %v3782 = vunpack.c.h.b16 %v3016
        %v3783 = vunpack.c.l.b16 %v3017
        %v3784 = vunpack.c.h.b16 %v3017
        %v3785 = vunpack.c.l.b16 %v3018
        %v3786 = vunpack.c.h.b16 %v3018
        %v3787 = vunpack.c.l.b16 %v3019
        %v3788 = vunpack.c.h.b16 %v3019
        %v3789 = vunpack.c.l.b16 %v3020
        %v3790 = vunpack.c.h.b16 %v3020
        %v3791 = vunpack.c.l.b16 %v3021
        %v3792 = vunpack.c.h.b16 %v3021
        %v3793 = vunpack.c.l.b16 %v3022
        %v3794 = vunpack.c.h.b16 %v3022
        %v3795 = vunpack.c.l.b16 %v3023
        %v3796 = vunpack.c.h.b16 %v3023
        %v3797 = vunpack.c.l.b16 %v3024
        %v3798 = vunpack.c.h.b16 %v3024
        %v3799 = vunpack.c.l.b16 %v3025
        %v3800 = vunpack.c.h.b16 %v3025
        %v3801 = vunpack.c.l.b16 %v3026
        %v3802 = vunpack.c.h.b16 %v3026
        %v3803 = vunpack.c.l.b16 %v3027
        %v3804 = vunpack.c.h.b16 %v3027
        %v3805 = vunpack.c.l.b16 %v3028
        %v3806 = vunpack.c.h.b16 %v3028
        %v3807 = vunpack.c.l.b16 %v3029
        %v3808 = vunpack.c.h.b16 %v3029
        %v3809 = vunpack.c.l.b16 %v3030
        %v3810 = vunpack.c.h.b16 %v3030
        %v3811 = vunpack.c.l.b16 %v3031
        %v3812 = vunpack.c.h.b16 %v3031
        %v3813 = vunpack.c.l.b16 %v3032
        %v3814 = vunpack.c.h.b16 %v3032
        %v3815 = vunpack.c.l.b16 %v3033
        %v3816 = vunpack.c.h.b16 %v3033
        %v3817 = vunpack.c.l.b16 %v3034
        %v3818 = vunpack.c.h.b16 %v3034
        %v3819 = vunpack.c.l.b16 %v3035
        %v3820 = vunpack.c.h.b16 %v3035
        %v3821 = vunpack.c.l.b16 %v3036
        %v3822 = vunpack.c.h.b16 %v3036
        %v3823 = vunpack.c.l.b16 %v3037
        %v3824 = vunpack.c.h.b16 %v3037
        %v3825 = vunpack.c.l.b16 %v3038
        %v3826 = vunpack.c.h.b16 %v3038
        %v3827 = vunpack.c.l.b16 %v3039
        %v3828 = vunpack.c.h.b16 %v3039
        %v3829 = vunpack.c.l.b16 %v3040
        %v3830 = vunpack.c.h.b16 %v3040
        %v3831 = vunpack.c.l.b16 %v3041
        %v3832 = vunpack.c.h.b16 %v3041
        %v3833 = vunpack.c.l.b16 %v3042
        %v3834 = vunpack.c.h.b16 %v3042
        %v3835 = vunpack.c.l.b16 %v3043
        %v3836 = vunpack.c.h.b16 %v3043
        %v3837 = vunpack.c.l.b16 %v3044
        %v3838 = vunpack.c.h.b16 %v3044
        %v3839 = vunpack.c.l.b16 %v3045
        %v3840 = vunpack.c.h.b16 %v3045
        %v3841 = vunpack.c.l.b16 %v3046
        %v3842 = vunpack.c.h.b16 %v3046
        %v3843 = vunpack.c.l.b16 %v3047
        %v3844 = vunpack.c.h.b16 %v3047
        %v3845 = vunpack.c.l.b16 %v3048
        %v3846 = vunpack.c.h.b16 %v3048
        %v3847 = vunpack.c.l.b16 %v3049
        %v3848 = vunpack.c.h.b16 %v3049
        %v3849 = vunpack.c.l.b16 %v3050
        %v3850 = vunpack.c.h.b16 %v3050
        %v3851 = vunpack.c.l.b16 %v3051
        %v3852 = vunpack.c.h.b16 %v3051
        %v3853 = vunpack.c.l.b16 %v3052
        %v3854 = vunpack.c.h.b16 %v3052
        %v3855 = vunpack.c.l.b16 %v3053
        %v3856 = vunpack.c.h.b16 %v3053
        %v3857 = vunpack.c.l.b16 %v3054
        %v3858 = vunpack.c.h.b16 %v3054
        %v3859 = vunpack.c.l.b16 %v3055
        %v3860 = vunpack.c.h.b16 %v3055
        %v3861 = vunpack.c.l.b16 %v3056
        %v3862 = vunpack.c.h.b16 %v3056
        %v3863 = vunpack.c.l.b16 %v3057
        %v3864 = vunpack.c.h.b16 %v3057
        %v3865 = vunpack.c.l.b16 %v3058
        %v3866 = vunpack.c.h.b16 %v3058
        %v3867 = vunpack.c.l.b16 %v3059
        %v3868 = vunpack.c.h.b16 %v3059
        %v3869 = vunpack.c.l.b16 %v3060
        %v3870 = vunpack.c.h.b16 %v3060
        %v3871 = vunpack.c.l.b16 %v3061
        %v3872 = vunpack.c.h.b16 %v3061
        %v3873 = vunpack.c.l.b16 %v3062
        %v3874 = vunpack.c.h.b16 %v3062
        %v3875 = vunpack.c.l.b16 %v3063
        %v3876 = vunpack.c.h.b16 %v3063
        %v3877 = vunpack.c.l.b16 %v3064
        %v3878 = vunpack.c.h.b16 %v3064
        %v3879 = vunpack.c.l.b16 %v3065
        %v3880 = vunpack.c.h.b16 %v3065
        %v3881 = vunpack.c.l.b16 %v3066
        %v3882 = vunpack.c.h.b16 %v3066
        %v3883 = vunpack.c.l.b16 %v3067
        %v3884 = vunpack.c.h.b16 %v3067
        %v3885 = vunpack.c.l.b16 %v3068
        %v3886 = vunpack.c.h.b16 %v3068
        %v3887 = vunpack.c.l.b16 %v3069
        %v3888 = vunpack.c.h.b16 %v3069
        %v3889 = vunpack.c.l.b16 %v3070
        %v3890 = vunpack.c.h.b16 %v3070
        %v3891 = vunpack.c.l.b16 %v3071
        %v3892 = vunpack.c.h.b16 %v3071
        %v3893 = vunpack.c.l.b16 %v3072
        %v3894 = vunpack.c.h.b16 %v3072
        %v3895 = vunpack.c.l.b16 %v3073
        %v3896 = vunpack.c.h.b16 %v3073
        %v3897 = vunpack.c.l.b16 %v3074
        %v3898 = vunpack.c.h.b16 %v3074
        %v3899 = vunpack.c.l.b16 %v3075
        %v3900 = vunpack.c.h.b16 %v3075
        %v3901 = vunpack.c.l.b16 %v3076
        %v3902 = vunpack.c.h.b16 %v3076
        %v3903 = vunpack.c.l.b16 %v3077
        %v3904 = vunpack.c.h.b16 %v3077
        %v3905 = vunpack.c.l.b16 %v3078
        %v3906 = vunpack.c.h.b16 %v3078
        %v3907 = vunpack.c.l.b16 %v3079
        %v3908 = vunpack.c.h.b16 %v3079
        %v3909 = vunpack.c.l.b16 %v3080
        %v3910 = vunpack.c.h.b16 %v3080
        %v3911 = vunpack.c.l.b16 %v3081
        %v3912 = vunpack.c.h.b16 %v3081
        %v3913 = vunpack.c.l.b16 %v3082
        %v3914 = vunpack.c.h.b16 %v3082
        %v3915 = vunpack.c.l.b16 %v3083
        %v3916 = vunpack.c.h.b16 %v3083
        %v3917 = vunpack.c.l.b16 %v3084
        %v3918 = vunpack.c.h.b16 %v3084
        %v3919 = vunpack.c.l.b16 %v3085
        %v3920 = vunpack.c.h.b16 %v3085
        %v3921 = vunpack.c.l.b16 %v3086
        %v3922 = vunpack.c.h.b16 %v3086
        %v3923 = vunpack.c.l.b16 %v3087
        %v3924 = vunpack.c.h.b16 %v3087
        %v3925 = vunpack.c.l.b16 %v3088
        %v3926 = vunpack.c.h.b16 %v3088
        %v3927 = vunpack.c.l.b16 %v3089
        %v3928 = vunpack.c.h.b16 %v3089
        %v3929 = vunpack.c.l.b16 %v3090
        %v3930 = vunpack.c.h.b16 %v3090
        %v3931 = vunpack.c.l.b16 %v3091
        %v3932 = vunpack.c.h.b16 %v3091
        %v3933 = vunpack.c.l.b16 %v3092
        %v3934 = vunpack.c.h.b16 %v3092
        %v3935 = vunpack.c.l.b16 %v3093
        %v3936 = vunpack.c.h.b16 %v3093
        %v3937 = vunpack.c.l.b16 %v3094
        %v3938 = vunpack.c.h.b16 %v3094
        %v3939 = vunpack.c.l.b16 %v3095
        %v3940 = vunpack.c.h.b16 %v3095
        %v3941 = vunpack.c.l.b16 %v3096
        %v3942 = vunpack.c.h.b16 %v3096
        %v3943 = vunpack.c.l.b16 %v3097
        %v3944 = vunpack.c.h.b16 %v3097
        %v3945 = vunpack.c.l.b16 %v3098
        %v3946 = vunpack.c.h.b16 %v3098
        %v3947 = vunpack.c.l.b16 %v3099
        %v3948 = vunpack.c.h.b16 %v3099
        %v3949 = vunpack.c.l.b16 %v3100
        %v3950 = vunpack.c.h.b16 %v3100
        %v3951 = vunpack.c.l.b16 %v3101
        %v3952 = vunpack.c.h.b16 %v3101
        %v3953 = vunpack.c.l.b16 %v3102
        %v3954 = vunpack.c.h.b16 %v3102
        %v3955 = vunpack.c.l.b16 %v3103
        %v3956 = vunpack.c.h.b16 %v3103
        %v3957 = vunpack.c.l.b16 %v3104
        %v3958 = vunpack.c.h.b16 %v3104
        %v3959 = vunpack.c.l.b16 %v3105
        %v3960 = vunpack.c.h.b16 %v3105
        %v3961 = vunpack.c.l.b16 %v3106
        %v3962 = vunpack.c.h.b16 %v3106
        %v3963 = vunpack.c.l.b16 %v3107
        %v3964 = vunpack.c.h.b16 %v3107
        %v3965 = vunpack.c.l.b16 %v3108
        %v3966 = vunpack.c.h.b16 %v3108
        %v3967 = vunpack.c.l.b16 %v3109
        %v3968 = vunpack.c.h.b16 %v3109
        %v3969 = vunpack.c.l.b16 %v3110
        %v3970 = vunpack.c.h.b16 %v3110
        %v3971 = vunpack.c.l.b16 %v3111
        %v3972 = vunpack.c.h.b16 %v3111
        %v3973 = vunpack.c.l.b16 %v3112
        %v3974 = vunpack.c.h.b16 %v3112
        %v3975 = vunpack.c.l.b16 %v3113
        %v3976 = vunpack.c.h.b16 %v3113
        %v3977 = vunpack.c.l.b16 %v3114
        %v3978 = vunpack.c.h.b16 %v3114
        %v3979 = vunpack.c.l.b16 %v3115
        %v3980 = vunpack.c.h.b16 %v3115
        %v3981 = vunpack.c.l.b16 %v3116
        %v3982 = vunpack.c.h.b16 %v3116
        %v3983 = vunpack.c.l.b16 %v3117
        %v3984 = vunpack.c.h.b16 %v3117
        %v3985 = vunpack.c.l.b16 %v3118
        %v3986 = vunpack.c.h.b16 %v3118
        %v3987 = vunpack.c.l.b16 %v3119
        %v3988 = vunpack.c.h.b16 %v3119
        %v3989 = vunpack.c.l.b16 %v3120
        %v3990 = vunpack.c.h.b16 %v3120
        %v3991 = vunpack.c.l.b16 %v3121
        %v3992 = vunpack.c.h.b16 %v3121
        %v3993 = vunpack.c.l.b16 %v3122
        %v3994 = vunpack.c.h.b16 %v3122
        %v3995 = vunpack.c.l.b16 %v3123
        %v3996 = vunpack.c.h.b16 %v3123
        %v3997 = vunpack.c.l.b16 %v3124
        %v3998 = vunpack.c.h.b16 %v3124
        %v3999 = vunpack.c.l.b16 %v3125
        %v4000 = vunpack.c.h.b16 %v3125
        %v4001 = vunpack.c.l.b16 %v3126
        %v4002 = vunpack.c.h.b16 %v3126
        %v4003 = vunpack.c.l.b16 %v3127
        %v4004 = vunpack.c.h.b16 %v3127
        %v4005 = vunpack.c.l.b16 %v3128
        %v4006 = vunpack.c.h.b16 %v3128
        %v4007 = vunpack.c.l.b16 %v3129
        %v4008 = vunpack.c.h.b16 %v3129
        %v4009 = vunpack.c.l.b16 %v3130
        %v4010 = vunpack.c.h.b16 %v3130
        %v4011 = vunpack.c.l.b16 %v3131
        %v4012 = vunpack.c.h.b16 %v3131
        %v4013 = vunpack.c.l.b16 %v3132
        %v4014 = vunpack.c.h.b16 %v3132
        %v4015 = vunpack.c.l.b16 %v3133
        %v4016 = vunpack.c.h.b16 %v3133
        %v4017 = vunpack.c.l.b16 %v3134
        %v4018 = vunpack.c.h.b16 %v3134
        %v4019 = vunpack.c.l.b16 %v3135
        %v4020 = vunpack.c.h.b16 %v3135
        %v4021 = vunpack.c.l.b16 %v3136
        %v4022 = vunpack.c.h.b16 %v3136
        %v4023 = vunpack.c.l.b16 %v3137
        %v4024 = vunpack.c.h.b16 %v3137
        %v4025 = vunpack.c.l.b16 %v3138
        %v4026 = vunpack.c.h.b16 %v3138
        %v4027 = vunpack.c.l.b16 %v3139
        %v4028 = vunpack.c.h.b16 %v3139
        %v4029 = vunpack.c.l.b16 %v3140
        %v4030 = vunpack.c.h.b16 %v3140
        %v4031 = vunpack.c.l.b16 %v3141
        %v4032 = vunpack.c.h.b16 %v3141
        %v4033 = vunpack.c.l.b16 %v3142
        %v4034 = vunpack.c.h.b16 %v3142
        %v4035 = vunpack.c.l.b16 %v3143
        %v4036 = vunpack.c.h.b16 %v3143
        %v4037 = vunpack.c.l.b16 %v3144
        %v4038 = vunpack.c.h.b16 %v3144
        %v4039 = vunpack.c.l.b16 %v3145
        %v4040 = vunpack.c.h.b16 %v3145
        %v4041 = vunpack.c.l.b16 %v3146
        %v4042 = vunpack.c.h.b16 %v3146
        %v4043 = vunpack.c.l.b16 %v3147
        %v4044 = vunpack.c.h.b16 %v3147
        %v4045 = vunpack.c.l.b16 %v3148
        %v4046 = vunpack.c.h.b16 %v3148
        %v4047 = vunpack.c.l.b16 %v3149
        %v4048 = vunpack.c.h.b16 %v3149
        %v4049 = vunpack.c.l.b16 %v3150
        %v4050 = vunpack.c.h.b16 %v3150
        %v4051 = vunpack.c.l.b16 %v3151
        %v4052 = vunpack.c.h.b16 %v3151
        %v4053 = vunpack.c.l.b16 %v3152
        %v4054 = vunpack.c.h.b16 %v3152
        %v4055 = vunpack.c.l.b16 %v3153
        %v4056 = vunpack.c.h.b16 %v3153
        %v4057 = vunpack.c.l.b16 %v3154
        %v4058 = vunpack.c.h.b16 %v3154
        %v4059 = vunpack.c.l.b16 %v3155
        %v4060 = vunpack.c.h.b16 %v3155
        %v4061 = vunpack.c.l.b16 %v3156
        %v4062 = vunpack.c.h.b16 %v3156
        %v4063 = vunpack.c.l.b16 %v3157
        %v4064 = vunpack.c.h.b16 %v3157
        %v4065 = vunpack.c.l.b16 %v3158
        %v4066 = vunpack.c.h.b16 %v3158
        %v4067 = vunpack.c.l.b16 %v3159
        %v4068 = vunpack.c.h.b16 %v3159
        %v4069 = vunpack.c.l.b16 %v3160
        %v4070 = vunpack.c.h.b16 %v3160
        %v4071 = vunpack.c.l.b16 %v3161
        %v4072 = vunpack.c.h.b16 %v3161
        %v4073 = vunpack.c.l.b16 %v3162
        %v4074 = vunpack.c.h.b16 %v3162
        %v4075 = vunpack.c.l.b16 %v3163
        %v4076 = vunpack.c.h.b16 %v3163
        %v4077 = vunpack.c.l.b16 %v3164
        %v4078 = vunpack.c.h.b16 %v3164
        %v4079 = vunpack.c.l.b16 %v3165
        %v4080 = vunpack.c.h.b16 %v3165
        %v4081 = vunpack.c.l.b16 %v3166
        %v4082 = vunpack.c.h.b16 %v3166
        %v4083 = vunpack.c.l.b16 %v3167
        %v4084 = vunpack.c.h.b16 %v3167
        %v4085 = vunpack.c.l.b16 %v3168
        %v4086 = vunpack.c.h.b16 %v3168
        %v4087 = vunpack.c.l.b16 %v3169
        %v4088 = vunpack.c.h.b16 %v3169
        %v4089 = vunpack.c.l.b16 %v3170
        %v4090 = vunpack.c.h.b16 %v3170
        %v4091 = vunpack.c.l.b16 %v3171
        %v4092 = vunpack.c.h.b16 %v3171
        %v4093 = vunpack.c.l.b16 %v3172
        %v4094 = vunpack.c.h.b16 %v3172
        %v4095 = vunpack.c.l.b16 %v3173
        %v4096 = vunpack.c.h.b16 %v3173
        %v4097 = vunpack.c.l.b16 %v3174
        %v4098 = vunpack.c.h.b16 %v3174
        %v4099 = vunpack.c.l.b16 %v3175
        %v4100 = vunpack.c.h.b16 %v3175
        %v4101 = vunpack.c.l.b16 %v3176
        %v4102 = vunpack.c.h.b16 %v3176
        %v4103 = vunpack.c.l.b16 %v3177
        %v4104 = vunpack.c.h.b16 %v3177
        %v4105 = vunpack.c.l.b16 %v3178
        %v4106 = vunpack.c.h.b16 %v3178
        %v4107 = vunpack.c.l.b16 %v3179
        %v4108 = vunpack.c.h.b16 %v3179
        %v4109 = vunpack.c.l.b16 %v3180
        %v4110 = vunpack.c.h.b16 %v3180
        %v4111 = vunpack.c.l.b16 %v3181
        %v4112 = vunpack.c.h.b16 %v3181
        %v4113 = vunpack.c.l.b16 %v3182
        %v4114 = vunpack.c.h.b16 %v3182
        %v4115 = vunpack.c.l.b16 %v3183
        %v4116 = vunpack.c.h.b16 %v3183
        %v4117 = vunpack.c.l.b16 %v3184
        %v4118 = vunpack.c.h.b16 %v3184
        %v4119 = vunpack.c.l.b16 %v3185
        %v4120 = vunpack.c.h.b16 %v3185
        %v4121 = vunpack.c.l.b16 %v3186
        %v4122 = vunpack.c.h.b16 %v3186
        %v4123 = vunpack.c.l.b16 %v3187
        %v4124 = vunpack.c.h.b16 %v3187
        %v4125 = vunpack.c.l.b16 %v3188
        %v4126 = vunpack.c.h.b16 %v3188
        %v4127 = vunpack.c.l.b16 %v3189
        %v4128 = vunpack.c.h.b16 %v3189
        %v4129 = vunpack.c.l.b16 %v3190
        %v4130 = vunpack.c.h.b16 %v3190
        %v4131 = vunpack.c.l.b16 %v3191
        %v4132 = vunpack.c.h.b16 %v3191
        %v4133 = vunpack.c.l.b16 %v3192
        %v4134 = vunpack.c.h.b16 %v3192
        %v4135 = vunpack.c.l.b16 %v3193
        %v4136 = vunpack.c.h.b16 %v3193
        %v4137 = vunpack.c.l.b16 %v3194
        %v4138 = vunpack.c.h.b16 %v3194
        %v4139 = vunpack.c.l.b16 %v3195
        %v4140 = vunpack.c.h.b16 %v3195
        %v4141 = vunpack.c.l.b16 %v3196
        %v4142 = vunpack.c.h.b16 %v3196
        %v4143 = vunpack.c.l.b16 %v3197
        %v4144 = vunpack.c.h.b16 %v3197
        %v4145 = vunpack.c.l.b16 %v3198
        %v4146 = vunpack.c.h.b16 %v3198
        %v4147 = vunpack.c.l.b16 %v3199
        %v4148 = vunpack.c.h.b16 %v3199
        %v4149 = vunpack.c.l.b16 %v3200
        %v4150 = vunpack.c.h.b16 %v3200
        %v4151 = vunpack.c.l.b16 %v3201
        %v4152 = vunpack.c.h.b16 %v3201
        %v4153 = vunpack.c.l.b16 %v3202
        %v4154 = vunpack.c.h.b16 %v3202
        %v4155 = vunpack.c.l.b16 %v3203
        %v4156 = vunpack.c.h.b16 %v3203
        %v4157 = vunpack.c.l.b16 %v3204
        %v4158 = vunpack.c.h.b16 %v3204
        %v4159 = vpack.c.b16 %v3589, %v3583
        %v4160 = vpack.c.b16 %v3590, %v3584
        %v4161 = vpack.c.b16 %v3591, %v3585
        %v4162 = vpack.c.b16 %v3592, %v3586
        %v4163 = vpack.c.b16 %v3593, %v3587
        %v4164 = vpack.c.b16 %v3594, %v3588
        %v4165 = vpack.c.b16 %v3601, %v3595
        %v4166 = vpack.c.b16 %v3602, %v3596
        %v4167 = vpack.c.b16 %v3603, %v3597
        %v4168 = vpack.c.b16 %v3604, %v3598
        %v4169 = vpack.c.b16 %v3605, %v3599
        %v4170 = vpack.c.b16 %v3606, %v3600
        %v4171 = vpack.c.b16 %v3613, %v3607
        %v4172 = vpack.c.b16 %v3614, %v3608
        %v4173 = vpack.c.b16 %v3615, %v3609
        %v4174 = vpack.c.b16 %v3616, %v3610
        %v4175 = vpack.c.b16 %v3617, %v3611
        %v4176 = vpack.c.b16 %v3618, %v3612
        %v4177 = vpack.c.b16 %v3625, %v3619
        %v4178 = vpack.c.b16 %v3626, %v3620
        %v4179 = vpack.c.b16 %v3627, %v3621
        %v4180 = vpack.c.b16 %v3628, %v3622
        %v4181 = vpack.c.b16 %v3629, %v3623
        %v4182 = vpack.c.b16 %v3630, %v3624
        %v4183 = vpack.c.b16 %v3637, %v3631
        %v4184 = vpack.c.b16 %v3638, %v3632
        %v4185 = vpack.c.b16 %v3639, %v3633
        %v4186 = vpack.c.b16 %v3640, %v3634
        %v4187 = vpack.c.b16 %v3641, %v3635
        %v4188 = vpack.c.b16 %v3642, %v3636
        %v4189 = vpack.c.b16 %v3649, %v3643
        %v4190 = vpack.c.b16 %v3650, %v3644
        %v4191 = vpack.c.b16 %v3651, %v3645
        %v4192 = vpack.c.b16 %v3652, %v3646
        %v4193 = vpack.c.b16 %v3653, %v3647
        %v4194 = vpack.c.b16 %v3654, %v3648
        %v4195 = vpack.c.b16 %v3661, %v3655
        %v4196 = vpack.c.b16 %v3662, %v3656
        %v4197 = vpack.c.b16 %v3663, %v3657
        %v4198 = vpack.c.b16 %v3664, %v3658
        %v4199 = vpack.c.b16 %v3665, %v3659
        %v4200 = vpack.c.b16 %v3666, %v3660
        %v4201 = vpack.c.b16 %v3673, %v3667
        %v4202 = vpack.c.b16 %v3674, %v3668
        %v4203 = vpack.c.b16 %v3675, %v3669
        %v4204 = vpack.c.b16 %v3676, %v3670
        %v4205 = vpack.c.b16 %v3677, %v3671
        %v4206 = vpack.c.b16 %v3678, %v3672
        %v4207 = vpack.c.b16 %v3685, %v3679
        %v4208 = vpack.c.b16 %v3686, %v3680
        %v4209 = vpack.c.b16 %v3687, %v3681
        %v4210 = vpack.c.b16 %v3688, %v3682
        %v4211 = vpack.c.b16 %v3689, %v3683
        %v4212 = vpack.c.b16 %v3690, %v3684
        %v4213 = vpack.c.b16 %v3697, %v3691
        %v4214 = vpack.c.b16 %v3698, %v3692
        %v4215 = vpack.c.b16 %v3699, %v3693
        %v4216 = vpack.c.b16 %v3700, %v3694
        %v4217 = vpack.c.b16 %v3701, %v3695
        %v4218 = vpack.c.b16 %v3702, %v3696
        %v4219 = vpack.c.b16 %v3709, %v3703
        %v4220 = vpack.c.b16 %v3710, %v3704
        %v4221 = vpack.c.b16 %v3711, %v3705
        %v4222 = vpack.c.b16 %v3712, %v3706
        %v4223 = vpack.c.b16 %v3713, %v3707
        %v4224 = vpack.c.b16 %v3714, %v3708
        %v4225 = vpack.c.b16 %v3721, %v3715
        %v4226 = vpack.c.b16 %v3722, %v3716
        %v4227 = vpack.c.b16 %v3723, %v3717
        %v4228 = vpack.c.b16 %v3724, %v3718
        %v4229 = vpack.c.b16 %v3725, %v3719
        %v4230 = vpack.c.b16 %v3726, %v3720
        %v4231 = vpack.c.b16 %v3733, %v3727
        %v4232 = vpack.c.b16 %v3734, %v3728
        %v4233 = vpack.c.b16 %v3735, %v3729
        %v4234 = vpack.c.b16 %v3736, %v3730
        %v4235 = vpack.c.b16 %v3737, %v3731
        %v4236 = vpack.c.b16 %v3738, %v3732
        %v4237 = vpack.c.b16 %v3745, %v3739
        %v4238 = vpack.c.b16 %v3746, %v3740
        %v4239 = vpack.c.b16 %v3747, %v3741
        %v4240 = vpack.c.b16 %v3748, %v3742
        %v4241 = vpack.c.b16 %v3749, %v3743
        %v4242 = vpack.c.b16 %v3750, %v3744
        %v4243 = vpack.c.b16 %v3757, %v3751
        %v4244 = vpack.c.b16 %v3758, %v3752
        %v4245 = vpack.c.b16 %v3759, %v3753
        %v4246 = vpack.c.b16 %v3760, %v3754
        %v4247 = vpack.c.b16 %v3761, %v3755
        %v4248 = vpack.c.b16 %v3762, %v3756
        %v4249 = vpack.c.b16 %v3769, %v3763
        %v4250 = vpack.c.b16 %v3770, %v3764
        %v4251 = vpack.c.b16 %v3771, %v3765
        %v4252 = vpack.c.b16 %v3772, %v3766
        %v4253 = vpack.c.b16 %v3773, %v3767
        %v4254 = vpack.c.b16 %v3774, %v3768
        %v4255 = vpack.c.b16 %v3781, %v3775
        %v4256 = vpack.c.b16 %v3782, %v3776
        %v4257 = vpack.c.b16 %v3783, %v3777
        %v4258 = vpack.c.b16 %v3784, %v3778
        %v4259 = vpack.c.b16 %v3785, %v3779
        %v4260 = vpack.c.b16 %v3786, %v3780
        %v4261 = vpack.c.b16 %v3793, %v3787
        %v4262 = vpack.c.b16 %v3794, %v3788
        %v4263 = vpack.c.b16 %v3795, %v3789
        %v4264 = vpack.c.b16 %v3796, %v3790
        %v4265 = vpack.c.b16 %v3797, %v3791
        %v4266 = vpack.c.b16 %v3798, %v3792
        %v4267 = vpack.c.b16 %v3805, %v3799
        %v4268 = vpack.c.b16 %v3806, %v3800
        %v4269 = vpack.c.b16 %v3807, %v3801
        %v4270 = vpack.c.b16 %v3808, %v3802
        %v4271 = vpack.c.b16 %v3809, %v3803
        %v4272 = vpack.c.b16 %v3810, %v3804
        %v4273 = vpack.c.b16 %v3817, %v3811
        %v4274 = vpack.c.b16 %v3818, %v3812
        %v4275 = vpack.c.b16 %v3819, %v3813
        %v4276 = vpack.c.b16 %v3820, %v3814
        %v4277 = vpack.c.b16 %v3821, %v3815
        %v4278 = vpack.c.b16 %v3822, %v3816
        %v4279 = vpack.c.b16 %v3829, %v3823
        %v4280 = vpack.c.b16 %v3830, %v3824
        %v4281 = vpack.c.b16 %v3831, %v3825
        %v4282 = vpack.c.b16 %v3832, %v3826
        %v4283 = vpack.c.b16 %v3833, %v3827
        %v4284 = vpack.c.b16 %v3834, %v3828
        %v4285 = vpack.c.b16 %v3841, %v3835
        %v4286 = vpack.c.b16 %v3842, %v3836
        %v4287 = vpack.c.b16 %v3843, %v3837
        %v4288 = vpack.c.b16 %v3844, %v3838
        %v4289 = vpack.c.b16 %v3845, %v3839
        %v4290 = vpack.c.b16 %v3846, %v3840
        %v4291 = vpack.c.b16 %v3853, %v3847
        %v4292 = vpack.c.b16 %v3854, %v3848
        %v4293 = vpack.c.b16 %v3855, %v3849
        %v4294 = vpack.c.b16 %v3856, %v3850
        %v4295 = vpack.c.b16 %v3857, %v3851
        %v4296 = vpack.c.b16 %v3858, %v3852
        %v4297 = vpack.c.b16 %v3865, %v3859
        %v4298 = vpack.c.b16 %v3866, %v3860
        %v4299 = vpack.c.b16 %v3867, %v3861
        %v4300 = vpack.c.b16 %v3868, %v3862
        %v4301 = vpack.c.b16 %v3869, %v3863
        %v4302 = vpack.c.b16 %v3870, %v3864
        %v4303 = vpack.c.b16 %v3877, %v3871
        %v4304 = vpack.c.b16 %v3878, %v3872
        %v4305 = vpack.c.b16 %v3879, %v3873
        %v4306 = vpack.c.b16 %v3880, %v3874
        %v4307 = vpack.c.b16 %v3881, %v3875
        %v4308 = vpack.c.b16 %v3882, %v3876
        %v4309 = vpack.c.b16 %v3889, %v3883
        %v4310 = vpack.c.b16 %v3890, %v3884
        %v4311 = vpack.c.b16 %v3891, %v3885
        %v4312 = vpack.c.b16 %v3892, %v3886
        %v4313 = vpack.c.b16 %v3893, %v3887
        %v4314 = vpack.c.b16 %v3894, %v3888
        %v4315 = vpack.c.b16 %v3901, %v3895
        %v4316 = vpack.c.b16 %v3902, %v3896
        %v4317 = vpack.c.b16 %v3903, %v3897
        %v4318 = vpack.c.b16 %v3904, %v3898
        %v4319 = vpack.c.b16 %v3905, %v3899
        %v4320 = vpack.c.b16 %v3906, %v3900
        %v4321 = vpack.c.b16 %v3913, %v3907
        %v4322 = vpack.c.b16 %v3914, %v3908
        %v4323 = vpack.c.b16 %v3915, %v3909
        %v4324 = vpack.c.b16 %v3916, %v3910
        %v4325 = vpack.c.b16 %v3917, %v3911
        %v4326 = vpack.c.b16 %v3918, %v3912
        %v4327 = vpack.c.b16 %v3925, %v3919
        %v4328 = vpack.c.b16 %v3926, %v3920
        %v4329 = vpack.c.b16 %v3927, %v3921
        %v4330 = vpack.c.b16 %v3928, %v3922
        %v4331 = vpack.c.b16 %v3929, %v3923
        %v4332 = vpack.c.b16 %v3930, %v3924
        %v4333 = vpack.c.b16 %v3937, %v3931
        %v4334 = vpack.c.b16 %v3938, %v3932
        %v4335 = vpack.c.b16 %v3939, %v3933
        %v4336 = vpack.c.b16 %v3940, %v3934
        %v4337 = vpack.c.b16 %v3941, %v3935
        %v4338 = vpack.c.b16 %v3942, %v3936
        %v4339 = vpack.c.b16 %v3949, %v3943
        %v4340 = vpack.c.b16 %v3950, %v3944
        %v4341 = vpack.c.b16 %v3951, %v3945
        %v4342 = vpack.c.b16 %v3952, %v3946
        %v4343 = vpack.c.b16 %v3953, %v3947
        %v4344 = vpack.c.b16 %v3954, %v3948
        %v4345 = vpack.c.b16 %v3961, %v3955
        %v4346 = vpack.c.b16 %v3962, %v3956
        %v4347 = vpack.c.b16 %v3963, %v3957
        %v4348 = vpack.c.b16 %v3964, %v3958
        %v4349 = vpack.c.b16 %v3965, %v3959
        %v4350 = vpack.c.b16 %v3966, %v3960
        %v4351 = vpack.c.b16 %v3973, %v3967
        %v4352 = vpack.c.b16 %v3974, %v3968
        %v4353 = vpack.c.b16 %v3975, %v3969
        %v4354 = vpack.c.b16 %v3976, %v3970
        %v4355 = vpack.c.b16 %v3977, %v3971
        %v4356 = vpack.c.b16 %v3978, %v3972
        %v4357 = vpack.c.b16 %v3985, %v3979
        %v4358 = vpack.c.b16 %v3986, %v3980
        %v4359 = vpack.c.b16 %v3987, %v3981
        %v4360 = vpack.c.b16 %v3988, %v3982
        %v4361 = vpack.c.b16 %v3989, %v3983
        %v4362 = vpack.c.b16 %v3990, %v3984
        %v4363 = vpack.c.b16 %v3997, %v3991
        %v4364 = vpack.c.b16 %v3998, %v3992
        %v4365 = vpack.c.b16 %v3999, %v3993
        %v4366 = vpack.c.b16 %v4000, %v3994
        %v4367 = vpack.c.b16 %v4001, %v3995
        %v4368 = vpack.c.b16 %v4002, %v3996
        %v4369 = vpack.c.b16 %v4009, %v4003
        %v4370 = vpack.c.b16 %v4010, %v4004
        %v4371 = vpack.c.b16 %v4011, %v4005
        %v4372 = vpack.c.b16 %v4012, %v4006
        %v4373 = vpack.c.b16 %v4013, %v4007
        %v4374 = vpack.c.b16 %v4014, %v4008
        %v4375 = vpack.c.b16 %v4021, %v4015
        %v4376 = vpack.c.b16 %v4022, %v4016
        %v4377 = vpack.c.b16 %v4023, %v4017
        %v4378 = vpack.c.b16 %v4024, %v4018
        %v4379 = vpack.c.b16 %v4025, %v4019
        %v4380 = vpack.c.b16 %v4026, %v4020
        %v4381 = vpack.c.b16 %v4033, %v4027
        %v4382 = vpack.c.b16 %v4034, %v4028
        %v4383 = vpack.c.b16 %v4035, %v4029
        %v4384 = vpack.c.b16 %v4036, %v4030
        %v4385 = vpack.c.b16 %v4037, %v4031
        %v4386 = vpack.c.b16 %v4038, %v4032
        %v4387 = vpack.c.b16 %v4045, %v4039
        %v4388 = vpack.c.b16 %v4046, %v4040
        %v4389 = vpack.c.b16 %v4047, %v4041
        %v4390 = vpack.c.b16 %v4048, %v4042
        %v4391 = vpack.c.b16 %v4049, %v4043
        %v4392 = vpack.c.b16 %v4050, %v4044
        %v4393 = vpack.c.b16 %v4057, %v4051
        %v4394 = vpack.c.b16 %v4058, %v4052
        %v4395 = vpack.c.b16 %v4059, %v4053
        %v4396 = vpack.c.b16 %v4060, %v4054
        %v4397 = vpack.c.b16 %v4061, %v4055
        %v4398 = vpack.c.b16 %v4062, %v4056
        %v4399 = vpack.c.b16 %v4069, %v4063
        %v4400 = vpack.c.b16 %v4070, %v4064
        %v4401 = vpack.c.b16 %v4071, %v4065
        %v4402 = vpack.c.b16 %v4072, %v4066
        %v4403 = vpack.c.b16 %v4073, %v4067
        %v4404 = vpack.c.b16 %v4074, %v4068
        %v4405 = vpack.c.b16 %v4081, %v4075
        %v4406 = vpack.c.b16 %v4082, %v4076
        %v4407 = vpack.c.b16 %v4083, %v4077
        %v4408 = vpack.c.b16 %v4084, %v4078
        %v4409 = vpack.c.b16 %v4085, %v4079
        %v4410 = vpack.c.b16 %v4086, %v4080
        %v4411 = vpack.c.b16 %v4093, %v4087
        %v4412 = vpack.c.b16 %v4094, %v4088
        %v4413 = vpack.c.b16 %v4095, %v4089
        %v4414 = vpack.c.b16 %v4096, %v4090
        %v4415 = vpack.c.b16 %v4097, %v4091
        %v4416 = vpack.c.b16 %v4098, %v4092
        %v4417 = vpack.c.b16 %v4105, %v4099
        %v4418 = vpack.c.b16 %v4106, %v4100
        %v4419 = vpack.c.b16 %v4107, %v4101
        %v4420 = vpack.c.b16 %v4108, %v4102
        %v4421 = vpack.c.b16 %v4109, %v4103
        %v4422 = vpack.c.b16 %v4110, %v4104
        %v4423 = vpack.c.b16 %v4117, %v4111
        %v4424 = vpack.c.b16 %v4118, %v4112
        %v4425 = vpack.c.b16 %v4119, %v4113
        %v4426 = vpack.c.b16 %v4120, %v4114
        %v4427 = vpack.c.b16 %v4121, %v4115
        %v4428 = vpack.c.b16 %v4122, %v4116
        %v4429 = vpack.c.b16 %v4129, %v4123
        %v4430 = vpack.c.b16 %v4130, %v4124
        %v4431 = vpack.c.b16 %v4131, %v4125
        %v4432 = vpack.c.b16 %v4132, %v4126
        %v4433 = vpack.c.b16 %v4133, %v4127
        %v4434 = vpack.c.b16 %v4134, %v4128
        %v4435 = vpack.c.b16 %v4141, %v4135
        %v4436 = vpack.c.b16 %v4142, %v4136
        %v4437 = vpack.c.b16 %v4143, %v4137
        %v4438 = vpack.c.b16 %v4144, %v4138
        %v4439 = vpack.c.b16 %v4145, %v4139
        %v4440 = vpack.c.b16 %v4146, %v4140
        %v4441 = vpack.c.b16 %v4153, %v4147
        %v4442 = vpack.c.b16 %v4154, %v4148
        %v4443 = vpack.c.b16 %v4155, %v4149
        %v4444 = vpack.c.b16 %v4156, %v4150
        %v4445 = vpack.c.b16 %v4157, %v4151
        %v4446 = vpack.c.b16 %v4158, %v4152
        %4735 = vmatprep.subr.bf16.mxu0 %v4160
        %4736 = vmatpush1.bf16.msra.mxu0 %v4159
        %4737 = vmatprep.subr.bf16.mxu0 %v4166
        %4738 = vmatpush1.bf16.msra.mxu0 %v4165
        %4739 = vmatprep.subr.bf16.mxu0 %v4172
        %4740 = vmatpush1.bf16.msra.mxu0 %v4171
        %4741 = vmatprep.subr.bf16.mxu0 %v4178
        %4742 = vmatpush1.bf16.msra.mxu0 %v4177
        %4743 = vmatprep.subr.bf16.mxu0 %v4184
        %4744 = vmatpush1.bf16.msra.mxu0 %v4183
        %4745 = vmatprep.subr.bf16.mxu0 %v4190
        %4746 = vmatpush1.bf16.msra.mxu0 %v4189
        %4747 = vmatprep.subr.bf16.mxu0 %v4196
        %4748 = vmatpush1.bf16.msra.mxu0 %v4195
        %4749 = vmatprep.subr.bf16.mxu0 %v4202
        %4750 = vmatpush1.bf16.msra.mxu0 %v4201
        %4751 = vmatprep.subr.bf16.mxu0 %v4208
        %4752 = vmatpush1.bf16.msra.mxu0 %v4207
        %4753 = vmatprep.subr.bf16.mxu0 %v4214
        %4754 = vmatpush1.bf16.msra.mxu0 %v4213
        %4755 = vmatprep.subr.bf16.mxu0 %v4220
        %4756 = vmatpush1.bf16.msra.mxu0 %v4219
        %4757 = vmatprep.subr.bf16.mxu0 %v4226
        %4758 = vmatpush1.bf16.msra.mxu0 %v4225
        %4759 = vmatprep.subr.bf16.mxu0 %v4232
        %4760 = vmatpush1.bf16.msra.mxu0 %v4231
        %4761 = vmatprep.subr.bf16.mxu0 %v4238
        %4762 = vmatpush1.bf16.msra.mxu0 %v4237
        %4763 = vmatprep.subr.bf16.mxu0 %v4244
        %4764 = vmatpush1.bf16.msra.mxu0 %v4243
        %4765 = vmatprep.subr.bf16.mxu0 %v4250
        %4766 = vmatpush1.bf16.msra.mxu0 %v4249
        %4767 = vmatprep.mubr.bf16.mxu0 %v3260
        %4768 = vmatmul.mubr.bf16.gmra.mrb[0].mxu0 %v3259
        %v4769 = vpop.f32.mrb[0].mxu0
        %v4770 = vadd.f32 0.0, %v4769
        %v4771 = vpop.f32.mrb[0].mxu0
        %v4772 = vadd.f32 0.0, %v4771
        %v4773 = vpop.f32.mrb[0].mxu0
        %v4774 = vadd.f32 0.0, %v4773
        %v4775 = vpop.f32.mrb[0].mxu0
        %v4776 = vadd.f32 0.0, %v4775
        %4777 = vmatprep.mubr.bf16.mxu0 %v3266
        %4778 = vmatmul.mubr.bf16.gmra.mrb[0].mxu0 %v3265
        %v4779 = vpop.f32.mrb[0].mxu0
        %v4780 = vpop.f32.mrb[0].mxu0
        %v4781 = vpop.f32.mrb[0].mxu0
        %v4782 = vadd.f32 0.0, %v4781
        %v4783 = vpop.f32.mrb[0].mxu0
        %v4784 = vadd.f32 0.0, %v4783
        %4785 = vmatprep.mubr.bf16.mxu0 %v3272
        %4786 = vmatmul.mubr.bf16.gmra.mrb[0].mxu0 %v3271
        %v4787 = vpop.f32.mrb[0].mxu0
        %v4788 = vadd.f32 0.0, %v4787
        %v4789 = vpop.f32.mrb[0].mxu0
        %v4790 = vadd.f32 0.0, %v4789
        %v4791 = vpop.f32.mrb[0].mxu0
        %v4792 = vpop.f32.mrb[0].mxu0
        %4793 = vdwg.mxu0
        %4794 = vmatprep.subr.bf16.mxu0 %v4256
        %4795 = vmatpush1.bf16.msra.mxu0 %v4255
        %4796 = vmatprep.subr.bf16.mxu0 %v4262
        %4797 = vmatpush1.bf16.msra.mxu0 %v4261
        %4798 = vmatprep.subr.bf16.mxu0 %v4268
        %4799 = vmatpush1.bf16.msra.mxu0 %v4267
        %4800 = vmatprep.subr.bf16.mxu0 %v4274
        %4801 = vmatpush1.bf16.msra.mxu0 %v4273
        %4802 = vmatprep.subr.bf16.mxu0 %v4280
        %4803 = vmatpush1.bf16.msra.mxu0 %v4279
        %4804 = vmatprep.subr.bf16.mxu0 %v4286
        %4805 = vmatpush1.bf16.msra.mxu0 %v4285
        %4806 = vmatprep.subr.bf16.mxu0 %v4292
        %4807 = vmatpush1.bf16.msra.mxu0 %v4291
        %4808 = vmatprep.subr.bf16.mxu0 %v4298
        %4809 = vmatpush1.bf16.msra.mxu0 %v4297
        %4810 = vmatprep.subr.bf16.mxu0 %v4304
        %4811 = vmatpush1.bf16.msra.mxu0 %v4303
        %4812 = vmatprep.subr.bf16.mxu0 %v4310
        %4813 = vmatpush1.bf16.msra.mxu0 %v4309
        %4814 = vmatprep.subr.bf16.mxu0 %v4316
        %4815 = vmatpush1.bf16.msra.mxu0 %v4315
        %4816 = vmatprep.subr.bf16.mxu0 %v4322
        %4817 = vmatpush1.bf16.msra.mxu0 %v4321
        %4818 = vmatprep.subr.bf16.mxu0 %v4328
        %4819 = vmatpush1.bf16.msra.mxu0 %v4327
        %4820 = vmatprep.subr.bf16.mxu0 %v4334
        %4821 = vmatpush1.bf16.msra.mxu0 %v4333
        %4822 = vmatprep.subr.bf16.mxu0 %v4340
        %4823 = vmatpush1.bf16.msra.mxu0 %v4339
        %4824 = vmatprep.subr.bf16.mxu0 %v4346
        %4825 = vmatpush1.bf16.msra.mxu0 %v4345
        %4826 = vmatprep.mubr.bf16.mxu0 %v3262
        %4827 = vmatmul.mubr.bf16.gmra.mrb[0].mxu0 %v3261
        %v4828 = vpop.f32.mrb[0].mxu0
        %v4829 = vadd.f32 %v4770, %v4828
        %v4830 = vpop.f32.mrb[0].mxu0
        %v4831 = vadd.f32 %v4772, %v4830
        %v4832 = vpop.f32.mrb[0].mxu0
        %v4833 = vadd.f32 %v4774, %v4832
        %v4834 = vpop.f32.mrb[0].mxu0
        %v4835 = vadd.f32 %v4776, %v4834
        %4836 = vmatprep.mubr.bf16.mxu0 %v3268
        %4837 = vmatmul.mubr.bf16.gmra.mrb[0].mxu0 %v3267
        %v4838 = vpop.f32.mrb[0].mxu0
        %v4839 = vpop.f32.mrb[0].mxu0
        %v4840 = vpop.f32.mrb[0].mxu0
        %v4841 = vadd.f32 %v4782, %v4840
        %v4842 = vpop.f32.mrb[0].mxu0
        %v4843 = vadd.f32 %v4784, %v4842
        %4844 = vmatprep.mubr.bf16.mxu0 %v3274
        %4845 = vmatmul.mubr.bf16.gmra.mrb[0].mxu0 %v3273
        %v4846 = vpop.f32.mrb[0].mxu0
        %v4847 = vadd.f32 %v4788, %v4846
        %v4848 = vpop.f32.mrb[0].mxu0
        %v4849 = vadd.f32 %v4790, %v4848
        %v4850 = vpop.f32.mrb[0].mxu0
        %v4851 = vpop.f32.mrb[0].mxu0
        %4852 = vdwg.mxu0
        %4853 = vmatprep.subr.bf16.mxu0 %v4352
        %4854 = vmatpush1.bf16.msra.mxu0 %v4351
        %4855 = vmatprep.subr.bf16.mxu0 %v4358
        %4856 = vmatpush1.bf16.msra.mxu0 %v4357
        %4857 = vmatprep.subr.bf16.mxu0 %v4364
        %4858 = vmatpush1.bf16.msra.mxu0 %v4363
        %4859 = vmatprep.subr.bf16.mxu0 %v4370
        %4860 = vmatpush1.bf16.msra.mxu0 %v4369
        %4861 = vmatprep.subr.bf16.mxu0 %v4376
        %4862 = vmatpush1.bf16.msra.mxu0 %v4375
        %4863 = vmatprep.subr.bf16.mxu0 %v4382
        %4864 = vmatpush1.bf16.msra.mxu0 %v4381
        %4865 = vmatprep.subr.bf16.mxu0 %v4388
        %4866 = vmatpush1.bf16.msra.mxu0 %v4387
        %4867 = vmatprep.subr.bf16.mxu0 %v4394
        %4868 = vmatpush1.bf16.msra.mxu0 %v4393
        %4869 = vmatprep.subr.bf16.mxu0 %v4400
        %4870 = vmatpush1.bf16.msra.mxu0 %v4399
        %4871 = vmatprep.subr.bf16.mxu0 %v4406
        %4872 = vmatpush1.bf16.msra.mxu0 %v4405
        %4873 = vmatprep.subr.bf16.mxu0 %v4412
        %4874 = vmatpush1.bf16.msra.mxu0 %v4411
        %4875 = vmatprep.subr.bf16.mxu0 %v4418
        %4876 = vmatpush1.bf16.msra.mxu0 %v4417
        %4877 = vmatprep.subr.bf16.mxu0 %v4424
        %4878 = vmatpush1.bf16.msra.mxu0 %v4423
        %4879 = vmatprep.subr.bf16.mxu0 %v4430
        %4880 = vmatpush1.bf16.msra.mxu0 %v4429
        %4881 = vmatprep.subr.bf16.mxu0 %v4436
        %4882 = vmatpush1.bf16.msra.mxu0 %v4435
        %4883 = vmatprep.subr.bf16.mxu0 %v4442
        %4884 = vmatpush1.bf16.msra.mxu0 %v4441
        %4885 = vmatprep.mubr.bf16.mxu0 %v3264
        %4886 = vmatmul.mubr.bf16.gmra.mrb[0].mxu0 %v3263
        %v4887 = vpop.f32.mrb[0].mxu0
        %v4888 = vadd.f32 %v4829, %v4887
        %v4889 = vpop.f32.mrb[0].mxu0
        %v4890 = vadd.f32 %v4831, %v4889
        %v4891 = vpop.f32.mrb[0].mxu0
        %v4892 = vadd.f32 %v4833, %v4891
        %v4893 = vpop.f32.mrb[0].mxu0
        %v4894 = vadd.f32 %v4835, %v4893
        %4895 = vmatprep.mubr.bf16.mxu0 %v3270
        %4896 = vmatmul.mubr.bf16.gmra.mrb[0].mxu0 %v3269
        %v4897 = vpop.f32.mrb[0].mxu0
        %v4898 = vpop.f32.mrb[0].mxu0
        %v4899 = vpop.f32.mrb[0].mxu0
        %v4900 = vadd.f32 %v4841, %v4899
        %v4901 = vpop.f32.mrb[0].mxu0
        %v4902 = vadd.f32 %v4843, %v4901
        %4903 = vmatprep.mubr.bf16.mxu0 %v3276
        %4904 = vmatmul.mubr.bf16.gmra.mrb[0].mxu0 %v3275
        %v4905 = vpop.f32.mrb[0].mxu0
        %v4906 = vadd.f32 %v4847, %v4905
        %v4907 = vpop.f32.mrb[0].mxu0
        %v4908 = vadd.f32 %v4849, %v4907
        %v4909 = vpop.f32.mrb[0].mxu0
        %v4910 = vpop.f32.mrb[0].mxu0
        %4911 = vdwg.mxu0
        %4912 = vmatprep.subr.bf16.mxu0 %v4162
        %4913 = vmatpush1.bf16.msra.mxu0 %v4161
        %4914 = vmatprep.subr.bf16.mxu0 %v4168
        %4915 = vmatpush1.bf16.msra.mxu0 %v4167
        %4916 = vmatprep.subr.bf16.mxu0 %v4174
        %4917 = vmatpush1.bf16.msra.mxu0 %v4173
        %4918 = vmatprep.subr.bf16.mxu0 %v4180
        %4919 = vmatpush1.bf16.msra.mxu0 %v4179
        %4920 = vmatprep.subr.bf16.mxu0 %v4186
        %4921 = vmatpush1.bf16.msra.mxu0 %v4185
        %4922 = vmatprep.subr.bf16.mxu0 %v4192
        %4923 = vmatpush1.bf16.msra.mxu0 %v4191
        %4924 = vmatprep.subr.bf16.mxu0 %v4198
        %4925 = vmatpush1.bf16.msra.mxu0 %v4197
        %4926 = vmatprep.subr.bf16.mxu0 %v4204
        %4927 = vmatpush1.bf16.msra.mxu0 %v4203
        %4928 = vmatprep.subr.bf16.mxu0 %v4210
        %4929 = vmatpush1.bf16.msra.mxu0 %v4209
        %4930 = vmatprep.subr.bf16.mxu0 %v4216
        %4931 = vmatpush1.bf16.msra.mxu0 %v4215
        %4932 = vmatprep.subr.bf16.mxu0 %v4222
        %4933 = vmatpush1.bf16.msra.mxu0 %v4221
        %4934 = vmatprep.subr.bf16.mxu0 %v4228
        %4935 = vmatpush1.bf16.msra.mxu0 %v4227
        %4936 = vmatprep.subr.bf16.mxu0 %v4234
        %4937 = vmatpush1.bf16.msra.mxu0 %v4233
        %4938 = vmatprep.subr.bf16.mxu0 %v4240
        %4939 = vmatpush1.bf16.msra.mxu0 %v4239
        %4940 = vmatprep.subr.bf16.mxu0 %v4246
        %4941 = vmatpush1.bf16.msra.mxu0 %v4245
        %4942 = vmatprep.subr.bf16.mxu0 %v4252
        %4943 = vmatpush1.bf16.msra.mxu0 %v4251
        %4944 = vmatprep.mubr.bf16.mxu0 %v3260
        %4945 = vmatmul.mubr.bf16.gmra.mrb[0].mxu0 %v3259
        %v4946 = vpop.f32.mrb[0].mxu0
        %v4947 = vpop.f32.mrb[0].mxu0
        %v4948 = vpop.f32.mrb[0].mxu0
        %v4949 = vadd.f32 0.0, %v4948
        %v4950 = vpop.f32.mrb[0].mxu0
        %v4951 = vadd.f32 0.0, %v4950
        %4952 = vmatprep.mubr.bf16.mxu0 %v3266
        %4953 = vmatmul.mubr.bf16.gmra.mrb[0].mxu0 %v3265
        %v4954 = vpop.f32.mrb[0].mxu0
        %v4955 = vpop.f32.mrb[0].mxu0
        %v4956 = vpop.f32.mrb[0].mxu0
        %v4957 = vpop.f32.mrb[0].mxu0
        %4958 = vmatprep.mubr.bf16.mxu0 %v3272
        %4959 = vmatmul.mubr.bf16.gmra.mrb[0].mxu0 %v3271
        %v4960 = vpop.f32.mrb[0].mxu0
        %v4961 = vadd.f32 0.0, %v4960
        %v4962 = vpop.f32.mrb[0].mxu0
        %v4963 = vadd.f32 0.0, %v4962
        %v4964 = vpop.f32.mrb[0].mxu0
        %v4965 = vpop.f32.mrb[0].mxu0
        %4966 = vdwg.mxu0
        %4967 = vmatprep.subr.bf16.mxu0 %v4258
        %4968 = vmatpush1.bf16.msra.mxu0 %v4257
        %4969 = vmatprep.subr.bf16.mxu0 %v4264
        %4970 = vmatpush1.bf16.msra.mxu0 %v4263
        %4971 = vmatprep.subr.bf16.mxu0 %v4270
        %4972 = vmatpush1.bf16.msra.mxu0 %v4269
        %4973 = vmatprep.subr.bf16.mxu0 %v4276
        %4974 = vmatpush1.bf16.msra.mxu0 %v4275
        %4975 = vmatprep.subr.bf16.mxu0 %v4282
        %4976 = vmatpush1.bf16.msra.mxu0 %v4281
        %4977 = vmatprep.subr.bf16.mxu0 %v4288
        %4978 = vmatpush1.bf16.msra.mxu0 %v4287
        %4979 = vmatprep.subr.bf16.mxu0 %v4294
        %4980 = vmatpush1.bf16.msra.mxu0 %v4293
        %4981 = vmatprep.subr.bf16.mxu0 %v4300
        %4982 = vmatpush1.bf16.msra.mxu0 %v4299
        %4983 = vmatprep.subr.bf16.mxu0 %v4306
        %4984 = vmatpush1.bf16.msra.mxu0 %v4305
        %4985 = vmatprep.subr.bf16.mxu0 %v4312
        %4986 = vmatpush1.bf16.msra.mxu0 %v4311
        %4987 = vmatprep.subr.bf16.mxu0 %v4318
        %4988 = vmatpush1.bf16.msra.mxu0 %v4317
        %4989 = vmatprep.subr.bf16.mxu0 %v4324
        %4990 = vmatpush1.bf16.msra.mxu0 %v4323
        %4991 = vmatprep.subr.bf16.mxu0 %v4330
        %4992 = vmatpush1.bf16.msra.mxu0 %v4329
        %4993 = vmatprep.subr.bf16.mxu0 %v4336
        %4994 = vmatpush1.bf16.msra.mxu0 %v4335
        %4995 = vmatprep.subr.bf16.mxu0 %v4342
        %4996 = vmatpush1.bf16.msra.mxu0 %v4341
        %4997 = vmatprep.subr.bf16.mxu0 %v4348
        %4998 = vmatpush1.bf16.msra.mxu0 %v4347
        %4999 = vmatprep.mubr.bf16.mxu0 %v3262
        %5000 = vmatmul.mubr.bf16.gmra.mrb[0].mxu0 %v3261
        %v5001 = vpop.f32.mrb[0].mxu0
        %v5002 = vpop.f32.mrb[0].mxu0
        %v5003 = vpop.f32.mrb[0].mxu0
        %v5004 = vadd.f32 %v4949, %v5003
        %v5005 = vpop.f32.mrb[0].mxu0
        %v5006 = vadd.f32 %v4951, %v5005
        %5007 = vmatprep.mubr.bf16.mxu0 %v3268
        %5008 = vmatmul.mubr.bf16.gmra.mrb[0].mxu0 %v3267
        %v5009 = vpop.f32.mrb[0].mxu0
        %v5010 = vpop.f32.mrb[0].mxu0
        %v5011 = vpop.f32.mrb[0].mxu0
        %v5012 = vpop.f32.mrb[0].mxu0
        %5013 = vmatprep.mubr.bf16.mxu0 %v3274
        %5014 = vmatmul.mubr.bf16.gmra.mrb[0].mxu0 %v3273
        %v5015 = vpop.f32.mrb[0].mxu0
        %v5016 = vadd.f32 %v4961, %v5015
        %v5017 = vpop.f32.mrb[0].mxu0
        %v5018 = vadd.f32 %v4963, %v5017
        %v5019 = vpop.f32.mrb[0].mxu0
        %v5020 = vpop.f32.mrb[0].mxu0
        %5021 = vdwg.mxu0
        %5022 = vmatprep.subr.bf16.mxu0 %v4354
        %5023 = vmatpush1.bf16.msra.mxu0 %v4353
        %5024 = vmatprep.subr.bf16.mxu0 %v4360
        %5025 = vmatpush1.bf16.msra.mxu0 %v4359
        %5026 = vmatprep.subr.bf16.mxu0 %v4366
        %5027 = vmatpush1.bf16.msra.mxu0 %v4365
        %5028 = vmatprep.subr.bf16.mxu0 %v4372
        %5029 = vmatpush1.bf16.msra.mxu0 %v4371
        %5030 = vmatprep.subr.bf16.mxu0 %v4378
        %5031 = vmatpush1.bf16.msra.mxu0 %v4377
        %5032 = vmatprep.subr.bf16.mxu0 %v4384
        %5033 = vmatpush1.bf16.msra.mxu0 %v4383
        %5034 = vmatprep.subr.bf16.mxu0 %v4390
        %5035 = vmatpush1.bf16.msra.mxu0 %v4389
        %5036 = vmatprep.subr.bf16.mxu0 %v4396
        %5037 = vmatpush1.bf16.msra.mxu0 %v4395
        %5038 = vmatprep.subr.bf16.mxu0 %v4402
        %5039 = vmatpush1.bf16.msra.mxu0 %v4401
        %5040 = vmatprep.subr.bf16.mxu0 %v4408
        %5041 = vmatpush1.bf16.msra.mxu0 %v4407
        %5042 = vmatprep.subr.bf16.mxu0 %v4414
        %5043 = vmatpush1.bf16.msra.mxu0 %v4413
        %5044 = vmatprep.subr.bf16.mxu0 %v4420
        %5045 = vmatpush1.bf16.msra.mxu0 %v4419
        %5046 = vmatprep.subr.bf16.mxu0 %v4426
        %5047 = vmatpush1.bf16.msra.mxu0 %v4425
        %5048 = vmatprep.subr.bf16.mxu0 %v4432
        %5049 = vmatpush1.bf16.msra.mxu0 %v4431
        %5050 = vmatprep.subr.bf16.mxu0 %v4438
        %5051 = vmatpush1.bf16.msra.mxu0 %v4437
        %5052 = vmatprep.subr.bf16.mxu0 %v4444
        %5053 = vmatpush1.bf16.msra.mxu0 %v4443
        %5054 = vmatprep.mubr.bf16.mxu0 %v3264
        %5055 = vmatmul.mubr.bf16.gmra.mrb[0].mxu0 %v3263
        %v5056 = vpop.f32.mrb[0].mxu0
        %v5057 = vpop.f32.mrb[0].mxu0
        %v5058 = vpop.f32.mrb[0].mxu0
        %v5059 = vadd.f32 %v5004, %v5058
        %v5060 = vpop.f32.mrb[0].mxu0
        %v5061 = vadd.f32 %v5006, %v5060
        %5062 = vmatprep.mubr.bf16.mxu0 %v3270
        %5063 = vmatmul.mubr.bf16.gmra.mrb[0].mxu0 %v3269
        %v5064 = vpop.f32.mrb[0].mxu0
        %v5065 = vpop.f32.mrb[0].mxu0
        %v5066 = vpop.f32.mrb[0].mxu0
        %v5067 = vpop.f32.mrb[0].mxu0
        %5068 = vmatprep.mubr.bf16.mxu0 %v3276
        %5069 = vmatmul.mubr.bf16.gmra.mrb[0].mxu0 %v3275
        %v5070 = vpop.f32.mrb[0].mxu0
        %v5071 = vadd.f32 %v5016, %v5070
        %v5072 = vpop.f32.mrb[0].mxu0
        %v5073 = vadd.f32 %v5018, %v5072
        %v5074 = vpop.f32.mrb[0].mxu0
        %v5075 = vpop.f32.mrb[0].mxu0
        %5076 = vdwg.mxu0
        %5077 = vmatprep.subr.bf16.mxu0 %v4164
        %5078 = vmatpush1.bf16.msra.mxu0 %v4163
        %5079 = vmatprep.subr.bf16.mxu0 %v4170
        %5080 = vmatpush1.bf16.msra.mxu0 %v4169
        %5081 = vmatprep.subr.bf16.mxu0 %v4176
        %5082 = vmatpush1.bf16.msra.mxu0 %v4175
        %5083 = vmatprep.subr.bf16.mxu0 %v4182
        %5084 = vmatpush1.bf16.msra.mxu0 %v4181
        %5085 = vmatprep.subr.bf16.mxu0 %v4188
        %5086 = vmatpush1.bf16.msra.mxu0 %v4187
        %5087 = vmatprep.subr.bf16.mxu0 %v4194
        %5088 = vmatpush1.bf16.msra.mxu0 %v4193
        %5089 = vmatprep.subr.bf16.mxu0 %v4200
        %5090 = vmatpush1.bf16.msra.mxu0 %v4199
        %5091 = vmatprep.subr.bf16.mxu0 %v4206
        %5092 = vmatpush1.bf16.msra.mxu0 %v4205
        %5093 = vmatprep.subr.bf16.mxu0 %v4212
        %5094 = vmatpush1.bf16.msra.mxu0 %v4211
        %5095 = vmatprep.subr.bf16.mxu0 %v4218
        %5096 = vmatpush1.bf16.msra.mxu0 %v4217
        %5097 = vmatprep.subr.bf16.mxu0 %v4224
        %5098 = vmatpush1.bf16.msra.mxu0 %v4223
        %5099 = vmatprep.subr.bf16.mxu0 %v4230
        %5100 = vmatpush1.bf16.msra.mxu0 %v4229
        %5101 = vmatprep.subr.bf16.mxu0 %v4236
        %5102 = vmatpush1.bf16.msra.mxu0 %v4235
        %5103 = vmatprep.subr.bf16.mxu0 %v4242
        %5104 = vmatpush1.bf16.msra.mxu0 %v4241
        %5105 = vmatprep.subr.bf16.mxu0 %v4248
        %5106 = vmatpush1.bf16.msra.mxu0 %v4247
        %5107 = vmatprep.subr.bf16.mxu0 %v4254
        %5108 = vmatpush1.bf16.msra.mxu0 %v4253
        %5109 = vmatprep.mubr.bf16.mxu0 %v3260
        %5110 = vmatmul.mubr.bf16.gmra.mrb[0].mxu0 %v3259
        %v5111 = vpop.f32.mrb[0].mxu0
        %v5112 = vpop.f32.mrb[0].mxu0
        %v5113 = vpop.f32.mrb[0].mxu0
        %v5114 = vadd.f32 0.0, %v5113
        %v5115 = vpop.f32.mrb[0].mxu0
        %v5116 = vadd.f32 0.0, %v5115
        %5117 = vmatprep.mubr.bf16.mxu0 %v3266
        %5118 = vmatmul.mubr.bf16.gmra.mrb[0].mxu0 %v3265
        %v5119 = vpop.f32.mrb[0].mxu0
        %v5120 = vadd.f32 0.0, %v5119
        %v5121 = vpop.f32.mrb[0].mxu0
        %v5122 = vadd.f32 0.0, %v5121
        %v5123 = vpop.f32.mrb[0].mxu0
        %v5124 = vpop.f32.mrb[0].mxu0
        %5125 = vmatprep.mubr.bf16.mxu0 %v3272
        %5126 = vmatmul.mubr.bf16.gmra.mrb[0].mxu0 %v3271
        %v5127 = vpop.f32.mrb[0].mxu0
        %v5128 = vadd.f32 0.0, %v5127
        %v5129 = vpop.f32.mrb[0].mxu0
        %v5130 = vadd.f32 0.0, %v5129
        %v5131 = vpop.f32.mrb[0].mxu0
        %v5132 = vadd.f32 0.0, %v5131
        %v5133 = vpop.f32.mrb[0].mxu0
        %v5134 = vadd.f32 0.0, %v5133
        %5135 = vdwg.mxu0
        %5136 = vmatprep.subr.bf16.mxu0 %v4260
        %5137 = vmatpush1.bf16.msra.mxu0 %v4259
        %5138 = vmatprep.subr.bf16.mxu0 %v4266
        %5139 = vmatpush1.bf16.msra.mxu0 %v4265
        %5140 = vmatprep.subr.bf16.mxu0 %v4272
        %5141 = vmatpush1.bf16.msra.mxu0 %v4271
        %5142 = vmatprep.subr.bf16.mxu0 %v4278
        %5143 = vmatpush1.bf16.msra.mxu0 %v4277
        %5144 = vmatprep.subr.bf16.mxu0 %v4284
        %5145 = vmatpush1.bf16.msra.mxu0 %v4283
        %5146 = vmatprep.subr.bf16.mxu0 %v4290
        %5147 = vmatpush1.bf16.msra.mxu0 %v4289
        %5148 = vmatprep.subr.bf16.mxu0 %v4296
        %5149 = vmatpush1.bf16.msra.mxu0 %v4295
        %5150 = vmatprep.subr.bf16.mxu0 %v4302
        %5151 = vmatpush1.bf16.msra.mxu0 %v4301
        %5152 = vmatprep.subr.bf16.mxu0 %v4308
        %5153 = vmatpush1.bf16.msra.mxu0 %v4307
        %5154 = vmatprep.subr.bf16.mxu0 %v4314
        %5155 = vmatpush1.bf16.msra.mxu0 %v4313
        %5156 = vmatprep.subr.bf16.mxu0 %v4320
        %5157 = vmatpush1.bf16.msra.mxu0 %v4319
        %5158 = vmatprep.subr.bf16.mxu0 %v4326
        %5159 = vmatpush1.bf16.msra.mxu0 %v4325
        %5160 = vmatprep.subr.bf16.mxu0 %v4332
        %5161 = vmatpush1.bf16.msra.mxu0 %v4331
        %5162 = vmatprep.subr.bf16.mxu0 %v4338
        %5163 = vmatpush1.bf16.msra.mxu0 %v4337
        %5164 = vmatprep.subr.bf16.mxu0 %v4344
        %5165 = vmatpush1.bf16.msra.mxu0 %v4343
        %5166 = vmatprep.subr.bf16.mxu0 %v4350
        %5167 = vmatpush1.bf16.msra.mxu0 %v4349
        %5168 = vmatprep.mubr.bf16.mxu0 %v3262
        %5169 = vmatmul.mubr.bf16.gmra.mrb[0].mxu0 %v3261
        %v5170 = vpop.f32.mrb[0].mxu0
        %v5171 = vpop.f32.mrb[0].mxu0
        %v5172 = vpop.f32.mrb[0].mxu0
        %v5173 = vadd.f32 %v5114, %v5172
        %v5174 = vpop.f32.mrb[0].mxu0
        %v5175 = vadd.f32 %v5116, %v5174
        %5176 = vmatprep.mubr.bf16.mxu0 %v3268
        %5177 = vmatmul.mubr.bf16.gmra.mrb[0].mxu0 %v3267
        %v5178 = vpop.f32.mrb[0].mxu0
        %v5179 = vadd.f32 %v5120, %v5178
        %v5180 = vpop.f32.mrb[0].mxu0
        %v5181 = vadd.f32 %v5122, %v5180
        %v5182 = vpop.f32.mrb[0].mxu0
        %v5183 = vpop.f32.mrb[0].mxu0
        %5184 = vmatprep.mubr.bf16.mxu0 %v3274
        %5185 = vmatmul.mubr.bf16.gmra.mrb[0].mxu0 %v3273
        %v5186 = vpop.f32.mrb[0].mxu0
        %v5187 = vadd.f32 %v5128, %v5186
        %v5188 = vpop.f32.mrb[0].mxu0
        %v5189 = vadd.f32 %v5130, %v5188
        %v5190 = vpop.f32.mrb[0].mxu0
        %v5191 = vadd.f32 %v5132, %v5190
        %v5192 = vpop.f32.mrb[0].mxu0
        %v5193 = vadd.f32 %v5134, %v5192
        %5194 = vdwg.mxu0
        %5195 = vmatprep.subr.bf16.mxu0 %v4356
        %5196 = vmatpush1.bf16.msra.mxu0 %v4355
        %5197 = vmatprep.subr.bf16.mxu0 %v4362
        %5198 = vmatpush1.bf16.msra.mxu0 %v4361
        %5199 = vmatprep.subr.bf16.mxu0 %v4368
        %5200 = vmatpush1.bf16.msra.mxu0 %v4367
        %5201 = vmatprep.subr.bf16.mxu0 %v4374
        %5202 = vmatpush1.bf16.msra.mxu0 %v4373
        %5203 = vmatprep.subr.bf16.mxu0 %v4380
        %5204 = vmatpush1.bf16.msra.mxu0 %v4379
        %5205 = vmatprep.subr.bf16.mxu0 %v4386
        %5206 = vmatpush1.bf16.msra.mxu0 %v4385
        %5207 = vmatprep.subr.bf16.mxu0 %v4392
        %5208 = vmatpush1.bf16.msra.mxu0 %v4391
        %5209 = vmatprep.subr.bf16.mxu0 %v4398
        %5210 = vmatpush1.bf16.msra.mxu0 %v4397
        %5211 = vmatprep.subr.bf16.mxu0 %v4404
        %5212 = vmatpush1.bf16.msra.mxu0 %v4403
        %5213 = vmatprep.subr.bf16.mxu0 %v4410
        %5214 = vmatpush1.bf16.msra.mxu0 %v4409
        %5215 = vmatprep.subr.bf16.mxu0 %v4416
        %5216 = vmatpush1.bf16.msra.mxu0 %v4415
        %5217 = vmatprep.subr.bf16.mxu0 %v4422
        %5218 = vmatpush1.bf16.msra.mxu0 %v4421
        %5219 = vmatprep.subr.bf16.mxu0 %v4428
        %5220 = vmatpush1.bf16.msra.mxu0 %v4427
        %5221 = vmatprep.subr.bf16.mxu0 %v4434
        %5222 = vmatpush1.bf16.msra.mxu0 %v4433
        %5223 = vmatprep.subr.bf16.mxu0 %v4440
        %5224 = vmatpush1.bf16.msra.mxu0 %v4439
        %5225 = vmatprep.subr.bf16.mxu0 %v4446
        %5226 = vmatpush1.bf16.msra.mxu0 %v4445
        %5227 = vmatprep.mubr.bf16.mxu0 %v3264
        %5228 = vmatmul.mubr.bf16.gmra.mrb[0].mxu0 %v3263
        %v5229 = vpop.f32.mrb[0].mxu0
        %v5230 = vpop.f32.mrb[0].mxu0
        %v5231 = vpop.f32.mrb[0].mxu0
        %v5232 = vadd.f32 %v5173, %v5231
        %v5233 = vpop.f32.mrb[0].mxu0
        %v5234 = vadd.f32 %v5175, %v5233
        %5235 = vmatprep.mubr.bf16.mxu0 %v3270
        %5236 = vmatmul.mubr.bf16.gmra.mrb[0].mxu0 %v3269
        %v5237 = vpop.f32.mrb[0].mxu0
        %v5238 = vadd.f32 %v5179, %v5237
        %v5239 = vpop.f32.mrb[0].mxu0
        %v5240 = vadd.f32 %v5181, %v5239
        %v5241 = vpop.f32.mrb[0].mxu0
        %v5242 = vpop.f32.mrb[0].mxu0
        %5243 = vmatprep.mubr.bf16.mxu0 %v3276
        %5244 = vmatmul.mubr.bf16.gmra.mrb[0].mxu0 %v3275
        %v5245 = vpop.f32.mrb[0].mxu0
        %v5246 = vadd.f32 %v5187, %v5245
        %v5247 = vpop.f32.mrb[0].mxu0
        %v5248 = vadd.f32 %v5189, %v5247
        %v5249 = vpop.f32.mrb[0].mxu0
        %v5250 = vadd.f32 %v5191, %v5249
        %v5251 = vpop.f32.mrb[0].mxu0
        %v5252 = vadd.f32 %v5193, %v5251
        %5253 = vdwg.mxu0
        %v5254 = vadd.f32 %v2890, %v4888
        %v5255 = vadd.f32 %v2891, %v4890
        %v5256 = vadd.f32 %v2892, %v4892
        %v5257 = vadd.f32 %v2893, %v4894
        %v5258 = vadd.f32 %v2894, %v4900
        %v5259 = vadd.f32 %v2895, %v4902
        %v5260 = vadd.f32 %v2896, %v4906
        %v5261 = vadd.f32 %v2897, %v4908
        %v5266 = vrot.slane %v5059, 1
        %v5267 = vrot.slane %v5061, 1
        %v5268 = vrot.slane %v5071, 1
        %v5269 = vrot.slane %v5073, 1
        %v5274 = vadd.f32 %v5254, %v5266
        %v5275 = vadd.f32 %v5255, %v5267
        %v5276 = vadd.f32 %v5256, %v5266
        %v5277 = vadd.f32 %v5257, %v5267
        %v5278 = vadd.f32 %v5258, %v5268
        %v5279 = vadd.f32 %v5259, %v5269
        %v5280 = vadd.f32 %v5260, %v5268
        %v5281 = vadd.f32 %v5261, %v5269
        %v5290 = vrot.slane %v5232, 2
        %v5291 = vrot.slane %v5234, 2
        %v5292 = vrot.slane %v5238, 2
        %v5293 = vsel %vm2869, %v5290, %v5292
        %v5294 = vrot.slane %v5240, 2
        %v5295 = vsel %vm2869, %v5291, %v5294
        %v5296 = vrot.slane %v5246, 2
        %v5297 = vrot.slane %v5248, 2
        %v5298 = vrot.slane %v5250, 2
        %v5299 = vsel %vm2869, %v5296, %v5298
        %v5300 = vrot.slane %v5252, 2
        %v5301 = vsel %vm2869, %v5297, %v5300
        %v5310 = vadd.f32 %v5274, %v5290
        %v5311 = vadd.f32 %v5275, %v5291
        %v5312 = vadd.f32 %v5276, %v5293
        %v5313 = vadd.f32 %v5277, %v5295
        %v5314 = vadd.f32 %v5278, %v5296
        %v5315 = vadd.f32 %v5279, %v5297
        %v5316 = vadd.f32 %v5280, %v5299
        %v5317 = vadd.f32 %v5281, %v5301
        %s5318 = scalar_lea.vmem [#allocation2], 144
        %v5319 = vld [vmem:[%s5318] sm:$0xff]
        %v5320 = vld [vmem:[%s5318 + $0x8] sm:$0xff]
        %v5321 = vld [vmem:[%s5318 + $0x10] sm:$0xff]
        %v5322 = vld [vmem:[%s5318 + $0x18] sm:$0xff]
        %v5323 = vld [vmem:[%s5318 + $0x20] sm:$0xff]
        %v5324 = vld [vmem:[%s5318 + $0x28] sm:$0xff]
        %v5325 = vld [vmem:[%s5318 + $0x30] sm:$0xff]
        %v5326 = vld [vmem:[%s5318 + $0x38] sm:$0xff]
        %v5327 = vld [vmem:[%s5318 + $0x40] sm:$0xff]
        %v5328 = vld [vmem:[%s5318 + $0x48] sm:$0xff]
        %v5329 = vld [vmem:[%s5318 + $0x50] sm:$0xff]
        %v5330 = vld [vmem:[%s5318 + $0x58] sm:$0xff]
        %v5331 = vld [vmem:[%s5318 + $0x60] sm:$0xff]
        %v5332 = vld [vmem:[%s5318 + $0x68] sm:$0xff]
        %v5333 = vld [vmem:[%s5318 + $0x70] sm:$0xff]
        %v5334 = vld [vmem:[%s5318 + $0x78] sm:$0xff]
        %v5335 = vld [vmem:[%s5318 + $0x80] sm:$0xff]
        %v5336 = vld [vmem:[%s5318 + $0x88] sm:$0xff]
        %s5337 = scalar_lea.vmem [#allocation9], 4608
        %v5338 = vld [vmem:[%s5337] sm:$0xff]
        %v5339 = vld [vmem:[%s5337 + $0x8] sm:$0xff]
        %v5340 = vld [vmem:[%s5337 + $0x10] sm:$0xff]
        %v5341 = vld [vmem:[%s5337 + $0x18] sm:$0xff]
        %v5342 = vld [vmem:[%s5337 + $0x20] sm:$0xff]
        %v5343 = vld [vmem:[%s5337 + $0x28] sm:$0xff]
        %v5344 = vld [vmem:[%s5337 + $0x30] sm:$0xff]
        %v5345 = vld [vmem:[%s5337 + $0x38] sm:$0xff]
        %v5346 = vld [vmem:[%s5337 + $0x40] sm:$0xff]
        %v5347 = vld [vmem:[%s5337 + $0x48] sm:$0xff]
        %v5348 = vld [vmem:[%s5337 + $0x50] sm:$0xff]
        %v5349 = vld [vmem:[%s5337 + $0x58] sm:$0xff]
        %v5350 = vld [vmem:[%s5337 + $0x60] sm:$0xff]
        %v5351 = vld [vmem:[%s5337 + $0x68] sm:$0xff]
        %v5352 = vld [vmem:[%s5337 + $0x70] sm:$0xff]
        %v5353 = vld [vmem:[%s5337 + $0x78] sm:$0xff]
        %v5354 = vld [vmem:[%s5337 + $0x80] sm:$0xff]
        %v5355 = vld [vmem:[%s5337 + $0x88] sm:$0xff]
        %v5356 = vld [vmem:[%s5337 + $0x90] sm:$0xff]
        %v5357 = vld [vmem:[%s5337 + $0x98] sm:$0xff]
        %v5358 = vld [vmem:[%s5337 + $0xa0] sm:$0xff]
        %v5359 = vld [vmem:[%s5337 + $0xa8] sm:$0xff]
        %v5360 = vld [vmem:[%s5337 + $0xb0] sm:$0xff]
        %v5361 = vld [vmem:[%s5337 + $0xb8] sm:$0xff]
        %v5362 = vld [vmem:[%s5337 + $0xc0] sm:$0xff]
        %v5363 = vld [vmem:[%s5337 + $0xc8] sm:$0xff]
        %v5364 = vld [vmem:[%s5337 + $0xd0] sm:$0xff]
        %v5365 = vld [vmem:[%s5337 + $0xd8] sm:$0xff]
        %v5366 = vld [vmem:[%s5337 + $0xe0] sm:$0xff]
        %v5367 = vld [vmem:[%s5337 + $0xe8] sm:$0xff]
        %v5368 = vld [vmem:[%s5337 + $0xf0] sm:$0xff]
        %v5369 = vld [vmem:[%s5337 + $0xf8] sm:$0xff]
        %v5370 = vld [vmem:[%s5337 + $0x100] sm:$0xff]
        %v5371 = vld [vmem:[%s5337 + $0x108] sm:$0xff]
        %v5372 = vld [vmem:[%s5337 + $0x110] sm:$0xff]
        %v5373 = vld [vmem:[%s5337 + $0x118] sm:$0xff]
        %v5374 = vld [vmem:[%s5337 + $0x120] sm:$0xff]
        %v5375 = vld [vmem:[%s5337 + $0x128] sm:$0xff]
        %v5376 = vld [vmem:[%s5337 + $0x130] sm:$0xff]
        %v5377 = vld [vmem:[%s5337 + $0x138] sm:$0xff]
        %v5378 = vld [vmem:[%s5337 + $0x140] sm:$0xff]
        %v5379 = vld [vmem:[%s5337 + $0x148] sm:$0xff]
        %v5380 = vld [vmem:[%s5337 + $0x150] sm:$0xff]
        %v5381 = vld [vmem:[%s5337 + $0x158] sm:$0xff]
        %v5382 = vld [vmem:[%s5337 + $0x160] sm:$0xff]
        %v5383 = vld [vmem:[%s5337 + $0x168] sm:$0xff]
        %v5384 = vld [vmem:[%s5337 + $0x170] sm:$0xff]
        %v5385 = vld [vmem:[%s5337 + $0x178] sm:$0xff]
        %v5386 = vld [vmem:[%s5337 + $0x180] sm:$0xff]
        %v5387 = vld [vmem:[%s5337 + $0x188] sm:$0xff]
        %v5388 = vld [vmem:[%s5337 + $0x190] sm:$0xff]
        %v5389 = vld [vmem:[%s5337 + $0x198] sm:$0xff]
        %v5390 = vld [vmem:[%s5337 + $0x1a0] sm:$0xff]
        %v5391 = vld [vmem:[%s5337 + $0x1a8] sm:$0xff]
        %v5392 = vld [vmem:[%s5337 + $0x1b0] sm:$0xff]
        %v5393 = vld [vmem:[%s5337 + $0x1b8] sm:$0xff]
        %v5394 = vld [vmem:[%s5337 + $0x1c0] sm:$0xff]
        %v5395 = vld [vmem:[%s5337 + $0x1c8] sm:$0xff]
        %v5396 = vld [vmem:[%s5337 + $0x1d0] sm:$0xff]
        %v5397 = vld [vmem:[%s5337 + $0x1d8] sm:$0xff]
        %v5398 = vld [vmem:[%s5337 + $0x1e0] sm:$0xff]
        %v5399 = vld [vmem:[%s5337 + $0x1e8] sm:$0xff]
        %v5400 = vld [vmem:[%s5337 + $0x1f0] sm:$0xff]
        %v5401 = vld [vmem:[%s5337 + $0x1f8] sm:$0xff]
        %v5402 = vld [vmem:[%s5337 + $0x200] sm:$0xff]
        %v5403 = vld [vmem:[%s5337 + $0x208] sm:$0xff]
        %v5404 = vld [vmem:[%s5337 + $0x210] sm:$0xff]
        %v5405 = vld [vmem:[%s5337 + $0x218] sm:$0xff]
        %v5406 = vld [vmem:[%s5337 + $0x220] sm:$0xff]
        %v5407 = vld [vmem:[%s5337 + $0x228] sm:$0xff]
        %v5408 = vld [vmem:[%s5337 + $0x230] sm:$0xff]
        %v5409 = vld [vmem:[%s5337 + $0x238] sm:$0xff]
        %v5410 = vld [vmem:[%s5337 + $0x240] sm:$0xff]
        %v5411 = vld [vmem:[%s5337 + $0x248] sm:$0xff]
        %v5412 = vld [vmem:[%s5337 + $0x250] sm:$0xff]
        %v5413 = vld [vmem:[%s5337 + $0x258] sm:$0xff]
        %v5414 = vld [vmem:[%s5337 + $0x260] sm:$0xff]
        %v5415 = vld [vmem:[%s5337 + $0x268] sm:$0xff]
        %v5416 = vld [vmem:[%s5337 + $0x270] sm:$0xff]
        %v5417 = vld [vmem:[%s5337 + $0x278] sm:$0xff]
        %v5418 = vld [vmem:[%s5337 + $0x280] sm:$0xff]
        %v5419 = vld [vmem:[%s5337 + $0x288] sm:$0xff]
        %v5420 = vld [vmem:[%s5337 + $0x290] sm:$0xff]
        %v5421 = vld [vmem:[%s5337 + $0x298] sm:$0xff]
        %v5422 = vld [vmem:[%s5337 + $0x2a0] sm:$0xff]
        %v5423 = vld [vmem:[%s5337 + $0x2a8] sm:$0xff]
        %v5424 = vld [vmem:[%s5337 + $0x2b0] sm:$0xff]
        %v5425 = vld [vmem:[%s5337 + $0x2b8] sm:$0xff]
        %v5426 = vld [vmem:[%s5337 + $0x2c0] sm:$0xff]
        %v5427 = vld [vmem:[%s5337 + $0x2c8] sm:$0xff]
        %v5428 = vld [vmem:[%s5337 + $0x2d0] sm:$0xff]
        %v5429 = vld [vmem:[%s5337 + $0x2d8] sm:$0xff]
        %v5430 = vld [vmem:[%s5337 + $0x2e0] sm:$0xff]
        %v5431 = vld [vmem:[%s5337 + $0x2e8] sm:$0xff]
        %v5432 = vld [vmem:[%s5337 + $0x2f0] sm:$0xff]
        %v5433 = vld [vmem:[%s5337 + $0x2f8] sm:$0xff]
        %v5434 = vld [vmem:[%s5337 + $0x300] sm:$0xff]
        %v5435 = vld [vmem:[%s5337 + $0x308] sm:$0xff]
        %v5436 = vld [vmem:[%s5337 + $0x310] sm:$0xff]
        %v5437 = vld [vmem:[%s5337 + $0x318] sm:$0xff]
        %v5438 = vld [vmem:[%s5337 + $0x320] sm:$0xff]
        %v5439 = vld [vmem:[%s5337 + $0x328] sm:$0xff]
        %v5440 = vld [vmem:[%s5337 + $0x330] sm:$0xff]
        %v5441 = vld [vmem:[%s5337 + $0x338] sm:$0xff]
        %v5442 = vld [vmem:[%s5337 + $0x340] sm:$0xff]
        %v5443 = vld [vmem:[%s5337 + $0x348] sm:$0xff]
        %v5444 = vld [vmem:[%s5337 + $0x350] sm:$0xff]
        %v5445 = vld [vmem:[%s5337 + $0x358] sm:$0xff]
        %v5446 = vld [vmem:[%s5337 + $0x360] sm:$0xff]
        %v5447 = vld [vmem:[%s5337 + $0x368] sm:$0xff]
        %v5448 = vld [vmem:[%s5337 + $0x370] sm:$0xff]
        %v5449 = vld [vmem:[%s5337 + $0x378] sm:$0xff]
        %v5450 = vld [vmem:[%s5337 + $0x380] sm:$0xff]
        %v5451 = vld [vmem:[%s5337 + $0x388] sm:$0xff]
        %v5452 = vld [vmem:[%s5337 + $0x390] sm:$0xff]
        %v5453 = vld [vmem:[%s5337 + $0x398] sm:$0xff]
        %v5454 = vld [vmem:[%s5337 + $0x3a0] sm:$0xff]
        %v5455 = vld [vmem:[%s5337 + $0x3a8] sm:$0xff]
        %v5456 = vld [vmem:[%s5337 + $0x3b0] sm:$0xff]
        %v5457 = vld [vmem:[%s5337 + $0x3b8] sm:$0xff]
        %v5458 = vld [vmem:[%s5337 + $0x3c0] sm:$0xff]
        %v5459 = vld [vmem:[%s5337 + $0x3c8] sm:$0xff]
        %v5460 = vld [vmem:[%s5337 + $0x3d0] sm:$0xff]
        %v5461 = vld [vmem:[%s5337 + $0x3d8] sm:$0xff]
        %v5462 = vld [vmem:[%s5337 + $0x3e0] sm:$0xff]
        %v5463 = vld [vmem:[%s5337 + $0x3e8] sm:$0xff]
        %v5464 = vld [vmem:[%s5337 + $0x3f0] sm:$0xff]
        %v5465 = vld [vmem:[%s5337 + $0x3f8] sm:$0xff]
        %v5466 = vld [vmem:[%s5337 + $0x400] sm:$0xff]
        %v5467 = vld [vmem:[%s5337 + $0x408] sm:$0xff]
        %v5468 = vld [vmem:[%s5337 + $0x410] sm:$0xff]
        %v5469 = vld [vmem:[%s5337 + $0x418] sm:$0xff]
        %v5470 = vld [vmem:[%s5337 + $0x420] sm:$0xff]
        %v5471 = vld [vmem:[%s5337 + $0x428] sm:$0xff]
        %v5472 = vld [vmem:[%s5337 + $0x430] sm:$0xff]
        %v5473 = vld [vmem:[%s5337 + $0x438] sm:$0xff]
        %v5474 = vld [vmem:[%s5337 + $0x440] sm:$0xff]
        %v5475 = vld [vmem:[%s5337 + $0x448] sm:$0xff]
        %v5476 = vld [vmem:[%s5337 + $0x450] sm:$0xff]
        %v5477 = vld [vmem:[%s5337 + $0x458] sm:$0xff]
        %v5478 = vld [vmem:[%s5337 + $0x460] sm:$0xff]
        %v5479 = vld [vmem:[%s5337 + $0x468] sm:$0xff]
        %v5480 = vld [vmem:[%s5337 + $0x470] sm:$0xff]
        %v5481 = vld [vmem:[%s5337 + $0x478] sm:$0xff]
        %v5482 = vld [vmem:[%s5337 + $0x480] sm:$0xff]
        %v5483 = vld [vmem:[%s5337 + $0x488] sm:$0xff]
        %v5484 = vld [vmem:[%s5337 + $0x490] sm:$0xff]
        %v5485 = vld [vmem:[%s5337 + $0x498] sm:$0xff]
        %v5486 = vld [vmem:[%s5337 + $0x4a0] sm:$0xff]
        %v5487 = vld [vmem:[%s5337 + $0x4a8] sm:$0xff]
        %v5488 = vld [vmem:[%s5337 + $0x4b0] sm:$0xff]
        %v5489 = vld [vmem:[%s5337 + $0x4b8] sm:$0xff]
        %v5490 = vld [vmem:[%s5337 + $0x4c0] sm:$0xff]
        %v5491 = vld [vmem:[%s5337 + $0x4c8] sm:$0xff]
        %v5492 = vld [vmem:[%s5337 + $0x4d0] sm:$0xff]
        %v5493 = vld [vmem:[%s5337 + $0x4d8] sm:$0xff]
        %v5494 = vld [vmem:[%s5337 + $0x4e0] sm:$0xff]
        %v5495 = vld [vmem:[%s5337 + $0x4e8] sm:$0xff]
        %v5496 = vld [vmem:[%s5337 + $0x4f0] sm:$0xff]
        %v5497 = vld [vmem:[%s5337 + $0x4f8] sm:$0xff]
        %v5498 = vld [vmem:[%s5337 + $0x500] sm:$0xff]
        %v5499 = vld [vmem:[%s5337 + $0x508] sm:$0xff]
        %v5500 = vld [vmem:[%s5337 + $0x510] sm:$0xff]
        %v5501 = vld [vmem:[%s5337 + $0x518] sm:$0xff]
        %v5502 = vld [vmem:[%s5337 + $0x520] sm:$0xff]
        %v5503 = vld [vmem:[%s5337 + $0x528] sm:$0xff]
        %v5504 = vld [vmem:[%s5337 + $0x530] sm:$0xff]
        %v5505 = vld [vmem:[%s5337 + $0x538] sm:$0xff]
        %v5506 = vld [vmem:[%s5337 + $0x540] sm:$0xff]
        %v5507 = vld [vmem:[%s5337 + $0x548] sm:$0xff]
        %v5508 = vld [vmem:[%s5337 + $0x550] sm:$0xff]
        %v5509 = vld [vmem:[%s5337 + $0x558] sm:$0xff]
        %v5510 = vld [vmem:[%s5337 + $0x560] sm:$0xff]
        %v5511 = vld [vmem:[%s5337 + $0x568] sm:$0xff]
        %v5512 = vld [vmem:[%s5337 + $0x570] sm:$0xff]
        %v5513 = vld [vmem:[%s5337 + $0x578] sm:$0xff]
        %v5514 = vld [vmem:[%s5337 + $0x580] sm:$0xff]
        %v5515 = vld [vmem:[%s5337 + $0x588] sm:$0xff]
        %v5516 = vld [vmem:[%s5337 + $0x590] sm:$0xff]
        %v5517 = vld [vmem:[%s5337 + $0x598] sm:$0xff]
        %v5518 = vld [vmem:[%s5337 + $0x5a0] sm:$0xff]
        %v5519 = vld [vmem:[%s5337 + $0x5a8] sm:$0xff]
        %v5520 = vld [vmem:[%s5337 + $0x5b0] sm:$0xff]
        %v5521 = vld [vmem:[%s5337 + $0x5b8] sm:$0xff]
        %v5522 = vld [vmem:[%s5337 + $0x5c0] sm:$0xff]
        %v5523 = vld [vmem:[%s5337 + $0x5c8] sm:$0xff]
        %v5524 = vld [vmem:[%s5337 + $0x5d0] sm:$0xff]
        %v5525 = vld [vmem:[%s5337 + $0x5d8] sm:$0xff]
        %v5526 = vld [vmem:[%s5337 + $0x5e0] sm:$0xff]
        %v5527 = vld [vmem:[%s5337 + $0x5e8] sm:$0xff]
        %v5528 = vld [vmem:[%s5337 + $0x5f0] sm:$0xff]
        %v5529 = vld [vmem:[%s5337 + $0x5f8] sm:$0xff]
        %v5530 = vld [vmem:[%s5337 + $0x600] sm:$0xff]
        %v5531 = vld [vmem:[%s5337 + $0x608] sm:$0xff]
        %v5532 = vld [vmem:[%s5337 + $0x610] sm:$0xff]
        %v5533 = vld [vmem:[%s5337 + $0x618] sm:$0xff]
        %v5534 = vld [vmem:[%s5337 + $0x620] sm:$0xff]
        %v5535 = vld [vmem:[%s5337 + $0x628] sm:$0xff]
        %v5536 = vld [vmem:[%s5337 + $0x630] sm:$0xff]
        %v5537 = vld [vmem:[%s5337 + $0x638] sm:$0xff]
        %v5538 = vld [vmem:[%s5337 + $0x640] sm:$0xff]
        %v5539 = vld [vmem:[%s5337 + $0x648] sm:$0xff]
        %v5540 = vld [vmem:[%s5337 + $0x650] sm:$0xff]
        %v5541 = vld [vmem:[%s5337 + $0x658] sm:$0xff]
        %v5542 = vld [vmem:[%s5337 + $0x660] sm:$0xff]
        %v5543 = vld [vmem:[%s5337 + $0x668] sm:$0xff]
        %v5544 = vld [vmem:[%s5337 + $0x670] sm:$0xff]
        %v5545 = vld [vmem:[%s5337 + $0x678] sm:$0xff]
        %v5546 = vld [vmem:[%s5337 + $0x680] sm:$0xff]
        %v5547 = vld [vmem:[%s5337 + $0x688] sm:$0xff]
        %v5548 = vld [vmem:[%s5337 + $0x690] sm:$0xff]
        %v5549 = vld [vmem:[%s5337 + $0x698] sm:$0xff]
        %v5550 = vld [vmem:[%s5337 + $0x6a0] sm:$0xff]
        %v5551 = vld [vmem:[%s5337 + $0x6a8] sm:$0xff]
        %v5552 = vld [vmem:[%s5337 + $0x6b0] sm:$0xff]
        %v5553 = vld [vmem:[%s5337 + $0x6b8] sm:$0xff]
        %v5554 = vld [vmem:[%s5337 + $0x6c0] sm:$0xff]
        %v5555 = vld [vmem:[%s5337 + $0x6c8] sm:$0xff]
        %v5556 = vld [vmem:[%s5337 + $0x6d0] sm:$0xff]
        %v5557 = vld [vmem:[%s5337 + $0x6d8] sm:$0xff]
        %v5558 = vld [vmem:[%s5337 + $0x6e0] sm:$0xff]
        %v5559 = vld [vmem:[%s5337 + $0x6e8] sm:$0xff]
        %v5560 = vld [vmem:[%s5337 + $0x6f0] sm:$0xff]
        %v5561 = vld [vmem:[%s5337 + $0x6f8] sm:$0xff]
        %v5562 = vld [vmem:[%s5337 + $0x700] sm:$0xff]
        %v5563 = vld [vmem:[%s5337 + $0x708] sm:$0xff]
        %v5564 = vld [vmem:[%s5337 + $0x710] sm:$0xff]
        %v5565 = vld [vmem:[%s5337 + $0x718] sm:$0xff]
        %v5566 = vld [vmem:[%s5337 + $0x720] sm:$0xff]
        %v5567 = vld [vmem:[%s5337 + $0x728] sm:$0xff]
        %v5568 = vld [vmem:[%s5337 + $0x730] sm:$0xff]
        %v5569 = vld [vmem:[%s5337 + $0x738] sm:$0xff]
        %v5570 = vld [vmem:[%s5337 + $0x740] sm:$0xff]
        %v5571 = vld [vmem:[%s5337 + $0x748] sm:$0xff]
        %v5572 = vld [vmem:[%s5337 + $0x750] sm:$0xff]
        %v5573 = vld [vmem:[%s5337 + $0x758] sm:$0xff]
        %v5574 = vld [vmem:[%s5337 + $0x760] sm:$0xff]
        %v5575 = vld [vmem:[%s5337 + $0x768] sm:$0xff]
        %v5576 = vld [vmem:[%s5337 + $0x770] sm:$0xff]
        %v5577 = vld [vmem:[%s5337 + $0x778] sm:$0xff]
        %v5578 = vld [vmem:[%s5337 + $0x780] sm:$0xff]
        %v5579 = vld [vmem:[%s5337 + $0x788] sm:$0xff]
        %v5580 = vld [vmem:[%s5337 + $0x790] sm:$0xff]
        %v5581 = vld [vmem:[%s5337 + $0x798] sm:$0xff]
        %v5582 = vld [vmem:[%s5337 + $0x7a0] sm:$0xff]
        %v5583 = vld [vmem:[%s5337 + $0x7a8] sm:$0xff]
        %v5584 = vld [vmem:[%s5337 + $0x7b0] sm:$0xff]
        %v5585 = vld [vmem:[%s5337 + $0x7b8] sm:$0xff]
        %v5586 = vld [vmem:[%s5337 + $0x7c0] sm:$0xff]
        %v5587 = vld [vmem:[%s5337 + $0x7c8] sm:$0xff]
        %v5588 = vld [vmem:[%s5337 + $0x7d0] sm:$0xff]
        %v5589 = vld [vmem:[%s5337 + $0x7d8] sm:$0xff]
        %v5590 = vld [vmem:[%s5337 + $0x7e0] sm:$0xff]
        %v5591 = vld [vmem:[%s5337 + $0x7e8] sm:$0xff]
        %v5592 = vld [vmem:[%s5337 + $0x7f0] sm:$0xff]
        %v5593 = vld [vmem:[%s5337 + $0x7f8] sm:$0xff]
        %v5594 = vld [vmem:[%s5337 + $0x800] sm:$0xff]
        %v5595 = vld [vmem:[%s5337 + $0x808] sm:$0xff]
        %v5596 = vld [vmem:[%s5337 + $0x810] sm:$0xff]
        %v5597 = vld [vmem:[%s5337 + $0x818] sm:$0xff]
        %v5598 = vld [vmem:[%s5337 + $0x820] sm:$0xff]
        %v5599 = vld [vmem:[%s5337 + $0x828] sm:$0xff]
        %v5600 = vld [vmem:[%s5337 + $0x830] sm:$0xff]
        %v5601 = vld [vmem:[%s5337 + $0x838] sm:$0xff]
        %v5602 = vld [vmem:[%s5337 + $0x840] sm:$0xff]
        %v5603 = vld [vmem:[%s5337 + $0x848] sm:$0xff]
        %v5604 = vld [vmem:[%s5337 + $0x850] sm:$0xff]
        %v5605 = vld [vmem:[%s5337 + $0x858] sm:$0xff]
        %v5606 = vld [vmem:[%s5337 + $0x860] sm:$0xff]
        %v5607 = vld [vmem:[%s5337 + $0x868] sm:$0xff]
        %v5608 = vld [vmem:[%s5337 + $0x870] sm:$0xff]
        %v5609 = vld [vmem:[%s5337 + $0x878] sm:$0xff]
        %v5610 = vld [vmem:[%s5337 + $0x880] sm:$0xff]
        %v5611 = vld [vmem:[%s5337 + $0x888] sm:$0xff]
        %v5612 = vld [vmem:[%s5337 + $0x890] sm:$0xff]
        %v5613 = vld [vmem:[%s5337 + $0x898] sm:$0xff]
        %v5614 = vld [vmem:[%s5337 + $0x8a0] sm:$0xff]
        %v5615 = vld [vmem:[%s5337 + $0x8a8] sm:$0xff]
        %v5616 = vld [vmem:[%s5337 + $0x8b0] sm:$0xff]
        %v5617 = vld [vmem:[%s5337 + $0x8b8] sm:$0xff]
        %v5618 = vld [vmem:[%s5337 + $0x8c0] sm:$0xff]
        %v5619 = vld [vmem:[%s5337 + $0x8c8] sm:$0xff]
        %v5620 = vld [vmem:[%s5337 + $0x8d0] sm:$0xff]
        %v5621 = vld [vmem:[%s5337 + $0x8d8] sm:$0xff]
        %v5622 = vld [vmem:[%s5337 + $0x8e0] sm:$0xff]
        %v5623 = vld [vmem:[%s5337 + $0x8e8] sm:$0xff]
        %v5624 = vld [vmem:[%s5337 + $0x8f0] sm:$0xff]
        %v5625 = vld [vmem:[%s5337 + $0x8f8] sm:$0xff]
        %v5644 = vunpack.c.l.b16 %v5319
        %v5645 = vunpack.c.h.b16 %v5319
        %v5646 = vunpack.c.l.b16 %v5320
        %v5647 = vunpack.c.h.b16 %v5320
        %v5648 = vunpack.c.l.b16 %v5321
        %v5649 = vunpack.c.h.b16 %v5321
        %v5650 = vunpack.c.l.b16 %v5322
        %v5651 = vunpack.c.h.b16 %v5322
        %v5652 = vunpack.c.l.b16 %v5323
        %v5653 = vunpack.c.h.b16 %v5323
        %v5654 = vunpack.c.l.b16 %v5324
        %v5655 = vunpack.c.h.b16 %v5324
        %v5656 = vunpack.c.l.b16 %v5325
        %v5657 = vunpack.c.h.b16 %v5325
        %v5658 = vunpack.c.l.b16 %v5326
        %v5659 = vunpack.c.h.b16 %v5326
        %v5660 = vunpack.c.l.b16 %v5327
        %v5661 = vunpack.c.h.b16 %v5327
        %v5662 = vunpack.c.l.b16 %v5328
        %v5663 = vunpack.c.h.b16 %v5328
        %v5664 = vunpack.c.l.b16 %v5329
        %v5665 = vunpack.c.h.b16 %v5329
        %v5666 = vunpack.c.l.b16 %v5330
        %v5667 = vunpack.c.h.b16 %v5330
        %v5668 = vunpack.c.l.b16 %v5331
        %v5669 = vunpack.c.h.b16 %v5331
        %v5670 = vunpack.c.l.b16 %v5332
        %v5671 = vunpack.c.h.b16 %v5332
        %v5672 = vunpack.c.l.b16 %v5333
        %v5673 = vunpack.c.h.b16 %v5333
        %v5674 = vunpack.c.l.b16 %v5334
        %v5675 = vunpack.c.h.b16 %v5334
        %v5676 = vunpack.c.l.b16 %v5335
        %v5677 = vunpack.c.h.b16 %v5335
        %v5678 = vunpack.c.l.b16 %v5336
        %v5679 = vunpack.c.h.b16 %v5336
        %v5680 = vpack.c.b16 %v5650, %v5644
        %v5681 = vpack.c.b16 %v5651, %v5645
        %v5682 = vpack.c.b16 %v5652, %v5646
        %v5683 = vpack.c.b16 %v5653, %v5647
        %v5684 = vpack.c.b16 %v5654, %v5648
        %v5685 = vpack.c.b16 %v5655, %v5649
        %v5686 = vpack.c.b16 %v5662, %v5656
        %v5687 = vpack.c.b16 %v5663, %v5657
        %v5688 = vpack.c.b16 %v5664, %v5658
        %v5689 = vpack.c.b16 %v5665, %v5659
        %v5690 = vpack.c.b16 %v5666, %v5660
        %v5691 = vpack.c.b16 %v5667, %v5661
        %v5692 = vpack.c.b16 %v5674, %v5668
        %v5693 = vpack.c.b16 %v5675, %v5669
        %v5694 = vpack.c.b16 %v5676, %v5670
        %v5695 = vpack.c.b16 %v5677, %v5671
        %v5696 = vpack.c.b16 %v5678, %v5672
        %v5697 = vpack.c.b16 %v5679, %v5673
        %v6004 = vunpack.c.l.b16 %v5338
        %v6005 = vunpack.c.h.b16 %v5338
        %v6006 = vunpack.c.l.b16 %v5339
        %v6007 = vunpack.c.h.b16 %v5339
        %v6008 = vunpack.c.l.b16 %v5340
        %v6009 = vunpack.c.h.b16 %v5340
        %v6010 = vunpack.c.l.b16 %v5341
        %v6011 = vunpack.c.h.b16 %v5341
        %v6012 = vunpack.c.l.b16 %v5342
        %v6013 = vunpack.c.h.b16 %v5342
        %v6014 = vunpack.c.l.b16 %v5343
        %v6015 = vunpack.c.h.b16 %v5343
        %v6016 = vunpack.c.l.b16 %v5344
        %v6017 = vunpack.c.h.b16 %v5344
        %v6018 = vunpack.c.l.b16 %v5345
        %v6019 = vunpack.c.h.b16 %v5345
        %v6020 = vunpack.c.l.b16 %v5346
        %v6021 = vunpack.c.h.b16 %v5346
        %v6022 = vunpack.c.l.b16 %v5347
        %v6023 = vunpack.c.h.b16 %v5347
        %v6024 = vunpack.c.l.b16 %v5348
        %v6025 = vunpack.c.h.b16 %v5348
        %v6026 = vunpack.c.l.b16 %v5349
        %v6027 = vunpack.c.h.b16 %v5349
        %v6028 = vunpack.c.l.b16 %v5350
        %v6029 = vunpack.c.h.b16 %v5350
        %v6030 = vunpack.c.l.b16 %v5351
        %v6031 = vunpack.c.h.b16 %v5351
        %v6032 = vunpack.c.l.b16 %v5352
        %v6033 = vunpack.c.h.b16 %v5352
        %v6034 = vunpack.c.l.b16 %v5353
        %v6035 = vunpack.c.h.b16 %v5353
        %v6036 = vunpack.c.l.b16 %v5354
        %v6037 = vunpack.c.h.b16 %v5354
        %v6038 = vunpack.c.l.b16 %v5355
        %v6039 = vunpack.c.h.b16 %v5355
        %v6040 = vunpack.c.l.b16 %v5356
        %v6041 = vunpack.c.h.b16 %v5356
        %v6042 = vunpack.c.l.b16 %v5357
        %v6043 = vunpack.c.h.b16 %v5357
        %v6044 = vunpack.c.l.b16 %v5358
        %v6045 = vunpack.c.h.b16 %v5358
        %v6046 = vunpack.c.l.b16 %v5359
        %v6047 = vunpack.c.h.b16 %v5359
        %v6048 = vunpack.c.l.b16 %v5360
        %v6049 = vunpack.c.h.b16 %v5360
        %v6050 = vunpack.c.l.b16 %v5361
        %v6051 = vunpack.c.h.b16 %v5361
        %v6052 = vunpack.c.l.b16 %v5362
        %v6053 = vunpack.c.h.b16 %v5362
        %v6054 = vunpack.c.l.b16 %v5363
        %v6055 = vunpack.c.h.b16 %v5363
        %v6056 = vunpack.c.l.b16 %v5364
        %v6057 = vunpack.c.h.b16 %v5364
        %v6058 = vunpack.c.l.b16 %v5365
        %v6059 = vunpack.c.h.b16 %v5365
        %v6060 = vunpack.c.l.b16 %v5366
        %v6061 = vunpack.c.h.b16 %v5366
        %v6062 = vunpack.c.l.b16 %v5367
        %v6063 = vunpack.c.h.b16 %v5367
        %v6064 = vunpack.c.l.b16 %v5368
        %v6065 = vunpack.c.h.b16 %v5368
        %v6066 = vunpack.c.l.b16 %v5369
        %v6067 = vunpack.c.h.b16 %v5369
        %v6068 = vunpack.c.l.b16 %v5370
        %v6069 = vunpack.c.h.b16 %v5370
        %v6070 = vunpack.c.l.b16 %v5371
        %v6071 = vunpack.c.h.b16 %v5371
        %v6072 = vunpack.c.l.b16 %v5372
        %v6073 = vunpack.c.h.b16 %v5372
        %v6074 = vunpack.c.l.b16 %v5373
        %v6075 = vunpack.c.h.b16 %v5373
        %v6076 = vunpack.c.l.b16 %v5374
        %v6077 = vunpack.c.h.b16 %v5374
        %v6078 = vunpack.c.l.b16 %v5375
        %v6079 = vunpack.c.h.b16 %v5375
        %v6080 = vunpack.c.l.b16 %v5376
        %v6081 = vunpack.c.h.b16 %v5376
        %v6082 = vunpack.c.l.b16 %v5377
        %v6083 = vunpack.c.h.b16 %v5377
        %v6084 = vunpack.c.l.b16 %v5378
        %v6085 = vunpack.c.h.b16 %v5378
        %v6086 = vunpack.c.l.b16 %v5379
        %v6087 = vunpack.c.h.b16 %v5379
        %v6088 = vunpack.c.l.b16 %v5380
        %v6089 = vunpack.c.h.b16 %v5380
        %v6090 = vunpack.c.l.b16 %v5381
        %v6091 = vunpack.c.h.b16 %v5381
        %v6092 = vunpack.c.l.b16 %v5382
        %v6093 = vunpack.c.h.b16 %v5382
        %v6094 = vunpack.c.l.b16 %v5383
        %v6095 = vunpack.c.h.b16 %v5383
        %v6096 = vunpack.c.l.b16 %v5384
        %v6097 = vunpack.c.h.b16 %v5384
        %v6098 = vunpack.c.l.b16 %v5385
        %v6099 = vunpack.c.h.b16 %v5385
        %v6100 = vunpack.c.l.b16 %v5386
        %v6101 = vunpack.c.h.b16 %v5386
        %v6102 = vunpack.c.l.b16 %v5387
        %v6103 = vunpack.c.h.b16 %v5387
        %v6104 = vunpack.c.l.b16 %v5388
        %v6105 = vunpack.c.h.b16 %v5388
        %v6106 = vunpack.c.l.b16 %v5389
        %v6107 = vunpack.c.h.b16 %v5389
        %v6108 = vunpack.c.l.b16 %v5390
        %v6109 = vunpack.c.h.b16 %v5390
        %v6110 = vunpack.c.l.b16 %v5391
        %v6111 = vunpack.c.h.b16 %v5391
        %v6112 = vunpack.c.l.b16 %v5392
        %v6113 = vunpack.c.h.b16 %v5392
        %v6114 = vunpack.c.l.b16 %v5393
        %v6115 = vunpack.c.h.b16 %v5393
        %v6116 = vunpack.c.l.b16 %v5394
        %v6117 = vunpack.c.h.b16 %v5394
        %v6118 = vunpack.c.l.b16 %v5395
        %v6119 = vunpack.c.h.b16 %v5395
        %v6120 = vunpack.c.l.b16 %v5396
        %v6121 = vunpack.c.h.b16 %v5396
        %v6122 = vunpack.c.l.b16 %v5397
        %v6123 = vunpack.c.h.b16 %v5397
        %v6124 = vunpack.c.l.b16 %v5398
        %v6125 = vunpack.c.h.b16 %v5398
        %v6126 = vunpack.c.l.b16 %v5399
        %v6127 = vunpack.c.h.b16 %v5399
        %v6128 = vunpack.c.l.b16 %v5400
        %v6129 = vunpack.c.h.b16 %v5400
        %v6130 = vunpack.c.l.b16 %v5401
        %v6131 = vunpack.c.h.b16 %v5401
        %v6132 = vunpack.c.l.b16 %v5402
        %v6133 = vunpack.c.h.b16 %v5402
        %v6134 = vunpack.c.l.b16 %v5403
        %v6135 = vunpack.c.h.b16 %v5403
        %v6136 = vunpack.c.l.b16 %v5404
        %v6137 = vunpack.c.h.b16 %v5404
        %v6138 = vunpack.c.l.b16 %v5405
        %v6139 = vunpack.c.h.b16 %v5405
        %v6140 = vunpack.c.l.b16 %v5406
        %v6141 = vunpack.c.h.b16 %v5406
        %v6142 = vunpack.c.l.b16 %v5407
        %v6143 = vunpack.c.h.b16 %v5407
        %v6144 = vunpack.c.l.b16 %v5408
        %v6145 = vunpack.c.h.b16 %v5408
        %v6146 = vunpack.c.l.b16 %v5409
        %v6147 = vunpack.c.h.b16 %v5409
        %v6148 = vunpack.c.l.b16 %v5410
        %v6149 = vunpack.c.h.b16 %v5410
        %v6150 = vunpack.c.l.b16 %v5411
        %v6151 = vunpack.c.h.b16 %v5411
        %v6152 = vunpack.c.l.b16 %v5412
        %v6153 = vunpack.c.h.b16 %v5412
        %v6154 = vunpack.c.l.b16 %v5413
        %v6155 = vunpack.c.h.b16 %v5413
        %v6156 = vunpack.c.l.b16 %v5414
        %v6157 = vunpack.c.h.b16 %v5414
        %v6158 = vunpack.c.l.b16 %v5415
        %v6159 = vunpack.c.h.b16 %v5415
        %v6160 = vunpack.c.l.b16 %v5416
        %v6161 = vunpack.c.h.b16 %v5416
        %v6162 = vunpack.c.l.b16 %v5417
        %v6163 = vunpack.c.h.b16 %v5417
        %v6164 = vunpack.c.l.b16 %v5418
        %v6165 = vunpack.c.h.b16 %v5418
        %v6166 = vunpack.c.l.b16 %v5419
        %v6167 = vunpack.c.h.b16 %v5419
        %v6168 = vunpack.c.l.b16 %v5420
        %v6169 = vunpack.c.h.b16 %v5420
        %v6170 = vunpack.c.l.b16 %v5421
        %v6171 = vunpack.c.h.b16 %v5421
        %v6172 = vunpack.c.l.b16 %v5422
        %v6173 = vunpack.c.h.b16 %v5422
        %v6174 = vunpack.c.l.b16 %v5423
        %v6175 = vunpack.c.h.b16 %v5423
        %v6176 = vunpack.c.l.b16 %v5424
        %v6177 = vunpack.c.h.b16 %v5424
        %v6178 = vunpack.c.l.b16 %v5425
        %v6179 = vunpack.c.h.b16 %v5425
        %v6180 = vunpack.c.l.b16 %v5426
        %v6181 = vunpack.c.h.b16 %v5426
        %v6182 = vunpack.c.l.b16 %v5427
        %v6183 = vunpack.c.h.b16 %v5427
        %v6184 = vunpack.c.l.b16 %v5428
        %v6185 = vunpack.c.h.b16 %v5428
        %v6186 = vunpack.c.l.b16 %v5429
        %v6187 = vunpack.c.h.b16 %v5429
        %v6188 = vunpack.c.l.b16 %v5430
        %v6189 = vunpack.c.h.b16 %v5430
        %v6190 = vunpack.c.l.b16 %v5431
        %v6191 = vunpack.c.h.b16 %v5431
        %v6192 = vunpack.c.l.b16 %v5432
        %v6193 = vunpack.c.h.b16 %v5432
        %v6194 = vunpack.c.l.b16 %v5433
        %v6195 = vunpack.c.h.b16 %v5433
        %v6196 = vunpack.c.l.b16 %v5434
        %v6197 = vunpack.c.h.b16 %v5434
        %v6198 = vunpack.c.l.b16 %v5435
        %v6199 = vunpack.c.h.b16 %v5435
        %v6200 = vunpack.c.l.b16 %v5436
        %v6201 = vunpack.c.h.b16 %v5436
        %v6202 = vunpack.c.l.b16 %v5437
        %v6203 = vunpack.c.h.b16 %v5437
        %v6204 = vunpack.c.l.b16 %v5438
        %v6205 = vunpack.c.h.b16 %v5438
        %v6206 = vunpack.c.l.b16 %v5439
        %v6207 = vunpack.c.h.b16 %v5439
        %v6208 = vunpack.c.l.b16 %v5440
        %v6209 = vunpack.c.h.b16 %v5440
        %v6210 = vunpack.c.l.b16 %v5441
        %v6211 = vunpack.c.h.b16 %v5441
        %v6212 = vunpack.c.l.b16 %v5442
        %v6213 = vunpack.c.h.b16 %v5442
        %v6214 = vunpack.c.l.b16 %v5443
        %v6215 = vunpack.c.h.b16 %v5443
        %v6216 = vunpack.c.l.b16 %v5444
        %v6217 = vunpack.c.h.b16 %v5444
        %v6218 = vunpack.c.l.b16 %v5445
        %v6219 = vunpack.c.h.b16 %v5445
        %v6220 = vunpack.c.l.b16 %v5446
        %v6221 = vunpack.c.h.b16 %v5446
        %v6222 = vunpack.c.l.b16 %v5447
        %v6223 = vunpack.c.h.b16 %v5447
        %v6224 = vunpack.c.l.b16 %v5448
        %v6225 = vunpack.c.h.b16 %v5448
        %v6226 = vunpack.c.l.b16 %v5449
        %v6227 = vunpack.c.h.b16 %v5449
        %v6228 = vunpack.c.l.b16 %v5450
        %v6229 = vunpack.c.h.b16 %v5450
        %v6230 = vunpack.c.l.b16 %v5451
        %v6231 = vunpack.c.h.b16 %v5451
        %v6232 = vunpack.c.l.b16 %v5452
        %v6233 = vunpack.c.h.b16 %v5452
        %v6234 = vunpack.c.l.b16 %v5453
        %v6235 = vunpack.c.h.b16 %v5453
        %v6236 = vunpack.c.l.b16 %v5454
        %v6237 = vunpack.c.h.b16 %v5454
        %v6238 = vunpack.c.l.b16 %v5455
        %v6239 = vunpack.c.h.b16 %v5455
        %v6240 = vunpack.c.l.b16 %v5456
        %v6241 = vunpack.c.h.b16 %v5456
        %v6242 = vunpack.c.l.b16 %v5457
        %v6243 = vunpack.c.h.b16 %v5457
        %v6244 = vunpack.c.l.b16 %v5458
        %v6245 = vunpack.c.h.b16 %v5458
        %v6246 = vunpack.c.l.b16 %v5459
        %v6247 = vunpack.c.h.b16 %v5459
        %v6248 = vunpack.c.l.b16 %v5460
        %v6249 = vunpack.c.h.b16 %v5460
        %v6250 = vunpack.c.l.b16 %v5461
        %v6251 = vunpack.c.h.b16 %v5461
        %v6252 = vunpack.c.l.b16 %v5462
        %v6253 = vunpack.c.h.b16 %v5462
        %v6254 = vunpack.c.l.b16 %v5463
        %v6255 = vunpack.c.h.b16 %v5463
        %v6256 = vunpack.c.l.b16 %v5464
        %v6257 = vunpack.c.h.b16 %v5464
        %v6258 = vunpack.c.l.b16 %v5465
        %v6259 = vunpack.c.h.b16 %v5465
        %v6260 = vunpack.c.l.b16 %v5466
        %v6261 = vunpack.c.h.b16 %v5466
        %v6262 = vunpack.c.l.b16 %v5467
        %v6263 = vunpack.c.h.b16 %v5467
        %v6264 = vunpack.c.l.b16 %v5468
        %v6265 = vunpack.c.h.b16 %v5468
        %v6266 = vunpack.c.l.b16 %v5469
        %v6267 = vunpack.c.h.b16 %v5469
        %v6268 = vunpack.c.l.b16 %v5470
        %v6269 = vunpack.c.h.b16 %v5470
        %v6270 = vunpack.c.l.b16 %v5471
        %v6271 = vunpack.c.h.b16 %v5471
        %v6272 = vunpack.c.l.b16 %v5472
        %v6273 = vunpack.c.h.b16 %v5472
        %v6274 = vunpack.c.l.b16 %v5473
        %v6275 = vunpack.c.h.b16 %v5473
        %v6276 = vunpack.c.l.b16 %v5474
        %v6277 = vunpack.c.h.b16 %v5474
        %v6278 = vunpack.c.l.b16 %v5475
        %v6279 = vunpack.c.h.b16 %v5475
        %v6280 = vunpack.c.l.b16 %v5476
        %v6281 = vunpack.c.h.b16 %v5476
        %v6282 = vunpack.c.l.b16 %v5477
        %v6283 = vunpack.c.h.b16 %v5477
        %v6284 = vunpack.c.l.b16 %v5478
        %v6285 = vunpack.c.h.b16 %v5478
        %v6286 = vunpack.c.l.b16 %v5479
        %v6287 = vunpack.c.h.b16 %v5479
        %v6288 = vunpack.c.l.b16 %v5480
        %v6289 = vunpack.c.h.b16 %v5480
        %v6290 = vunpack.c.l.b16 %v5481
        %v6291 = vunpack.c.h.b16 %v5481
        %v6292 = vunpack.c.l.b16 %v5482
        %v6293 = vunpack.c.h.b16 %v5482
        %v6294 = vunpack.c.l.b16 %v5483
        %v6295 = vunpack.c.h.b16 %v5483
        %v6296 = vunpack.c.l.b16 %v5484
        %v6297 = vunpack.c.h.b16 %v5484
        %v6298 = vunpack.c.l.b16 %v5485
        %v6299 = vunpack.c.h.b16 %v5485
        %v6300 = vunpack.c.l.b16 %v5486
        %v6301 = vunpack.c.h.b16 %v5486
        %v6302 = vunpack.c.l.b16 %v5487
        %v6303 = vunpack.c.h.b16 %v5487
        %v6304 = vunpack.c.l.b16 %v5488
        %v6305 = vunpack.c.h.b16 %v5488
        %v6306 = vunpack.c.l.b16 %v5489
        %v6307 = vunpack.c.h.b16 %v5489
        %v6308 = vunpack.c.l.b16 %v5490
        %v6309 = vunpack.c.h.b16 %v5490
        %v6310 = vunpack.c.l.b16 %v5491
        %v6311 = vunpack.c.h.b16 %v5491
        %v6312 = vunpack.c.l.b16 %v5492
        %v6313 = vunpack.c.h.b16 %v5492
        %v6314 = vunpack.c.l.b16 %v5493
        %v6315 = vunpack.c.h.b16 %v5493
        %v6316 = vunpack.c.l.b16 %v5494
        %v6317 = vunpack.c.h.b16 %v5494
        %v6318 = vunpack.c.l.b16 %v5495
        %v6319 = vunpack.c.h.b16 %v5495
        %v6320 = vunpack.c.l.b16 %v5496
        %v6321 = vunpack.c.h.b16 %v5496
        %v6322 = vunpack.c.l.b16 %v5497
        %v6323 = vunpack.c.h.b16 %v5497
        %v6324 = vunpack.c.l.b16 %v5498
        %v6325 = vunpack.c.h.b16 %v5498
        %v6326 = vunpack.c.l.b16 %v5499
        %v6327 = vunpack.c.h.b16 %v5499
        %v6328 = vunpack.c.l.b16 %v5500
        %v6329 = vunpack.c.h.b16 %v5500
        %v6330 = vunpack.c.l.b16 %v5501
        %v6331 = vunpack.c.h.b16 %v5501
        %v6332 = vunpack.c.l.b16 %v5502
        %v6333 = vunpack.c.h.b16 %v5502
        %v6334 = vunpack.c.l.b16 %v5503
        %v6335 = vunpack.c.h.b16 %v5503
        %v6336 = vunpack.c.l.b16 %v5504
        %v6337 = vunpack.c.h.b16 %v5504
        %v6338 = vunpack.c.l.b16 %v5505
        %v6339 = vunpack.c.h.b16 %v5505
        %v6340 = vunpack.c.l.b16 %v5506
        %v6341 = vunpack.c.h.b16 %v5506
        %v6342 = vunpack.c.l.b16 %v5507
        %v6343 = vunpack.c.h.b16 %v5507
        %v6344 = vunpack.c.l.b16 %v5508
        %v6345 = vunpack.c.h.b16 %v5508
        %v6346 = vunpack.c.l.b16 %v5509
        %v6347 = vunpack.c.h.b16 %v5509
        %v6348 = vunpack.c.l.b16 %v5510
        %v6349 = vunpack.c.h.b16 %v5510
        %v6350 = vunpack.c.l.b16 %v5511
        %v6351 = vunpack.c.h.b16 %v5511
        %v6352 = vunpack.c.l.b16 %v5512
        %v6353 = vunpack.c.h.b16 %v5512
        %v6354 = vunpack.c.l.b16 %v5513
        %v6355 = vunpack.c.h.b16 %v5513
        %v6356 = vunpack.c.l.b16 %v5514
        %v6357 = vunpack.c.h.b16 %v5514
        %v6358 = vunpack.c.l.b16 %v5515
        %v6359 = vunpack.c.h.b16 %v5515
        %v6360 = vunpack.c.l.b16 %v5516
        %v6361 = vunpack.c.h.b16 %v5516
        %v6362 = vunpack.c.l.b16 %v5517
        %v6363 = vunpack.c.h.b16 %v5517
        %v6364 = vunpack.c.l.b16 %v5518
        %v6365 = vunpack.c.h.b16 %v5518
        %v6366 = vunpack.c.l.b16 %v5519
        %v6367 = vunpack.c.h.b16 %v5519
        %v6368 = vunpack.c.l.b16 %v5520
        %v6369 = vunpack.c.h.b16 %v5520
        %v6370 = vunpack.c.l.b16 %v5521
        %v6371 = vunpack.c.h.b16 %v5521
        %v6372 = vunpack.c.l.b16 %v5522
        %v6373 = vunpack.c.h.b16 %v5522
        %v6374 = vunpack.c.l.b16 %v5523
        %v6375 = vunpack.c.h.b16 %v5523
        %v6376 = vunpack.c.l.b16 %v5524
        %v6377 = vunpack.c.h.b16 %v5524
        %v6378 = vunpack.c.l.b16 %v5525
        %v6379 = vunpack.c.h.b16 %v5525
        %v6380 = vunpack.c.l.b16 %v5526
        %v6381 = vunpack.c.h.b16 %v5526
        %v6382 = vunpack.c.l.b16 %v5527
        %v6383 = vunpack.c.h.b16 %v5527
        %v6384 = vunpack.c.l.b16 %v5528
        %v6385 = vunpack.c.h.b16 %v5528
        %v6386 = vunpack.c.l.b16 %v5529
        %v6387 = vunpack.c.h.b16 %v5529
        %v6388 = vunpack.c.l.b16 %v5530
        %v6389 = vunpack.c.h.b16 %v5530
        %v6390 = vunpack.c.l.b16 %v5531
        %v6391 = vunpack.c.h.b16 %v5531
        %v6392 = vunpack.c.l.b16 %v5532
        %v6393 = vunpack.c.h.b16 %v5532
        %v6394 = vunpack.c.l.b16 %v5533
        %v6395 = vunpack.c.h.b16 %v5533
        %v6396 = vunpack.c.l.b16 %v5534
        %v6397 = vunpack.c.h.b16 %v5534
        %v6398 = vunpack.c.l.b16 %v5535
        %v6399 = vunpack.c.h.b16 %v5535
        %v6400 = vunpack.c.l.b16 %v5536
        %v6401 = vunpack.c.h.b16 %v5536
        %v6402 = vunpack.c.l.b16 %v5537
        %v6403 = vunpack.c.h.b16 %v5537
        %v6404 = vunpack.c.l.b16 %v5538
        %v6405 = vunpack.c.h.b16 %v5538
        %v6406 = vunpack.c.l.b16 %v5539
        %v6407 = vunpack.c.h.b16 %v5539
        %v6408 = vunpack.c.l.b16 %v5540
        %v6409 = vunpack.c.h.b16 %v5540
        %v6410 = vunpack.c.l.b16 %v5541
        %v6411 = vunpack.c.h.b16 %v5541
        %v6412 = vunpack.c.l.b16 %v5542
        %v6413 = vunpack.c.h.b16 %v5542
        %v6414 = vunpack.c.l.b16 %v5543
        %v6415 = vunpack.c.h.b16 %v5543
        %v6416 = vunpack.c.l.b16 %v5544
        %v6417 = vunpack.c.h.b16 %v5544
        %v6418 = vunpack.c.l.b16 %v5545
        %v6419 = vunpack.c.h.b16 %v5545
        %v6420 = vunpack.c.l.b16 %v5546
        %v6421 = vunpack.c.h.b16 %v5546
        %v6422 = vunpack.c.l.b16 %v5547
        %v6423 = vunpack.c.h.b16 %v5547
        %v6424 = vunpack.c.l.b16 %v5548
        %v6425 = vunpack.c.h.b16 %v5548
        %v6426 = vunpack.c.l.b16 %v5549
        %v6427 = vunpack.c.h.b16 %v5549
        %v6428 = vunpack.c.l.b16 %v5550
        %v6429 = vunpack.c.h.b16 %v5550
        %v6430 = vunpack.c.l.b16 %v5551
        %v6431 = vunpack.c.h.b16 %v5551
        %v6432 = vunpack.c.l.b16 %v5552
        %v6433 = vunpack.c.h.b16 %v5552
        %v6434 = vunpack.c.l.b16 %v5553
        %v6435 = vunpack.c.h.b16 %v5553
        %v6436 = vunpack.c.l.b16 %v5554
        %v6437 = vunpack.c.h.b16 %v5554
        %v6438 = vunpack.c.l.b16 %v5555
        %v6439 = vunpack.c.h.b16 %v5555
        %v6440 = vunpack.c.l.b16 %v5556
        %v6441 = vunpack.c.h.b16 %v5556
        %v6442 = vunpack.c.l.b16 %v5557
        %v6443 = vunpack.c.h.b16 %v5557
        %v6444 = vunpack.c.l.b16 %v5558
        %v6445 = vunpack.c.h.b16 %v5558
        %v6446 = vunpack.c.l.b16 %v5559
        %v6447 = vunpack.c.h.b16 %v5559
        %v6448 = vunpack.c.l.b16 %v5560
        %v6449 = vunpack.c.h.b16 %v5560
        %v6450 = vunpack.c.l.b16 %v5561
        %v6451 = vunpack.c.h.b16 %v5561
        %v6452 = vunpack.c.l.b16 %v5562
        %v6453 = vunpack.c.h.b16 %v5562
        %v6454 = vunpack.c.l.b16 %v5563
        %v6455 = vunpack.c.h.b16 %v5563
        %v6456 = vunpack.c.l.b16 %v5564
        %v6457 = vunpack.c.h.b16 %v5564
        %v6458 = vunpack.c.l.b16 %v5565
        %v6459 = vunpack.c.h.b16 %v5565
        %v6460 = vunpack.c.l.b16 %v5566
        %v6461 = vunpack.c.h.b16 %v5566
        %v6462 = vunpack.c.l.b16 %v5567
        %v6463 = vunpack.c.h.b16 %v5567
        %v6464 = vunpack.c.l.b16 %v5568
        %v6465 = vunpack.c.h.b16 %v5568
        %v6466 = vunpack.c.l.b16 %v5569
        %v6467 = vunpack.c.h.b16 %v5569
        %v6468 = vunpack.c.l.b16 %v5570
        %v6469 = vunpack.c.h.b16 %v5570
        %v6470 = vunpack.c.l.b16 %v5571
        %v6471 = vunpack.c.h.b16 %v5571
        %v6472 = vunpack.c.l.b16 %v5572
        %v6473 = vunpack.c.h.b16 %v5572
        %v6474 = vunpack.c.l.b16 %v5573
        %v6475 = vunpack.c.h.b16 %v5573
        %v6476 = vunpack.c.l.b16 %v5574
        %v6477 = vunpack.c.h.b16 %v5574
        %v6478 = vunpack.c.l.b16 %v5575
        %v6479 = vunpack.c.h.b16 %v5575
        %v6480 = vunpack.c.l.b16 %v5576
        %v6481 = vunpack.c.h.b16 %v5576
        %v6482 = vunpack.c.l.b16 %v5577
        %v6483 = vunpack.c.h.b16 %v5577
        %v6484 = vunpack.c.l.b16 %v5578
        %v6485 = vunpack.c.h.b16 %v5578
        %v6486 = vunpack.c.l.b16 %v5579
        %v6487 = vunpack.c.h.b16 %v5579
        %v6488 = vunpack.c.l.b16 %v5580
        %v6489 = vunpack.c.h.b16 %v5580
        %v6490 = vunpack.c.l.b16 %v5581
        %v6491 = vunpack.c.h.b16 %v5581
        %v6492 = vunpack.c.l.b16 %v5582
        %v6493 = vunpack.c.h.b16 %v5582
        %v6494 = vunpack.c.l.b16 %v5583
        %v6495 = vunpack.c.h.b16 %v5583
        %v6496 = vunpack.c.l.b16 %v5584
        %v6497 = vunpack.c.h.b16 %v5584
        %v6498 = vunpack.c.l.b16 %v5585
        %v6499 = vunpack.c.h.b16 %v5585
        %v6500 = vunpack.c.l.b16 %v5586
        %v6501 = vunpack.c.h.b16 %v5586
        %v6502 = vunpack.c.l.b16 %v5587
        %v6503 = vunpack.c.h.b16 %v5587
        %v6504 = vunpack.c.l.b16 %v5588
        %v6505 = vunpack.c.h.b16 %v5588
        %v6506 = vunpack.c.l.b16 %v5589
        %v6507 = vunpack.c.h.b16 %v5589
        %v6508 = vunpack.c.l.b16 %v5590
        %v6509 = vunpack.c.h.b16 %v5590
        %v6510 = vunpack.c.l.b16 %v5591
        %v6511 = vunpack.c.h.b16 %v5591
        %v6512 = vunpack.c.l.b16 %v5592
        %v6513 = vunpack.c.h.b16 %v5592
        %v6514 = vunpack.c.l.b16 %v5593
        %v6515 = vunpack.c.h.b16 %v5593
        %v6516 = vunpack.c.l.b16 %v5594
        %v6517 = vunpack.c.h.b16 %v5594
        %v6518 = vunpack.c.l.b16 %v5595
        %v6519 = vunpack.c.h.b16 %v5595
        %v6520 = vunpack.c.l.b16 %v5596
        %v6521 = vunpack.c.h.b16 %v5596
        %v6522 = vunpack.c.l.b16 %v5597
        %v6523 = vunpack.c.h.b16 %v5597
        %v6524 = vunpack.c.l.b16 %v5598
        %v6525 = vunpack.c.h.b16 %v5598
        %v6526 = vunpack.c.l.b16 %v5599
        %v6527 = vunpack.c.h.b16 %v5599
        %v6528 = vunpack.c.l.b16 %v5600
        %v6529 = vunpack.c.h.b16 %v5600
        %v6530 = vunpack.c.l.b16 %v5601
        %v6531 = vunpack.c.h.b16 %v5601
        %v6532 = vunpack.c.l.b16 %v5602
        %v6533 = vunpack.c.h.b16 %v5602
        %v6534 = vunpack.c.l.b16 %v5603
        %v6535 = vunpack.c.h.b16 %v5603
        %v6536 = vunpack.c.l.b16 %v5604
        %v6537 = vunpack.c.h.b16 %v5604
        %v6538 = vunpack.c.l.b16 %v5605
        %v6539 = vunpack.c.h.b16 %v5605
        %v6540 = vunpack.c.l.b16 %v5606
        %v6541 = vunpack.c.h.b16 %v5606
        %v6542 = vunpack.c.l.b16 %v5607
        %v6543 = vunpack.c.h.b16 %v5607
        %v6544 = vunpack.c.l.b16 %v5608
        %v6545 = vunpack.c.h.b16 %v5608
        %v6546 = vunpack.c.l.b16 %v5609
        %v6547 = vunpack.c.h.b16 %v5609
        %v6548 = vunpack.c.l.b16 %v5610
        %v6549 = vunpack.c.h.b16 %v5610
        %v6550 = vunpack.c.l.b16 %v5611
        %v6551 = vunpack.c.h.b16 %v5611
        %v6552 = vunpack.c.l.b16 %v5612
        %v6553 = vunpack.c.h.b16 %v5612
        %v6554 = vunpack.c.l.b16 %v5613
        %v6555 = vunpack.c.h.b16 %v5613
        %v6556 = vunpack.c.l.b16 %v5614
        %v6557 = vunpack.c.h.b16 %v5614
        %v6558 = vunpack.c.l.b16 %v5615
        %v6559 = vunpack.c.h.b16 %v5615
        %v6560 = vunpack.c.l.b16 %v5616
        %v6561 = vunpack.c.h.b16 %v5616
        %v6562 = vunpack.c.l.b16 %v5617
        %v6563 = vunpack.c.h.b16 %v5617
        %v6564 = vunpack.c.l.b16 %v5618
        %v6565 = vunpack.c.h.b16 %v5618
        %v6566 = vunpack.c.l.b16 %v5619
        %v6567 = vunpack.c.h.b16 %v5619
        %v6568 = vunpack.c.l.b16 %v5620
        %v6569 = vunpack.c.h.b16 %v5620
        %v6570 = vunpack.c.l.b16 %v5621
        %v6571 = vunpack.c.h.b16 %v5621
        %v6572 = vunpack.c.l.b16 %v5622
        %v6573 = vunpack.c.h.b16 %v5622
        %v6574 = vunpack.c.l.b16 %v5623
        %v6575 = vunpack.c.h.b16 %v5623
        %v6576 = vunpack.c.l.b16 %v5624
        %v6577 = vunpack.c.h.b16 %v5624
        %v6578 = vunpack.c.l.b16 %v5625
        %v6579 = vunpack.c.h.b16 %v5625
        %v6580 = vpack.c.b16 %v6010, %v6004
        %v6581 = vpack.c.b16 %v6011, %v6005
        %v6582 = vpack.c.b16 %v6012, %v6006
        %v6583 = vpack.c.b16 %v6013, %v6007
        %v6584 = vpack.c.b16 %v6014, %v6008
        %v6585 = vpack.c.b16 %v6015, %v6009
        %v6586 = vpack.c.b16 %v6022, %v6016
        %v6587 = vpack.c.b16 %v6023, %v6017
        %v6588 = vpack.c.b16 %v6024, %v6018
        %v6589 = vpack.c.b16 %v6025, %v6019
        %v6590 = vpack.c.b16 %v6026, %v6020
        %v6591 = vpack.c.b16 %v6027, %v6021
        %v6592 = vpack.c.b16 %v6034, %v6028
        %v6593 = vpack.c.b16 %v6035, %v6029
        %v6594 = vpack.c.b16 %v6036, %v6030
        %v6595 = vpack.c.b16 %v6037, %v6031
        %v6596 = vpack.c.b16 %v6038, %v6032
        %v6597 = vpack.c.b16 %v6039, %v6033
        %v6598 = vpack.c.b16 %v6046, %v6040
        %v6599 = vpack.c.b16 %v6047, %v6041
        %v6600 = vpack.c.b16 %v6048, %v6042
        %v6601 = vpack.c.b16 %v6049, %v6043
        %v6602 = vpack.c.b16 %v6050, %v6044
        %v6603 = vpack.c.b16 %v6051, %v6045
        %v6604 = vpack.c.b16 %v6058, %v6052
        %v6605 = vpack.c.b16 %v6059, %v6053
        %v6606 = vpack.c.b16 %v6060, %v6054
        %v6607 = vpack.c.b16 %v6061, %v6055
        %v6608 = vpack.c.b16 %v6062, %v6056
        %v6609 = vpack.c.b16 %v6063, %v6057
        %v6610 = vpack.c.b16 %v6070, %v6064
        %v6611 = vpack.c.b16 %v6071, %v6065
        %v6612 = vpack.c.b16 %v6072, %v6066
        %v6613 = vpack.c.b16 %v6073, %v6067
        %v6614 = vpack.c.b16 %v6074, %v6068
        %v6615 = vpack.c.b16 %v6075, %v6069
        %v6616 = vpack.c.b16 %v6082, %v6076
        %v6617 = vpack.c.b16 %v6083, %v6077
        %v6618 = vpack.c.b16 %v6084, %v6078
        %v6619 = vpack.c.b16 %v6085, %v6079
        %v6620 = vpack.c.b16 %v6086, %v6080
        %v6621 = vpack.c.b16 %v6087, %v6081
        %v6622 = vpack.c.b16 %v6094, %v6088
        %v6623 = vpack.c.b16 %v6095, %v6089
        %v6624 = vpack.c.b16 %v6096, %v6090
        %v6625 = vpack.c.b16 %v6097, %v6091
        %v6626 = vpack.c.b16 %v6098, %v6092
        %v6627 = vpack.c.b16 %v6099, %v6093
        %v6628 = vpack.c.b16 %v6106, %v6100
        %v6629 = vpack.c.b16 %v6107, %v6101
        %v6630 = vpack.c.b16 %v6108, %v6102
        %v6631 = vpack.c.b16 %v6109, %v6103
        %v6632 = vpack.c.b16 %v6110, %v6104
        %v6633 = vpack.c.b16 %v6111, %v6105
        %v6634 = vpack.c.b16 %v6118, %v6112
        %v6635 = vpack.c.b16 %v6119, %v6113
        %v6636 = vpack.c.b16 %v6120, %v6114
        %v6637 = vpack.c.b16 %v6121, %v6115
        %v6638 = vpack.c.b16 %v6122, %v6116
        %v6639 = vpack.c.b16 %v6123, %v6117
        %v6640 = vpack.c.b16 %v6130, %v6124
        %v6641 = vpack.c.b16 %v6131, %v6125
        %v6642 = vpack.c.b16 %v6132, %v6126
        %v6643 = vpack.c.b16 %v6133, %v6127
        %v6644 = vpack.c.b16 %v6134, %v6128
        %v6645 = vpack.c.b16 %v6135, %v6129
        %v6646 = vpack.c.b16 %v6142, %v6136
        %v6647 = vpack.c.b16 %v6143, %v6137
        %v6648 = vpack.c.b16 %v6144, %v6138
        %v6649 = vpack.c.b16 %v6145, %v6139
        %v6650 = vpack.c.b16 %v6146, %v6140
        %v6651 = vpack.c.b16 %v6147, %v6141
        %v6652 = vpack.c.b16 %v6154, %v6148
        %v6653 = vpack.c.b16 %v6155, %v6149
        %v6654 = vpack.c.b16 %v6156, %v6150
        %v6655 = vpack.c.b16 %v6157, %v6151
        %v6656 = vpack.c.b16 %v6158, %v6152
        %v6657 = vpack.c.b16 %v6159, %v6153
        %v6658 = vpack.c.b16 %v6166, %v6160
        %v6659 = vpack.c.b16 %v6167, %v6161
        %v6660 = vpack.c.b16 %v6168, %v6162
        %v6661 = vpack.c.b16 %v6169, %v6163
        %v6662 = vpack.c.b16 %v6170, %v6164
        %v6663 = vpack.c.b16 %v6171, %v6165
        %v6664 = vpack.c.b16 %v6178, %v6172
        %v6665 = vpack.c.b16 %v6179, %v6173
        %v6666 = vpack.c.b16 %v6180, %v6174
        %v6667 = vpack.c.b16 %v6181, %v6175
        %v6668 = vpack.c.b16 %v6182, %v6176
        %v6669 = vpack.c.b16 %v6183, %v6177
        %v6670 = vpack.c.b16 %v6190, %v6184
        %v6671 = vpack.c.b16 %v6191, %v6185
        %v6672 = vpack.c.b16 %v6192, %v6186
        %v6673 = vpack.c.b16 %v6193, %v6187
        %v6674 = vpack.c.b16 %v6194, %v6188
        %v6675 = vpack.c.b16 %v6195, %v6189
        %v6676 = vpack.c.b16 %v6202, %v6196
        %v6677 = vpack.c.b16 %v6203, %v6197
        %v6678 = vpack.c.b16 %v6204, %v6198
        %v6679 = vpack.c.b16 %v6205, %v6199
        %v6680 = vpack.c.b16 %v6206, %v6200
        %v6681 = vpack.c.b16 %v6207, %v6201
        %v6682 = vpack.c.b16 %v6214, %v6208
        %v6683 = vpack.c.b16 %v6215, %v6209
        %v6684 = vpack.c.b16 %v6216, %v6210
        %v6685 = vpack.c.b16 %v6217, %v6211
        %v6686 = vpack.c.b16 %v6218, %v6212
        %v6687 = vpack.c.b16 %v6219, %v6213
        %v6688 = vpack.c.b16 %v6226, %v6220
        %v6689 = vpack.c.b16 %v6227, %v6221
        %v6690 = vpack.c.b16 %v6228, %v6222
        %v6691 = vpack.c.b16 %v6229, %v6223
        %v6692 = vpack.c.b16 %v6230, %v6224
        %v6693 = vpack.c.b16 %v6231, %v6225
        %v6694 = vpack.c.b16 %v6238, %v6232
        %v6695 = vpack.c.b16 %v6239, %v6233
        %v6696 = vpack.c.b16 %v6240, %v6234
        %v6697 = vpack.c.b16 %v6241, %v6235
        %v6698 = vpack.c.b16 %v6242, %v6236
        %v6699 = vpack.c.b16 %v6243, %v6237
        %v6700 = vpack.c.b16 %v6250, %v6244
        %v6701 = vpack.c.b16 %v6251, %v6245
        %v6702 = vpack.c.b16 %v6252, %v6246
        %v6703 = vpack.c.b16 %v6253, %v6247
        %v6704 = vpack.c.b16 %v6254, %v6248
        %v6705 = vpack.c.b16 %v6255, %v6249
        %v6706 = vpack.c.b16 %v6262, %v6256
        %v6707 = vpack.c.b16 %v6263, %v6257
        %v6708 = vpack.c.b16 %v6264, %v6258
        %v6709 = vpack.c.b16 %v6265, %v6259
        %v6710 = vpack.c.b16 %v6266, %v6260
        %v6711 = vpack.c.b16 %v6267, %v6261
        %v6712 = vpack.c.b16 %v6274, %v6268
        %v6713 = vpack.c.b16 %v6275, %v6269
        %v6714 = vpack.c.b16 %v6276, %v6270
        %v6715 = vpack.c.b16 %v6277, %v6271
        %v6716 = vpack.c.b16 %v6278, %v6272
        %v6717 = vpack.c.b16 %v6279, %v6273
        %v6718 = vpack.c.b16 %v6286, %v6280
        %v6719 = vpack.c.b16 %v6287, %v6281
        %v6720 = vpack.c.b16 %v6288, %v6282
        %v6721 = vpack.c.b16 %v6289, %v6283
        %v6722 = vpack.c.b16 %v6290, %v6284
        %v6723 = vpack.c.b16 %v6291, %v6285
        %v6724 = vpack.c.b16 %v6298, %v6292
        %v6725 = vpack.c.b16 %v6299, %v6293
        %v6726 = vpack.c.b16 %v6300, %v6294
        %v6727 = vpack.c.b16 %v6301, %v6295
        %v6728 = vpack.c.b16 %v6302, %v6296
        %v6729 = vpack.c.b16 %v6303, %v6297
        %v6730 = vpack.c.b16 %v6310, %v6304
        %v6731 = vpack.c.b16 %v6311, %v6305
        %v6732 = vpack.c.b16 %v6312, %v6306
        %v6733 = vpack.c.b16 %v6313, %v6307
        %v6734 = vpack.c.b16 %v6314, %v6308
        %v6735 = vpack.c.b16 %v6315, %v6309
        %v6736 = vpack.c.b16 %v6322, %v6316
        %v6737 = vpack.c.b16 %v6323, %v6317
        %v6738 = vpack.c.b16 %v6324, %v6318
        %v6739 = vpack.c.b16 %v6325, %v6319
        %v6740 = vpack.c.b16 %v6326, %v6320
        %v6741 = vpack.c.b16 %v6327, %v6321
        %v6742 = vpack.c.b16 %v6334, %v6328
        %v6743 = vpack.c.b16 %v6335, %v6329
        %v6744 = vpack.c.b16 %v6336, %v6330
        %v6745 = vpack.c.b16 %v6337, %v6331
        %v6746 = vpack.c.b16 %v6338, %v6332
        %v6747 = vpack.c.b16 %v6339, %v6333
        %v6748 = vpack.c.b16 %v6346, %v6340
        %v6749 = vpack.c.b16 %v6347, %v6341
        %v6750 = vpack.c.b16 %v6348, %v6342
        %v6751 = vpack.c.b16 %v6349, %v6343
        %v6752 = vpack.c.b16 %v6350, %v6344
        %v6753 = vpack.c.b16 %v6351, %v6345
        %v6754 = vpack.c.b16 %v6358, %v6352
        %v6755 = vpack.c.b16 %v6359, %v6353
        %v6756 = vpack.c.b16 %v6360, %v6354
        %v6757 = vpack.c.b16 %v6361, %v6355
        %v6758 = vpack.c.b16 %v6362, %v6356
        %v6759 = vpack.c.b16 %v6363, %v6357
        %v6760 = vpack.c.b16 %v6370, %v6364
        %v6761 = vpack.c.b16 %v6371, %v6365
        %v6762 = vpack.c.b16 %v6372, %v6366
        %v6763 = vpack.c.b16 %v6373, %v6367
        %v6764 = vpack.c.b16 %v6374, %v6368
        %v6765 = vpack.c.b16 %v6375, %v6369
        %v6766 = vpack.c.b16 %v6382, %v6376
        %v6767 = vpack.c.b16 %v6383, %v6377
        %v6768 = vpack.c.b16 %v6384, %v6378
        %v6769 = vpack.c.b16 %v6385, %v6379
        %v6770 = vpack.c.b16 %v6386, %v6380
        %v6771 = vpack.c.b16 %v6387, %v6381
        %v6772 = vpack.c.b16 %v6394, %v6388
        %v6773 = vpack.c.b16 %v6395, %v6389
        %v6774 = vpack.c.b16 %v6396, %v6390
        %v6775 = vpack.c.b16 %v6397, %v6391
        %v6776 = vpack.c.b16 %v6398, %v6392
        %v6777 = vpack.c.b16 %v6399, %v6393
        %v6778 = vpack.c.b16 %v6406, %v6400
        %v6779 = vpack.c.b16 %v6407, %v6401
        %v6780 = vpack.c.b16 %v6408, %v6402
        %v6781 = vpack.c.b16 %v6409, %v6403
        %v6782 = vpack.c.b16 %v6410, %v6404
        %v6783 = vpack.c.b16 %v6411, %v6405
        %v6784 = vpack.c.b16 %v6418, %v6412
        %v6785 = vpack.c.b16 %v6419, %v6413
        %v6786 = vpack.c.b16 %v6420, %v6414
        %v6787 = vpack.c.b16 %v6421, %v6415
        %v6788 = vpack.c.b16 %v6422, %v6416
        %v6789 = vpack.c.b16 %v6423, %v6417
        %v6790 = vpack.c.b16 %v6430, %v6424
        %v6791 = vpack.c.b16 %v6431, %v6425
        %v6792 = vpack.c.b16 %v6432, %v6426
        %v6793 = vpack.c.b16 %v6433, %v6427
        %v6794 = vpack.c.b16 %v6434, %v6428
        %v6795 = vpack.c.b16 %v6435, %v6429
        %v6796 = vpack.c.b16 %v6442, %v6436
        %v6797 = vpack.c.b16 %v6443, %v6437
        %v6798 = vpack.c.b16 %v6444, %v6438
        %v6799 = vpack.c.b16 %v6445, %v6439
        %v6800 = vpack.c.b16 %v6446, %v6440
        %v6801 = vpack.c.b16 %v6447, %v6441
        %v6802 = vpack.c.b16 %v6454, %v6448
        %v6803 = vpack.c.b16 %v6455, %v6449
        %v6804 = vpack.c.b16 %v6456, %v6450
        %v6805 = vpack.c.b16 %v6457, %v6451
        %v6806 = vpack.c.b16 %v6458, %v6452
        %v6807 = vpack.c.b16 %v6459, %v6453
        %v6808 = vpack.c.b16 %v6466, %v6460
        %v6809 = vpack.c.b16 %v6467, %v6461
        %v6810 = vpack.c.b16 %v6468, %v6462
        %v6811 = vpack.c.b16 %v6469, %v6463
        %v6812 = vpack.c.b16 %v6470, %v6464
        %v6813 = vpack.c.b16 %v6471, %v6465
        %v6814 = vpack.c.b16 %v6478, %v6472
        %v6815 = vpack.c.b16 %v6479, %v6473
        %v6816 = vpack.c.b16 %v6480, %v6474
        %v6817 = vpack.c.b16 %v6481, %v6475
        %v6818 = vpack.c.b16 %v6482, %v6476
        %v6819 = vpack.c.b16 %v6483, %v6477
        %v6820 = vpack.c.b16 %v6490, %v6484
        %v6821 = vpack.c.b16 %v6491, %v6485
        %v6822 = vpack.c.b16 %v6492, %v6486
        %v6823 = vpack.c.b16 %v6493, %v6487
        %v6824 = vpack.c.b16 %v6494, %v6488
        %v6825 = vpack.c.b16 %v6495, %v6489
        %v6826 = vpack.c.b16 %v6502, %v6496
        %v6827 = vpack.c.b16 %v6503, %v6497
        %v6828 = vpack.c.b16 %v6504, %v6498
        %v6829 = vpack.c.b16 %v6505, %v6499
        %v6830 = vpack.c.b16 %v6506, %v6500
        %v6831 = vpack.c.b16 %v6507, %v6501
        %v6832 = vpack.c.b16 %v6514, %v6508
        %v6833 = vpack.c.b16 %v6515, %v6509
        %v6834 = vpack.c.b16 %v6516, %v6510
        %v6835 = vpack.c.b16 %v6517, %v6511
        %v6836 = vpack.c.b16 %v6518, %v6512
        %v6837 = vpack.c.b16 %v6519, %v6513
        %v6838 = vpack.c.b16 %v6526, %v6520
        %v6839 = vpack.c.b16 %v6527, %v6521
        %v6840 = vpack.c.b16 %v6528, %v6522
        %v6841 = vpack.c.b16 %v6529, %v6523
        %v6842 = vpack.c.b16 %v6530, %v6524
        %v6843 = vpack.c.b16 %v6531, %v6525
        %v6844 = vpack.c.b16 %v6538, %v6532
        %v6845 = vpack.c.b16 %v6539, %v6533
        %v6846 = vpack.c.b16 %v6540, %v6534
        %v6847 = vpack.c.b16 %v6541, %v6535
        %v6848 = vpack.c.b16 %v6542, %v6536
        %v6849 = vpack.c.b16 %v6543, %v6537
        %v6850 = vpack.c.b16 %v6550, %v6544
        %v6851 = vpack.c.b16 %v6551, %v6545
        %v6852 = vpack.c.b16 %v6552, %v6546
        %v6853 = vpack.c.b16 %v6553, %v6547
        %v6854 = vpack.c.b16 %v6554, %v6548
        %v6855 = vpack.c.b16 %v6555, %v6549
        %v6856 = vpack.c.b16 %v6562, %v6556
        %v6857 = vpack.c.b16 %v6563, %v6557
        %v6858 = vpack.c.b16 %v6564, %v6558
        %v6859 = vpack.c.b16 %v6565, %v6559
        %v6860 = vpack.c.b16 %v6566, %v6560
        %v6861 = vpack.c.b16 %v6567, %v6561
        %v6862 = vpack.c.b16 %v6574, %v6568
        %v6863 = vpack.c.b16 %v6575, %v6569
        %v6864 = vpack.c.b16 %v6576, %v6570
        %v6865 = vpack.c.b16 %v6577, %v6571
        %v6866 = vpack.c.b16 %v6578, %v6572
        %v6867 = vpack.c.b16 %v6579, %v6573
        %7156 = vmatprep.subr.bf16.mxu0 %v6581
        %7157 = vmatpush1.bf16.msra.mxu0 %v6580
        %7158 = vmatprep.subr.bf16.mxu0 %v6587
        %7159 = vmatpush1.bf16.msra.mxu0 %v6586
        %7160 = vmatprep.subr.bf16.mxu0 %v6593
        %7161 = vmatpush1.bf16.msra.mxu0 %v6592
        %7162 = vmatprep.subr.bf16.mxu0 %v6599
        %7163 = vmatpush1.bf16.msra.mxu0 %v6598
        %7164 = vmatprep.subr.bf16.mxu0 %v6605
        %7165 = vmatpush1.bf16.msra.mxu0 %v6604
        %7166 = vmatprep.subr.bf16.mxu0 %v6611
        %7167 = vmatpush1.bf16.msra.mxu0 %v6610
        %7168 = vmatprep.subr.bf16.mxu0 %v6617
        %7169 = vmatpush1.bf16.msra.mxu0 %v6616
        %7170 = vmatprep.subr.bf16.mxu0 %v6623
        %7171 = vmatpush1.bf16.msra.mxu0 %v6622
        %7172 = vmatprep.subr.bf16.mxu0 %v6629
        %7173 = vmatpush1.bf16.msra.mxu0 %v6628
        %7174 = vmatprep.subr.bf16.mxu0 %v6635
        %7175 = vmatpush1.bf16.msra.mxu0 %v6634
        %7176 = vmatprep.subr.bf16.mxu0 %v6641
        %7177 = vmatpush1.bf16.msra.mxu0 %v6640
        %7178 = vmatprep.subr.bf16.mxu0 %v6647
        %7179 = vmatpush1.bf16.msra.mxu0 %v6646
        %7180 = vmatprep.subr.bf16.mxu0 %v6653
        %7181 = vmatpush1.bf16.msra.mxu0 %v6652
        %7182 = vmatprep.subr.bf16.mxu0 %v6659
        %7183 = vmatpush1.bf16.msra.mxu0 %v6658
        %7184 = vmatprep.subr.bf16.mxu0 %v6665
        %7185 = vmatpush1.bf16.msra.mxu0 %v6664
        %7186 = vmatprep.subr.bf16.mxu0 %v6671
        %7187 = vmatpush1.bf16.msra.mxu0 %v6670
        %7188 = vmatprep.mubr.bf16.mxu0 %v5681
        %7189 = vmatmul.mubr.bf16.gmra.mrb[0].mxu0 %v5680
        %v7190 = vpop.f32.mrb[0].mxu0
        %v7191 = vadd.f32 0.0, %v7190
        %v7192 = vpop.f32.mrb[0].mxu0
        %v7193 = vadd.f32 0.0, %v7192
        %v7194 = vpop.f32.mrb[0].mxu0
        %v7195 = vadd.f32 0.0, %v7194
        %v7196 = vpop.f32.mrb[0].mxu0
        %v7197 = vadd.f32 0.0, %v7196
        %7198 = vmatprep.mubr.bf16.mxu0 %v5687
        %7199 = vmatmul.mubr.bf16.gmra.mrb[0].mxu0 %v5686
        %v7200 = vpop.f32.mrb[0].mxu0
        %v7201 = vpop.f32.mrb[0].mxu0
        %v7202 = vpop.f32.mrb[0].mxu0
        %v7203 = vadd.f32 0.0, %v7202
        %v7204 = vpop.f32.mrb[0].mxu0
        %v7205 = vadd.f32 0.0, %v7204
        %7206 = vmatprep.mubr.bf16.mxu0 %v5693
        %7207 = vmatmul.mubr.bf16.gmra.mrb[0].mxu0 %v5692
        %v7208 = vpop.f32.mrb[0].mxu0
        %v7209 = vadd.f32 0.0, %v7208
        %v7210 = vpop.f32.mrb[0].mxu0
        %v7211 = vadd.f32 0.0, %v7210
        %v7212 = vpop.f32.mrb[0].mxu0
        %v7213 = vpop.f32.mrb[0].mxu0
        %7214 = vdwg.mxu0
        %7215 = vmatprep.subr.bf16.mxu0 %v6677
        %7216 = vmatpush1.bf16.msra.mxu0 %v6676
        %7217 = vmatprep.subr.bf16.mxu0 %v6683
        %7218 = vmatpush1.bf16.msra.mxu0 %v6682
        %7219 = vmatprep.subr.bf16.mxu0 %v6689
        %7220 = vmatpush1.bf16.msra.mxu0 %v6688
        %7221 = vmatprep.subr.bf16.mxu0 %v6695
        %7222 = vmatpush1.bf16.msra.mxu0 %v6694
        %7223 = vmatprep.subr.bf16.mxu0 %v6701
        %7224 = vmatpush1.bf16.msra.mxu0 %v6700
        %7225 = vmatprep.subr.bf16.mxu0 %v6707
        %7226 = vmatpush1.bf16.msra.mxu0 %v6706
        %7227 = vmatprep.subr.bf16.mxu0 %v6713
        %7228 = vmatpush1.bf16.msra.mxu0 %v6712
        %7229 = vmatprep.subr.bf16.mxu0 %v6719
        %7230 = vmatpush1.bf16.msra.mxu0 %v6718
        %7231 = vmatprep.subr.bf16.mxu0 %v6725
        %7232 = vmatpush1.bf16.msra.mxu0 %v6724
        %7233 = vmatprep.subr.bf16.mxu0 %v6731
        %7234 = vmatpush1.bf16.msra.mxu0 %v6730
        %7235 = vmatprep.subr.bf16.mxu0 %v6737
        %7236 = vmatpush1.bf16.msra.mxu0 %v6736
        %7237 = vmatprep.subr.bf16.mxu0 %v6743
        %7238 = vmatpush1.bf16.msra.mxu0 %v6742
        %7239 = vmatprep.subr.bf16.mxu0 %v6749
        %7240 = vmatpush1.bf16.msra.mxu0 %v6748
        %7241 = vmatprep.subr.bf16.mxu0 %v6755
        %7242 = vmatpush1.bf16.msra.mxu0 %v6754
        %7243 = vmatprep.subr.bf16.mxu0 %v6761
        %7244 = vmatpush1.bf16.msra.mxu0 %v6760
        %7245 = vmatprep.subr.bf16.mxu0 %v6767
        %7246 = vmatpush1.bf16.msra.mxu0 %v6766
        %7247 = vmatprep.mubr.bf16.mxu0 %v5683
        %7248 = vmatmul.mubr.bf16.gmra.mrb[0].mxu0 %v5682
        %v7249 = vpop.f32.mrb[0].mxu0
        %v7250 = vadd.f32 %v7191, %v7249
        %v7251 = vpop.f32.mrb[0].mxu0
        %v7252 = vadd.f32 %v7193, %v7251
        %v7253 = vpop.f32.mrb[0].mxu0
        %v7254 = vadd.f32 %v7195, %v7253
        %v7255 = vpop.f32.mrb[0].mxu0
        %v7256 = vadd.f32 %v7197, %v7255
        %7257 = vmatprep.mubr.bf16.mxu0 %v5689
        %7258 = vmatmul.mubr.bf16.gmra.mrb[0].mxu0 %v5688
        %v7259 = vpop.f32.mrb[0].mxu0
        %v7260 = vpop.f32.mrb[0].mxu0
        %v7261 = vpop.f32.mrb[0].mxu0
        %v7262 = vadd.f32 %v7203, %v7261
        %v7263 = vpop.f32.mrb[0].mxu0
        %v7264 = vadd.f32 %v7205, %v7263
        %7265 = vmatprep.mubr.bf16.mxu0 %v5695
        %7266 = vmatmul.mubr.bf16.gmra.mrb[0].mxu0 %v5694
        %v7267 = vpop.f32.mrb[0].mxu0
        %v7268 = vadd.f32 %v7209, %v7267
        %v7269 = vpop.f32.mrb[0].mxu0
        %v7270 = vadd.f32 %v7211, %v7269
        %v7271 = vpop.f32.mrb[0].mxu0
        %v7272 = vpop.f32.mrb[0].mxu0
        %7273 = vdwg.mxu0
        %7274 = vmatprep.subr.bf16.mxu0 %v6773
        %7275 = vmatpush1.bf16.msra.mxu0 %v6772
        %7276 = vmatprep.subr.bf16.mxu0 %v6779
        %7277 = vmatpush1.bf16.msra.mxu0 %v6778
        %7278 = vmatprep.subr.bf16.mxu0 %v6785
        %7279 = vmatpush1.bf16.msra.mxu0 %v6784
        %7280 = vmatprep.subr.bf16.mxu0 %v6791
        %7281 = vmatpush1.bf16.msra.mxu0 %v6790
        %7282 = vmatprep.subr.bf16.mxu0 %v6797
        %7283 = vmatpush1.bf16.msra.mxu0 %v6796
        %7284 = vmatprep.subr.bf16.mxu0 %v6803
        %7285 = vmatpush1.bf16.msra.mxu0 %v6802
        %7286 = vmatprep.subr.bf16.mxu0 %v6809
        %7287 = vmatpush1.bf16.msra.mxu0 %v6808
        %7288 = vmatprep.subr.bf16.mxu0 %v6815
        %7289 = vmatpush1.bf16.msra.mxu0 %v6814
        %7290 = vmatprep.subr.bf16.mxu0 %v6821
        %7291 = vmatpush1.bf16.msra.mxu0 %v6820
        %7292 = vmatprep.subr.bf16.mxu0 %v6827
        %7293 = vmatpush1.bf16.msra.mxu0 %v6826
        %7294 = vmatprep.subr.bf16.mxu0 %v6833
        %7295 = vmatpush1.bf16.msra.mxu0 %v6832
        %7296 = vmatprep.subr.bf16.mxu0 %v6839
        %7297 = vmatpush1.bf16.msra.mxu0 %v6838
        %7298 = vmatprep.subr.bf16.mxu0 %v6845
        %7299 = vmatpush1.bf16.msra.mxu0 %v6844
        %7300 = vmatprep.subr.bf16.mxu0 %v6851
        %7301 = vmatpush1.bf16.msra.mxu0 %v6850
        %7302 = vmatprep.subr.bf16.mxu0 %v6857
        %7303 = vmatpush1.bf16.msra.mxu0 %v6856
        %7304 = vmatprep.subr.bf16.mxu0 %v6863
        %7305 = vmatpush1.bf16.msra.mxu0 %v6862
        %7306 = vmatprep.mubr.bf16.mxu0 %v5685
        %7307 = vmatmul.mubr.bf16.gmra.mrb[0].mxu0 %v5684
        %v7308 = vpop.f32.mrb[0].mxu0
        %v7309 = vadd.f32 %v7250, %v7308
        %v7310 = vpop.f32.mrb[0].mxu0
        %v7311 = vadd.f32 %v7252, %v7310
        %v7312 = vpop.f32.mrb[0].mxu0
        %v7313 = vadd.f32 %v7254, %v7312
        %v7314 = vpop.f32.mrb[0].mxu0
        %v7315 = vadd.f32 %v7256, %v7314
        %7316 = vmatprep.mubr.bf16.mxu0 %v5691
        %7317 = vmatmul.mubr.bf16.gmra.mrb[0].mxu0 %v5690
        %v7318 = vpop.f32.mrb[0].mxu0
        %v7319 = vpop.f32.mrb[0].mxu0
        %v7320 = vpop.f32.mrb[0].mxu0
        %v7321 = vadd.f32 %v7262, %v7320
        %v7322 = vpop.f32.mrb[0].mxu0
        %v7323 = vadd.f32 %v7264, %v7322
        %7324 = vmatprep.mubr.bf16.mxu0 %v5697
        %7325 = vmatmul.mubr.bf16.gmra.mrb[0].mxu0 %v5696
        %v7326 = vpop.f32.mrb[0].mxu0
        %v7327 = vadd.f32 %v7268, %v7326
        %v7328 = vpop.f32.mrb[0].mxu0
        %v7329 = vadd.f32 %v7270, %v7328
        %v7330 = vpop.f32.mrb[0].mxu0
        %v7331 = vpop.f32.mrb[0].mxu0
        %7332 = vdwg.mxu0
        %7333 = vmatprep.subr.bf16.mxu0 %v6583
        %7334 = vmatpush1.bf16.msra.mxu0 %v6582
        %7335 = vmatprep.subr.bf16.mxu0 %v6589
        %7336 = vmatpush1.bf16.msra.mxu0 %v6588
        %7337 = vmatprep.subr.bf16.mxu0 %v6595
        %7338 = vmatpush1.bf16.msra.mxu0 %v6594
        %7339 = vmatprep.subr.bf16.mxu0 %v6601
        %7340 = vmatpush1.bf16.msra.mxu0 %v6600
        %7341 = vmatprep.subr.bf16.mxu0 %v6607
        %7342 = vmatpush1.bf16.msra.mxu0 %v6606
        %7343 = vmatprep.subr.bf16.mxu0 %v6613
        %7344 = vmatpush1.bf16.msra.mxu0 %v6612
        %7345 = vmatprep.subr.bf16.mxu0 %v6619
        %7346 = vmatpush1.bf16.msra.mxu0 %v6618
        %7347 = vmatprep.subr.bf16.mxu0 %v6625
        %7348 = vmatpush1.bf16.msra.mxu0 %v6624
        %7349 = vmatprep.subr.bf16.mxu0 %v6631
        %7350 = vmatpush1.bf16.msra.mxu0 %v6630
        %7351 = vmatprep.subr.bf16.mxu0 %v6637
        %7352 = vmatpush1.bf16.msra.mxu0 %v6636
        %7353 = vmatprep.subr.bf16.mxu0 %v6643
        %7354 = vmatpush1.bf16.msra.mxu0 %v6642
        %7355 = vmatprep.subr.bf16.mxu0 %v6649
        %7356 = vmatpush1.bf16.msra.mxu0 %v6648
        %7357 = vmatprep.subr.bf16.mxu0 %v6655
        %7358 = vmatpush1.bf16.msra.mxu0 %v6654
        %7359 = vmatprep.subr.bf16.mxu0 %v6661
        %7360 = vmatpush1.bf16.msra.mxu0 %v6660
        %7361 = vmatprep.subr.bf16.mxu0 %v6667
        %7362 = vmatpush1.bf16.msra.mxu0 %v6666
        %7363 = vmatprep.subr.bf16.mxu0 %v6673
        %7364 = vmatpush1.bf16.msra.mxu0 %v6672
        %7365 = vmatprep.mubr.bf16.mxu0 %v5681
        %7366 = vmatmul.mubr.bf16.gmra.mrb[0].mxu0 %v5680
        %v7367 = vpop.f32.mrb[0].mxu0
        %v7368 = vpop.f32.mrb[0].mxu0
        %v7369 = vpop.f32.mrb[0].mxu0
        %v7370 = vadd.f32 0.0, %v7369
        %v7371 = vpop.f32.mrb[0].mxu0
        %v7372 = vadd.f32 0.0, %v7371
        %7373 = vmatprep.mubr.bf16.mxu0 %v5687
        %7374 = vmatmul.mubr.bf16.gmra.mrb[0].mxu0 %v5686
        %v7375 = vpop.f32.mrb[0].mxu0
        %v7376 = vpop.f32.mrb[0].mxu0
        %v7377 = vpop.f32.mrb[0].mxu0
        %v7378 = vpop.f32.mrb[0].mxu0
        %7379 = vmatprep.mubr.bf16.mxu0 %v5693
        %7380 = vmatmul.mubr.bf16.gmra.mrb[0].mxu0 %v5692
        %v7381 = vpop.f32.mrb[0].mxu0
        %v7382 = vadd.f32 0.0, %v7381
        %v7383 = vpop.f32.mrb[0].mxu0
        %v7384 = vadd.f32 0.0, %v7383
        %v7385 = vpop.f32.mrb[0].mxu0
        %v7386 = vpop.f32.mrb[0].mxu0
        %7387 = vdwg.mxu0
        %7388 = vmatprep.subr.bf16.mxu0 %v6679
        %7389 = vmatpush1.bf16.msra.mxu0 %v6678
        %7390 = vmatprep.subr.bf16.mxu0 %v6685
        %7391 = vmatpush1.bf16.msra.mxu0 %v6684
        %7392 = vmatprep.subr.bf16.mxu0 %v6691
        %7393 = vmatpush1.bf16.msra.mxu0 %v6690
        %7394 = vmatprep.subr.bf16.mxu0 %v6697
        %7395 = vmatpush1.bf16.msra.mxu0 %v6696
        %7396 = vmatprep.subr.bf16.mxu0 %v6703
        %7397 = vmatpush1.bf16.msra.mxu0 %v6702
        %7398 = vmatprep.subr.bf16.mxu0 %v6709
        %7399 = vmatpush1.bf16.msra.mxu0 %v6708
        %7400 = vmatprep.subr.bf16.mxu0 %v6715
        %7401 = vmatpush1.bf16.msra.mxu0 %v6714
        %7402 = vmatprep.subr.bf16.mxu0 %v6721
        %7403 = vmatpush1.bf16.msra.mxu0 %v6720
        %7404 = vmatprep.subr.bf16.mxu0 %v6727
        %7405 = vmatpush1.bf16.msra.mxu0 %v6726
        %7406 = vmatprep.subr.bf16.mxu0 %v6733
        %7407 = vmatpush1.bf16.msra.mxu0 %v6732
        %7408 = vmatprep.subr.bf16.mxu0 %v6739
        %7409 = vmatpush1.bf16.msra.mxu0 %v6738
        %7410 = vmatprep.subr.bf16.mxu0 %v6745
        %7411 = vmatpush1.bf16.msra.mxu0 %v6744
        %7412 = vmatprep.subr.bf16.mxu0 %v6751
        %7413 = vmatpush1.bf16.msra.mxu0 %v6750
        %7414 = vmatprep.subr.bf16.mxu0 %v6757
        %7415 = vmatpush1.bf16.msra.mxu0 %v6756
        %7416 = vmatprep.subr.bf16.mxu0 %v6763
        %7417 = vmatpush1.bf16.msra.mxu0 %v6762
        %7418 = vmatprep.subr.bf16.mxu0 %v6769
        %7419 = vmatpush1.bf16.msra.mxu0 %v6768
        %7420 = vmatprep.mubr.bf16.mxu0 %v5683
        %7421 = vmatmul.mubr.bf16.gmra.mrb[0].mxu0 %v5682
        %v7422 = vpop.f32.mrb[0].mxu0
        %v7423 = vpop.f32.mrb[0].mxu0
        %v7424 = vpop.f32.mrb[0].mxu0
        %v7425 = vadd.f32 %v7370, %v7424
        %v7426 = vpop.f32.mrb[0].mxu0
        %v7427 = vadd.f32 %v7372, %v7426
        %7428 = vmatprep.mubr.bf16.mxu0 %v5689
        %7429 = vmatmul.mubr.bf16.gmra.mrb[0].mxu0 %v5688
        %v7430 = vpop.f32.mrb[0].mxu0
        %v7431 = vpop.f32.mrb[0].mxu0
        %v7432 = vpop.f32.mrb[0].mxu0
        %v7433 = vpop.f32.mrb[0].mxu0
        %7434 = vmatprep.mubr.bf16.mxu0 %v5695
        %7435 = vmatmul.mubr.bf16.gmra.mrb[0].mxu0 %v5694
        %v7436 = vpop.f32.mrb[0].mxu0
        %v7437 = vadd.f32 %v7382, %v7436
        %v7438 = vpop.f32.mrb[0].mxu0
        %v7439 = vadd.f32 %v7384, %v7438
        %v7440 = vpop.f32.mrb[0].mxu0
        %v7441 = vpop.f32.mrb[0].mxu0
        %7442 = vdwg.mxu0
        %7443 = vmatprep.subr.bf16.mxu0 %v6775
        %7444 = vmatpush1.bf16.msra.mxu0 %v6774
        %7445 = vmatprep.subr.bf16.mxu0 %v6781
        %7446 = vmatpush1.bf16.msra.mxu0 %v6780
        %7447 = vmatprep.subr.bf16.mxu0 %v6787
        %7448 = vmatpush1.bf16.msra.mxu0 %v6786
        %7449 = vmatprep.subr.bf16.mxu0 %v6793
        %7450 = vmatpush1.bf16.msra.mxu0 %v6792
        %7451 = vmatprep.subr.bf16.mxu0 %v6799
        %7452 = vmatpush1.bf16.msra.mxu0 %v6798
        %7453 = vmatprep.subr.bf16.mxu0 %v6805
        %7454 = vmatpush1.bf16.msra.mxu0 %v6804
        %7455 = vmatprep.subr.bf16.mxu0 %v6811
        %7456 = vmatpush1.bf16.msra.mxu0 %v6810
        %7457 = vmatprep.subr.bf16.mxu0 %v6817
        %7458 = vmatpush1.bf16.msra.mxu0 %v6816
        %7459 = vmatprep.subr.bf16.mxu0 %v6823
        %7460 = vmatpush1.bf16.msra.mxu0 %v6822
        %7461 = vmatprep.subr.bf16.mxu0 %v6829
        %7462 = vmatpush1.bf16.msra.mxu0 %v6828
        %7463 = vmatprep.subr.bf16.mxu0 %v6835
        %7464 = vmatpush1.bf16.msra.mxu0 %v6834
        %7465 = vmatprep.subr.bf16.mxu0 %v6841
        %7466 = vmatpush1.bf16.msra.mxu0 %v6840
        %7467 = vmatprep.subr.bf16.mxu0 %v6847
        %7468 = vmatpush1.bf16.msra.mxu0 %v6846
        %7469 = vmatprep.subr.bf16.mxu0 %v6853
        %7470 = vmatpush1.bf16.msra.mxu0 %v6852
        %7471 = vmatprep.subr.bf16.mxu0 %v6859
        %7472 = vmatpush1.bf16.msra.mxu0 %v6858
        %7473 = vmatprep.subr.bf16.mxu0 %v6865
        %7474 = vmatpush1.bf16.msra.mxu0 %v6864
        %7475 = vmatprep.mubr.bf16.mxu0 %v5685
        %7476 = vmatmul.mubr.bf16.gmra.mrb[0].mxu0 %v5684
        %v7477 = vpop.f32.mrb[0].mxu0
        %v7478 = vpop.f32.mrb[0].mxu0
        %v7479 = vpop.f32.mrb[0].mxu0
        %v7480 = vadd.f32 %v7425, %v7479
        %v7481 = vpop.f32.mrb[0].mxu0
        %v7482 = vadd.f32 %v7427, %v7481
        %7483 = vmatprep.mubr.bf16.mxu0 %v5691
        %7484 = vmatmul.mubr.bf16.gmra.mrb[0].mxu0 %v5690
        %v7485 = vpop.f32.mrb[0].mxu0
        %v7486 = vpop.f32.mrb[0].mxu0
        %v7487 = vpop.f32.mrb[0].mxu0
        %v7488 = vpop.f32.mrb[0].mxu0
        %7489 = vmatprep.mubr.bf16.mxu0 %v5697
        %7490 = vmatmul.mubr.bf16.gmra.mrb[0].mxu0 %v5696
        %v7491 = vpop.f32.mrb[0].mxu0
        %v7492 = vadd.f32 %v7437, %v7491
        %v7493 = vpop.f32.mrb[0].mxu0
        %v7494 = vadd.f32 %v7439, %v7493
        %v7495 = vpop.f32.mrb[0].mxu0
        %v7496 = vpop.f32.mrb[0].mxu0
        %7497 = vdwg.mxu0
        %7498 = vmatprep.subr.bf16.mxu0 %v6585
        %7499 = vmatpush1.bf16.msra.mxu0 %v6584
        %7500 = vmatprep.subr.bf16.mxu0 %v6591
        %7501 = vmatpush1.bf16.msra.mxu0 %v6590
        %7502 = vmatprep.subr.bf16.mxu0 %v6597
        %7503 = vmatpush1.bf16.msra.mxu0 %v6596
        %7504 = vmatprep.subr.bf16.mxu0 %v6603
        %7505 = vmatpush1.bf16.msra.mxu0 %v6602
        %7506 = vmatprep.subr.bf16.mxu0 %v6609
        %7507 = vmatpush1.bf16.msra.mxu0 %v6608
        %7508 = vmatprep.subr.bf16.mxu0 %v6615
        %7509 = vmatpush1.bf16.msra.mxu0 %v6614
        %7510 = vmatprep.subr.bf16.mxu0 %v6621
        %7511 = vmatpush1.bf16.msra.mxu0 %v6620
        %7512 = vmatprep.subr.bf16.mxu0 %v6627
        %7513 = vmatpush1.bf16.msra.mxu0 %v6626
        %7514 = vmatprep.subr.bf16.mxu0 %v6633
        %7515 = vmatpush1.bf16.msra.mxu0 %v6632
        %7516 = vmatprep.subr.bf16.mxu0 %v6639
        %7517 = vmatpush1.bf16.msra.mxu0 %v6638
        %7518 = vmatprep.subr.bf16.mxu0 %v6645
        %7519 = vmatpush1.bf16.msra.mxu0 %v6644
        %7520 = vmatprep.subr.bf16.mxu0 %v6651
        %7521 = vmatpush1.bf16.msra.mxu0 %v6650
        %7522 = vmatprep.subr.bf16.mxu0 %v6657
        %7523 = vmatpush1.bf16.msra.mxu0 %v6656
        %7524 = vmatprep.subr.bf16.mxu0 %v6663
        %7525 = vmatpush1.bf16.msra.mxu0 %v6662
        %7526 = vmatprep.subr.bf16.mxu0 %v6669
        %7527 = vmatpush1.bf16.msra.mxu0 %v6668
        %7528 = vmatprep.subr.bf16.mxu0 %v6675
        %7529 = vmatpush1.bf16.msra.mxu0 %v6674
        %7530 = vmatprep.mubr.bf16.mxu0 %v5681
        %7531 = vmatmul.mubr.bf16.gmra.mrb[0].mxu0 %v5680
        %v7532 = vpop.f32.mrb[0].mxu0
        %v7533 = vpop.f32.mrb[0].mxu0
        %v7534 = vpop.f32.mrb[0].mxu0
        %v7535 = vadd.f32 0.0, %v7534
        %v7536 = vpop.f32.mrb[0].mxu0
        %v7537 = vadd.f32 0.0, %v7536
        %7538 = vmatprep.mubr.bf16.mxu0 %v5687
        %7539 = vmatmul.mubr.bf16.gmra.mrb[0].mxu0 %v5686
        %v7540 = vpop.f32.mrb[0].mxu0
        %v7541 = vadd.f32 0.0, %v7540
        %v7542 = vpop.f32.mrb[0].mxu0
        %v7543 = vadd.f32 0.0, %v7542
        %v7544 = vpop.f32.mrb[0].mxu0
        %v7545 = vpop.f32.mrb[0].mxu0
        %7546 = vmatprep.mubr.bf16.mxu0 %v5693
        %7547 = vmatmul.mubr.bf16.gmra.mrb[0].mxu0 %v5692
        %v7548 = vpop.f32.mrb[0].mxu0
        %v7549 = vadd.f32 0.0, %v7548
        %v7550 = vpop.f32.mrb[0].mxu0
        %v7551 = vadd.f32 0.0, %v7550
        %v7552 = vpop.f32.mrb[0].mxu0
        %v7553 = vadd.f32 0.0, %v7552
        %v7554 = vpop.f32.mrb[0].mxu0
        %v7555 = vadd.f32 0.0, %v7554
        %7556 = vdwg.mxu0
        %7557 = vmatprep.subr.bf16.mxu0 %v6681
        %7558 = vmatpush1.bf16.msra.mxu0 %v6680
        %7559 = vmatprep.subr.bf16.mxu0 %v6687
        %7560 = vmatpush1.bf16.msra.mxu0 %v6686
        %7561 = vmatprep.subr.bf16.mxu0 %v6693
        %7562 = vmatpush1.bf16.msra.mxu0 %v6692
        %7563 = vmatprep.subr.bf16.mxu0 %v6699
        %7564 = vmatpush1.bf16.msra.mxu0 %v6698
        %7565 = vmatprep.subr.bf16.mxu0 %v6705
        %7566 = vmatpush1.bf16.msra.mxu0 %v6704
        %7567 = vmatprep.subr.bf16.mxu0 %v6711
        %7568 = vmatpush1.bf16.msra.mxu0 %v6710
        %7569 = vmatprep.subr.bf16.mxu0 %v6717
        %7570 = vmatpush1.bf16.msra.mxu0 %v6716
        %7571 = vmatprep.subr.bf16.mxu0 %v6723
        %7572 = vmatpush1.bf16.msra.mxu0 %v6722
        %7573 = vmatprep.subr.bf16.mxu0 %v6729
        %7574 = vmatpush1.bf16.msra.mxu0 %v6728
        %7575 = vmatprep.subr.bf16.mxu0 %v6735
        %7576 = vmatpush1.bf16.msra.mxu0 %v6734
        %7577 = vmatprep.subr.bf16.mxu0 %v6741
        %7578 = vmatpush1.bf16.msra.mxu0 %v6740
        %7579 = vmatprep.subr.bf16.mxu0 %v6747
        %7580 = vmatpush1.bf16.msra.mxu0 %v6746
        %7581 = vmatprep.subr.bf16.mxu0 %v6753
        %7582 = vmatpush1.bf16.msra.mxu0 %v6752
        %7583 = vmatprep.subr.bf16.mxu0 %v6759
        %7584 = vmatpush1.bf16.msra.mxu0 %v6758
        %7585 = vmatprep.subr.bf16.mxu0 %v6765
        %7586 = vmatpush1.bf16.msra.mxu0 %v6764
        %7587 = vmatprep.subr.bf16.mxu0 %v6771
        %7588 = vmatpush1.bf16.msra.mxu0 %v6770
        %7589 = vmatprep.mubr.bf16.mxu0 %v5683
        %7590 = vmatmul.mubr.bf16.gmra.mrb[0].mxu0 %v5682
        %v7591 = vpop.f32.mrb[0].mxu0
        %v7592 = vpop.f32.mrb[0].mxu0
        %v7593 = vpop.f32.mrb[0].mxu0
        %v7594 = vadd.f32 %v7535, %v7593
        %v7595 = vpop.f32.mrb[0].mxu0
        %v7596 = vadd.f32 %v7537, %v7595
        %7597 = vmatprep.mubr.bf16.mxu0 %v5689
        %7598 = vmatmul.mubr.bf16.gmra.mrb[0].mxu0 %v5688
        %v7599 = vpop.f32.mrb[0].mxu0
        %v7600 = vadd.f32 %v7541, %v7599
        %v7601 = vpop.f32.mrb[0].mxu0
        %v7602 = vadd.f32 %v7543, %v7601
        %v7603 = vpop.f32.mrb[0].mxu0
        %v7604 = vpop.f32.mrb[0].mxu0
        %7605 = vmatprep.mubr.bf16.mxu0 %v5695
        %7606 = vmatmul.mubr.bf16.gmra.mrb[0].mxu0 %v5694
        %v7607 = vpop.f32.mrb[0].mxu0
        %v7608 = vadd.f32 %v7549, %v7607
        %v7609 = vpop.f32.mrb[0].mxu0
        %v7610 = vadd.f32 %v7551, %v7609
        %v7611 = vpop.f32.mrb[0].mxu0
        %v7612 = vadd.f32 %v7553, %v7611
        %v7613 = vpop.f32.mrb[0].mxu0
        %v7614 = vadd.f32 %v7555, %v7613
        %7615 = vdwg.mxu0
        %7616 = vmatprep.subr.bf16.mxu0 %v6777
        %7617 = vmatpush1.bf16.msra.mxu0 %v6776
        %7618 = vmatprep.subr.bf16.mxu0 %v6783
        %7619 = vmatpush1.bf16.msra.mxu0 %v6782
        %7620 = vmatprep.subr.bf16.mxu0 %v6789
        %7621 = vmatpush1.bf16.msra.mxu0 %v6788
        %7622 = vmatprep.subr.bf16.mxu0 %v6795
        %7623 = vmatpush1.bf16.msra.mxu0 %v6794
        %7624 = vmatprep.subr.bf16.mxu0 %v6801
        %7625 = vmatpush1.bf16.msra.mxu0 %v6800
        %7626 = vmatprep.subr.bf16.mxu0 %v6807
        %7627 = vmatpush1.bf16.msra.mxu0 %v6806
        %7628 = vmatprep.subr.bf16.mxu0 %v6813
        %7629 = vmatpush1.bf16.msra.mxu0 %v6812
        %7630 = vmatprep.subr.bf16.mxu0 %v6819
        %7631 = vmatpush1.bf16.msra.mxu0 %v6818
        %7632 = vmatprep.subr.bf16.mxu0 %v6825
        %7633 = vmatpush1.bf16.msra.mxu0 %v6824
        %7634 = vmatprep.subr.bf16.mxu0 %v6831
        %7635 = vmatpush1.bf16.msra.mxu0 %v6830
        %7636 = vmatprep.subr.bf16.mxu0 %v6837
        %7637 = vmatpush1.bf16.msra.mxu0 %v6836
        %7638 = vmatprep.subr.bf16.mxu0 %v6843
        %7639 = vmatpush1.bf16.msra.mxu0 %v6842
        %7640 = vmatprep.subr.bf16.mxu0 %v6849
        %7641 = vmatpush1.bf16.msra.mxu0 %v6848
        %7642 = vmatprep.subr.bf16.mxu0 %v6855
        %7643 = vmatpush1.bf16.msra.mxu0 %v6854
        %7644 = vmatprep.subr.bf16.mxu0 %v6861
        %7645 = vmatpush1.bf16.msra.mxu0 %v6860
        %7646 = vmatprep.subr.bf16.mxu0 %v6867
        %7647 = vmatpush1.bf16.msra.mxu0 %v6866
        %7648 = vmatprep.mubr.bf16.mxu0 %v5685
        %7649 = vmatmul.mubr.bf16.gmra.mrb[0].mxu0 %v5684
        %v7650 = vpop.f32.mrb[0].mxu0
        %v7651 = vpop.f32.mrb[0].mxu0
        %v7652 = vpop.f32.mrb[0].mxu0
        %v7653 = vadd.f32 %v7594, %v7652
        %v7654 = vpop.f32.mrb[0].mxu0
        %v7655 = vadd.f32 %v7596, %v7654
        %7656 = vmatprep.mubr.bf16.mxu0 %v5691
        %7657 = vmatmul.mubr.bf16.gmra.mrb[0].mxu0 %v5690
        %v7658 = vpop.f32.mrb[0].mxu0
        %v7659 = vadd.f32 %v7600, %v7658
        %v7660 = vpop.f32.mrb[0].mxu0
        %v7661 = vadd.f32 %v7602, %v7660
        %v7662 = vpop.f32.mrb[0].mxu0
        %v7663 = vpop.f32.mrb[0].mxu0
        %7664 = vmatprep.mubr.bf16.mxu0 %v5697
        %7665 = vmatmul.mubr.bf16.gmra.mrb[0].mxu0 %v5696
        %v7666 = vpop.f32.mrb[0].mxu0
        %v7667 = vadd.f32 %v7608, %v7666
        %v7668 = vpop.f32.mrb[0].mxu0
        %v7669 = vadd.f32 %v7610, %v7668
        %v7670 = vpop.f32.mrb[0].mxu0
        %v7671 = vadd.f32 %v7612, %v7670
        %v7672 = vpop.f32.mrb[0].mxu0
        %v7673 = vadd.f32 %v7614, %v7672
        %7674 = vdwg.mxu0
        %v7675 = vadd.f32 %v5310, %v7309
        %v7676 = vadd.f32 %v5311, %v7311
        %v7677 = vadd.f32 %v5312, %v7313
        %v7678 = vadd.f32 %v5313, %v7315
        %v7679 = vadd.f32 %v5314, %v7321
        %v7680 = vadd.f32 %v5315, %v7323
        %v7681 = vadd.f32 %v5316, %v7327
        %v7682 = vadd.f32 %v5317, %v7329
        %v7687 = vrot.slane %v7480, 1
        %v7688 = vrot.slane %v7482, 1
        %v7689 = vrot.slane %v7492, 1
        %v7690 = vrot.slane %v7494, 1
        %v7695 = vadd.f32 %v7675, %v7687
        %v7696 = vadd.f32 %v7676, %v7688
        %v7697 = vadd.f32 %v7677, %v7687
        %v7698 = vadd.f32 %v7678, %v7688
        %v7699 = vadd.f32 %v7679, %v7689
        %v7700 = vadd.f32 %v7680, %v7690
        %v7701 = vadd.f32 %v7681, %v7689
        %v7702 = vadd.f32 %v7682, %v7690
        %v7711 = vrot.slane %v7653, 2
        %v7712 = vrot.slane %v7655, 2
        %v7713 = vrot.slane %v7659, 2
        %v7714 = vsel %vm2869, %v7711, %v7713
        %v7715 = vrot.slane %v7661, 2
        %v7716 = vsel %vm2869, %v7712, %v7715
        %v7717 = vrot.slane %v7667, 2
        %v7718 = vrot.slane %v7669, 2
        %v7719 = vrot.slane %v7671, 2
        %v7720 = vsel %vm2869, %v7717, %v7719
        %v7721 = vrot.slane %v7673, 2
        %v7722 = vsel %vm2869, %v7718, %v7721
        %v7731 = vadd.f32 %v7695, %v7711
        %v7732 = vadd.f32 %v7696, %v7712
        %v7733 = vadd.f32 %v7697, %v7714
        %v7734 = vadd.f32 %v7698, %v7716
        %v7735 = vadd.f32 %v7699, %v7717
        %v7736 = vadd.f32 %v7700, %v7718
        %v7737 = vadd.f32 %v7701, %v7720
        %v7738 = vadd.f32 %v7702, %v7722
        %v7739 = vld [vmem:[#allocation11] sm:$0x3]
        %v7741 = vlaneseq
        %v7742 = vshrl.u32 %v7741, 7
        %v7743 = vsub.s32 0, %v7742
        %v7744 = vrot.slane %v7739, %v7743
        %v7745 = vlaneseq
        %v7746 = vshrl.u32 %v7745, 7
        %v7747 = vsub.s32 1, %v7746
        %v7748 = vrot.slane %v7739, %v7747
        %v7751 = vadd.f32 %v7731, %v7744
        %v7752 = vadd.f32 %v7732, %v7748
        %v7753 = vadd.f32 %v7733, %v7744
        %v7754 = vadd.f32 %v7734, %v7748
        %v7755 = vadd.f32 %v7735, %v7744
        %v7756 = vadd.f32 %v7736, %v7748
        %v7757 = vadd.f32 %v7737, %v7744
        %v7758 = vadd.f32 %v7738, %v7748
        %v7759 = vpack.c.bf16 %v7753, %v7751
        %v7760 = vpack.c.bf16 %v7754, %v7752
        %v7761 = vpack.c.bf16 %v7757, %v7755
        %v7762 = vpack.c.bf16 %v7758, %v7756
        %v7767 = vunpack.c.l.b16 %v7759
        %v7768 = vunpack.c.l.b16 %v7760
        %v7769 = vunpack.c.h.b16 %v7759
        %v7770 = vunpack.c.h.b16 %v7760
        %v7771 = vunpack.c.l.b16 %v7761
        %v7772 = vunpack.c.l.b16 %v7762
        %v7773 = vunpack.c.h.b16 %v7761
        %v7774 = vunpack.c.h.b16 %v7762
        %v7775 = vpack.c.b16 %v7768, %v7767
        %v7776 = vpack.c.b16 %v7770, %v7769
        %v7777 = vpack.c.b16 %v7772, %v7771
        %v7778 = vpack.c.b16 %v7774, %v7773
        %vm7779 = vsmask.f32 256
        %vm7780 = vsmask.f32 4368
        %vm7781 = vmor %vm7779, %vm7780
        %v7783 = vshrl.u32 %v7775, 16
        %v7785 = vrot.slane %v7783, 7
        %v7786 = vrot.slane %v7785, 4
        %v7788 = vshrl.u32 %v7776, 16
        %v7790 = vrot.slane %v7788, 7
        %v7791 = vshll.u32 %v7776, 16
        %v7793 = vor.u32 %v7790, %v7791
        %v7794 = vsel %vm7781, %v7786, %v7793
        %v7796 = vshrl.u32 %v7777, 16
        %v7798 = vrot.slane %v7796, 7
        %v7799 = vrot.slane %v7798, 4
        %v7801 = vshrl.u32 %v7778, 16
        %v7803 = vrot.slane %v7801, 7
        %v7804 = vshll.u32 %v7778, 16
        %v7806 = vor.u32 %v7803, %v7804
        %v7807 = vsel %vm7781, %v7799, %v7806
        %7810 = vst [vmem:[%s393] sm:$0xff] %v7794
        %7811 = vst [vmem:[%s393 + $0x8] sm:$0xff] %v7807
        %s7812 = sand.u32 %s190, 1
        %s7813 = scalar_lea.sflag [#allocation5], %s7812
        %s7814 = sand.u32 %s190, 1
        %s7815 = smul.addr %s7814, 16
        %s7816 = scalar_lea.vmem [#allocation12], %s7815
        // Predicated region
        $region77: #{tpu_custom_call.1} parent=39 // pred_check
          %p7817 = pneg %p200
        $region78: #{tpu_custom_call.1} parent=39 // pred_check_branch
          %7819 = sbr.rel (%p7817) target = $region80
        $region79: #{tpu_custom_call.1} parent=39 // pred_region
          %s7820 = smul.u32 2, %s31
          %s7822 = ssub.s32 256, 256
          %7823 = vsyncadd %s7813, %s7822
          %s7824 = smul.addr %s7820, 2
          %s7825 = smul.addr %s30, 16
          %s7826 = sadd.s32 %s7824, %s7825
          %s7827 = smul.addr %s7826, 64
          %s7828 = scalar_lea.hbm %s5, %s7827
          %s7829 = sshll.u32 %s7816, 4
          %s7830 = int_to_ptr.vmem [resolvable:$true] %s7829
          %7835 = dma.vmem_to_hbm [thread:$0]  %s7830, 256, %s7828, %s7813, 128, 128, 8
        $region80: #{tpu_custom_call.1} parent=39 // pred_fallthru
          _
      $region40: #{tpu_custom_call.1} parent=5 // pred_fallthru
        _
      %p7836 = scmp.le.s32.totalorder 2, %s21
      // Predicated region
      $region81: #{tpu_custom_call.1} parent=5 // pred_check
        %p7837 = pneg %p7836
      $region82: #{tpu_custom_call.1} parent=5 // pred_check_branch
        %7839 = sbr.rel (%p7837) target = $region84
      $region83: #{tpu_custom_call.1} parent=5 // pred_region
        %s7840 = ssub.s32 %s21, 2
        // Predicated region
        $region85: #{tpu_custom_call.1} parent=83 // pred_check
          %p7841 = pneg %p206
        $region86: #{tpu_custom_call.1} parent=83 // pred_check_branch
          %7843 = sbr.rel (%p7841) target = $region88
        $region87: #{tpu_custom_call.1} parent=83 // pred_region
          %s7844 = sand.u32 %s191, 1
          %s7845 = scalar_lea.sflag [#allocation5], %s7844
          %s7846 = sand.u32 %s191, 1
          %s7847 = smul.addr %s7846, 16
          %s7848 = scalar_lea.vmem [#allocation12], %s7847
          %7849 = dma.done %s7845, 256
        $region88: #{tpu_custom_call.1} parent=83 // pred_fallthru
          _
      $region84: #{tpu_custom_call.1} parent=5 // pred_fallthru
        _
    $region6: #{tpu_custom_call.1} parent=1 // loop_footer
      %s25 = sadd.s32 1, %s21
    $region7: #{tpu_custom_call.1} parent=1 // loop_footer_branch
      %20 = sbr.rel target = $region3
    $region8: #{tpu_custom_call.1} parent=1 // loop_exit
      _
    %7850 = vsyncpa [#allocation4], 1
    %s7851 = scalar_lea.sflag [#allocation4], 1
    %7852 = vsyncpa %s7851, 1
    %7853 = vsyncpa [#allocation7], 1
    %s7854 = scalar_lea.sflag [#allocation7], 1
    %7855 = vsyncpa %s7854, 1
    %7856 = vsyncpa [#allocation10], 1
    %7857 = vsyncpa [#allocation5], 1
    %s7858 = scalar_lea.sflag [#allocation5], 1
    %7859 = vsyncpa %s7858, 1

</llo_original>
